<compile_context>
chip_gen: v7x
topology: tpu7x:2x2x1
jax: 0.10.0
libtpu: 0.0.40
codegen_flags: <defaults>
</compile_context>

<pallas_src>
import functools

import jax
import jax.numpy as jnp
import numpy as np
from jax import lax
from jax.experimental import pallas as pl
from jax.experimental.pallas import tpu as pltpu


_VMEM = pl.BlockSpec(memory_space=pltpu.MemorySpace.VMEM)


# ----------------------------------------------------------------------------
# Fused Pallas kernel: stacked LSTMs, wavefront schedule, norms pre-folded
# ----------------------------------------------------------------------------
def _fused_encoder_kernel(x_ref, w_ref, hT_ref, *, L, T, B, H, dins):
    # x_ref : (T, B, D)        time-major input (real batch rows, no padding)
    # w_ref : (L, Rmax, 4H)    packed per-layer [Wih^T ; Whh^T ; bias ; 0-pad]
    # hT_ref: (B, H)           final hidden state of the last layer
    f32 = jnp.float32

    # Lane mask picking the 'g' gate (tanh) region out of [i | f | g | o].
    lane = lax.broadcasted_iota(jnp.int32, (B, 4 * H), 1)
    g_mask = jnp.logical_and(lane >= 2 * H, lane < 3 * H)
    # Single-tanh trick constants (hoisted):
    #   act = tanh(gates * gscale) * gscale + goff
    # which is tanh() on the g lanes and sigmoid() (= 0.5*tanh(z/2)+0.5) on
    # the i/f/o lanes -> one EUP push for all four gates.
    gscale = jnp.where(g_mask, 1.0, 0.5).astype(f32)
    goff = jnp.where(g_mask, 0.0, 0.5).astype(f32)

    h = [jnp.zeros((B, H), f32) for _ in range(L)]
    c = [jnp.zeros((B, H), f32) for _ in range(L)]

    # Wavefront over (layer, time): at step s, layer l advances to t = s - l.
    # T and L are tiny & static -> full unroll for LLO scheduler visibility.
    for s in range(T + L - 1):
        h_prev = list(h)                    # snapshot: state after step s - 1
        for l in range(L):
            t = s - l
            if not (0 <= t < T):
                continue
            din = dins[l]
            # Weight slices are re-read at their use sites (cheap VMEM loads)
            # to keep vreg pressure low across the large unrolled body.
            wih = w_ref[l, 0:din, :]                        # (din, 4H)
            whh = w_ref[l, din:din + H, :]                  # (H,   4H)
            bias = w_ref[l, din + H:din + H + 1, :]         # (1,   4H)
            xin = x_ref[t] if l == 0 else h_prev[l - 1]     # (B, din)
            # MXU precision: Mosaic default (documented); reference = HIGHEST.
            gates = (
                jnp.dot(xin, wih, preferred_element_type=f32)
                + jnp.dot(h_prev[l], whh, preferred_element_type=f32)
                + bias
            )
            act = jnp.tanh(gates * gscale) * gscale + goff  # 1 EUP push
            # TODO(synk): if the bundle dump shows the lane-offset quarter
            # slices below generating relayouts on the dep chain, replace them
            # with an explicit pltpu.roll + masked combines.
            i_g = act[:, 0:H]
            f_g = act[:, H:2 * H]
            g_g = act[:, 2 * H:3 * H]
            o_g = act[:, 3 * H:4 * H]
            c[l] = f_g * c[l] + i_g * g_g
            h[l] = o_g * jnp.tanh(c[l])

    hT_ref[...] = h[L - 1]


# ----------------------------------------------------------------------------
# One-time parameter preparation: transpose, bias merge, BN fold, single pack
# ----------------------------------------------------------------------------
def prepare_encoder_params(params, eps=1e-5):
    """Fold each NormLayer into the first-layer input weights of the following
    LSTM stack and pack every weight/bias into one lane-aligned (L, Rmax, 4H)
    array so the kernel needs a single input DMA."""
    H = int(np.shape(params["rnn1"][0]["w_hh"])[1])

    def fold(norm, layers):
        gamma, beta, mean, var = [jnp.asarray(v, jnp.float32) for v in norm]
        scale = gamma * lax.rsqrt(var + eps)
        shift = beta - mean * scale
        blocks = []
        for idx, p in enumerate(layers):
            wih_t = jnp.asarray(p["w_ih"], jnp.float32).T        # (Din, 4H)
            whh_t = jnp.asarray(p["w_hh"], jnp.float32).T        # (H, 4H)
            bias = jnp.asarray(p["b_ih"] + p["b_hh"], jnp.float32)
            if idx == 0:  # x_norm @ Wih^T == x @ (scale*Wih^T) + shift @ Wih^T
                bias = bias + jnp.dot(shift, wih_t,
                                      precision=lax.Precision.HIGHEST)
                wih_t = scale[:, None] * wih_t
            blocks.append((wih_t, whh_t, bias))
        return blocks

    blocks = fold(params["bn1"], params["rnn1"]) + fold(params["bn2"], params["rnn2"])
    L = len(blocks)
    dins = tuple(int(b[0].shape[0]) for b in blocks)
    rmax = -(-(max(dins) + H + 1) // 8) * 8          # 8-sublane aligned rows
    packed = np.zeros((L, rmax, 4 * H), np.float32)
    for l, (wih_t, whh_t, bias) in enumerate(blocks):
        din = dins[l]
        packed[l, :din, :] = np.asarray(wih_t)
        packed[l, din:din + H, :] = np.asarray(whh_t)
        packed[l, din + H, :] = np.asarray(bias)
    return jnp.asarray(packed), dins


# ----------------------------------------------------------------------------
# Forward wrapper (single pallas_call, single weight DMA)
# ----------------------------------------------------------------------------
@functools.partial(jax.jit, static_argnames=("dins",))
def keystrokes_encoder_forward(x_btd, packed_w, *, dins):
    B, T, _ = x_btd.shape
    L, _, four_h = packed_w.shape
    H = four_h // 4
    # Only remaining wrapper op: time-major view so the per-step input read
    # inside the kernel is a plain leading-dim load.
    x_tbd = jnp.transpose(x_btd, (1, 0, 2)).astype(jnp.float32)   # (T, B, D)
    kernel = functools.partial(
        _fused_encoder_kernel, L=L, T=T, B=B, H=H, dins=dins)
    return pl.pallas_call(
        kernel,
        out_shape=jax.ShapeDtypeStruct((B, H), jnp.float32),
        in_specs=[_VMEM, _VMEM],
        out_specs=_VMEM,
    )(x_tbd, packed_w)


# ----------------------------------------------------------------------------
# Deterministic parameter init (PyTorch-style shapes / uniform init)
# ----------------------------------------------------------------------------
def init_lstm_params(key, n_layers, d_in, d_hidden):
    bound = 1.0 / np.sqrt(d_hidden)
    layers = []
    for l in range(n_layers):
        din = d_in if l == 0 else d_hidden
        key, k1, k2, k3, k4 = jax.random.split(key, 5)
        layers.append(dict(
            w_ih=jax.random.uniform(k1, (4 * d_hidden, din), jnp.float32, -bound, bound),
            w_hh=jax.random.uniform(k2, (4 * d_hidden, d_hidden), jnp.float32, -bound, bound),
            b_ih=jax.random.uniform(k3, (4 * d_hidden,), jnp.float32, -bound, bound),
            b_hh=jax.random.uniform(k4, (4 * d_hidden,), jnp.float32, -bound, bound),
        ))
    return key, layers


def init_norm_params(key, d):
    key, k1, k2, k3, k4 = jax.random.split(key, 5)
    gamma = jax.random.uniform(k1, (d,), jnp.float32, 0.5, 1.5)
    beta = jax.random.uniform(k2, (d,), jnp.float32, -0.1, 0.1)
    mean = jax.random.uniform(k3, (d,), jnp.float32, -0.5, 0.5)
    var = jax.random.uniform(k4, (d,), jnp.float32, 0.5, 1.5)
    return key, (gamma, beta, mean, var)


# ----------------------------------------------------------------------------
# Pure-JAX reference (unfused, explicit norms) for the correctness check
# ----------------------------------------------------------------------------
def _ref_lstm_layer(x_tbd, p):
    H = p["w_hh"].shape[1]
    B = x_tbd.shape[1]
    prec = lax.Precision.HIGHEST

    def step(carry, x_t):
        h, c = carry
        gates = (jnp.dot(x_t, p["w_ih"].T, precision=prec)
                 + jnp.dot(h, p["w_hh"].T, precision=prec)
                 + p["b_ih"] + p["b_hh"])
        i, f, g, o = jnp.split(gates, 4, axis=-1)
        c = jax.nn.sigmoid(f) * c + jax.nn.sigmoid(i) * jnp.tanh(g)
        h = jax.nn.sigmoid(o) * jnp.tanh(c)
        return (h, c), h

    (hT, _), ys = lax.scan(step, (jnp.zeros((B, H)), jnp.zeros((B, H))), x_tbd)
    return ys, hT


def _ref_norm(x_tbd, gamma, beta, mean, var):
    return (x_tbd - mean) * lax.rsqrt(var + 1e-5) * gamma + beta


def reference_forward(x_btd, params):
    x = jnp.transpose(x_btd, (1, 0, 2)).astype(jnp.float32)
    x = _ref_norm(x, *params["bn1"])
    for p in params["rnn1"]:
        x, _ = _ref_lstm_layer(x, p)
    x = _ref_norm(x, *params["bn2"])
    hT = None
    for p in params["rnn2"]:
        x, hT = _ref_lstm_layer(x, p)
    return hT


# ----------------------------------------------------------------------------
if __name__ == "__main__":
    # Small shapes consistent with the module.
    d_codes, d_times = 28, 4
    d_model = d_codes + d_times      # 32
    d_hidden = 32
    n_layers = 2
    B, T = 4, 8

    key = jax.random.PRNGKey(0)
    key, bn1 = init_norm_params(key, d_model)
    key, rnn1 = init_lstm_params(key, n_layers, d_model, d_hidden)
    key, bn2 = init_norm_params(key, d_hidden)
    key, rnn2 = init_lstm_params(key, n_layers, d_hidden, d_hidden)
    params = dict(bn1=bn1, rnn1=rnn1, bn2=bn2, rnn2=rnn2)

    key, kx = jax.random.split(key)
    x = jax.random.normal(kx, (B, T, d_model), jnp.float32)

    packed_w, dins = prepare_encoder_params(params)   # one-time prep / BN fold
    out = jax.block_until_ready(
        keystrokes_encoder_forward(x, packed_w, dins=dins))
    ref = jax.block_until_ready(reference_forward(x, params))

    assert out.shape == (B, d_hidden)
    np.testing.assert_allclose(np.asarray(out), np.asarray(ref), rtol=2e-3, atol=2e-3)
    print("KERNEL_OK")
</pallas_src>

<mosaic_0001>
module attributes {stable_mosaic.version = 11 : i64} {
  func.func @_fused_encoder_kernel(%arg0: memref<8x4x32xf32, #tpu.memory_space<vmem>>, %arg1: memref<4x72x128xf32, #tpu.memory_space<vmem>>, %arg2: memref<4x32xf32, #tpu.memory_space<vmem>>) attributes {dimension_semantics = [], scalar_prefetch = 0 : i64, scratch_operands = 0 : i64, tpu.core_type = #tpu.core_type<tc>} {
    %0 = tpu.iota {dimensions = array<i32: 1>} : vector<4x128xi32>
    %c64_i32 = arith.constant 64 : i32
    %1 = vector.broadcast %c64_i32 : i32 to vector<4x128xi32>
    %2 = arith.cmpi sge, %0, %1 : vector<4x128xi32>
    %c96_i32 = arith.constant 96 : i32
    %3 = vector.broadcast %c96_i32 : i32 to vector<4x128xi32>
    %4 = arith.cmpi slt, %0, %3 : vector<4x128xi32>
    %5 = arith.andi %2, %4 : vector<4x128xi1>
    %cst = arith.constant 1.000000e+00 : f32
    %cst_0 = arith.constant 5.000000e-01 : f32
    %6 = vector.broadcast %cst : f32 to vector<4x128xf32>
    %7 = vector.broadcast %cst_0 : f32 to vector<4x128xf32>
    %8 = arith.select %5, %6, %7 : vector<4x128xi1>, vector<4x128xf32>
    %cst_1 = arith.constant 0.000000e+00 : f32
    %cst_2 = arith.constant 5.000000e-01 : f32
    %9 = vector.broadcast %cst_1 : f32 to vector<4x128xf32>
    %10 = vector.broadcast %cst_2 : f32 to vector<4x128xf32>
    %11 = arith.select %5, %9, %10 : vector<4x128xi1>, vector<4x128xf32>
    %cst_3 = arith.constant 0.000000e+00 : f32
    %12 = vector.broadcast %cst_3 : f32 to vector<4x32xf32>
    %cst_4 = arith.constant 0.000000e+00 : f32
    %13 = vector.broadcast %cst_4 : f32 to vector<4x32xf32>
    %cst_5 = arith.constant 0.000000e+00 : f32
    %14 = vector.broadcast %cst_5 : f32 to vector<4x32xf32>
    %cst_6 = arith.constant 0.000000e+00 : f32
    %15 = vector.broadcast %cst_6 : f32 to vector<4x32xf32>
    %cst_7 = arith.constant 0.000000e+00 : f32
    %16 = vector.broadcast %cst_7 : f32 to vector<4x32xf32>
    %cst_8 = arith.constant 0.000000e+00 : f32
    %17 = vector.broadcast %cst_8 : f32 to vector<4x32xf32>
    %cst_9 = arith.constant 0.000000e+00 : f32
    %18 = vector.broadcast %cst_9 : f32 to vector<4x32xf32>
    %cst_10 = arith.constant 0.000000e+00 : f32
    %19 = vector.broadcast %cst_10 : f32 to vector<4x32xf32>
    %c0 = arith.constant 0 : index
    %c0_11 = arith.constant 0 : index
    %c0_12 = arith.constant 0 : index
    %20 = vector.load %arg1[%c0, %c0_11, %c0_12] : memref<4x72x128xf32, #tpu.memory_space<vmem>>, vector<1x32x128xf32>
    %21 = vector.shape_cast %20 : vector<1x32x128xf32> to vector<32x128xf32>
    %c0_13 = arith.constant 0 : index
    %c32 = arith.constant 32 : index
    %c0_14 = arith.constant 0 : index
    %22 = vector.load %arg1[%c0_13, %c32, %c0_14] : memref<4x72x128xf32, #tpu.memory_space<vmem>>, vector<1x32x128xf32>
    %23 = vector.shape_cast %22 : vector<1x32x128xf32> to vector<32x128xf32>
    %c0_15 = arith.constant 0 : index
    %c64 = arith.constant 64 : index
    %c0_16 = arith.constant 0 : index
    %24 = vector.load %arg1[%c0_15, %c64, %c0_16] : memref<4x72x128xf32, #tpu.memory_space<vmem>>, vector<1x1x128xf32>
    %25 = vector.shape_cast %24 : vector<1x1x128xf32> to vector<1x128xf32>
    %c0_17 = arith.constant 0 : index
    %c0_18 = arith.constant 0 : index
    %c0_19 = arith.constant 0 : index
    %26 = vector.load %arg0[%c0_17, %c0_18, %c0_19] : memref<8x4x32xf32, #tpu.memory_space<vmem>>, vector<1x4x32xf32>
    %27 = vector.shape_cast %26 : vector<1x4x32xf32> to vector<4x32xf32>
    %cst_20 = arith.constant dense<0.000000e+00> : vector<4x128xf32>
    %28 = tpu.matmul %27, %21, %cst_20 {dimension_numbers = #tpu.dot_dimension_numbers<[1], [0], [0], [1], [0, 0, 1, 1], [], []>} : vector<4x32xf32>, vector<32x128xf32>, vector<4x128xf32> -> vector<4x128xf32>
    %cst_21 = arith.constant dense<0.000000e+00> : vector<4x128xf32>
    %29 = tpu.matmul %12, %23, %cst_21 {dimension_numbers = #tpu.dot_dimension_numbers<[1], [0], [0], [1], [0, 0, 1, 1], [], []>} : vector<4x32xf32>, vector<32x128xf32>, vector<4x128xf32> -> vector<4x128xf32>
    %30 = arith.addf %28, %29 : vector<4x128xf32>
    %31 = vector.broadcast %25 : vector<1x128xf32> to vector<4x128xf32>
    %32 = arith.addf %30, %31 : vector<4x128xf32>
    %33 = arith.mulf %32, %8 : vector<4x128xf32>
    %34 = math.tanh %33 : vector<4x128xf32>
    %35 = arith.mulf %34, %8 : vector<4x128xf32>
    %36 = arith.addf %35, %11 : vector<4x128xf32>
    %37 = vector.extract_strided_slice %36 {offsets = [0, 0], sizes = [4, 32], strides = [1, 1]} : vector<4x128xf32> to vector<4x32xf32>
    %38 = vector.extract_strided_slice %36 {offsets = [0, 32], sizes = [4, 32], strides = [1, 1]} : vector<4x128xf32> to vector<4x32xf32>
    %39 = vector.extract_strided_slice %36 {offsets = [0, 64], sizes = [4, 32], strides = [1, 1]} : vector<4x128xf32> to vector<4x32xf32>
    %40 = vector.extract_strided_slice %36 {offsets = [0, 96], sizes = [4, 32], strides = [1, 1]} : vector<4x128xf32> to vector<4x32xf32>
    %41 = arith.mulf %38, %16 : vector<4x32xf32>
    %42 = arith.mulf %37, %39 : vector<4x32xf32>
    %43 = arith.addf %41, %42 : vector<4x32xf32>
    %44 = math.tanh %43 : vector<4x32xf32>
    %45 = arith.mulf %40, %44 : vector<4x32xf32>
    %c0_22 = arith.constant 0 : index
    %c0_23 = arith.constant 0 : index
    %c0_24 = arith.constant 0 : index
    %46 = vector.load %arg1[%c0_22, %c0_23, %c0_24] : memref<4x72x128xf32, #tpu.memory_space<vmem>>, vector<1x32x128xf32>
    %47 = vector.shape_cast %46 : vector<1x32x128xf32> to vector<32x128xf32>
    %c0_25 = arith.constant 0 : index
    %c32_26 = arith.constant 32 : index
    %c0_27 = arith.constant 0 : index
    %48 = vector.load %arg1[%c0_25, %c32_26, %c0_27] : memref<4x72x128xf32, #tpu.memory_space<vmem>>, vector<1x32x128xf32>
    %49 = vector.shape_cast %48 : vector<1x32x128xf32> to vector<32x128xf32>
    %c0_28 = arith.constant 0 : index
    %c64_29 = arith.constant 64 : index
    %c0_30 = arith.constant 0 : index
    %50 = vector.load %arg1[%c0_28, %c64_29, %c0_30] : memref<4x72x128xf32, #tpu.memory_space<vmem>>, vector<1x1x128xf32>
    %51 = vector.shape_cast %50 : vector<1x1x128xf32> to vector<1x128xf32>
    %c1 = arith.constant 1 : index
    %c0_31 = arith.constant 0 : index
    %c0_32 = arith.constant 0 : index
    %52 = vector.load %arg0[%c1, %c0_31, %c0_32] : memref<8x4x32xf32, #tpu.memory_space<vmem>>, vector<1x4x32xf32>
    %53 = vector.shape_cast %52 : vector<1x4x32xf32> to vector<4x32xf32>
    %cst_33 = arith.constant dense<0.000000e+00> : vector<4x128xf32>
    %54 = tpu.matmul %53, %47, %cst_33 {dimension_numbers = #tpu.dot_dimension_numbers<[1], [0], [0], [1], [0, 0, 1, 1], [], []>} : vector<4x32xf32>, vector<32x128xf32>, vector<4x128xf32> -> vector<4x128xf32>
    %cst_34 = arith.constant dense<0.000000e+00> : vector<4x128xf32>
    %55 = tpu.matmul %45, %49, %cst_34 {dimension_numbers = #tpu.dot_dimension_numbers<[1], [0], [0], [1], [0, 0, 1, 1], [], []>} : vector<4x32xf32>, vector<32x128xf32>, vector<4x128xf32> -> vector<4x128xf32>
    %56 = arith.addf %54, %55 : vector<4x128xf32>
    %57 = vector.broadcast %51 : vector<1x128xf32> to vector<4x128xf32>
    %58 = arith.addf %56, %57 : vector<4x128xf32>
    %59 = arith.mulf %58, %8 : vector<4x128xf32>
    %60 = math.tanh %59 : vector<4x128xf32>
    %61 = arith.mulf %60, %8 : vector<4x128xf32>
    %62 = arith.addf %61, %11 : vector<4x128xf32>
    %63 = vector.extract_strided_slice %62 {offsets = [0, 0], sizes = [4, 32], strides = [1, 1]} : vector<4x128xf32> to vector<4x32xf32>
    %64 = vector.extract_strided_slice %62 {offsets = [0, 32], sizes = [4, 32], strides = [1, 1]} : vector<4x128xf32> to vector<4x32xf32>
    %65 = vector.extract_strided_slice %62 {offsets = [0, 64], sizes = [4, 32], strides = [1, 1]} : vector<4x128xf32> to vector<4x32xf32>
    %66 = vector.extract_strided_slice %62 {offsets = [0, 96], sizes = [4, 32], strides = [1, 1]} : vector<4x128xf32> to vector<4x32xf32>
    %67 = arith.mulf %64, %43 : vector<4x32xf32>
    %68 = arith.mulf %63, %65 : vector<4x32xf32>
    %69 = arith.addf %67, %68 : vector<4x32xf32>
    %70 = math.tanh %69 : vector<4x32xf32>
    %71 = arith.mulf %66, %70 : vector<4x32xf32>
    %c1_35 = arith.constant 1 : index
    %c0_36 = arith.constant 0 : index
    %c0_37 = arith.constant 0 : index
    %72 = vector.load %arg1[%c1_35, %c0_36, %c0_37] : memref<4x72x128xf32, #tpu.memory_space<vmem>>, vector<1x32x128xf32>
    %73 = vector.shape_cast %72 : vector<1x32x128xf32> to vector<32x128xf32>
    %c1_38 = arith.constant 1 : index
    %c32_39 = arith.constant 32 : index
    %c0_40 = arith.constant 0 : index
    %74 = vector.load %arg1[%c1_38, %c32_39, %c0_40] : memref<4x72x128xf32, #tpu.memory_space<vmem>>, vector<1x32x128xf32>
    %75 = vector.shape_cast %74 : vector<1x32x128xf32> to vector<32x128xf32>
    %c1_41 = arith.constant 1 : index
    %c64_42 = arith.constant 64 : index
    %c0_43 = arith.constant 0 : index
    %76 = vector.load %arg1[%c1_41, %c64_42, %c0_43] : memref<4x72x128xf32, #tpu.memory_space<vmem>>, vector<1x1x128xf32>
    %77 = vector.shape_cast %76 : vector<1x1x128xf32> to vector<1x128xf32>
    %cst_44 = arith.constant dense<0.000000e+00> : vector<4x128xf32>
    %78 = tpu.matmul %45, %73, %cst_44 {dimension_numbers = #tpu.dot_dimension_numbers<[1], [0], [0], [1], [0, 0, 1, 1], [], []>} : vector<4x32xf32>, vector<32x128xf32>, vector<4x128xf32> -> vector<4x128xf32>
    %cst_45 = arith.constant dense<0.000000e+00> : vector<4x128xf32>
    %79 = tpu.matmul %13, %75, %cst_45 {dimension_numbers = #tpu.dot_dimension_numbers<[1], [0], [0], [1], [0, 0, 1, 1], [], []>} : vector<4x32xf32>, vector<32x128xf32>, vector<4x128xf32> -> vector<4x128xf32>
    %80 = arith.addf %78, %79 : vector<4x128xf32>
    %81 = vector.broadcast %77 : vector<1x128xf32> to vector<4x128xf32>
    %82 = arith.addf %80, %81 : vector<4x128xf32>
    %83 = arith.mulf %82, %8 : vector<4x128xf32>
    %84 = math.tanh %83 : vector<4x128xf32>
    %85 = arith.mulf %84, %8 : vector<4x128xf32>
    %86 = arith.addf %85, %11 : vector<4x128xf32>
    %87 = vector.extract_strided_slice %86 {offsets = [0, 0], sizes = [4, 32], strides = [1, 1]} : vector<4x128xf32> to vector<4x32xf32>
    %88 = vector.extract_strided_slice %86 {offsets = [0, 32], sizes = [4, 32], strides = [1, 1]} : vector<4x128xf32> to vector<4x32xf32>
    %89 = vector.extract_strided_slice %86 {offsets = [0, 64], sizes = [4, 32], strides = [1, 1]} : vector<4x128xf32> to vector<4x32xf32>
    %90 = vector.extract_strided_slice %86 {offsets = [0, 96], sizes = [4, 32], strides = [1, 1]} : vector<4x128xf32> to vector<4x32xf32>
    %91 = arith.mulf %88, %17 : vector<4x32xf32>
    %92 = arith.mulf %87, %89 : vector<4x32xf32>
    %93 = arith.addf %91, %92 : vector<4x32xf32>
    %94 = math.tanh %93 : vector<4x32xf32>
    %95 = arith.mulf %90, %94 : vector<4x32xf32>
    %c0_46 = arith.constant 0 : index
    %c0_47 = arith.constant 0 : index
    %c0_48 = arith.constant 0 : index
    %96 = vector.load %arg1[%c0_46, %c0_47, %c0_48] : memref<4x72x128xf32, #tpu.memory_space<vmem>>, vector<1x32x128xf32>
    %97 = vector.shape_cast %96 : vector<1x32x128xf32> to vector<32x128xf32>
    %c0_49 = arith.constant 0 : index
    %c32_50 = arith.constant 32 : index
    %c0_51 = arith.constant 0 : index
    %98 = vector.load %arg1[%c0_49, %c32_50, %c0_51] : memref<4x72x128xf32, #tpu.memory_space<vmem>>, vector<1x32x128xf32>
    %99 = vector.shape_cast %98 : vector<1x32x128xf32> to vector<32x128xf32>
    %c0_52 = arith.constant 0 : index
    %c64_53 = arith.constant 64 : index
    %c0_54 = arith.constant 0 : index
    %100 = vector.load %arg1[%c0_52, %c64_53, %c0_54] : memref<4x72x128xf32, #tpu.memory_space<vmem>>, vector<1x1x128xf32>
    %101 = vector.shape_cast %100 : vector<1x1x128xf32> to vector<1x128xf32>
    %c2 = arith.constant 2 : index
    %c0_55 = arith.constant 0 : index
    %c0_56 = arith.constant 0 : index
    %102 = vector.load %arg0[%c2, %c0_55, %c0_56] : memref<8x4x32xf32, #tpu.memory_space<vmem>>, vector<1x4x32xf32>
    %103 = vector.shape_cast %102 : vector<1x4x32xf32> to vector<4x32xf32>
    %cst_57 = arith.constant dense<0.000000e+00> : vector<4x128xf32>
    %104 = tpu.matmul %103, %97, %cst_57 {dimension_numbers = #tpu.dot_dimension_numbers<[1], [0], [0], [1], [0, 0, 1, 1], [], []>} : vector<4x32xf32>, vector<32x128xf32>, vector<4x128xf32> -> vector<4x128xf32>
    %cst_58 = arith.constant dense<0.000000e+00> : vector<4x128xf32>
    %105 = tpu.matmul %71, %99, %cst_58 {dimension_numbers = #tpu.dot_dimension_numbers<[1], [0], [0], [1], [0, 0, 1, 1], [], []>} : vector<4x32xf32>, vector<32x128xf32>, vector<4x128xf32> -> vector<4x128xf32>
    %106 = arith.addf %104, %105 : vector<4x128xf32>
    %107 = vector.broadcast %101 : vector<1x128xf32> to vector<4x128xf32>
    %108 = arith.addf %106, %107 : vector<4x128xf32>
    %109 = arith.mulf %108, %8 : vector<4x128xf32>
    %110 = math.tanh %109 : vector<4x128xf32>
    %111 = arith.mulf %110, %8 : vector<4x128xf32>
    %112 = arith.addf %111, %11 : vector<4x128xf32>
    %113 = vector.extract_strided_slice %112 {offsets = [0, 0], sizes = [4, 32], strides = [1, 1]} : vector<4x128xf32> to vector<4x32xf32>
    %114 = vector.extract_strided_slice %112 {offsets = [0, 32], sizes = [4, 32], strides = [1, 1]} : vector<4x128xf32> to vector<4x32xf32>
    %115 = vector.extract_strided_slice %112 {offsets = [0, 64], sizes = [4, 32], strides = [1, 1]} : vector<4x128xf32> to vector<4x32xf32>
    %116 = vector.extract_strided_slice %112 {offsets = [0, 96], sizes = [4, 32], strides = [1, 1]} : vector<4x128xf32> to vector<4x32xf32>
    %117 = arith.mulf %114, %69 : vector<4x32xf32>
    %118 = arith.mulf %113, %115 : vector<4x32xf32>
    %119 = arith.addf %117, %118 : vector<4x32xf32>
    %120 = math.tanh %119 : vector<4x32xf32>
    %121 = arith.mulf %116, %120 : vector<4x32xf32>
    %c1_59 = arith.constant 1 : index
    %c0_60 = arith.constant 0 : index
    %c0_61 = arith.constant 0 : index
    %122 = vector.load %arg1[%c1_59, %c0_60, %c0_61] : memref<4x72x128xf32, #tpu.memory_space<vmem>>, vector<1x32x128xf32>
    %123 = vector.shape_cast %122 : vector<1x32x128xf32> to vector<32x128xf32>
    %c1_62 = arith.constant 1 : index
    %c32_63 = arith.constant 32 : index
    %c0_64 = arith.constant 0 : index
    %124 = vector.load %arg1[%c1_62, %c32_63, %c0_64] : memref<4x72x128xf32, #tpu.memory_space<vmem>>, vector<1x32x128xf32>
    %125 = vector.shape_cast %124 : vector<1x32x128xf32> to vector<32x128xf32>
    %c1_65 = arith.constant 1 : index
    %c64_66 = arith.constant 64 : index
    %c0_67 = arith.constant 0 : index
    %126 = vector.load %arg1[%c1_65, %c64_66, %c0_67] : memref<4x72x128xf32, #tpu.memory_space<vmem>>, vector<1x1x128xf32>
    %127 = vector.shape_cast %126 : vector<1x1x128xf32> to vector<1x128xf32>
    %cst_68 = arith.constant dense<0.000000e+00> : vector<4x128xf32>
    %128 = tpu.matmul %71, %123, %cst_68 {dimension_numbers = #tpu.dot_dimension_numbers<[1], [0], [0], [1], [0, 0, 1, 1], [], []>} : vector<4x32xf32>, vector<32x128xf32>, vector<4x128xf32> -> vector<4x128xf32>
    %cst_69 = arith.constant dense<0.000000e+00> : vector<4x128xf32>
    %129 = tpu.matmul %95, %125, %cst_69 {dimension_numbers = #tpu.dot_dimension_numbers<[1], [0], [0], [1], [0, 0, 1, 1], [], []>} : vector<4x32xf32>, vector<32x128xf32>, vector<4x128xf32> -> vector<4x128xf32>
    %130 = arith.addf %128, %129 : vector<4x128xf32>
    %131 = vector.broadcast %127 : vector<1x128xf32> to vector<4x128xf32>
    %132 = arith.addf %130, %131 : vector<4x128xf32>
    %133 = arith.mulf %132, %8 : vector<4x128xf32>
    %134 = math.tanh %133 : vector<4x128xf32>
    %135 = arith.mulf %134, %8 : vector<4x128xf32>
    %136 = arith.addf %135, %11 : vector<4x128xf32>
    %137 = vector.extract_strided_slice %136 {offsets = [0, 0], sizes = [4, 32], strides = [1, 1]} : vector<4x128xf32> to vector<4x32xf32>
    %138 = vector.extract_strided_slice %136 {offsets = [0, 32], sizes = [4, 32], strides = [1, 1]} : vector<4x128xf32> to vector<4x32xf32>
    %139 = vector.extract_strided_slice %136 {offsets = [0, 64], sizes = [4, 32], strides = [1, 1]} : vector<4x128xf32> to vector<4x32xf32>
    %140 = vector.extract_strided_slice %136 {offsets = [0, 96], sizes = [4, 32], strides = [1, 1]} : vector<4x128xf32> to vector<4x32xf32>
    %141 = arith.mulf %138, %93 : vector<4x32xf32>
    %142 = arith.mulf %137, %139 : vector<4x32xf32>
    %143 = arith.addf %141, %142 : vector<4x32xf32>
    %144 = math.tanh %143 : vector<4x32xf32>
    %145 = arith.mulf %140, %144 : vector<4x32xf32>
    %c2_70 = arith.constant 2 : index
    %c0_71 = arith.constant 0 : index
    %c0_72 = arith.constant 0 : index
    %146 = vector.load %arg1[%c2_70, %c0_71, %c0_72] : memref<4x72x128xf32, #tpu.memory_space<vmem>>, vector<1x32x128xf32>
    %147 = vector.shape_cast %146 : vector<1x32x128xf32> to vector<32x128xf32>
    %c2_73 = arith.constant 2 : index
    %c32_74 = arith.constant 32 : index
    %c0_75 = arith.constant 0 : index
    %148 = vector.load %arg1[%c2_73, %c32_74, %c0_75] : memref<4x72x128xf32, #tpu.memory_space<vmem>>, vector<1x32x128xf32>
    %149 = vector.shape_cast %148 : vector<1x32x128xf32> to vector<32x128xf32>
    %c2_76 = arith.constant 2 : index
    %c64_77 = arith.constant 64 : index
    %c0_78 = arith.constant 0 : index
    %150 = vector.load %arg1[%c2_76, %c64_77, %c0_78] : memref<4x72x128xf32, #tpu.memory_space<vmem>>, vector<1x1x128xf32>
    %151 = vector.shape_cast %150 : vector<1x1x128xf32> to vector<1x128xf32>
    %cst_79 = arith.constant dense<0.000000e+00> : vector<4x128xf32>
    %152 = tpu.matmul %95, %147, %cst_79 {dimension_numbers = #tpu.dot_dimension_numbers<[1], [0], [0], [1], [0, 0, 1, 1], [], []>} : vector<4x32xf32>, vector<32x128xf32>, vector<4x128xf32> -> vector<4x128xf32>
    %cst_80 = arith.constant dense<0.000000e+00> : vector<4x128xf32>
    %153 = tpu.matmul %14, %149, %cst_80 {dimension_numbers = #tpu.dot_dimension_numbers<[1], [0], [0], [1], [0, 0, 1, 1], [], []>} : vector<4x32xf32>, vector<32x128xf32>, vector<4x128xf32> -> vector<4x128xf32>
    %154 = arith.addf %152, %153 : vector<4x128xf32>
    %155 = vector.broadcast %151 : vector<1x128xf32> to vector<4x128xf32>
    %156 = arith.addf %154, %155 : vector<4x128xf32>
    %157 = arith.mulf %156, %8 : vector<4x128xf32>
    %158 = math.tanh %157 : vector<4x128xf32>
    %159 = arith.mulf %158, %8 : vector<4x128xf32>
    %160 = arith.addf %159, %11 : vector<4x128xf32>
    %161 = vector.extract_strided_slice %160 {offsets = [0, 0], sizes = [4, 32], strides = [1, 1]} : vector<4x128xf32> to vector<4x32xf32>
    %162 = vector.extract_strided_slice %160 {offsets = [0, 32], sizes = [4, 32], strides = [1, 1]} : vector<4x128xf32> to vector<4x32xf32>
    %163 = vector.extract_strided_slice %160 {offsets = [0, 64], sizes = [4, 32], strides = [1, 1]} : vector<4x128xf32> to vector<4x32xf32>
    %164 = vector.extract_strided_slice %160 {offsets = [0, 96], sizes = [4, 32], strides = [1, 1]} : vector<4x128xf32> to vector<4x32xf32>
    %165 = arith.mulf %162, %18 : vector<4x32xf32>
    %166 = arith.mulf %161, %163 : vector<4x32xf32>
    %167 = arith.addf %165, %166 : vector<4x32xf32>
    %168 = math.tanh %167 : vector<4x32xf32>
    %169 = arith.mulf %164, %168 : vector<4x32xf32>
    %c0_81 = arith.constant 0 : index
    %c0_82 = arith.constant 0 : index
    %c0_83 = arith.constant 0 : index
    %170 = vector.load %arg1[%c0_81, %c0_82, %c0_83] : memref<4x72x128xf32, #tpu.memory_space<vmem>>, vector<1x32x128xf32>
    %171 = vector.shape_cast %170 : vector<1x32x128xf32> to vector<32x128xf32>
    %c0_84 = arith.constant 0 : index
    %c32_85 = arith.constant 32 : index
    %c0_86 = arith.constant 0 : index
    %172 = vector.load %arg1[%c0_84, %c32_85, %c0_86] : memref<4x72x128xf32, #tpu.memory_space<vmem>>, vector<1x32x128xf32>
    %173 = vector.shape_cast %172 : vector<1x32x128xf32> to vector<32x128xf32>
    %c0_87 = arith.constant 0 : index
    %c64_88 = arith.constant 64 : index
    %c0_89 = arith.constant 0 : index
    %174 = vector.load %arg1[%c0_87, %c64_88, %c0_89] : memref<4x72x128xf32, #tpu.memory_space<vmem>>, vector<1x1x128xf32>
    %175 = vector.shape_cast %174 : vector<1x1x128xf32> to vector<1x128xf32>
    %c3 = arith.constant 3 : index
    %c0_90 = arith.constant 0 : index
    %c0_91 = arith.constant 0 : index
    %176 = vector.load %arg0[%c3, %c0_90, %c0_91] : memref<8x4x32xf32, #tpu.memory_space<vmem>>, vector<1x4x32xf32>
    %177 = vector.shape_cast %176 : vector<1x4x32xf32> to vector<4x32xf32>
    %cst_92 = arith.constant dense<0.000000e+00> : vector<4x128xf32>
    %178 = tpu.matmul %177, %171, %cst_92 {dimension_numbers = #tpu.dot_dimension_numbers<[1], [0], [0], [1], [0, 0, 1, 1], [], []>} : vector<4x32xf32>, vector<32x128xf32>, vector<4x128xf32> -> vector<4x128xf32>
    %cst_93 = arith.constant dense<0.000000e+00> : vector<4x128xf32>
    %179 = tpu.matmul %121, %173, %cst_93 {dimension_numbers = #tpu.dot_dimension_numbers<[1], [0], [0], [1], [0, 0, 1, 1], [], []>} : vector<4x32xf32>, vector<32x128xf32>, vector<4x128xf32> -> vector<4x128xf32>
    %180 = arith.addf %178, %179 : vector<4x128xf32>
    %181 = vector.broadcast %175 : vector<1x128xf32> to vector<4x128xf32>
    %182 = arith.addf %180, %181 : vector<4x128xf32>
    %183 = arith.mulf %182, %8 : vector<4x128xf32>
    %184 = math.tanh %183 : vector<4x128xf32>
    %185 = arith.mulf %184, %8 : vector<4x128xf32>
    %186 = arith.addf %185, %11 : vector<4x128xf32>
    %187 = vector.extract_strided_slice %186 {offsets = [0, 0], sizes = [4, 32], strides = [1, 1]} : vector<4x128xf32> to vector<4x32xf32>
    %188 = vector.extract_strided_slice %186 {offsets = [0, 32], sizes = [4, 32], strides = [1, 1]} : vector<4x128xf32> to vector<4x32xf32>
    %189 = vector.extract_strided_slice %186 {offsets = [0, 64], sizes = [4, 32], strides = [1, 1]} : vector<4x128xf32> to vector<4x32xf32>
    %190 = vector.extract_strided_slice %186 {offsets = [0, 96], sizes = [4, 32], strides = [1, 1]} : vector<4x128xf32> to vector<4x32xf32>
    %191 = arith.mulf %188, %119 : vector<4x32xf32>
    %192 = arith.mulf %187, %189 : vector<4x32xf32>
    %193 = arith.addf %191, %192 : vector<4x32xf32>
    %194 = math.tanh %193 : vector<4x32xf32>
    %195 = arith.mulf %190, %194 : vector<4x32xf32>
    %c1_94 = arith.constant 1 : index
    %c0_95 = arith.constant 0 : index
    %c0_96 = arith.constant 0 : index
    %196 = vector.load %arg1[%c1_94, %c0_95, %c0_96] : memref<4x72x128xf32, #tpu.memory_space<vmem>>, vector<1x32x128xf32>
    %197 = vector.shape_cast %196 : vector<1x32x128xf32> to vector<32x128xf32>
    %c1_97 = arith.constant 1 : index
    %c32_98 = arith.constant 32 : index
    %c0_99 = arith.constant 0 : index
    %198 = vector.load %arg1[%c1_97, %c32_98, %c0_99] : memref<4x72x128xf32, #tpu.memory_space<vmem>>, vector<1x32x128xf32>
    %199 = vector.shape_cast %198 : vector<1x32x128xf32> to vector<32x128xf32>
    %c1_100 = arith.constant 1 : index
    %c64_101 = arith.constant 64 : index
    %c0_102 = arith.constant 0 : index
    %200 = vector.load %arg1[%c1_100, %c64_101, %c0_102] : memref<4x72x128xf32, #tpu.memory_space<vmem>>, vector<1x1x128xf32>
    %201 = vector.shape_cast %200 : vector<1x1x128xf32> to vector<1x128xf32>
    %cst_103 = arith.constant dense<0.000000e+00> : vector<4x128xf32>
    %202 = tpu.matmul %121, %197, %cst_103 {dimension_numbers = #tpu.dot_dimension_numbers<[1], [0], [0], [1], [0, 0, 1, 1], [], []>} : vector<4x32xf32>, vector<32x128xf32>, vector<4x128xf32> -> vector<4x128xf32>
    %cst_104 = arith.constant dense<0.000000e+00> : vector<4x128xf32>
    %203 = tpu.matmul %145, %199, %cst_104 {dimension_numbers = #tpu.dot_dimension_numbers<[1], [0], [0], [1], [0, 0, 1, 1], [], []>} : vector<4x32xf32>, vector<32x128xf32>, vector<4x128xf32> -> vector<4x128xf32>
    %204 = arith.addf %202, %203 : vector<4x128xf32>
    %205 = vector.broadcast %201 : vector<1x128xf32> to vector<4x128xf32>
    %206 = arith.addf %204, %205 : vector<4x128xf32>
    %207 = arith.mulf %206, %8 : vector<4x128xf32>
    %208 = math.tanh %207 : vector<4x128xf32>
    %209 = arith.mulf %208, %8 : vector<4x128xf32>
    %210 = arith.addf %209, %11 : vector<4x128xf32>
    %211 = vector.extract_strided_slice %210 {offsets = [0, 0], sizes = [4, 32], strides = [1, 1]} : vector<4x128xf32> to vector<4x32xf32>
    %212 = vector.extract_strided_slice %210 {offsets = [0, 32], sizes = [4, 32], strides = [1, 1]} : vector<4x128xf32> to vector<4x32xf32>
    %213 = vector.extract_strided_slice %210 {offsets = [0, 64], sizes = [4, 32], strides = [1, 1]} : vector<4x128xf32> to vector<4x32xf32>
    %214 = vector.extract_strided_slice %210 {offsets = [0, 96], sizes = [4, 32], strides = [1, 1]} : vector<4x128xf32> to vector<4x32xf32>
    %215 = arith.mulf %212, %143 : vector<4x32xf32>
    %216 = arith.mulf %211, %213 : vector<4x32xf32>
    %217 = arith.addf %215, %216 : vector<4x32xf32>
    %218 = math.tanh %217 : vector<4x32xf32>
    %219 = arith.mulf %214, %218 : vector<4x32xf32>
    %c2_105 = arith.constant 2 : index
    %c0_106 = arith.constant 0 : index
    %c0_107 = arith.constant 0 : index
    %220 = vector.load %arg1[%c2_105, %c0_106, %c0_107] : memref<4x72x128xf32, #tpu.memory_space<vmem>>, vector<1x32x128xf32>
    %221 = vector.shape_cast %220 : vector<1x32x128xf32> to vector<32x128xf32>
    %c2_108 = arith.constant 2 : index
    %c32_109 = arith.constant 32 : index
    %c0_110 = arith.constant 0 : index
    %222 = vector.load %arg1[%c2_108, %c32_109, %c0_110] : memref<4x72x128xf32, #tpu.memory_space<vmem>>, vector<1x32x128xf32>
    %223 = vector.shape_cast %222 : vector<1x32x128xf32> to vector<32x128xf32>
    %c2_111 = arith.constant 2 : index
    %c64_112 = arith.constant 64 : index
    %c0_113 = arith.constant 0 : index
    %224 = vector.load %arg1[%c2_111, %c64_112, %c0_113] : memref<4x72x128xf32, #tpu.memory_space<vmem>>, vector<1x1x128xf32>
    %225 = vector.shape_cast %224 : vector<1x1x128xf32> to vector<1x128xf32>
    %cst_114 = arith.constant dense<0.000000e+00> : vector<4x128xf32>
    %226 = tpu.matmul %145, %221, %cst_114 {dimension_numbers = #tpu.dot_dimension_numbers<[1], [0], [0], [1], [0, 0, 1, 1], [], []>} : vector<4x32xf32>, vector<32x128xf32>, vector<4x128xf32> -> vector<4x128xf32>
    %cst_115 = arith.constant dense<0.000000e+00> : vector<4x128xf32>
    %227 = tpu.matmul %169, %223, %cst_115 {dimension_numbers = #tpu.dot_dimension_numbers<[1], [0], [0], [1], [0, 0, 1, 1], [], []>} : vector<4x32xf32>, vector<32x128xf32>, vector<4x128xf32> -> vector<4x128xf32>
    %228 = arith.addf %226, %227 : vector<4x128xf32>
    %229 = vector.broadcast %225 : vector<1x128xf32> to vector<4x128xf32>
    %230 = arith.addf %228, %229 : vector<4x128xf32>
    %231 = arith.mulf %230, %8 : vector<4x128xf32>
    %232 = math.tanh %231 : vector<4x128xf32>
    %233 = arith.mulf %232, %8 : vector<4x128xf32>
    %234 = arith.addf %233, %11 : vector<4x128xf32>
    %235 = vector.extract_strided_slice %234 {offsets = [0, 0], sizes = [4, 32], strides = [1, 1]} : vector<4x128xf32> to vector<4x32xf32>
    %236 = vector.extract_strided_slice %234 {offsets = [0, 32], sizes = [4, 32], strides = [1, 1]} : vector<4x128xf32> to vector<4x32xf32>
    %237 = vector.extract_strided_slice %234 {offsets = [0, 64], sizes = [4, 32], strides = [1, 1]} : vector<4x128xf32> to vector<4x32xf32>
    %238 = vector.extract_strided_slice %234 {offsets = [0, 96], sizes = [4, 32], strides = [1, 1]} : vector<4x128xf32> to vector<4x32xf32>
    %239 = arith.mulf %236, %167 : vector<4x32xf32>
    %240 = arith.mulf %235, %237 : vector<4x32xf32>
    %241 = arith.addf %239, %240 : vector<4x32xf32>
    %242 = math.tanh %241 : vector<4x32xf32>
    %243 = arith.mulf %238, %242 : vector<4x32xf32>
    %c3_116 = arith.constant 3 : index
    %c0_117 = arith.constant 0 : index
    %c0_118 = arith.constant 0 : index
    %244 = vector.load %arg1[%c3_116, %c0_117, %c0_118] : memref<4x72x128xf32, #tpu.memory_space<vmem>>, vector<1x32x128xf32>
    %245 = vector.shape_cast %244 : vector<1x32x128xf32> to vector<32x128xf32>
    %c3_119 = arith.constant 3 : index
    %c32_120 = arith.constant 32 : index
    %c0_121 = arith.constant 0 : index
    %246 = vector.load %arg1[%c3_119, %c32_120, %c0_121] : memref<4x72x128xf32, #tpu.memory_space<vmem>>, vector<1x32x128xf32>
    %247 = vector.shape_cast %246 : vector<1x32x128xf32> to vector<32x128xf32>
    %c3_122 = arith.constant 3 : index
    %c64_123 = arith.constant 64 : index
    %c0_124 = arith.constant 0 : index
    %248 = vector.load %arg1[%c3_122, %c64_123, %c0_124] : memref<4x72x128xf32, #tpu.memory_space<vmem>>, vector<1x1x128xf32>
    %249 = vector.shape_cast %248 : vector<1x1x128xf32> to vector<1x128xf32>
    %cst_125 = arith.constant dense<0.000000e+00> : vector<4x128xf32>
    %250 = tpu.matmul %169, %245, %cst_125 {dimension_numbers = #tpu.dot_dimension_numbers<[1], [0], [0], [1], [0, 0, 1, 1], [], []>} : vector<4x32xf32>, vector<32x128xf32>, vector<4x128xf32> -> vector<4x128xf32>
    %cst_126 = arith.constant dense<0.000000e+00> : vector<4x128xf32>
    %251 = tpu.matmul %15, %247, %cst_126 {dimension_numbers = #tpu.dot_dimension_numbers<[1], [0], [0], [1], [0, 0, 1, 1], [], []>} : vector<4x32xf32>, vector<32x128xf32>, vector<4x128xf32> -> vector<4x128xf32>
    %252 = arith.addf %250, %251 : vector<4x128xf32>
    %253 = vector.broadcast %249 : vector<1x128xf32> to vector<4x128xf32>
    %254 = arith.addf %252, %253 : vector<4x128xf32>
    %255 = arith.mulf %254, %8 : vector<4x128xf32>
    %256 = math.tanh %255 : vector<4x128xf32>
    %257 = arith.mulf %256, %8 : vector<4x128xf32>
    %258 = arith.addf %257, %11 : vector<4x128xf32>
    %259 = vector.extract_strided_slice %258 {offsets = [0, 0], sizes = [4, 32], strides = [1, 1]} : vector<4x128xf32> to vector<4x32xf32>
    %260 = vector.extract_strided_slice %258 {offsets = [0, 32], sizes = [4, 32], strides = [1, 1]} : vector<4x128xf32> to vector<4x32xf32>
    %261 = vector.extract_strided_slice %258 {offsets = [0, 64], sizes = [4, 32], strides = [1, 1]} : vector<4x128xf32> to vector<4x32xf32>
    %262 = vector.extract_strided_slice %258 {offsets = [0, 96], sizes = [4, 32], strides = [1, 1]} : vector<4x128xf32> to vector<4x32xf32>
    %263 = arith.mulf %260, %19 : vector<4x32xf32>
    %264 = arith.mulf %259, %261 : vector<4x32xf32>
    %265 = arith.addf %263, %264 : vector<4x32xf32>
    %266 = math.tanh %265 : vector<4x32xf32>
    %267 = arith.mulf %262, %266 : vector<4x32xf32>
    %c0_127 = arith.constant 0 : index
    %c0_128 = arith.constant 0 : index
    %c0_129 = arith.constant 0 : index
    %268 = vector.load %arg1[%c0_127, %c0_128, %c0_129] : memref<4x72x128xf32, #tpu.memory_space<vmem>>, vector<1x32x128xf32>
    %269 = vector.shape_cast %268 : vector<1x32x128xf32> to vector<32x128xf32>
    %c0_130 = arith.constant 0 : index
    %c32_131 = arith.constant 32 : index
    %c0_132 = arith.constant 0 : index
    %270 = vector.load %arg1[%c0_130, %c32_131, %c0_132] : memref<4x72x128xf32, #tpu.memory_space<vmem>>, vector<1x32x128xf32>
    %271 = vector.shape_cast %270 : vector<1x32x128xf32> to vector<32x128xf32>
    %c0_133 = arith.constant 0 : index
    %c64_134 = arith.constant 64 : index
    %c0_135 = arith.constant 0 : index
    %272 = vector.load %arg1[%c0_133, %c64_134, %c0_135] : memref<4x72x128xf32, #tpu.memory_space<vmem>>, vector<1x1x128xf32>
    %273 = vector.shape_cast %272 : vector<1x1x128xf32> to vector<1x128xf32>
    %c4 = arith.constant 4 : index
    %c0_136 = arith.constant 0 : index
    %c0_137 = arith.constant 0 : index
    %274 = vector.load %arg0[%c4, %c0_136, %c0_137] : memref<8x4x32xf32, #tpu.memory_space<vmem>>, vector<1x4x32xf32>
    %275 = vector.shape_cast %274 : vector<1x4x32xf32> to vector<4x32xf32>
    %cst_138 = arith.constant dense<0.000000e+00> : vector<4x128xf32>
    %276 = tpu.matmul %275, %269, %cst_138 {dimension_numbers = #tpu.dot_dimension_numbers<[1], [0], [0], [1], [0, 0, 1, 1], [], []>} : vector<4x32xf32>, vector<32x128xf32>, vector<4x128xf32> -> vector<4x128xf32>
    %cst_139 = arith.constant dense<0.000000e+00> : vector<4x128xf32>
    %277 = tpu.matmul %195, %271, %cst_139 {dimension_numbers = #tpu.dot_dimension_numbers<[1], [0], [0], [1], [0, 0, 1, 1], [], []>} : vector<4x32xf32>, vector<32x128xf32>, vector<4x128xf32> -> vector<4x128xf32>
    %278 = arith.addf %276, %277 : vector<4x128xf32>
    %279 = vector.broadcast %273 : vector<1x128xf32> to vector<4x128xf32>
    %280 = arith.addf %278, %279 : vector<4x128xf32>
    %281 = arith.mulf %280, %8 : vector<4x128xf32>
    %282 = math.tanh %281 : vector<4x128xf32>
    %283 = arith.mulf %282, %8 : vector<4x128xf32>
    %284 = arith.addf %283, %11 : vector<4x128xf32>
    %285 = vector.extract_strided_slice %284 {offsets = [0, 0], sizes = [4, 32], strides = [1, 1]} : vector<4x128xf32> to vector<4x32xf32>
    %286 = vector.extract_strided_slice %284 {offsets = [0, 32], sizes = [4, 32], strides = [1, 1]} : vector<4x128xf32> to vector<4x32xf32>
    %287 = vector.extract_strided_slice %284 {offsets = [0, 64], sizes = [4, 32], strides = [1, 1]} : vector<4x128xf32> to vector<4x32xf32>
    %288 = vector.extract_strided_slice %284 {offsets = [0, 96], sizes = [4, 32], strides = [1, 1]} : vector<4x128xf32> to vector<4x32xf32>
    %289 = arith.mulf %286, %193 : vector<4x32xf32>
    %290 = arith.mulf %285, %287 : vector<4x32xf32>
    %291 = arith.addf %289, %290 : vector<4x32xf32>
    %292 = math.tanh %291 : vector<4x32xf32>
    %293 = arith.mulf %288, %292 : vector<4x32xf32>
    %c1_140 = arith.constant 1 : index
    %c0_141 = arith.constant 0 : index
    %c0_142 = arith.constant 0 : index
    %294 = vector.load %arg1[%c1_140, %c0_141, %c0_142] : memref<4x72x128xf32, #tpu.memory_space<vmem>>, vector<1x32x128xf32>
    %295 = vector.shape_cast %294 : vector<1x32x128xf32> to vector<32x128xf32>
    %c1_143 = arith.constant 1 : index
    %c32_144 = arith.constant 32 : index
    %c0_145 = arith.constant 0 : index
    %296 = vector.load %arg1[%c1_143, %c32_144, %c0_145] : memref<4x72x128xf32, #tpu.memory_space<vmem>>, vector<1x32x128xf32>
    %297 = vector.shape_cast %296 : vector<1x32x128xf32> to vector<32x128xf32>
    %c1_146 = arith.constant 1 : index
    %c64_147 = arith.constant 64 : index
    %c0_148 = arith.constant 0 : index
    %298 = vector.load %arg1[%c1_146, %c64_147, %c0_148] : memref<4x72x128xf32, #tpu.memory_space<vmem>>, vector<1x1x128xf32>
    %299 = vector.shape_cast %298 : vector<1x1x128xf32> to vector<1x128xf32>
    %cst_149 = arith.constant dense<0.000000e+00> : vector<4x128xf32>
    %300 = tpu.matmul %195, %295, %cst_149 {dimension_numbers = #tpu.dot_dimension_numbers<[1], [0], [0], [1], [0, 0, 1, 1], [], []>} : vector<4x32xf32>, vector<32x128xf32>, vector<4x128xf32> -> vector<4x128xf32>
    %cst_150 = arith.constant dense<0.000000e+00> : vector<4x128xf32>
    %301 = tpu.matmul %219, %297, %cst_150 {dimension_numbers = #tpu.dot_dimension_numbers<[1], [0], [0], [1], [0, 0, 1, 1], [], []>} : vector<4x32xf32>, vector<32x128xf32>, vector<4x128xf32> -> vector<4x128xf32>
    %302 = arith.addf %300, %301 : vector<4x128xf32>
    %303 = vector.broadcast %299 : vector<1x128xf32> to vector<4x128xf32>
    %304 = arith.addf %302, %303 : vector<4x128xf32>
    %305 = arith.mulf %304, %8 : vector<4x128xf32>
    %306 = math.tanh %305 : vector<4x128xf32>
    %307 = arith.mulf %306, %8 : vector<4x128xf32>
    %308 = arith.addf %307, %11 : vector<4x128xf32>
    %309 = vector.extract_strided_slice %308 {offsets = [0, 0], sizes = [4, 32], strides = [1, 1]} : vector<4x128xf32> to vector<4x32xf32>
    %310 = vector.extract_strided_slice %308 {offsets = [0, 32], sizes = [4, 32], strides = [1, 1]} : vector<4x128xf32> to vector<4x32xf32>
    %311 = vector.extract_strided_slice %308 {offsets = [0, 64], sizes = [4, 32], strides = [1, 1]} : vector<4x128xf32> to vector<4x32xf32>
    %312 = vector.extract_strided_slice %308 {offsets = [0, 96], sizes = [4, 32], strides = [1, 1]} : vector<4x128xf32> to vector<4x32xf32>
    %313 = arith.mulf %310, %217 : vector<4x32xf32>
    %314 = arith.mulf %309, %311 : vector<4x32xf32>
    %315 = arith.addf %313, %314 : vector<4x32xf32>
    %316 = math.tanh %315 : vector<4x32xf32>
    %317 = arith.mulf %312, %316 : vector<4x32xf32>
    %c2_151 = arith.constant 2 : index
    %c0_152 = arith.constant 0 : index
    %c0_153 = arith.constant 0 : index
    %318 = vector.load %arg1[%c2_151, %c0_152, %c0_153] : memref<4x72x128xf32, #tpu.memory_space<vmem>>, vector<1x32x128xf32>
    %319 = vector.shape_cast %318 : vector<1x32x128xf32> to vector<32x128xf32>
    %c2_154 = arith.constant 2 : index
    %c32_155 = arith.constant 32 : index
    %c0_156 = arith.constant 0 : index
    %320 = vector.load %arg1[%c2_154, %c32_155, %c0_156] : memref<4x72x128xf32, #tpu.memory_space<vmem>>, vector<1x32x128xf32>
    %321 = vector.shape_cast %320 : vector<1x32x128xf32> to vector<32x128xf32>
    %c2_157 = arith.constant 2 : index
    %c64_158 = arith.constant 64 : index
    %c0_159 = arith.constant 0 : index
    %322 = vector.load %arg1[%c2_157, %c64_158, %c0_159] : memref<4x72x128xf32, #tpu.memory_space<vmem>>, vector<1x1x128xf32>
    %323 = vector.shape_cast %322 : vector<1x1x128xf32> to vector<1x128xf32>
    %cst_160 = arith.constant dense<0.000000e+00> : vector<4x128xf32>
    %324 = tpu.matmul %219, %319, %cst_160 {dimension_numbers = #tpu.dot_dimension_numbers<[1], [0], [0], [1], [0, 0, 1, 1], [], []>} : vector<4x32xf32>, vector<32x128xf32>, vector<4x128xf32> -> vector<4x128xf32>
    %cst_161 = arith.constant dense<0.000000e+00> : vector<4x128xf32>
    %325 = tpu.matmul %243, %321, %cst_161 {dimension_numbers = #tpu.dot_dimension_numbers<[1], [0], [0], [1], [0, 0, 1, 1], [], []>} : vector<4x32xf32>, vector<32x128xf32>, vector<4x128xf32> -> vector<4x128xf32>
    %326 = arith.addf %324, %325 : vector<4x128xf32>
    %327 = vector.broadcast %323 : vector<1x128xf32> to vector<4x128xf32>
    %328 = arith.addf %326, %327 : vector<4x128xf32>
    %329 = arith.mulf %328, %8 : vector<4x128xf32>
    %330 = math.tanh %329 : vector<4x128xf32>
    %331 = arith.mulf %330, %8 : vector<4x128xf32>
    %332 = arith.addf %331, %11 : vector<4x128xf32>
    %333 = vector.extract_strided_slice %332 {offsets = [0, 0], sizes = [4, 32], strides = [1, 1]} : vector<4x128xf32> to vector<4x32xf32>
    %334 = vector.extract_strided_slice %332 {offsets = [0, 32], sizes = [4, 32], strides = [1, 1]} : vector<4x128xf32> to vector<4x32xf32>
    %335 = vector.extract_strided_slice %332 {offsets = [0, 64], sizes = [4, 32], strides = [1, 1]} : vector<4x128xf32> to vector<4x32xf32>
    %336 = vector.extract_strided_slice %332 {offsets = [0, 96], sizes = [4, 32], strides = [1, 1]} : vector<4x128xf32> to vector<4x32xf32>
    %337 = arith.mulf %334, %241 : vector<4x32xf32>
    %338 = arith.mulf %333, %335 : vector<4x32xf32>
    %339 = arith.addf %337, %338 : vector<4x32xf32>
    %340 = math.tanh %339 : vector<4x32xf32>
    %341 = arith.mulf %336, %340 : vector<4x32xf32>
    %c3_162 = arith.constant 3 : index
    %c0_163 = arith.constant 0 : index
    %c0_164 = arith.constant 0 : index
    %342 = vector.load %arg1[%c3_162, %c0_163, %c0_164] : memref<4x72x128xf32, #tpu.memory_space<vmem>>, vector<1x32x128xf32>
    %343 = vector.shape_cast %342 : vector<1x32x128xf32> to vector<32x128xf32>
    %c3_165 = arith.constant 3 : index
    %c32_166 = arith.constant 32 : index
    %c0_167 = arith.constant 0 : index
    %344 = vector.load %arg1[%c3_165, %c32_166, %c0_167] : memref<4x72x128xf32, #tpu.memory_space<vmem>>, vector<1x32x128xf32>
    %345 = vector.shape_cast %344 : vector<1x32x128xf32> to vector<32x128xf32>
    %c3_168 = arith.constant 3 : index
    %c64_169 = arith.constant 64 : index
    %c0_170 = arith.constant 0 : index
    %346 = vector.load %arg1[%c3_168, %c64_169, %c0_170] : memref<4x72x128xf32, #tpu.memory_space<vmem>>, vector<1x1x128xf32>
    %347 = vector.shape_cast %346 : vector<1x1x128xf32> to vector<1x128xf32>
    %cst_171 = arith.constant dense<0.000000e+00> : vector<4x128xf32>
    %348 = tpu.matmul %243, %343, %cst_171 {dimension_numbers = #tpu.dot_dimension_numbers<[1], [0], [0], [1], [0, 0, 1, 1], [], []>} : vector<4x32xf32>, vector<32x128xf32>, vector<4x128xf32> -> vector<4x128xf32>
    %cst_172 = arith.constant dense<0.000000e+00> : vector<4x128xf32>
    %349 = tpu.matmul %267, %345, %cst_172 {dimension_numbers = #tpu.dot_dimension_numbers<[1], [0], [0], [1], [0, 0, 1, 1], [], []>} : vector<4x32xf32>, vector<32x128xf32>, vector<4x128xf32> -> vector<4x128xf32>
    %350 = arith.addf %348, %349 : vector<4x128xf32>
    %351 = vector.broadcast %347 : vector<1x128xf32> to vector<4x128xf32>
    %352 = arith.addf %350, %351 : vector<4x128xf32>
    %353 = arith.mulf %352, %8 : vector<4x128xf32>
    %354 = math.tanh %353 : vector<4x128xf32>
    %355 = arith.mulf %354, %8 : vector<4x128xf32>
    %356 = arith.addf %355, %11 : vector<4x128xf32>
    %357 = vector.extract_strided_slice %356 {offsets = [0, 0], sizes = [4, 32], strides = [1, 1]} : vector<4x128xf32> to vector<4x32xf32>
    %358 = vector.extract_strided_slice %356 {offsets = [0, 32], sizes = [4, 32], strides = [1, 1]} : vector<4x128xf32> to vector<4x32xf32>
    %359 = vector.extract_strided_slice %356 {offsets = [0, 64], sizes = [4, 32], strides = [1, 1]} : vector<4x128xf32> to vector<4x32xf32>
    %360 = vector.extract_strided_slice %356 {offsets = [0, 96], sizes = [4, 32], strides = [1, 1]} : vector<4x128xf32> to vector<4x32xf32>
    %361 = arith.mulf %358, %265 : vector<4x32xf32>
    %362 = arith.mulf %357, %359 : vector<4x32xf32>
    %363 = arith.addf %361, %362 : vector<4x32xf32>
    %364 = math.tanh %363 : vector<4x32xf32>
    %365 = arith.mulf %360, %364 : vector<4x32xf32>
    %c0_173 = arith.constant 0 : index
    %c0_174 = arith.constant 0 : index
    %c0_175 = arith.constant 0 : index
    %366 = vector.load %arg1[%c0_173, %c0_174, %c0_175] : memref<4x72x128xf32, #tpu.memory_space<vmem>>, vector<1x32x128xf32>
    %367 = vector.shape_cast %366 : vector<1x32x128xf32> to vector<32x128xf32>
    %c0_176 = arith.constant 0 : index
    %c32_177 = arith.constant 32 : index
    %c0_178 = arith.constant 0 : index
    %368 = vector.load %arg1[%c0_176, %c32_177, %c0_178] : memref<4x72x128xf32, #tpu.memory_space<vmem>>, vector<1x32x128xf32>
    %369 = vector.shape_cast %368 : vector<1x32x128xf32> to vector<32x128xf32>
    %c0_179 = arith.constant 0 : index
    %c64_180 = arith.constant 64 : index
    %c0_181 = arith.constant 0 : index
    %370 = vector.load %arg1[%c0_179, %c64_180, %c0_181] : memref<4x72x128xf32, #tpu.memory_space<vmem>>, vector<1x1x128xf32>
    %371 = vector.shape_cast %370 : vector<1x1x128xf32> to vector<1x128xf32>
    %c5 = arith.constant 5 : index
    %c0_182 = arith.constant 0 : index
    %c0_183 = arith.constant 0 : index
    %372 = vector.load %arg0[%c5, %c0_182, %c0_183] : memref<8x4x32xf32, #tpu.memory_space<vmem>>, vector<1x4x32xf32>
    %373 = vector.shape_cast %372 : vector<1x4x32xf32> to vector<4x32xf32>
    %cst_184 = arith.constant dense<0.000000e+00> : vector<4x128xf32>
    %374 = tpu.matmul %373, %367, %cst_184 {dimension_numbers = #tpu.dot_dimension_numbers<[1], [0], [0], [1], [0, 0, 1, 1], [], []>} : vector<4x32xf32>, vector<32x128xf32>, vector<4x128xf32> -> vector<4x128xf32>
    %cst_185 = arith.constant dense<0.000000e+00> : vector<4x128xf32>
    %375 = tpu.matmul %293, %369, %cst_185 {dimension_numbers = #tpu.dot_dimension_numbers<[1], [0], [0], [1], [0, 0, 1, 1], [], []>} : vector<4x32xf32>, vector<32x128xf32>, vector<4x128xf32> -> vector<4x128xf32>
    %376 = arith.addf %374, %375 : vector<4x128xf32>
    %377 = vector.broadcast %371 : vector<1x128xf32> to vector<4x128xf32>
    %378 = arith.addf %376, %377 : vector<4x128xf32>
    %379 = arith.mulf %378, %8 : vector<4x128xf32>
    %380 = math.tanh %379 : vector<4x128xf32>
    %381 = arith.mulf %380, %8 : vector<4x128xf32>
    %382 = arith.addf %381, %11 : vector<4x128xf32>
    %383 = vector.extract_strided_slice %382 {offsets = [0, 0], sizes = [4, 32], strides = [1, 1]} : vector<4x128xf32> to vector<4x32xf32>
    %384 = vector.extract_strided_slice %382 {offsets = [0, 32], sizes = [4, 32], strides = [1, 1]} : vector<4x128xf32> to vector<4x32xf32>
    %385 = vector.extract_strided_slice %382 {offsets = [0, 64], sizes = [4, 32], strides = [1, 1]} : vector<4x128xf32> to vector<4x32xf32>
    %386 = vector.extract_strided_slice %382 {offsets = [0, 96], sizes = [4, 32], strides = [1, 1]} : vector<4x128xf32> to vector<4x32xf32>
    %387 = arith.mulf %384, %291 : vector<4x32xf32>
    %388 = arith.mulf %383, %385 : vector<4x32xf32>
    %389 = arith.addf %387, %388 : vector<4x32xf32>
    %390 = math.tanh %389 : vector<4x32xf32>
    %391 = arith.mulf %386, %390 : vector<4x32xf32>
    %c1_186 = arith.constant 1 : index
    %c0_187 = arith.constant 0 : index
    %c0_188 = arith.constant 0 : index
    %392 = vector.load %arg1[%c1_186, %c0_187, %c0_188] : memref<4x72x128xf32, #tpu.memory_space<vmem>>, vector<1x32x128xf32>
    %393 = vector.shape_cast %392 : vector<1x32x128xf32> to vector<32x128xf32>
    %c1_189 = arith.constant 1 : index
    %c32_190 = arith.constant 32 : index
    %c0_191 = arith.constant 0 : index
    %394 = vector.load %arg1[%c1_189, %c32_190, %c0_191] : memref<4x72x128xf32, #tpu.memory_space<vmem>>, vector<1x32x128xf32>
    %395 = vector.shape_cast %394 : vector<1x32x128xf32> to vector<32x128xf32>
    %c1_192 = arith.constant 1 : index
    %c64_193 = arith.constant 64 : index
    %c0_194 = arith.constant 0 : index
    %396 = vector.load %arg1[%c1_192, %c64_193, %c0_194] : memref<4x72x128xf32, #tpu.memory_space<vmem>>, vector<1x1x128xf32>
    %397 = vector.shape_cast %396 : vector<1x1x128xf32> to vector<1x128xf32>
    %cst_195 = arith.constant dense<0.000000e+00> : vector<4x128xf32>
    %398 = tpu.matmul %293, %393, %cst_195 {dimension_numbers = #tpu.dot_dimension_numbers<[1], [0], [0], [1], [0, 0, 1, 1], [], []>} : vector<4x32xf32>, vector<32x128xf32>, vector<4x128xf32> -> vector<4x128xf32>
    %cst_196 = arith.constant dense<0.000000e+00> : vector<4x128xf32>
    %399 = tpu.matmul %317, %395, %cst_196 {dimension_numbers = #tpu.dot_dimension_numbers<[1], [0], [0], [1], [0, 0, 1, 1], [], []>} : vector<4x32xf32>, vector<32x128xf32>, vector<4x128xf32> -> vector<4x128xf32>
    %400 = arith.addf %398, %399 : vector<4x128xf32>
    %401 = vector.broadcast %397 : vector<1x128xf32> to vector<4x128xf32>
    %402 = arith.addf %400, %401 : vector<4x128xf32>
    %403 = arith.mulf %402, %8 : vector<4x128xf32>
    %404 = math.tanh %403 : vector<4x128xf32>
    %405 = arith.mulf %404, %8 : vector<4x128xf32>
    %406 = arith.addf %405, %11 : vector<4x128xf32>
    %407 = vector.extract_strided_slice %406 {offsets = [0, 0], sizes = [4, 32], strides = [1, 1]} : vector<4x128xf32> to vector<4x32xf32>
    %408 = vector.extract_strided_slice %406 {offsets = [0, 32], sizes = [4, 32], strides = [1, 1]} : vector<4x128xf32> to vector<4x32xf32>
    %409 = vector.extract_strided_slice %406 {offsets = [0, 64], sizes = [4, 32], strides = [1, 1]} : vector<4x128xf32> to vector<4x32xf32>
    %410 = vector.extract_strided_slice %406 {offsets = [0, 96], sizes = [4, 32], strides = [1, 1]} : vector<4x128xf32> to vector<4x32xf32>
    %411 = arith.mulf %408, %315 : vector<4x32xf32>
    %412 = arith.mulf %407, %409 : vector<4x32xf32>
    %413 = arith.addf %411, %412 : vector<4x32xf32>
    %414 = math.tanh %413 : vector<4x32xf32>
    %415 = arith.mulf %410, %414 : vector<4x32xf32>
    %c2_197 = arith.constant 2 : index
    %c0_198 = arith.constant 0 : index
    %c0_199 = arith.constant 0 : index
    %416 = vector.load %arg1[%c2_197, %c0_198, %c0_199] : memref<4x72x128xf32, #tpu.memory_space<vmem>>, vector<1x32x128xf32>
    %417 = vector.shape_cast %416 : vector<1x32x128xf32> to vector<32x128xf32>
    %c2_200 = arith.constant 2 : index
    %c32_201 = arith.constant 32 : index
    %c0_202 = arith.constant 0 : index
    %418 = vector.load %arg1[%c2_200, %c32_201, %c0_202] : memref<4x72x128xf32, #tpu.memory_space<vmem>>, vector<1x32x128xf32>
    %419 = vector.shape_cast %418 : vector<1x32x128xf32> to vector<32x128xf32>
    %c2_203 = arith.constant 2 : index
    %c64_204 = arith.constant 64 : index
    %c0_205 = arith.constant 0 : index
    %420 = vector.load %arg1[%c2_203, %c64_204, %c0_205] : memref<4x72x128xf32, #tpu.memory_space<vmem>>, vector<1x1x128xf32>
    %421 = vector.shape_cast %420 : vector<1x1x128xf32> to vector<1x128xf32>
    %cst_206 = arith.constant dense<0.000000e+00> : vector<4x128xf32>
    %422 = tpu.matmul %317, %417, %cst_206 {dimension_numbers = #tpu.dot_dimension_numbers<[1], [0], [0], [1], [0, 0, 1, 1], [], []>} : vector<4x32xf32>, vector<32x128xf32>, vector<4x128xf32> -> vector<4x128xf32>
    %cst_207 = arith.constant dense<0.000000e+00> : vector<4x128xf32>
    %423 = tpu.matmul %341, %419, %cst_207 {dimension_numbers = #tpu.dot_dimension_numbers<[1], [0], [0], [1], [0, 0, 1, 1], [], []>} : vector<4x32xf32>, vector<32x128xf32>, vector<4x128xf32> -> vector<4x128xf32>
    %424 = arith.addf %422, %423 : vector<4x128xf32>
    %425 = vector.broadcast %421 : vector<1x128xf32> to vector<4x128xf32>
    %426 = arith.addf %424, %425 : vector<4x128xf32>
    %427 = arith.mulf %426, %8 : vector<4x128xf32>
    %428 = math.tanh %427 : vector<4x128xf32>
    %429 = arith.mulf %428, %8 : vector<4x128xf32>
    %430 = arith.addf %429, %11 : vector<4x128xf32>
    %431 = vector.extract_strided_slice %430 {offsets = [0, 0], sizes = [4, 32], strides = [1, 1]} : vector<4x128xf32> to vector<4x32xf32>
    %432 = vector.extract_strided_slice %430 {offsets = [0, 32], sizes = [4, 32], strides = [1, 1]} : vector<4x128xf32> to vector<4x32xf32>
    %433 = vector.extract_strided_slice %430 {offsets = [0, 64], sizes = [4, 32], strides = [1, 1]} : vector<4x128xf32> to vector<4x32xf32>
    %434 = vector.extract_strided_slice %430 {offsets = [0, 96], sizes = [4, 32], strides = [1, 1]} : vector<4x128xf32> to vector<4x32xf32>
    %435 = arith.mulf %432, %339 : vector<4x32xf32>
    %436 = arith.mulf %431, %433 : vector<4x32xf32>
    %437 = arith.addf %435, %436 : vector<4x32xf32>
    %438 = math.tanh %437 : vector<4x32xf32>
    %439 = arith.mulf %434, %438 : vector<4x32xf32>
    %c3_208 = arith.constant 3 : index
    %c0_209 = arith.constant 0 : index
    %c0_210 = arith.constant 0 : index
    %440 = vector.load %arg1[%c3_208, %c0_209, %c0_210] : memref<4x72x128xf32, #tpu.memory_space<vmem>>, vector<1x32x128xf32>
    %441 = vector.shape_cast %440 : vector<1x32x128xf32> to vector<32x128xf32>
    %c3_211 = arith.constant 3 : index
    %c32_212 = arith.constant 32 : index
    %c0_213 = arith.constant 0 : index
    %442 = vector.load %arg1[%c3_211, %c32_212, %c0_213] : memref<4x72x128xf32, #tpu.memory_space<vmem>>, vector<1x32x128xf32>
    %443 = vector.shape_cast %442 : vector<1x32x128xf32> to vector<32x128xf32>
    %c3_214 = arith.constant 3 : index
    %c64_215 = arith.constant 64 : index
    %c0_216 = arith.constant 0 : index
    %444 = vector.load %arg1[%c3_214, %c64_215, %c0_216] : memref<4x72x128xf32, #tpu.memory_space<vmem>>, vector<1x1x128xf32>
    %445 = vector.shape_cast %444 : vector<1x1x128xf32> to vector<1x128xf32>
    %cst_217 = arith.constant dense<0.000000e+00> : vector<4x128xf32>
    %446 = tpu.matmul %341, %441, %cst_217 {dimension_numbers = #tpu.dot_dimension_numbers<[1], [0], [0], [1], [0, 0, 1, 1], [], []>} : vector<4x32xf32>, vector<32x128xf32>, vector<4x128xf32> -> vector<4x128xf32>
    %cst_218 = arith.constant dense<0.000000e+00> : vector<4x128xf32>
    %447 = tpu.matmul %365, %443, %cst_218 {dimension_numbers = #tpu.dot_dimension_numbers<[1], [0], [0], [1], [0, 0, 1, 1], [], []>} : vector<4x32xf32>, vector<32x128xf32>, vector<4x128xf32> -> vector<4x128xf32>
    %448 = arith.addf %446, %447 : vector<4x128xf32>
    %449 = vector.broadcast %445 : vector<1x128xf32> to vector<4x128xf32>
    %450 = arith.addf %448, %449 : vector<4x128xf32>
    %451 = arith.mulf %450, %8 : vector<4x128xf32>
    %452 = math.tanh %451 : vector<4x128xf32>
    %453 = arith.mulf %452, %8 : vector<4x128xf32>
    %454 = arith.addf %453, %11 : vector<4x128xf32>
    %455 = vector.extract_strided_slice %454 {offsets = [0, 0], sizes = [4, 32], strides = [1, 1]} : vector<4x128xf32> to vector<4x32xf32>
    %456 = vector.extract_strided_slice %454 {offsets = [0, 32], sizes = [4, 32], strides = [1, 1]} : vector<4x128xf32> to vector<4x32xf32>
    %457 = vector.extract_strided_slice %454 {offsets = [0, 64], sizes = [4, 32], strides = [1, 1]} : vector<4x128xf32> to vector<4x32xf32>
    %458 = vector.extract_strided_slice %454 {offsets = [0, 96], sizes = [4, 32], strides = [1, 1]} : vector<4x128xf32> to vector<4x32xf32>
    %459 = arith.mulf %456, %363 : vector<4x32xf32>
    %460 = arith.mulf %455, %457 : vector<4x32xf32>
    %461 = arith.addf %459, %460 : vector<4x32xf32>
    %462 = math.tanh %461 : vector<4x32xf32>
    %463 = arith.mulf %458, %462 : vector<4x32xf32>
    %c0_219 = arith.constant 0 : index
    %c0_220 = arith.constant 0 : index
    %c0_221 = arith.constant 0 : index
    %464 = vector.load %arg1[%c0_219, %c0_220, %c0_221] : memref<4x72x128xf32, #tpu.memory_space<vmem>>, vector<1x32x128xf32>
    %465 = vector.shape_cast %464 : vector<1x32x128xf32> to vector<32x128xf32>
    %c0_222 = arith.constant 0 : index
    %c32_223 = arith.constant 32 : index
    %c0_224 = arith.constant 0 : index
    %466 = vector.load %arg1[%c0_222, %c32_223, %c0_224] : memref<4x72x128xf32, #tpu.memory_space<vmem>>, vector<1x32x128xf32>
    %467 = vector.shape_cast %466 : vector<1x32x128xf32> to vector<32x128xf32>
    %c0_225 = arith.constant 0 : index
    %c64_226 = arith.constant 64 : index
    %c0_227 = arith.constant 0 : index
    %468 = vector.load %arg1[%c0_225, %c64_226, %c0_227] : memref<4x72x128xf32, #tpu.memory_space<vmem>>, vector<1x1x128xf32>
    %469 = vector.shape_cast %468 : vector<1x1x128xf32> to vector<1x128xf32>
    %c6 = arith.constant 6 : index
    %c0_228 = arith.constant 0 : index
    %c0_229 = arith.constant 0 : index
    %470 = vector.load %arg0[%c6, %c0_228, %c0_229] : memref<8x4x32xf32, #tpu.memory_space<vmem>>, vector<1x4x32xf32>
    %471 = vector.shape_cast %470 : vector<1x4x32xf32> to vector<4x32xf32>
    %cst_230 = arith.constant dense<0.000000e+00> : vector<4x128xf32>
    %472 = tpu.matmul %471, %465, %cst_230 {dimension_numbers = #tpu.dot_dimension_numbers<[1], [0], [0], [1], [0, 0, 1, 1], [], []>} : vector<4x32xf32>, vector<32x128xf32>, vector<4x128xf32> -> vector<4x128xf32>
    %cst_231 = arith.constant dense<0.000000e+00> : vector<4x128xf32>
    %473 = tpu.matmul %391, %467, %cst_231 {dimension_numbers = #tpu.dot_dimension_numbers<[1], [0], [0], [1], [0, 0, 1, 1], [], []>} : vector<4x32xf32>, vector<32x128xf32>, vector<4x128xf32> -> vector<4x128xf32>
    %474 = arith.addf %472, %473 : vector<4x128xf32>
    %475 = vector.broadcast %469 : vector<1x128xf32> to vector<4x128xf32>
    %476 = arith.addf %474, %475 : vector<4x128xf32>
    %477 = arith.mulf %476, %8 : vector<4x128xf32>
    %478 = math.tanh %477 : vector<4x128xf32>
    %479 = arith.mulf %478, %8 : vector<4x128xf32>
    %480 = arith.addf %479, %11 : vector<4x128xf32>
    %481 = vector.extract_strided_slice %480 {offsets = [0, 0], sizes = [4, 32], strides = [1, 1]} : vector<4x128xf32> to vector<4x32xf32>
    %482 = vector.extract_strided_slice %480 {offsets = [0, 32], sizes = [4, 32], strides = [1, 1]} : vector<4x128xf32> to vector<4x32xf32>
    %483 = vector.extract_strided_slice %480 {offsets = [0, 64], sizes = [4, 32], strides = [1, 1]} : vector<4x128xf32> to vector<4x32xf32>
    %484 = vector.extract_strided_slice %480 {offsets = [0, 96], sizes = [4, 32], strides = [1, 1]} : vector<4x128xf32> to vector<4x32xf32>
    %485 = arith.mulf %482, %389 : vector<4x32xf32>
    %486 = arith.mulf %481, %483 : vector<4x32xf32>
    %487 = arith.addf %485, %486 : vector<4x32xf32>
    %488 = math.tanh %487 : vector<4x32xf32>
    %489 = arith.mulf %484, %488 : vector<4x32xf32>
    %c1_232 = arith.constant 1 : index
    %c0_233 = arith.constant 0 : index
    %c0_234 = arith.constant 0 : index
    %490 = vector.load %arg1[%c1_232, %c0_233, %c0_234] : memref<4x72x128xf32, #tpu.memory_space<vmem>>, vector<1x32x128xf32>
    %491 = vector.shape_cast %490 : vector<1x32x128xf32> to vector<32x128xf32>
    %c1_235 = arith.constant 1 : index
    %c32_236 = arith.constant 32 : index
    %c0_237 = arith.constant 0 : index
    %492 = vector.load %arg1[%c1_235, %c32_236, %c0_237] : memref<4x72x128xf32, #tpu.memory_space<vmem>>, vector<1x32x128xf32>
    %493 = vector.shape_cast %492 : vector<1x32x128xf32> to vector<32x128xf32>
    %c1_238 = arith.constant 1 : index
    %c64_239 = arith.constant 64 : index
    %c0_240 = arith.constant 0 : index
    %494 = vector.load %arg1[%c1_238, %c64_239, %c0_240] : memref<4x72x128xf32, #tpu.memory_space<vmem>>, vector<1x1x128xf32>
    %495 = vector.shape_cast %494 : vector<1x1x128xf32> to vector<1x128xf32>
    %cst_241 = arith.constant dense<0.000000e+00> : vector<4x128xf32>
    %496 = tpu.matmul %391, %491, %cst_241 {dimension_numbers = #tpu.dot_dimension_numbers<[1], [0], [0], [1], [0, 0, 1, 1], [], []>} : vector<4x32xf32>, vector<32x128xf32>, vector<4x128xf32> -> vector<4x128xf32>
    %cst_242 = arith.constant dense<0.000000e+00> : vector<4x128xf32>
    %497 = tpu.matmul %415, %493, %cst_242 {dimension_numbers = #tpu.dot_dimension_numbers<[1], [0], [0], [1], [0, 0, 1, 1], [], []>} : vector<4x32xf32>, vector<32x128xf32>, vector<4x128xf32> -> vector<4x128xf32>
    %498 = arith.addf %496, %497 : vector<4x128xf32>
    %499 = vector.broadcast %495 : vector<1x128xf32> to vector<4x128xf32>
    %500 = arith.addf %498, %499 : vector<4x128xf32>
    %501 = arith.mulf %500, %8 : vector<4x128xf32>
    %502 = math.tanh %501 : vector<4x128xf32>
    %503 = arith.mulf %502, %8 : vector<4x128xf32>
    %504 = arith.addf %503, %11 : vector<4x128xf32>
    %505 = vector.extract_strided_slice %504 {offsets = [0, 0], sizes = [4, 32], strides = [1, 1]} : vector<4x128xf32> to vector<4x32xf32>
    %506 = vector.extract_strided_slice %504 {offsets = [0, 32], sizes = [4, 32], strides = [1, 1]} : vector<4x128xf32> to vector<4x32xf32>
    %507 = vector.extract_strided_slice %504 {offsets = [0, 64], sizes = [4, 32], strides = [1, 1]} : vector<4x128xf32> to vector<4x32xf32>
    %508 = vector.extract_strided_slice %504 {offsets = [0, 96], sizes = [4, 32], strides = [1, 1]} : vector<4x128xf32> to vector<4x32xf32>
    %509 = arith.mulf %506, %413 : vector<4x32xf32>
    %510 = arith.mulf %505, %507 : vector<4x32xf32>
    %511 = arith.addf %509, %510 : vector<4x32xf32>
    %512 = math.tanh %511 : vector<4x32xf32>
    %513 = arith.mulf %508, %512 : vector<4x32xf32>
    %c2_243 = arith.constant 2 : index
    %c0_244 = arith.constant 0 : index
    %c0_245 = arith.constant 0 : index
    %514 = vector.load %arg1[%c2_243, %c0_244, %c0_245] : memref<4x72x128xf32, #tpu.memory_space<vmem>>, vector<1x32x128xf32>
    %515 = vector.shape_cast %514 : vector<1x32x128xf32> to vector<32x128xf32>
    %c2_246 = arith.constant 2 : index
    %c32_247 = arith.constant 32 : index
    %c0_248 = arith.constant 0 : index
    %516 = vector.load %arg1[%c2_246, %c32_247, %c0_248] : memref<4x72x128xf32, #tpu.memory_space<vmem>>, vector<1x32x128xf32>
    %517 = vector.shape_cast %516 : vector<1x32x128xf32> to vector<32x128xf32>
    %c2_249 = arith.constant 2 : index
    %c64_250 = arith.constant 64 : index
    %c0_251 = arith.constant 0 : index
    %518 = vector.load %arg1[%c2_249, %c64_250, %c0_251] : memref<4x72x128xf32, #tpu.memory_space<vmem>>, vector<1x1x128xf32>
    %519 = vector.shape_cast %518 : vector<1x1x128xf32> to vector<1x128xf32>
    %cst_252 = arith.constant dense<0.000000e+00> : vector<4x128xf32>
    %520 = tpu.matmul %415, %515, %cst_252 {dimension_numbers = #tpu.dot_dimension_numbers<[1], [0], [0], [1], [0, 0, 1, 1], [], []>} : vector<4x32xf32>, vector<32x128xf32>, vector<4x128xf32> -> vector<4x128xf32>
    %cst_253 = arith.constant dense<0.000000e+00> : vector<4x128xf32>
    %521 = tpu.matmul %439, %517, %cst_253 {dimension_numbers = #tpu.dot_dimension_numbers<[1], [0], [0], [1], [0, 0, 1, 1], [], []>} : vector<4x32xf32>, vector<32x128xf32>, vector<4x128xf32> -> vector<4x128xf32>
    %522 = arith.addf %520, %521 : vector<4x128xf32>
    %523 = vector.broadcast %519 : vector<1x128xf32> to vector<4x128xf32>
    %524 = arith.addf %522, %523 : vector<4x128xf32>
    %525 = arith.mulf %524, %8 : vector<4x128xf32>
    %526 = math.tanh %525 : vector<4x128xf32>
    %527 = arith.mulf %526, %8 : vector<4x128xf32>
    %528 = arith.addf %527, %11 : vector<4x128xf32>
    %529 = vector.extract_strided_slice %528 {offsets = [0, 0], sizes = [4, 32], strides = [1, 1]} : vector<4x128xf32> to vector<4x32xf32>
    %530 = vector.extract_strided_slice %528 {offsets = [0, 32], sizes = [4, 32], strides = [1, 1]} : vector<4x128xf32> to vector<4x32xf32>
    %531 = vector.extract_strided_slice %528 {offsets = [0, 64], sizes = [4, 32], strides = [1, 1]} : vector<4x128xf32> to vector<4x32xf32>
    %532 = vector.extract_strided_slice %528 {offsets = [0, 96], sizes = [4, 32], strides = [1, 1]} : vector<4x128xf32> to vector<4x32xf32>
    %533 = arith.mulf %530, %437 : vector<4x32xf32>
    %534 = arith.mulf %529, %531 : vector<4x32xf32>
    %535 = arith.addf %533, %534 : vector<4x32xf32>
    %536 = math.tanh %535 : vector<4x32xf32>
    %537 = arith.mulf %532, %536 : vector<4x32xf32>
    %c3_254 = arith.constant 3 : index
    %c0_255 = arith.constant 0 : index
    %c0_256 = arith.constant 0 : index
    %538 = vector.load %arg1[%c3_254, %c0_255, %c0_256] : memref<4x72x128xf32, #tpu.memory_space<vmem>>, vector<1x32x128xf32>
    %539 = vector.shape_cast %538 : vector<1x32x128xf32> to vector<32x128xf32>
    %c3_257 = arith.constant 3 : index
    %c32_258 = arith.constant 32 : index
    %c0_259 = arith.constant 0 : index
    %540 = vector.load %arg1[%c3_257, %c32_258, %c0_259] : memref<4x72x128xf32, #tpu.memory_space<vmem>>, vector<1x32x128xf32>
    %541 = vector.shape_cast %540 : vector<1x32x128xf32> to vector<32x128xf32>
    %c3_260 = arith.constant 3 : index
    %c64_261 = arith.constant 64 : index
    %c0_262 = arith.constant 0 : index
    %542 = vector.load %arg1[%c3_260, %c64_261, %c0_262] : memref<4x72x128xf32, #tpu.memory_space<vmem>>, vector<1x1x128xf32>
    %543 = vector.shape_cast %542 : vector<1x1x128xf32> to vector<1x128xf32>
    %cst_263 = arith.constant dense<0.000000e+00> : vector<4x128xf32>
    %544 = tpu.matmul %439, %539, %cst_263 {dimension_numbers = #tpu.dot_dimension_numbers<[1], [0], [0], [1], [0, 0, 1, 1], [], []>} : vector<4x32xf32>, vector<32x128xf32>, vector<4x128xf32> -> vector<4x128xf32>
    %cst_264 = arith.constant dense<0.000000e+00> : vector<4x128xf32>
    %545 = tpu.matmul %463, %541, %cst_264 {dimension_numbers = #tpu.dot_dimension_numbers<[1], [0], [0], [1], [0, 0, 1, 1], [], []>} : vector<4x32xf32>, vector<32x128xf32>, vector<4x128xf32> -> vector<4x128xf32>
    %546 = arith.addf %544, %545 : vector<4x128xf32>
    %547 = vector.broadcast %543 : vector<1x128xf32> to vector<4x128xf32>
    %548 = arith.addf %546, %547 : vector<4x128xf32>
    %549 = arith.mulf %548, %8 : vector<4x128xf32>
    %550 = math.tanh %549 : vector<4x128xf32>
    %551 = arith.mulf %550, %8 : vector<4x128xf32>
    %552 = arith.addf %551, %11 : vector<4x128xf32>
    %553 = vector.extract_strided_slice %552 {offsets = [0, 0], sizes = [4, 32], strides = [1, 1]} : vector<4x128xf32> to vector<4x32xf32>
    %554 = vector.extract_strided_slice %552 {offsets = [0, 32], sizes = [4, 32], strides = [1, 1]} : vector<4x128xf32> to vector<4x32xf32>
    %555 = vector.extract_strided_slice %552 {offsets = [0, 64], sizes = [4, 32], strides = [1, 1]} : vector<4x128xf32> to vector<4x32xf32>
    %556 = vector.extract_strided_slice %552 {offsets = [0, 96], sizes = [4, 32], strides = [1, 1]} : vector<4x128xf32> to vector<4x32xf32>
    %557 = arith.mulf %554, %461 : vector<4x32xf32>
    %558 = arith.mulf %553, %555 : vector<4x32xf32>
    %559 = arith.addf %557, %558 : vector<4x32xf32>
    %560 = math.tanh %559 : vector<4x32xf32>
    %561 = arith.mulf %556, %560 : vector<4x32xf32>
    %c0_265 = arith.constant 0 : index
    %c0_266 = arith.constant 0 : index
    %c0_267 = arith.constant 0 : index
    %562 = vector.load %arg1[%c0_265, %c0_266, %c0_267] : memref<4x72x128xf32, #tpu.memory_space<vmem>>, vector<1x32x128xf32>
    %563 = vector.shape_cast %562 : vector<1x32x128xf32> to vector<32x128xf32>
    %c0_268 = arith.constant 0 : index
    %c32_269 = arith.constant 32 : index
    %c0_270 = arith.constant 0 : index
    %564 = vector.load %arg1[%c0_268, %c32_269, %c0_270] : memref<4x72x128xf32, #tpu.memory_space<vmem>>, vector<1x32x128xf32>
    %565 = vector.shape_cast %564 : vector<1x32x128xf32> to vector<32x128xf32>
    %c0_271 = arith.constant 0 : index
    %c64_272 = arith.constant 64 : index
    %c0_273 = arith.constant 0 : index
    %566 = vector.load %arg1[%c0_271, %c64_272, %c0_273] : memref<4x72x128xf32, #tpu.memory_space<vmem>>, vector<1x1x128xf32>
    %567 = vector.shape_cast %566 : vector<1x1x128xf32> to vector<1x128xf32>
    %c7 = arith.constant 7 : index
    %c0_274 = arith.constant 0 : index
    %c0_275 = arith.constant 0 : index
    %568 = vector.load %arg0[%c7, %c0_274, %c0_275] : memref<8x4x32xf32, #tpu.memory_space<vmem>>, vector<1x4x32xf32>
    %569 = vector.shape_cast %568 : vector<1x4x32xf32> to vector<4x32xf32>
    %cst_276 = arith.constant dense<0.000000e+00> : vector<4x128xf32>
    %570 = tpu.matmul %569, %563, %cst_276 {dimension_numbers = #tpu.dot_dimension_numbers<[1], [0], [0], [1], [0, 0, 1, 1], [], []>} : vector<4x32xf32>, vector<32x128xf32>, vector<4x128xf32> -> vector<4x128xf32>
    %cst_277 = arith.constant dense<0.000000e+00> : vector<4x128xf32>
    %571 = tpu.matmul %489, %565, %cst_277 {dimension_numbers = #tpu.dot_dimension_numbers<[1], [0], [0], [1], [0, 0, 1, 1], [], []>} : vector<4x32xf32>, vector<32x128xf32>, vector<4x128xf32> -> vector<4x128xf32>
    %572 = arith.addf %570, %571 : vector<4x128xf32>
    %573 = vector.broadcast %567 : vector<1x128xf32> to vector<4x128xf32>
    %574 = arith.addf %572, %573 : vector<4x128xf32>
    %575 = arith.mulf %574, %8 : vector<4x128xf32>
    %576 = math.tanh %575 : vector<4x128xf32>
    %577 = arith.mulf %576, %8 : vector<4x128xf32>
    %578 = arith.addf %577, %11 : vector<4x128xf32>
    %579 = vector.extract_strided_slice %578 {offsets = [0, 0], sizes = [4, 32], strides = [1, 1]} : vector<4x128xf32> to vector<4x32xf32>
    %580 = vector.extract_strided_slice %578 {offsets = [0, 32], sizes = [4, 32], strides = [1, 1]} : vector<4x128xf32> to vector<4x32xf32>
    %581 = vector.extract_strided_slice %578 {offsets = [0, 64], sizes = [4, 32], strides = [1, 1]} : vector<4x128xf32> to vector<4x32xf32>
    %582 = vector.extract_strided_slice %578 {offsets = [0, 96], sizes = [4, 32], strides = [1, 1]} : vector<4x128xf32> to vector<4x32xf32>
    %583 = arith.mulf %580, %487 : vector<4x32xf32>
    %584 = arith.mulf %579, %581 : vector<4x32xf32>
    %585 = arith.addf %583, %584 : vector<4x32xf32>
    %586 = math.tanh %585 : vector<4x32xf32>
    %587 = arith.mulf %582, %586 : vector<4x32xf32>
    %c1_278 = arith.constant 1 : index
    %c0_279 = arith.constant 0 : index
    %c0_280 = arith.constant 0 : index
    %588 = vector.load %arg1[%c1_278, %c0_279, %c0_280] : memref<4x72x128xf32, #tpu.memory_space<vmem>>, vector<1x32x128xf32>
    %589 = vector.shape_cast %588 : vector<1x32x128xf32> to vector<32x128xf32>
    %c1_281 = arith.constant 1 : index
    %c32_282 = arith.constant 32 : index
    %c0_283 = arith.constant 0 : index
    %590 = vector.load %arg1[%c1_281, %c32_282, %c0_283] : memref<4x72x128xf32, #tpu.memory_space<vmem>>, vector<1x32x128xf32>
    %591 = vector.shape_cast %590 : vector<1x32x128xf32> to vector<32x128xf32>
    %c1_284 = arith.constant 1 : index
    %c64_285 = arith.constant 64 : index
    %c0_286 = arith.constant 0 : index
    %592 = vector.load %arg1[%c1_284, %c64_285, %c0_286] : memref<4x72x128xf32, #tpu.memory_space<vmem>>, vector<1x1x128xf32>
    %593 = vector.shape_cast %592 : vector<1x1x128xf32> to vector<1x128xf32>
    %cst_287 = arith.constant dense<0.000000e+00> : vector<4x128xf32>
    %594 = tpu.matmul %489, %589, %cst_287 {dimension_numbers = #tpu.dot_dimension_numbers<[1], [0], [0], [1], [0, 0, 1, 1], [], []>} : vector<4x32xf32>, vector<32x128xf32>, vector<4x128xf32> -> vector<4x128xf32>
    %cst_288 = arith.constant dense<0.000000e+00> : vector<4x128xf32>
    %595 = tpu.matmul %513, %591, %cst_288 {dimension_numbers = #tpu.dot_dimension_numbers<[1], [0], [0], [1], [0, 0, 1, 1], [], []>} : vector<4x32xf32>, vector<32x128xf32>, vector<4x128xf32> -> vector<4x128xf32>
    %596 = arith.addf %594, %595 : vector<4x128xf32>
    %597 = vector.broadcast %593 : vector<1x128xf32> to vector<4x128xf32>
    %598 = arith.addf %596, %597 : vector<4x128xf32>
    %599 = arith.mulf %598, %8 : vector<4x128xf32>
    %600 = math.tanh %599 : vector<4x128xf32>
    %601 = arith.mulf %600, %8 : vector<4x128xf32>
    %602 = arith.addf %601, %11 : vector<4x128xf32>
    %603 = vector.extract_strided_slice %602 {offsets = [0, 0], sizes = [4, 32], strides = [1, 1]} : vector<4x128xf32> to vector<4x32xf32>
    %604 = vector.extract_strided_slice %602 {offsets = [0, 32], sizes = [4, 32], strides = [1, 1]} : vector<4x128xf32> to vector<4x32xf32>
    %605 = vector.extract_strided_slice %602 {offsets = [0, 64], sizes = [4, 32], strides = [1, 1]} : vector<4x128xf32> to vector<4x32xf32>
    %606 = vector.extract_strided_slice %602 {offsets = [0, 96], sizes = [4, 32], strides = [1, 1]} : vector<4x128xf32> to vector<4x32xf32>
    %607 = arith.mulf %604, %511 : vector<4x32xf32>
    %608 = arith.mulf %603, %605 : vector<4x32xf32>
    %609 = arith.addf %607, %608 : vector<4x32xf32>
    %610 = math.tanh %609 : vector<4x32xf32>
    %611 = arith.mulf %606, %610 : vector<4x32xf32>
    %c2_289 = arith.constant 2 : index
    %c0_290 = arith.constant 0 : index
    %c0_291 = arith.constant 0 : index
    %612 = vector.load %arg1[%c2_289, %c0_290, %c0_291] : memref<4x72x128xf32, #tpu.memory_space<vmem>>, vector<1x32x128xf32>
    %613 = vector.shape_cast %612 : vector<1x32x128xf32> to vector<32x128xf32>
    %c2_292 = arith.constant 2 : index
    %c32_293 = arith.constant 32 : index
    %c0_294 = arith.constant 0 : index
    %614 = vector.load %arg1[%c2_292, %c32_293, %c0_294] : memref<4x72x128xf32, #tpu.memory_space<vmem>>, vector<1x32x128xf32>
    %615 = vector.shape_cast %614 : vector<1x32x128xf32> to vector<32x128xf32>
    %c2_295 = arith.constant 2 : index
    %c64_296 = arith.constant 64 : index
    %c0_297 = arith.constant 0 : index
    %616 = vector.load %arg1[%c2_295, %c64_296, %c0_297] : memref<4x72x128xf32, #tpu.memory_space<vmem>>, vector<1x1x128xf32>
    %617 = vector.shape_cast %616 : vector<1x1x128xf32> to vector<1x128xf32>
    %cst_298 = arith.constant dense<0.000000e+00> : vector<4x128xf32>
    %618 = tpu.matmul %513, %613, %cst_298 {dimension_numbers = #tpu.dot_dimension_numbers<[1], [0], [0], [1], [0, 0, 1, 1], [], []>} : vector<4x32xf32>, vector<32x128xf32>, vector<4x128xf32> -> vector<4x128xf32>
    %cst_299 = arith.constant dense<0.000000e+00> : vector<4x128xf32>
    %619 = tpu.matmul %537, %615, %cst_299 {dimension_numbers = #tpu.dot_dimension_numbers<[1], [0], [0], [1], [0, 0, 1, 1], [], []>} : vector<4x32xf32>, vector<32x128xf32>, vector<4x128xf32> -> vector<4x128xf32>
    %620 = arith.addf %618, %619 : vector<4x128xf32>
    %621 = vector.broadcast %617 : vector<1x128xf32> to vector<4x128xf32>
    %622 = arith.addf %620, %621 : vector<4x128xf32>
    %623 = arith.mulf %622, %8 : vector<4x128xf32>
    %624 = math.tanh %623 : vector<4x128xf32>
    %625 = arith.mulf %624, %8 : vector<4x128xf32>
    %626 = arith.addf %625, %11 : vector<4x128xf32>
    %627 = vector.extract_strided_slice %626 {offsets = [0, 0], sizes = [4, 32], strides = [1, 1]} : vector<4x128xf32> to vector<4x32xf32>
    %628 = vector.extract_strided_slice %626 {offsets = [0, 32], sizes = [4, 32], strides = [1, 1]} : vector<4x128xf32> to vector<4x32xf32>
    %629 = vector.extract_strided_slice %626 {offsets = [0, 64], sizes = [4, 32], strides = [1, 1]} : vector<4x128xf32> to vector<4x32xf32>
    %630 = vector.extract_strided_slice %626 {offsets = [0, 96], sizes = [4, 32], strides = [1, 1]} : vector<4x128xf32> to vector<4x32xf32>
    %631 = arith.mulf %628, %535 : vector<4x32xf32>
    %632 = arith.mulf %627, %629 : vector<4x32xf32>
    %633 = arith.addf %631, %632 : vector<4x32xf32>
    %634 = math.tanh %633 : vector<4x32xf32>
    %635 = arith.mulf %630, %634 : vector<4x32xf32>
    %c3_300 = arith.constant 3 : index
    %c0_301 = arith.constant 0 : index
    %c0_302 = arith.constant 0 : index
    %636 = vector.load %arg1[%c3_300, %c0_301, %c0_302] : memref<4x72x128xf32, #tpu.memory_space<vmem>>, vector<1x32x128xf32>
    %637 = vector.shape_cast %636 : vector<1x32x128xf32> to vector<32x128xf32>
    %c3_303 = arith.constant 3 : index
    %c32_304 = arith.constant 32 : index
    %c0_305 = arith.constant 0 : index
    %638 = vector.load %arg1[%c3_303, %c32_304, %c0_305] : memref<4x72x128xf32, #tpu.memory_space<vmem>>, vector<1x32x128xf32>
    %639 = vector.shape_cast %638 : vector<1x32x128xf32> to vector<32x128xf32>
    %c3_306 = arith.constant 3 : index
    %c64_307 = arith.constant 64 : index
    %c0_308 = arith.constant 0 : index
    %640 = vector.load %arg1[%c3_306, %c64_307, %c0_308] : memref<4x72x128xf32, #tpu.memory_space<vmem>>, vector<1x1x128xf32>
    %641 = vector.shape_cast %640 : vector<1x1x128xf32> to vector<1x128xf32>
    %cst_309 = arith.constant dense<0.000000e+00> : vector<4x128xf32>
    %642 = tpu.matmul %537, %637, %cst_309 {dimension_numbers = #tpu.dot_dimension_numbers<[1], [0], [0], [1], [0, 0, 1, 1], [], []>} : vector<4x32xf32>, vector<32x128xf32>, vector<4x128xf32> -> vector<4x128xf32>
    %cst_310 = arith.constant dense<0.000000e+00> : vector<4x128xf32>
    %643 = tpu.matmul %561, %639, %cst_310 {dimension_numbers = #tpu.dot_dimension_numbers<[1], [0], [0], [1], [0, 0, 1, 1], [], []>} : vector<4x32xf32>, vector<32x128xf32>, vector<4x128xf32> -> vector<4x128xf32>
    %644 = arith.addf %642, %643 : vector<4x128xf32>
    %645 = vector.broadcast %641 : vector<1x128xf32> to vector<4x128xf32>
    %646 = arith.addf %644, %645 : vector<4x128xf32>
    %647 = arith.mulf %646, %8 : vector<4x128xf32>
    %648 = math.tanh %647 : vector<4x128xf32>
    %649 = arith.mulf %648, %8 : vector<4x128xf32>
    %650 = arith.addf %649, %11 : vector<4x128xf32>
    %651 = vector.extract_strided_slice %650 {offsets = [0, 0], sizes = [4, 32], strides = [1, 1]} : vector<4x128xf32> to vector<4x32xf32>
    %652 = vector.extract_strided_slice %650 {offsets = [0, 32], sizes = [4, 32], strides = [1, 1]} : vector<4x128xf32> to vector<4x32xf32>
    %653 = vector.extract_strided_slice %650 {offsets = [0, 64], sizes = [4, 32], strides = [1, 1]} : vector<4x128xf32> to vector<4x32xf32>
    %654 = vector.extract_strided_slice %650 {offsets = [0, 96], sizes = [4, 32], strides = [1, 1]} : vector<4x128xf32> to vector<4x32xf32>
    %655 = arith.mulf %652, %559 : vector<4x32xf32>
    %656 = arith.mulf %651, %653 : vector<4x32xf32>
    %657 = arith.addf %655, %656 : vector<4x32xf32>
    %658 = math.tanh %657 : vector<4x32xf32>
    %659 = arith.mulf %654, %658 : vector<4x32xf32>
    %c1_311 = arith.constant 1 : index
    %c0_312 = arith.constant 0 : index
    %c0_313 = arith.constant 0 : index
    %660 = vector.load %arg1[%c1_311, %c0_312, %c0_313] : memref<4x72x128xf32, #tpu.memory_space<vmem>>, vector<1x32x128xf32>
    %661 = vector.shape_cast %660 : vector<1x32x128xf32> to vector<32x128xf32>
    %c1_314 = arith.constant 1 : index
    %c32_315 = arith.constant 32 : index
    %c0_316 = arith.constant 0 : index
    %662 = vector.load %arg1[%c1_314, %c32_315, %c0_316] : memref<4x72x128xf32, #tpu.memory_space<vmem>>, vector<1x32x128xf32>
    %663 = vector.shape_cast %662 : vector<1x32x128xf32> to vector<32x128xf32>
    %c1_317 = arith.constant 1 : index
    %c64_318 = arith.constant 64 : index
    %c0_319 = arith.constant 0 : index
    %664 = vector.load %arg1[%c1_317, %c64_318, %c0_319] : memref<4x72x128xf32, #tpu.memory_space<vmem>>, vector<1x1x128xf32>
    %665 = vector.shape_cast %664 : vector<1x1x128xf32> to vector<1x128xf32>
    %cst_320 = arith.constant dense<0.000000e+00> : vector<4x128xf32>
    %666 = tpu.matmul %587, %661, %cst_320 {dimension_numbers = #tpu.dot_dimension_numbers<[1], [0], [0], [1], [0, 0, 1, 1], [], []>} : vector<4x32xf32>, vector<32x128xf32>, vector<4x128xf32> -> vector<4x128xf32>
    %cst_321 = arith.constant dense<0.000000e+00> : vector<4x128xf32>
    %667 = tpu.matmul %611, %663, %cst_321 {dimension_numbers = #tpu.dot_dimension_numbers<[1], [0], [0], [1], [0, 0, 1, 1], [], []>} : vector<4x32xf32>, vector<32x128xf32>, vector<4x128xf32> -> vector<4x128xf32>
    %668 = arith.addf %666, %667 : vector<4x128xf32>
    %669 = vector.broadcast %665 : vector<1x128xf32> to vector<4x128xf32>
    %670 = arith.addf %668, %669 : vector<4x128xf32>
    %671 = arith.mulf %670, %8 : vector<4x128xf32>
    %672 = math.tanh %671 : vector<4x128xf32>
    %673 = arith.mulf %672, %8 : vector<4x128xf32>
    %674 = arith.addf %673, %11 : vector<4x128xf32>
    %675 = vector.extract_strided_slice %674 {offsets = [0, 0], sizes = [4, 32], strides = [1, 1]} : vector<4x128xf32> to vector<4x32xf32>
    %676 = vector.extract_strided_slice %674 {offsets = [0, 32], sizes = [4, 32], strides = [1, 1]} : vector<4x128xf32> to vector<4x32xf32>
    %677 = vector.extract_strided_slice %674 {offsets = [0, 64], sizes = [4, 32], strides = [1, 1]} : vector<4x128xf32> to vector<4x32xf32>
    %678 = vector.extract_strided_slice %674 {offsets = [0, 96], sizes = [4, 32], strides = [1, 1]} : vector<4x128xf32> to vector<4x32xf32>
    %679 = arith.mulf %676, %609 : vector<4x32xf32>
    %680 = arith.mulf %675, %677 : vector<4x32xf32>
    %681 = arith.addf %679, %680 : vector<4x32xf32>
    %682 = math.tanh %681 : vector<4x32xf32>
    %683 = arith.mulf %678, %682 : vector<4x32xf32>
    %c2_322 = arith.constant 2 : index
    %c0_323 = arith.constant 0 : index
    %c0_324 = arith.constant 0 : index
    %684 = vector.load %arg1[%c2_322, %c0_323, %c0_324] : memref<4x72x128xf32, #tpu.memory_space<vmem>>, vector<1x32x128xf32>
    %685 = vector.shape_cast %684 : vector<1x32x128xf32> to vector<32x128xf32>
    %c2_325 = arith.constant 2 : index
    %c32_326 = arith.constant 32 : index
    %c0_327 = arith.constant 0 : index
    %686 = vector.load %arg1[%c2_325, %c32_326, %c0_327] : memref<4x72x128xf32, #tpu.memory_space<vmem>>, vector<1x32x128xf32>
    %687 = vector.shape_cast %686 : vector<1x32x128xf32> to vector<32x128xf32>
    %c2_328 = arith.constant 2 : index
    %c64_329 = arith.constant 64 : index
    %c0_330 = arith.constant 0 : index
    %688 = vector.load %arg1[%c2_328, %c64_329, %c0_330] : memref<4x72x128xf32, #tpu.memory_space<vmem>>, vector<1x1x128xf32>
    %689 = vector.shape_cast %688 : vector<1x1x128xf32> to vector<1x128xf32>
    %cst_331 = arith.constant dense<0.000000e+00> : vector<4x128xf32>
    %690 = tpu.matmul %611, %685, %cst_331 {dimension_numbers = #tpu.dot_dimension_numbers<[1], [0], [0], [1], [0, 0, 1, 1], [], []>} : vector<4x32xf32>, vector<32x128xf32>, vector<4x128xf32> -> vector<4x128xf32>
    %cst_332 = arith.constant dense<0.000000e+00> : vector<4x128xf32>
    %691 = tpu.matmul %635, %687, %cst_332 {dimension_numbers = #tpu.dot_dimension_numbers<[1], [0], [0], [1], [0, 0, 1, 1], [], []>} : vector<4x32xf32>, vector<32x128xf32>, vector<4x128xf32> -> vector<4x128xf32>
    %692 = arith.addf %690, %691 : vector<4x128xf32>
    %693 = vector.broadcast %689 : vector<1x128xf32> to vector<4x128xf32>
    %694 = arith.addf %692, %693 : vector<4x128xf32>
    %695 = arith.mulf %694, %8 : vector<4x128xf32>
    %696 = math.tanh %695 : vector<4x128xf32>
    %697 = arith.mulf %696, %8 : vector<4x128xf32>
    %698 = arith.addf %697, %11 : vector<4x128xf32>
    %699 = vector.extract_strided_slice %698 {offsets = [0, 0], sizes = [4, 32], strides = [1, 1]} : vector<4x128xf32> to vector<4x32xf32>
    %700 = vector.extract_strided_slice %698 {offsets = [0, 32], sizes = [4, 32], strides = [1, 1]} : vector<4x128xf32> to vector<4x32xf32>
    %701 = vector.extract_strided_slice %698 {offsets = [0, 64], sizes = [4, 32], strides = [1, 1]} : vector<4x128xf32> to vector<4x32xf32>
    %702 = vector.extract_strided_slice %698 {offsets = [0, 96], sizes = [4, 32], strides = [1, 1]} : vector<4x128xf32> to vector<4x32xf32>
    %703 = arith.mulf %700, %633 : vector<4x32xf32>
    %704 = arith.mulf %699, %701 : vector<4x32xf32>
    %705 = arith.addf %703, %704 : vector<4x32xf32>
    %706 = math.tanh %705 : vector<4x32xf32>
    %707 = arith.mulf %702, %706 : vector<4x32xf32>
    %c3_333 = arith.constant 3 : index
    %c0_334 = arith.constant 0 : index
    %c0_335 = arith.constant 0 : index
    %708 = vector.load %arg1[%c3_333, %c0_334, %c0_335] : memref<4x72x128xf32, #tpu.memory_space<vmem>>, vector<1x32x128xf32>
    %709 = vector.shape_cast %708 : vector<1x32x128xf32> to vector<32x128xf32>
    %c3_336 = arith.constant 3 : index
    %c32_337 = arith.constant 32 : index
    %c0_338 = arith.constant 0 : index
    %710 = vector.load %arg1[%c3_336, %c32_337, %c0_338] : memref<4x72x128xf32, #tpu.memory_space<vmem>>, vector<1x32x128xf32>
    %711 = vector.shape_cast %710 : vector<1x32x128xf32> to vector<32x128xf32>
    %c3_339 = arith.constant 3 : index
    %c64_340 = arith.constant 64 : index
    %c0_341 = arith.constant 0 : index
    %712 = vector.load %arg1[%c3_339, %c64_340, %c0_341] : memref<4x72x128xf32, #tpu.memory_space<vmem>>, vector<1x1x128xf32>
    %713 = vector.shape_cast %712 : vector<1x1x128xf32> to vector<1x128xf32>
    %cst_342 = arith.constant dense<0.000000e+00> : vector<4x128xf32>
    %714 = tpu.matmul %635, %709, %cst_342 {dimension_numbers = #tpu.dot_dimension_numbers<[1], [0], [0], [1], [0, 0, 1, 1], [], []>} : vector<4x32xf32>, vector<32x128xf32>, vector<4x128xf32> -> vector<4x128xf32>
    %cst_343 = arith.constant dense<0.000000e+00> : vector<4x128xf32>
    %715 = tpu.matmul %659, %711, %cst_343 {dimension_numbers = #tpu.dot_dimension_numbers<[1], [0], [0], [1], [0, 0, 1, 1], [], []>} : vector<4x32xf32>, vector<32x128xf32>, vector<4x128xf32> -> vector<4x128xf32>
    %716 = arith.addf %714, %715 : vector<4x128xf32>
    %717 = vector.broadcast %713 : vector<1x128xf32> to vector<4x128xf32>
    %718 = arith.addf %716, %717 : vector<4x128xf32>
    %719 = arith.mulf %718, %8 : vector<4x128xf32>
    %720 = math.tanh %719 : vector<4x128xf32>
    %721 = arith.mulf %720, %8 : vector<4x128xf32>
    %722 = arith.addf %721, %11 : vector<4x128xf32>
    %723 = vector.extract_strided_slice %722 {offsets = [0, 0], sizes = [4, 32], strides = [1, 1]} : vector<4x128xf32> to vector<4x32xf32>
    %724 = vector.extract_strided_slice %722 {offsets = [0, 32], sizes = [4, 32], strides = [1, 1]} : vector<4x128xf32> to vector<4x32xf32>
    %725 = vector.extract_strided_slice %722 {offsets = [0, 64], sizes = [4, 32], strides = [1, 1]} : vector<4x128xf32> to vector<4x32xf32>
    %726 = vector.extract_strided_slice %722 {offsets = [0, 96], sizes = [4, 32], strides = [1, 1]} : vector<4x128xf32> to vector<4x32xf32>
    %727 = arith.mulf %724, %657 : vector<4x32xf32>
    %728 = arith.mulf %723, %725 : vector<4x32xf32>
    %729 = arith.addf %727, %728 : vector<4x32xf32>
    %730 = math.tanh %729 : vector<4x32xf32>
    %731 = arith.mulf %726, %730 : vector<4x32xf32>
    %c2_344 = arith.constant 2 : index
    %c0_345 = arith.constant 0 : index
    %c0_346 = arith.constant 0 : index
    %732 = vector.load %arg1[%c2_344, %c0_345, %c0_346] : memref<4x72x128xf32, #tpu.memory_space<vmem>>, vector<1x32x128xf32>
    %733 = vector.shape_cast %732 : vector<1x32x128xf32> to vector<32x128xf32>
    %c2_347 = arith.constant 2 : index
    %c32_348 = arith.constant 32 : index
    %c0_349 = arith.constant 0 : index
    %734 = vector.load %arg1[%c2_347, %c32_348, %c0_349] : memref<4x72x128xf32, #tpu.memory_space<vmem>>, vector<1x32x128xf32>
    %735 = vector.shape_cast %734 : vector<1x32x128xf32> to vector<32x128xf32>
    %c2_350 = arith.constant 2 : index
    %c64_351 = arith.constant 64 : index
    %c0_352 = arith.constant 0 : index
    %736 = vector.load %arg1[%c2_350, %c64_351, %c0_352] : memref<4x72x128xf32, #tpu.memory_space<vmem>>, vector<1x1x128xf32>
    %737 = vector.shape_cast %736 : vector<1x1x128xf32> to vector<1x128xf32>
    %cst_353 = arith.constant dense<0.000000e+00> : vector<4x128xf32>
    %738 = tpu.matmul %683, %733, %cst_353 {dimension_numbers = #tpu.dot_dimension_numbers<[1], [0], [0], [1], [0, 0, 1, 1], [], []>} : vector<4x32xf32>, vector<32x128xf32>, vector<4x128xf32> -> vector<4x128xf32>
    %cst_354 = arith.constant dense<0.000000e+00> : vector<4x128xf32>
    %739 = tpu.matmul %707, %735, %cst_354 {dimension_numbers = #tpu.dot_dimension_numbers<[1], [0], [0], [1], [0, 0, 1, 1], [], []>} : vector<4x32xf32>, vector<32x128xf32>, vector<4x128xf32> -> vector<4x128xf32>
    %740 = arith.addf %738, %739 : vector<4x128xf32>
    %741 = vector.broadcast %737 : vector<1x128xf32> to vector<4x128xf32>
    %742 = arith.addf %740, %741 : vector<4x128xf32>
    %743 = arith.mulf %742, %8 : vector<4x128xf32>
    %744 = math.tanh %743 : vector<4x128xf32>
    %745 = arith.mulf %744, %8 : vector<4x128xf32>
    %746 = arith.addf %745, %11 : vector<4x128xf32>
    %747 = vector.extract_strided_slice %746 {offsets = [0, 0], sizes = [4, 32], strides = [1, 1]} : vector<4x128xf32> to vector<4x32xf32>
    %748 = vector.extract_strided_slice %746 {offsets = [0, 32], sizes = [4, 32], strides = [1, 1]} : vector<4x128xf32> to vector<4x32xf32>
    %749 = vector.extract_strided_slice %746 {offsets = [0, 64], sizes = [4, 32], strides = [1, 1]} : vector<4x128xf32> to vector<4x32xf32>
    %750 = vector.extract_strided_slice %746 {offsets = [0, 96], sizes = [4, 32], strides = [1, 1]} : vector<4x128xf32> to vector<4x32xf32>
    %751 = arith.mulf %748, %705 : vector<4x32xf32>
    %752 = arith.mulf %747, %749 : vector<4x32xf32>
    %753 = arith.addf %751, %752 : vector<4x32xf32>
    %754 = math.tanh %753 : vector<4x32xf32>
    %755 = arith.mulf %750, %754 : vector<4x32xf32>
    %c3_355 = arith.constant 3 : index
    %c0_356 = arith.constant 0 : index
    %c0_357 = arith.constant 0 : index
    %756 = vector.load %arg1[%c3_355, %c0_356, %c0_357] : memref<4x72x128xf32, #tpu.memory_space<vmem>>, vector<1x32x128xf32>
    %757 = vector.shape_cast %756 : vector<1x32x128xf32> to vector<32x128xf32>
    %c3_358 = arith.constant 3 : index
    %c32_359 = arith.constant 32 : index
    %c0_360 = arith.constant 0 : index
    %758 = vector.load %arg1[%c3_358, %c32_359, %c0_360] : memref<4x72x128xf32, #tpu.memory_space<vmem>>, vector<1x32x128xf32>
    %759 = vector.shape_cast %758 : vector<1x32x128xf32> to vector<32x128xf32>
    %c3_361 = arith.constant 3 : index
    %c64_362 = arith.constant 64 : index
    %c0_363 = arith.constant 0 : index
    %760 = vector.load %arg1[%c3_361, %c64_362, %c0_363] : memref<4x72x128xf32, #tpu.memory_space<vmem>>, vector<1x1x128xf32>
    %761 = vector.shape_cast %760 : vector<1x1x128xf32> to vector<1x128xf32>
    %cst_364 = arith.constant dense<0.000000e+00> : vector<4x128xf32>
    %762 = tpu.matmul %707, %757, %cst_364 {dimension_numbers = #tpu.dot_dimension_numbers<[1], [0], [0], [1], [0, 0, 1, 1], [], []>} : vector<4x32xf32>, vector<32x128xf32>, vector<4x128xf32> -> vector<4x128xf32>
    %cst_365 = arith.constant dense<0.000000e+00> : vector<4x128xf32>
    %763 = tpu.matmul %731, %759, %cst_365 {dimension_numbers = #tpu.dot_dimension_numbers<[1], [0], [0], [1], [0, 0, 1, 1], [], []>} : vector<4x32xf32>, vector<32x128xf32>, vector<4x128xf32> -> vector<4x128xf32>
    %764 = arith.addf %762, %763 : vector<4x128xf32>
    %765 = vector.broadcast %761 : vector<1x128xf32> to vector<4x128xf32>
    %766 = arith.addf %764, %765 : vector<4x128xf32>
    %767 = arith.mulf %766, %8 : vector<4x128xf32>
    %768 = math.tanh %767 : vector<4x128xf32>
    %769 = arith.mulf %768, %8 : vector<4x128xf32>
    %770 = arith.addf %769, %11 : vector<4x128xf32>
    %771 = vector.extract_strided_slice %770 {offsets = [0, 0], sizes = [4, 32], strides = [1, 1]} : vector<4x128xf32> to vector<4x32xf32>
    %772 = vector.extract_strided_slice %770 {offsets = [0, 32], sizes = [4, 32], strides = [1, 1]} : vector<4x128xf32> to vector<4x32xf32>
    %773 = vector.extract_strided_slice %770 {offsets = [0, 64], sizes = [4, 32], strides = [1, 1]} : vector<4x128xf32> to vector<4x32xf32>
    %774 = vector.extract_strided_slice %770 {offsets = [0, 96], sizes = [4, 32], strides = [1, 1]} : vector<4x128xf32> to vector<4x32xf32>
    %775 = arith.mulf %772, %729 : vector<4x32xf32>
    %776 = arith.mulf %771, %773 : vector<4x32xf32>
    %777 = arith.addf %775, %776 : vector<4x32xf32>
    %778 = math.tanh %777 : vector<4x32xf32>
    %779 = arith.mulf %774, %778 : vector<4x32xf32>
    %c3_366 = arith.constant 3 : index
    %c0_367 = arith.constant 0 : index
    %c0_368 = arith.constant 0 : index
    %780 = vector.load %arg1[%c3_366, %c0_367, %c0_368] : memref<4x72x128xf32, #tpu.memory_space<vmem>>, vector<1x32x128xf32>
    %781 = vector.shape_cast %780 : vector<1x32x128xf32> to vector<32x128xf32>
    %c3_369 = arith.constant 3 : index
    %c32_370 = arith.constant 32 : index
    %c0_371 = arith.constant 0 : index
    %782 = vector.load %arg1[%c3_369, %c32_370, %c0_371] : memref<4x72x128xf32, #tpu.memory_space<vmem>>, vector<1x32x128xf32>
    %783 = vector.shape_cast %782 : vector<1x32x128xf32> to vector<32x128xf32>
    %c3_372 = arith.constant 3 : index
    %c64_373 = arith.constant 64 : index
    %c0_374 = arith.constant 0 : index
    %784 = vector.load %arg1[%c3_372, %c64_373, %c0_374] : memref<4x72x128xf32, #tpu.memory_space<vmem>>, vector<1x1x128xf32>
    %785 = vector.shape_cast %784 : vector<1x1x128xf32> to vector<1x128xf32>
    %cst_375 = arith.constant dense<0.000000e+00> : vector<4x128xf32>
    %786 = tpu.matmul %755, %781, %cst_375 {dimension_numbers = #tpu.dot_dimension_numbers<[1], [0], [0], [1], [0, 0, 1, 1], [], []>} : vector<4x32xf32>, vector<32x128xf32>, vector<4x128xf32> -> vector<4x128xf32>
    %cst_376 = arith.constant dense<0.000000e+00> : vector<4x128xf32>
    %787 = tpu.matmul %779, %783, %cst_376 {dimension_numbers = #tpu.dot_dimension_numbers<[1], [0], [0], [1], [0, 0, 1, 1], [], []>} : vector<4x32xf32>, vector<32x128xf32>, vector<4x128xf32> -> vector<4x128xf32>
    %788 = arith.addf %786, %787 : vector<4x128xf32>
    %789 = vector.broadcast %785 : vector<1x128xf32> to vector<4x128xf32>
    %790 = arith.addf %788, %789 : vector<4x128xf32>
    %791 = arith.mulf %790, %8 : vector<4x128xf32>
    %792 = math.tanh %791 : vector<4x128xf32>
    %793 = arith.mulf %792, %8 : vector<4x128xf32>
    %794 = arith.addf %793, %11 : vector<4x128xf32>
    %795 = vector.extract_strided_slice %794 {offsets = [0, 0], sizes = [4, 32], strides = [1, 1]} : vector<4x128xf32> to vector<4x32xf32>
    %796 = vector.extract_strided_slice %794 {offsets = [0, 32], sizes = [4, 32], strides = [1, 1]} : vector<4x128xf32> to vector<4x32xf32>
    %797 = vector.extract_strided_slice %794 {offsets = [0, 64], sizes = [4, 32], strides = [1, 1]} : vector<4x128xf32> to vector<4x32xf32>
    %798 = vector.extract_strided_slice %794 {offsets = [0, 96], sizes = [4, 32], strides = [1, 1]} : vector<4x128xf32> to vector<4x32xf32>
    %799 = arith.mulf %796, %777 : vector<4x32xf32>
    %800 = arith.mulf %795, %797 : vector<4x32xf32>
    %801 = arith.addf %799, %800 : vector<4x32xf32>
    %802 = math.tanh %801 : vector<4x32xf32>
    %803 = arith.mulf %798, %802 : vector<4x32xf32>
    %c0_377 = arith.constant 0 : index
    %c0_378 = arith.constant 0 : index
    %804 = vector.load %arg2[%c0_377, %c0_378] : memref<4x32xf32, #tpu.memory_space<vmem>>, vector<4x32xf32>
    tpu.vector_store %arg2[%c0_377, %c0_378], %803 {strides = array<i32>} : memref<4x32xf32, #tpu.memory_space<vmem>>, vector<4x32xf32>,
    return
  }
}

</mosaic_0001>

<llo_original>
// kernel: keystrokes_encoder_forward.1
$region0: #{keystrokes_encoder_forward.1}
  #allocation0 [shape = 'u32[]', space=smem, size = 0x4, offset = 0x4, fixed_abs, tag = 'smem constant byte address 0x4 - core index']
  #allocation1 [shape = 'u32[144,128]{1,0:T(1,128)}', space=vmem, size = 0x12000, scoped, tag = 'internal scratch']
  %s0 = inlined_call_operand.vmem [shape: f32[8,4,32], index: 0, kind: input, shape index: {}]
  %s1 = inlined_call_operand.hbm [shape: f32[4,72,128], index: 1, kind: input, shape index: {}]
  %s2 = inlined_call_operand.hbm [shape: f32[4,32], index: 2, kind: output, shape index: {}]
  %s3 = sld [smem:[#allocation0]]
  $region22: #{keystrokes_encoder_forward.1} parent=0
    _
  %s5 = ssub.s32 1, %s3
  %s6 = scalar_select 0, %s5, %s3
  $region1: #{keystrokes_encoder_forward.1} parent=0
    #allocation2 [shape = 'u8[147456]{0}', space=vmem, size = 0x24000, scoped, tag = 'input window, operand 1, single buffered']
    #allocation3 [shape = 's32[1]{0}', space=sflag, size = 0x4, scoped, tag = 'scoped memory for keystrokes_encoder_forward.1']
    #allocation4 [shape = 's32[1]{0}', space=sflag, size = 0x4, scoped, tag = 'scoped memory for keystrokes_encoder_forward.1']
    #allocation5 [shape = 'u8[2048]{0}', space=vmem, size = 0x800, scoped, tag = 'output window, operand 0, single buffered']
    %7 = vsyncpa [#allocation3], 0
    %8 = vsyncpa [#allocation4], 0
    // Predicated region
    $region2: #{keystrokes_encoder_forward.1} parent=1 // pred_check
      _
    $region3: #{keystrokes_encoder_forward.1} parent=1 // pred_check_branch
      %10 = sbr.rel (0) target = $region5
    $region4: #{keystrokes_encoder_forward.1} parent=1 // pred_region
      _
    $region5: #{keystrokes_encoder_forward.1} parent=1 // pred_fallthru
      _
    // Predicated region
    $region6: #{keystrokes_encoder_forward.1} parent=1 // pred_check
      _
    $region7: #{keystrokes_encoder_forward.1} parent=1 // pred_check_branch
      %12 = sbr.rel (0) target = $region9
    $region8: #{keystrokes_encoder_forward.1} parent=1 // pred_region
      %s14 = ssub.s32 4608, 4608
      %15 = vsyncadd [#allocation3], %s14
      %s16 = sshll.u32 [#allocation2], 4
      %s17 = int_to_ptr.vmem [resolvable:$true] %s16
      %22 = dma.hbm_to_vmem [thread:$0]  %s1, 4608, %s17, [#allocation3], 128, 128, 8
    $region9: #{keystrokes_encoder_forward.1} parent=1 // pred_fallthru
      _
    // Predicated region
    $region10: #{keystrokes_encoder_forward.1} parent=1 // pred_check
      _
    $region11: #{keystrokes_encoder_forward.1} parent=1 // pred_check_branch
      %24 = sbr.rel (0) target = $region13
    $region12: #{keystrokes_encoder_forward.1} parent=1 // pred_region
      %25 = dma.done [#allocation3], 4608
    $region13: #{keystrokes_encoder_forward.1} parent=1 // pred_fallthru
      _
    %v26 = vlaneseq
    %v27 = vand.u32 %v26, 127
    %vm28 = vcmp.ge.s32.totalorder %v27, 64
    %vm29 = vcmp.lt.s32.totalorder %v27, 96
    %vm30 = vmand %vm28, %vm29
    %v31 = vsel %vm30, 1.0, 0.5
    %v32 = vsel %vm30, 0.0, 0.5
    %v33 = vld [vmem:[#allocation2] sm:$0xff]
    %v34 = vld [vmem:[#allocation2 + $0x8] sm:$0xff]
    %v35 = vld [vmem:[#allocation2 + $0x10] sm:$0xff]
    %v36 = vld [vmem:[#allocation2 + $0x18] sm:$0xff]
    %v37 = vld [vmem:[#allocation2 + $0x20] sm:$0xff]
    %v38 = vld [vmem:[#allocation2 + $0x28] sm:$0xff]
    %v39 = vld [vmem:[#allocation2 + $0x30] sm:$0xff]
    %v40 = vld [vmem:[#allocation2 + $0x38] sm:$0xff]
    %v41 = vld [vmem:[#allocation2 + $0x40] sm:$0x1]
    %v42 = vld [vmem:[%s0] sm:$0xf]
    %vm43 = vcmask 261120
    %v45 = vsel %vm43, 0.0, 0
    %47 = vmatprep.subr.mxu0 0.0
    %48 = vmatpush1.msra.mxu0 %v37
    %49 = vmatprep.subr.mxu0 0.0
    %50 = vmatpush1.msra.mxu0 %v38
    %51 = vmatprep.subr.mxu0 0.0
    %52 = vmatpush1.msra.mxu0 %v39
    %53 = vmatprep.subr.mxu0 0.0
    %54 = vmatpush1.msra.mxu0 %v40
    %55 = vmatprep.subr.mxu0 0.0
    %56 = vmatpush1.msra.mxu0 0.0
    %57 = vmatprep.subr.mxu0 0.0
    %58 = vmatpush1.msra.mxu0 0.0
    %59 = vmatprep.subr.mxu0 0.0
    %60 = vmatpush1.msra.mxu0 0.0
    %61 = vmatprep.subr.mxu0 0.0
    %62 = vmatpush1.msra.mxu0 0.0
    %63 = vmatprep.subr.mxu0 0.0
    %64 = vmatpush1.msra.mxu0 0.0
    %65 = vmatprep.subr.mxu0 0.0
    %66 = vmatpush1.msra.mxu0 0.0
    %67 = vmatprep.subr.mxu0 0.0
    %68 = vmatpush1.msra.mxu0 0.0
    %69 = vmatprep.subr.mxu0 0.0
    %70 = vmatpush1.msra.mxu0 0.0
    %71 = vmatprep.subr.mxu0 0.0
    %72 = vmatpush1.msra.mxu0 0.0
    %73 = vmatprep.subr.mxu0 0.0
    %74 = vmatpush1.msra.mxu0 0.0
    %75 = vmatprep.subr.mxu0 0.0
    %76 = vmatpush1.msra.mxu0 0.0
    %77 = vmatprep.subr.mxu0 0.0
    %78 = vmatpush1.msra.mxu0 0.0
    %79 = vmatprep.subr.mxu0 0.0
    %80 = vmatpush1.msra.mxu0 0.0
    %81 = vmatprep.subr.mxu0 0.0
    %82 = vmatpush1.msra.mxu0 0.0
    %83 = vmatprep.subr.mxu0 0.0
    %84 = vmatpush1.msra.mxu0 0.0
    %85 = vmatprep.subr.mxu0 0.0
    %86 = vmatpush1.msra.mxu0 0.0
    %87 = vmatprep.subr.mxu0 0.0
    %88 = vmatpush1.msra.mxu0 0.0
    %89 = vmatprep.subr.mxu0 0.0
    %90 = vmatpush1.msra.mxu0 0.0
    %91 = vmatprep.subr.mxu0 0.0
    %92 = vmatpush1.msra.mxu0 0.0
    %93 = vmatprep.subr.mxu0 0.0
    %94 = vmatpush1.msra.mxu0 0.0
    %95 = vmatprep.subr.mxu0 0.0
    %96 = vmatpush1.msra.mxu0 0.0
    %97 = vmatprep.subr.mxu0 0.0
    %98 = vmatpush1.msra.mxu0 0.0
    %99 = vmatprep.subr.mxu0 0.0
    %100 = vmatpush1.msra.mxu0 0.0
    %101 = vmatprep.subr.mxu0 0.0
    %102 = vmatpush1.msra.mxu0 0.0
    %103 = vmatprep.subr.mxu0 0.0
    %104 = vmatpush1.msra.mxu0 0.0
    %105 = vmatprep.subr.mxu0 0.0
    %106 = vmatpush1.msra.mxu0 0.0
    %107 = vmatprep.subr.mxu0 0.0
    %108 = vmatpush1.msra.mxu0 0.0
    %109 = vmatprep.subr.mxu0 0.0
    %110 = vmatpush1.msra.mxu0 0.0
    %111 = vmatprep.mubr.f32.mxu0 0.0
    %112 = vmatmul.mubr.f32.gmra.mrb[0].mxu0 %v45
    %v113 = vpop.f32.mrb[0].mxu0
    %v114 = vadd.f32 0.0, %v113
    %v115 = vpop.f32.mrb[0].mxu0
    %116 = vdwg.mxu0
    %v118 = vsel %vm43, %v42, 0
    %120 = vmatprep.subr.mxu0 0.0
    %121 = vmatpush1.msra.mxu0 %v33
    %122 = vmatprep.subr.mxu0 0.0
    %123 = vmatpush1.msra.mxu0 %v34
    %124 = vmatprep.subr.mxu0 0.0
    %125 = vmatpush1.msra.mxu0 %v35
    %126 = vmatprep.subr.mxu0 0.0
    %127 = vmatpush1.msra.mxu0 %v36
    %128 = vmatprep.subr.mxu0 0.0
    %129 = vmatpush1.msra.mxu0 0.0
    %130 = vmatprep.subr.mxu0 0.0
    %131 = vmatpush1.msra.mxu0 0.0
    %132 = vmatprep.subr.mxu0 0.0
    %133 = vmatpush1.msra.mxu0 0.0
    %134 = vmatprep.subr.mxu0 0.0
    %135 = vmatpush1.msra.mxu0 0.0
    %136 = vmatprep.subr.mxu0 0.0
    %137 = vmatpush1.msra.mxu0 0.0
    %138 = vmatprep.subr.mxu0 0.0
    %139 = vmatpush1.msra.mxu0 0.0
    %140 = vmatprep.subr.mxu0 0.0
    %141 = vmatpush1.msra.mxu0 0.0
    %142 = vmatprep.subr.mxu0 0.0
    %143 = vmatpush1.msra.mxu0 0.0
    %144 = vmatprep.subr.mxu0 0.0
    %145 = vmatpush1.msra.mxu0 0.0
    %146 = vmatprep.subr.mxu0 0.0
    %147 = vmatpush1.msra.mxu0 0.0
    %148 = vmatprep.subr.mxu0 0.0
    %149 = vmatpush1.msra.mxu0 0.0
    %150 = vmatprep.subr.mxu0 0.0
    %151 = vmatpush1.msra.mxu0 0.0
    %152 = vmatprep.subr.mxu0 0.0
    %153 = vmatpush1.msra.mxu0 0.0
    %154 = vmatprep.subr.mxu0 0.0
    %155 = vmatpush1.msra.mxu0 0.0
    %156 = vmatprep.subr.mxu0 0.0
    %157 = vmatpush1.msra.mxu0 0.0
    %158 = vmatprep.subr.mxu0 0.0
    %159 = vmatpush1.msra.mxu0 0.0
    %160 = vmatprep.subr.mxu0 0.0
    %161 = vmatpush1.msra.mxu0 0.0
    %162 = vmatprep.subr.mxu0 0.0
    %163 = vmatpush1.msra.mxu0 0.0
    %164 = vmatprep.subr.mxu0 0.0
    %165 = vmatpush1.msra.mxu0 0.0
    %166 = vmatprep.subr.mxu0 0.0
    %167 = vmatpush1.msra.mxu0 0.0
    %168 = vmatprep.subr.mxu0 0.0
    %169 = vmatpush1.msra.mxu0 0.0
    %170 = vmatprep.subr.mxu0 0.0
    %171 = vmatpush1.msra.mxu0 0.0
    %172 = vmatprep.subr.mxu0 0.0
    %173 = vmatpush1.msra.mxu0 0.0
    %174 = vmatprep.subr.mxu0 0.0
    %175 = vmatpush1.msra.mxu0 0.0
    %176 = vmatprep.subr.mxu0 0.0
    %177 = vmatpush1.msra.mxu0 0.0
    %178 = vmatprep.subr.mxu0 0.0
    %179 = vmatpush1.msra.mxu0 0.0
    %180 = vmatprep.subr.mxu0 0.0
    %181 = vmatpush1.msra.mxu0 0.0
    %182 = vmatprep.subr.mxu0 0.0
    %183 = vmatpush1.msra.mxu0 0.0
    %184 = vmatprep.mubr.f32.mxu0 0.0
    %185 = vmatmul.mubr.f32.gmra.mrb[0].mxu0 %v118
    %v186 = vpop.f32.mrb[0].mxu0
    %v187 = vadd.f32 %v114, %v186
    %v188 = vpop.f32.mrb[0].mxu0
    %189 = vdwg.mxu0
    %v190 = vlaneseq
    %v191 = vshrl.u32 %v190, 7
    %v192 = vsub.s32 0, %v191
    %v193 = vrot.slane %v41, %v192
    %v194 = vadd.f32 %v187, %v193
    %v195 = vmul.f32 %v194, %v31
    %v196 = vtanh.pop %v195
    %v197 = vmul.f32 %v196, %v31
    %v198 = vadd.f32 %v197, %v32
    %v199 = vmul.f32 %v198, 0.0
    %201 = vrot.lane.b32.xlu0 %v198, 64
    %v202 = vpop.permute.xlu0 %201
    %v204 = vmul.f32 %v198, %v202
    %206 = vrot.lane.b32.xlu0 %v204, 32
    %v207 = vpop.permute.xlu0 %206
    %v209 = vadd.f32 %v199, %v207
    %v210 = vtanh.pop %v209
    %212 = vrot.lane.b32.xlu0 %v210, 64
    %v213 = vpop.permute.xlu0 %212
    %v215 = vmul.f32 %v198, %v213
    %s216 = scalar_lea.vmem %s0, 4
    %v217 = vld [vmem:[%s216] sm:$0xf]
    %219 = vrot.lane.b32.xlu0 %v215, 32
    %v220 = vpop.permute.xlu0 %219
    %v221 = vsel %vm43, %v220, 0
    %223 = vmatprep.subr.mxu0 0.0
    %224 = vmatpush1.msra.mxu0 %v37
    %225 = vmatprep.subr.mxu0 0.0
    %226 = vmatpush1.msra.mxu0 %v38
    %227 = vmatprep.subr.mxu0 0.0
    %228 = vmatpush1.msra.mxu0 %v39
    %229 = vmatprep.subr.mxu0 0.0
    %230 = vmatpush1.msra.mxu0 %v40
    %231 = vmatprep.subr.mxu0 0.0
    %232 = vmatpush1.msra.mxu0 0.0
    %233 = vmatprep.subr.mxu0 0.0
    %234 = vmatpush1.msra.mxu0 0.0
    %235 = vmatprep.subr.mxu0 0.0
    %236 = vmatpush1.msra.mxu0 0.0
    %237 = vmatprep.subr.mxu0 0.0
    %238 = vmatpush1.msra.mxu0 0.0
    %239 = vmatprep.subr.mxu0 0.0
    %240 = vmatpush1.msra.mxu0 0.0
    %241 = vmatprep.subr.mxu0 0.0
    %242 = vmatpush1.msra.mxu0 0.0
    %243 = vmatprep.subr.mxu0 0.0
    %244 = vmatpush1.msra.mxu0 0.0
    %245 = vmatprep.subr.mxu0 0.0
    %246 = vmatpush1.msra.mxu0 0.0
    %247 = vmatprep.subr.mxu0 0.0
    %248 = vmatpush1.msra.mxu0 0.0
    %249 = vmatprep.subr.mxu0 0.0
    %250 = vmatpush1.msra.mxu0 0.0
    %251 = vmatprep.subr.mxu0 0.0
    %252 = vmatpush1.msra.mxu0 0.0
    %253 = vmatprep.subr.mxu0 0.0
    %254 = vmatpush1.msra.mxu0 0.0
    %255 = vmatprep.subr.mxu0 0.0
    %256 = vmatpush1.msra.mxu0 0.0
    %257 = vmatprep.subr.mxu0 0.0
    %258 = vmatpush1.msra.mxu0 0.0
    %259 = vmatprep.subr.mxu0 0.0
    %260 = vmatpush1.msra.mxu0 0.0
    %261 = vmatprep.subr.mxu0 0.0
    %262 = vmatpush1.msra.mxu0 0.0
    %263 = vmatprep.subr.mxu0 0.0
    %264 = vmatpush1.msra.mxu0 0.0
    %265 = vmatprep.subr.mxu0 0.0
    %266 = vmatpush1.msra.mxu0 0.0
    %267 = vmatprep.subr.mxu0 0.0
    %268 = vmatpush1.msra.mxu0 0.0
    %269 = vmatprep.subr.mxu0 0.0
    %270 = vmatpush1.msra.mxu0 0.0
    %271 = vmatprep.subr.mxu0 0.0
    %272 = vmatpush1.msra.mxu0 0.0
    %273 = vmatprep.subr.mxu0 0.0
    %274 = vmatpush1.msra.mxu0 0.0
    %275 = vmatprep.subr.mxu0 0.0
    %276 = vmatpush1.msra.mxu0 0.0
    %277 = vmatprep.subr.mxu0 0.0
    %278 = vmatpush1.msra.mxu0 0.0
    %279 = vmatprep.subr.mxu0 0.0
    %280 = vmatpush1.msra.mxu0 0.0
    %281 = vmatprep.subr.mxu0 0.0
    %282 = vmatpush1.msra.mxu0 0.0
    %283 = vmatprep.subr.mxu0 0.0
    %284 = vmatpush1.msra.mxu0 0.0
    %285 = vmatprep.subr.mxu0 0.0
    %286 = vmatpush1.msra.mxu0 0.0
    %287 = vmatprep.mubr.f32.mxu0 0.0
    %288 = vmatmul.mubr.f32.gmra.mrb[0].mxu0 %v221
    %v289 = vpop.f32.mrb[0].mxu0
    %v290 = vadd.f32 0.0, %v289
    %v291 = vpop.f32.mrb[0].mxu0
    %292 = vdwg.mxu0
    %v294 = vsel %vm43, %v217, 0
    %296 = vmatprep.subr.mxu0 0.0
    %297 = vmatpush1.msra.mxu0 %v33
    %298 = vmatprep.subr.mxu0 0.0
    %299 = vmatpush1.msra.mxu0 %v34
    %300 = vmatprep.subr.mxu0 0.0
    %301 = vmatpush1.msra.mxu0 %v35
    %302 = vmatprep.subr.mxu0 0.0
    %303 = vmatpush1.msra.mxu0 %v36
    %304 = vmatprep.subr.mxu0 0.0
    %305 = vmatpush1.msra.mxu0 0.0
    %306 = vmatprep.subr.mxu0 0.0
    %307 = vmatpush1.msra.mxu0 0.0
    %308 = vmatprep.subr.mxu0 0.0
    %309 = vmatpush1.msra.mxu0 0.0
    %310 = vmatprep.subr.mxu0 0.0
    %311 = vmatpush1.msra.mxu0 0.0
    %312 = vmatprep.subr.mxu0 0.0
    %313 = vmatpush1.msra.mxu0 0.0
    %314 = vmatprep.subr.mxu0 0.0
    %315 = vmatpush1.msra.mxu0 0.0
    %316 = vmatprep.subr.mxu0 0.0
    %317 = vmatpush1.msra.mxu0 0.0
    %318 = vmatprep.subr.mxu0 0.0
    %319 = vmatpush1.msra.mxu0 0.0
    %320 = vmatprep.subr.mxu0 0.0
    %321 = vmatpush1.msra.mxu0 0.0
    %322 = vmatprep.subr.mxu0 0.0
    %323 = vmatpush1.msra.mxu0 0.0
    %324 = vmatprep.subr.mxu0 0.0
    %325 = vmatpush1.msra.mxu0 0.0
    %326 = vmatprep.subr.mxu0 0.0
    %327 = vmatpush1.msra.mxu0 0.0
    %328 = vmatprep.subr.mxu0 0.0
    %329 = vmatpush1.msra.mxu0 0.0
    %330 = vmatprep.subr.mxu0 0.0
    %331 = vmatpush1.msra.mxu0 0.0
    %332 = vmatprep.subr.mxu0 0.0
    %333 = vmatpush1.msra.mxu0 0.0
    %334 = vmatprep.subr.mxu0 0.0
    %335 = vmatpush1.msra.mxu0 0.0
    %336 = vmatprep.subr.mxu0 0.0
    %337 = vmatpush1.msra.mxu0 0.0
    %338 = vmatprep.subr.mxu0 0.0
    %339 = vmatpush1.msra.mxu0 0.0
    %340 = vmatprep.subr.mxu0 0.0
    %341 = vmatpush1.msra.mxu0 0.0
    %342 = vmatprep.subr.mxu0 0.0
    %343 = vmatpush1.msra.mxu0 0.0
    %344 = vmatprep.subr.mxu0 0.0
    %345 = vmatpush1.msra.mxu0 0.0
    %346 = vmatprep.subr.mxu0 0.0
    %347 = vmatpush1.msra.mxu0 0.0
    %348 = vmatprep.subr.mxu0 0.0
    %349 = vmatpush1.msra.mxu0 0.0
    %350 = vmatprep.subr.mxu0 0.0
    %351 = vmatpush1.msra.mxu0 0.0
    %352 = vmatprep.subr.mxu0 0.0
    %353 = vmatpush1.msra.mxu0 0.0
    %354 = vmatprep.subr.mxu0 0.0
    %355 = vmatpush1.msra.mxu0 0.0
    %356 = vmatprep.subr.mxu0 0.0
    %357 = vmatpush1.msra.mxu0 0.0
    %358 = vmatprep.subr.mxu0 0.0
    %359 = vmatpush1.msra.mxu0 0.0
    %360 = vmatprep.mubr.f32.mxu0 0.0
    %361 = vmatmul.mubr.f32.gmra.mrb[0].mxu0 %v294
    %v362 = vpop.f32.mrb[0].mxu0
    %v363 = vadd.f32 %v290, %v362
    %v364 = vpop.f32.mrb[0].mxu0
    %365 = vdwg.mxu0
    %v366 = vadd.f32 %v363, %v193
    %v367 = vmul.f32 %v366, %v31
    %v368 = vtanh.pop %v367
    %v369 = vmul.f32 %v368, %v31
    %v370 = vadd.f32 %v369, %v32
    %v371 = vmul.f32 %v370, %v209
    %373 = vrot.lane.b32.xlu0 %v370, 64
    %v374 = vpop.permute.xlu0 %373
    %v376 = vmul.f32 %v370, %v374
    %378 = vrot.lane.b32.xlu0 %v376, 32
    %v379 = vpop.permute.xlu0 %378
    %v381 = vadd.f32 %v371, %v379
    %v382 = vtanh.pop %v381
    %384 = vrot.lane.b32.xlu0 %v382, 64
    %v385 = vpop.permute.xlu0 %384
    %v387 = vmul.f32 %v370, %v385
    %s388 = scalar_lea.vmem [#allocation2], 72
    %v389 = vld [vmem:[%s388] sm:$0xff]
    %v390 = vld [vmem:[%s388 + $0x8] sm:$0xff]
    %v391 = vld [vmem:[%s388 + $0x10] sm:$0xff]
    %v392 = vld [vmem:[%s388 + $0x18] sm:$0xff]
    %v393 = vld [vmem:[%s388 + $0x20] sm:$0xff]
    %v394 = vld [vmem:[%s388 + $0x28] sm:$0xff]
    %v395 = vld [vmem:[%s388 + $0x30] sm:$0xff]
    %v396 = vld [vmem:[%s388 + $0x38] sm:$0xff]
    %v397 = vld [vmem:[%s388 + $0x40] sm:$0x1]
    %398 = vmatprep.subr.mxu0 0.0
    %399 = vmatpush1.msra.mxu0 %v393
    %400 = vmatprep.subr.mxu0 0.0
    %401 = vmatpush1.msra.mxu0 %v394
    %402 = vmatprep.subr.mxu0 0.0
    %403 = vmatpush1.msra.mxu0 %v395
    %404 = vmatprep.subr.mxu0 0.0
    %405 = vmatpush1.msra.mxu0 %v396
    %406 = vmatprep.subr.mxu0 0.0
    %407 = vmatpush1.msra.mxu0 0.0
    %408 = vmatprep.subr.mxu0 0.0
    %409 = vmatpush1.msra.mxu0 0.0
    %410 = vmatprep.subr.mxu0 0.0
    %411 = vmatpush1.msra.mxu0 0.0
    %412 = vmatprep.subr.mxu0 0.0
    %413 = vmatpush1.msra.mxu0 0.0
    %414 = vmatprep.subr.mxu0 0.0
    %415 = vmatpush1.msra.mxu0 0.0
    %416 = vmatprep.subr.mxu0 0.0
    %417 = vmatpush1.msra.mxu0 0.0
    %418 = vmatprep.subr.mxu0 0.0
    %419 = vmatpush1.msra.mxu0 0.0
    %420 = vmatprep.subr.mxu0 0.0
    %421 = vmatpush1.msra.mxu0 0.0
    %422 = vmatprep.subr.mxu0 0.0
    %423 = vmatpush1.msra.mxu0 0.0
    %424 = vmatprep.subr.mxu0 0.0
    %425 = vmatpush1.msra.mxu0 0.0
    %426 = vmatprep.subr.mxu0 0.0
    %427 = vmatpush1.msra.mxu0 0.0
    %428 = vmatprep.subr.mxu0 0.0
    %429 = vmatpush1.msra.mxu0 0.0
    %430 = vmatprep.subr.mxu0 0.0
    %431 = vmatpush1.msra.mxu0 0.0
    %432 = vmatprep.subr.mxu0 0.0
    %433 = vmatpush1.msra.mxu0 0.0
    %434 = vmatprep.subr.mxu0 0.0
    %435 = vmatpush1.msra.mxu0 0.0
    %436 = vmatprep.subr.mxu0 0.0
    %437 = vmatpush1.msra.mxu0 0.0
    %438 = vmatprep.subr.mxu0 0.0
    %439 = vmatpush1.msra.mxu0 0.0
    %440 = vmatprep.subr.mxu0 0.0
    %441 = vmatpush1.msra.mxu0 0.0
    %442 = vmatprep.subr.mxu0 0.0
    %443 = vmatpush1.msra.mxu0 0.0
    %444 = vmatprep.subr.mxu0 0.0
    %445 = vmatpush1.msra.mxu0 0.0
    %446 = vmatprep.subr.mxu0 0.0
    %447 = vmatpush1.msra.mxu0 0.0
    %448 = vmatprep.subr.mxu0 0.0
    %449 = vmatpush1.msra.mxu0 0.0
    %450 = vmatprep.subr.mxu0 0.0
    %451 = vmatpush1.msra.mxu0 0.0
    %452 = vmatprep.subr.mxu0 0.0
    %453 = vmatpush1.msra.mxu0 0.0
    %454 = vmatprep.subr.mxu0 0.0
    %455 = vmatpush1.msra.mxu0 0.0
    %456 = vmatprep.subr.mxu0 0.0
    %457 = vmatpush1.msra.mxu0 0.0
    %458 = vmatprep.subr.mxu0 0.0
    %459 = vmatpush1.msra.mxu0 0.0
    %460 = vmatprep.subr.mxu0 0.0
    %461 = vmatpush1.msra.mxu0 0.0
    %462 = vmatprep.mubr.f32.mxu0 0.0
    %463 = vmatmul.mubr.f32.gmra.mrb[0].mxu0 %v45
    %v464 = vpop.f32.mrb[0].mxu0
    %v465 = vadd.f32 0.0, %v464
    %v466 = vpop.f32.mrb[0].mxu0
    %467 = vdwg.mxu0
    %468 = vmatprep.subr.mxu0 0.0
    %469 = vmatpush1.msra.mxu0 %v389
    %470 = vmatprep.subr.mxu0 0.0
    %471 = vmatpush1.msra.mxu0 %v390
    %472 = vmatprep.subr.mxu0 0.0
    %473 = vmatpush1.msra.mxu0 %v391
    %474 = vmatprep.subr.mxu0 0.0
    %475 = vmatpush1.msra.mxu0 %v392
    %476 = vmatprep.subr.mxu0 0.0
    %477 = vmatpush1.msra.mxu0 0.0
    %478 = vmatprep.subr.mxu0 0.0
    %479 = vmatpush1.msra.mxu0 0.0
    %480 = vmatprep.subr.mxu0 0.0
    %481 = vmatpush1.msra.mxu0 0.0
    %482 = vmatprep.subr.mxu0 0.0
    %483 = vmatpush1.msra.mxu0 0.0
    %484 = vmatprep.subr.mxu0 0.0
    %485 = vmatpush1.msra.mxu0 0.0
    %486 = vmatprep.subr.mxu0 0.0
    %487 = vmatpush1.msra.mxu0 0.0
    %488 = vmatprep.subr.mxu0 0.0
    %489 = vmatpush1.msra.mxu0 0.0
    %490 = vmatprep.subr.mxu0 0.0
    %491 = vmatpush1.msra.mxu0 0.0
    %492 = vmatprep.subr.mxu0 0.0
    %493 = vmatpush1.msra.mxu0 0.0
    %494 = vmatprep.subr.mxu0 0.0
    %495 = vmatpush1.msra.mxu0 0.0
    %496 = vmatprep.subr.mxu0 0.0
    %497 = vmatpush1.msra.mxu0 0.0
    %498 = vmatprep.subr.mxu0 0.0
    %499 = vmatpush1.msra.mxu0 0.0
    %500 = vmatprep.subr.mxu0 0.0
    %501 = vmatpush1.msra.mxu0 0.0
    %502 = vmatprep.subr.mxu0 0.0
    %503 = vmatpush1.msra.mxu0 0.0
    %504 = vmatprep.subr.mxu0 0.0
    %505 = vmatpush1.msra.mxu0 0.0
    %506 = vmatprep.subr.mxu0 0.0
    %507 = vmatpush1.msra.mxu0 0.0
    %508 = vmatprep.subr.mxu0 0.0
    %509 = vmatpush1.msra.mxu0 0.0
    %510 = vmatprep.subr.mxu0 0.0
    %511 = vmatpush1.msra.mxu0 0.0
    %512 = vmatprep.subr.mxu0 0.0
    %513 = vmatpush1.msra.mxu0 0.0
    %514 = vmatprep.subr.mxu0 0.0
    %515 = vmatpush1.msra.mxu0 0.0
    %516 = vmatprep.subr.mxu0 0.0
    %517 = vmatpush1.msra.mxu0 0.0
    %518 = vmatprep.subr.mxu0 0.0
    %519 = vmatpush1.msra.mxu0 0.0
    %520 = vmatprep.subr.mxu0 0.0
    %521 = vmatpush1.msra.mxu0 0.0
    %522 = vmatprep.subr.mxu0 0.0
    %523 = vmatpush1.msra.mxu0 0.0
    %524 = vmatprep.subr.mxu0 0.0
    %525 = vmatpush1.msra.mxu0 0.0
    %526 = vmatprep.subr.mxu0 0.0
    %527 = vmatpush1.msra.mxu0 0.0
    %528 = vmatprep.subr.mxu0 0.0
    %529 = vmatpush1.msra.mxu0 0.0
    %530 = vmatprep.subr.mxu0 0.0
    %531 = vmatpush1.msra.mxu0 0.0
    %532 = vmatprep.mubr.f32.mxu0 0.0
    %533 = vmatmul.mubr.f32.gmra.mrb[0].mxu0 %v221
    %v534 = vpop.f32.mrb[0].mxu0
    %v535 = vadd.f32 %v465, %v534
    %v536 = vpop.f32.mrb[0].mxu0
    %537 = vdwg.mxu0
    %v538 = vlaneseq
    %v539 = vshrl.u32 %v538, 7
    %v540 = vsub.s32 0, %v539
    %v541 = vrot.slane %v397, %v540
    %v542 = vadd.f32 %v535, %v541
    %v543 = vmul.f32 %v542, %v31
    %v544 = vtanh.pop %v543
    %v545 = vmul.f32 %v544, %v31
    %v546 = vadd.f32 %v545, %v32
    %v547 = vmul.f32 %v546, 0.0
    %549 = vrot.lane.b32.xlu0 %v546, 64
    %v550 = vpop.permute.xlu0 %549
    %v552 = vmul.f32 %v546, %v550
    %554 = vrot.lane.b32.xlu0 %v552, 32
    %v555 = vpop.permute.xlu0 %554
    %v557 = vadd.f32 %v547, %v555
    %v558 = vtanh.pop %v557
    %560 = vrot.lane.b32.xlu0 %v558, 64
    %v561 = vpop.permute.xlu0 %560
    %v563 = vmul.f32 %v546, %v561
    %s564 = scalar_lea.vmem %s0, 8
    %v565 = vld [vmem:[%s564] sm:$0xf]
    %567 = vrot.lane.b32.xlu0 %v387, 32
    %v568 = vpop.permute.xlu0 %567
    %v569 = vsel %vm43, %v568, 0
    %571 = vmatprep.subr.mxu0 0.0
    %572 = vmatpush1.msra.mxu0 %v37
    %573 = vmatprep.subr.mxu0 0.0
    %574 = vmatpush1.msra.mxu0 %v38
    %575 = vmatprep.subr.mxu0 0.0
    %576 = vmatpush1.msra.mxu0 %v39
    %577 = vmatprep.subr.mxu0 0.0
    %578 = vmatpush1.msra.mxu0 %v40
    %579 = vmatprep.subr.mxu0 0.0
    %580 = vmatpush1.msra.mxu0 0.0
    %581 = vmatprep.subr.mxu0 0.0
    %582 = vmatpush1.msra.mxu0 0.0
    %583 = vmatprep.subr.mxu0 0.0
    %584 = vmatpush1.msra.mxu0 0.0
    %585 = vmatprep.subr.mxu0 0.0
    %586 = vmatpush1.msra.mxu0 0.0
    %587 = vmatprep.subr.mxu0 0.0
    %588 = vmatpush1.msra.mxu0 0.0
    %589 = vmatprep.subr.mxu0 0.0
    %590 = vmatpush1.msra.mxu0 0.0
    %591 = vmatprep.subr.mxu0 0.0
    %592 = vmatpush1.msra.mxu0 0.0
    %593 = vmatprep.subr.mxu0 0.0
    %594 = vmatpush1.msra.mxu0 0.0
    %595 = vmatprep.subr.mxu0 0.0
    %596 = vmatpush1.msra.mxu0 0.0
    %597 = vmatprep.subr.mxu0 0.0
    %598 = vmatpush1.msra.mxu0 0.0
    %599 = vmatprep.subr.mxu0 0.0
    %600 = vmatpush1.msra.mxu0 0.0
    %601 = vmatprep.subr.mxu0 0.0
    %602 = vmatpush1.msra.mxu0 0.0
    %603 = vmatprep.subr.mxu0 0.0
    %604 = vmatpush1.msra.mxu0 0.0
    %605 = vmatprep.subr.mxu0 0.0
    %606 = vmatpush1.msra.mxu0 0.0
    %607 = vmatprep.subr.mxu0 0.0
    %608 = vmatpush1.msra.mxu0 0.0
    %609 = vmatprep.subr.mxu0 0.0
    %610 = vmatpush1.msra.mxu0 0.0
    %611 = vmatprep.subr.mxu0 0.0
    %612 = vmatpush1.msra.mxu0 0.0
    %613 = vmatprep.subr.mxu0 0.0
    %614 = vmatpush1.msra.mxu0 0.0
    %615 = vmatprep.subr.mxu0 0.0
    %616 = vmatpush1.msra.mxu0 0.0
    %617 = vmatprep.subr.mxu0 0.0
    %618 = vmatpush1.msra.mxu0 0.0
    %619 = vmatprep.subr.mxu0 0.0
    %620 = vmatpush1.msra.mxu0 0.0
    %621 = vmatprep.subr.mxu0 0.0
    %622 = vmatpush1.msra.mxu0 0.0
    %623 = vmatprep.subr.mxu0 0.0
    %624 = vmatpush1.msra.mxu0 0.0
    %625 = vmatprep.subr.mxu0 0.0
    %626 = vmatpush1.msra.mxu0 0.0
    %627 = vmatprep.subr.mxu0 0.0
    %628 = vmatpush1.msra.mxu0 0.0
    %629 = vmatprep.subr.mxu0 0.0
    %630 = vmatpush1.msra.mxu0 0.0
    %631 = vmatprep.subr.mxu0 0.0
    %632 = vmatpush1.msra.mxu0 0.0
    %633 = vmatprep.subr.mxu0 0.0
    %634 = vmatpush1.msra.mxu0 0.0
    %635 = vmatprep.mubr.f32.mxu0 0.0
    %636 = vmatmul.mubr.f32.gmra.mrb[0].mxu0 %v569
    %v637 = vpop.f32.mrb[0].mxu0
    %v638 = vadd.f32 0.0, %v637
    %v639 = vpop.f32.mrb[0].mxu0
    %640 = vdwg.mxu0
    %v642 = vsel %vm43, %v565, 0
    %644 = vmatprep.subr.mxu0 0.0
    %645 = vmatpush1.msra.mxu0 %v33
    %646 = vmatprep.subr.mxu0 0.0
    %647 = vmatpush1.msra.mxu0 %v34
    %648 = vmatprep.subr.mxu0 0.0
    %649 = vmatpush1.msra.mxu0 %v35
    %650 = vmatprep.subr.mxu0 0.0
    %651 = vmatpush1.msra.mxu0 %v36
    %652 = vmatprep.subr.mxu0 0.0
    %653 = vmatpush1.msra.mxu0 0.0
    %654 = vmatprep.subr.mxu0 0.0
    %655 = vmatpush1.msra.mxu0 0.0
    %656 = vmatprep.subr.mxu0 0.0
    %657 = vmatpush1.msra.mxu0 0.0
    %658 = vmatprep.subr.mxu0 0.0
    %659 = vmatpush1.msra.mxu0 0.0
    %660 = vmatprep.subr.mxu0 0.0
    %661 = vmatpush1.msra.mxu0 0.0
    %662 = vmatprep.subr.mxu0 0.0
    %663 = vmatpush1.msra.mxu0 0.0
    %664 = vmatprep.subr.mxu0 0.0
    %665 = vmatpush1.msra.mxu0 0.0
    %666 = vmatprep.subr.mxu0 0.0
    %667 = vmatpush1.msra.mxu0 0.0
    %668 = vmatprep.subr.mxu0 0.0
    %669 = vmatpush1.msra.mxu0 0.0
    %670 = vmatprep.subr.mxu0 0.0
    %671 = vmatpush1.msra.mxu0 0.0
    %672 = vmatprep.subr.mxu0 0.0
    %673 = vmatpush1.msra.mxu0 0.0
    %674 = vmatprep.subr.mxu0 0.0
    %675 = vmatpush1.msra.mxu0 0.0
    %676 = vmatprep.subr.mxu0 0.0
    %677 = vmatpush1.msra.mxu0 0.0
    %678 = vmatprep.subr.mxu0 0.0
    %679 = vmatpush1.msra.mxu0 0.0
    %680 = vmatprep.subr.mxu0 0.0
    %681 = vmatpush1.msra.mxu0 0.0
    %682 = vmatprep.subr.mxu0 0.0
    %683 = vmatpush1.msra.mxu0 0.0
    %684 = vmatprep.subr.mxu0 0.0
    %685 = vmatpush1.msra.mxu0 0.0
    %686 = vmatprep.subr.mxu0 0.0
    %687 = vmatpush1.msra.mxu0 0.0
    %688 = vmatprep.subr.mxu0 0.0
    %689 = vmatpush1.msra.mxu0 0.0
    %690 = vmatprep.subr.mxu0 0.0
    %691 = vmatpush1.msra.mxu0 0.0
    %692 = vmatprep.subr.mxu0 0.0
    %693 = vmatpush1.msra.mxu0 0.0
    %694 = vmatprep.subr.mxu0 0.0
    %695 = vmatpush1.msra.mxu0 0.0
    %696 = vmatprep.subr.mxu0 0.0
    %697 = vmatpush1.msra.mxu0 0.0
    %698 = vmatprep.subr.mxu0 0.0
    %699 = vmatpush1.msra.mxu0 0.0
    %700 = vmatprep.subr.mxu0 0.0
    %701 = vmatpush1.msra.mxu0 0.0
    %702 = vmatprep.subr.mxu0 0.0
    %703 = vmatpush1.msra.mxu0 0.0
    %704 = vmatprep.subr.mxu0 0.0
    %705 = vmatpush1.msra.mxu0 0.0
    %706 = vmatprep.subr.mxu0 0.0
    %707 = vmatpush1.msra.mxu0 0.0
    %708 = vmatprep.mubr.f32.mxu0 0.0
    %709 = vmatmul.mubr.f32.gmra.mrb[0].mxu0 %v642
    %v710 = vpop.f32.mrb[0].mxu0
    %v711 = vadd.f32 %v638, %v710
    %v712 = vpop.f32.mrb[0].mxu0
    %713 = vdwg.mxu0
    %v714 = vadd.f32 %v711, %v193
    %v715 = vmul.f32 %v714, %v31
    %v716 = vtanh.pop %v715
    %v717 = vmul.f32 %v716, %v31
    %v718 = vadd.f32 %v717, %v32
    %v719 = vmul.f32 %v718, %v381
    %721 = vrot.lane.b32.xlu0 %v718, 64
    %v722 = vpop.permute.xlu0 %721
    %v724 = vmul.f32 %v718, %v722
    %726 = vrot.lane.b32.xlu0 %v724, 32
    %v727 = vpop.permute.xlu0 %726
    %v729 = vadd.f32 %v719, %v727
    %v730 = vtanh.pop %v729
    %732 = vrot.lane.b32.xlu0 %v730, 64
    %v733 = vpop.permute.xlu0 %732
    %v735 = vmul.f32 %v718, %v733
    %737 = vrot.lane.b32.xlu0 %v563, 32
    %v738 = vpop.permute.xlu0 %737
    %v739 = vsel %vm43, %v738, 0
    %741 = vmatprep.subr.mxu0 0.0
    %742 = vmatpush1.msra.mxu0 %v393
    %743 = vmatprep.subr.mxu0 0.0
    %744 = vmatpush1.msra.mxu0 %v394
    %745 = vmatprep.subr.mxu0 0.0
    %746 = vmatpush1.msra.mxu0 %v395
    %747 = vmatprep.subr.mxu0 0.0
    %748 = vmatpush1.msra.mxu0 %v396
    %749 = vmatprep.subr.mxu0 0.0
    %750 = vmatpush1.msra.mxu0 0.0
    %751 = vmatprep.subr.mxu0 0.0
    %752 = vmatpush1.msra.mxu0 0.0
    %753 = vmatprep.subr.mxu0 0.0
    %754 = vmatpush1.msra.mxu0 0.0
    %755 = vmatprep.subr.mxu0 0.0
    %756 = vmatpush1.msra.mxu0 0.0
    %757 = vmatprep.subr.mxu0 0.0
    %758 = vmatpush1.msra.mxu0 0.0
    %759 = vmatprep.subr.mxu0 0.0
    %760 = vmatpush1.msra.mxu0 0.0
    %761 = vmatprep.subr.mxu0 0.0
    %762 = vmatpush1.msra.mxu0 0.0
    %763 = vmatprep.subr.mxu0 0.0
    %764 = vmatpush1.msra.mxu0 0.0
    %765 = vmatprep.subr.mxu0 0.0
    %766 = vmatpush1.msra.mxu0 0.0
    %767 = vmatprep.subr.mxu0 0.0
    %768 = vmatpush1.msra.mxu0 0.0
    %769 = vmatprep.subr.mxu0 0.0
    %770 = vmatpush1.msra.mxu0 0.0
    %771 = vmatprep.subr.mxu0 0.0
    %772 = vmatpush1.msra.mxu0 0.0
    %773 = vmatprep.subr.mxu0 0.0
    %774 = vmatpush1.msra.mxu0 0.0
    %775 = vmatprep.subr.mxu0 0.0
    %776 = vmatpush1.msra.mxu0 0.0
    %777 = vmatprep.subr.mxu0 0.0
    %778 = vmatpush1.msra.mxu0 0.0
    %779 = vmatprep.subr.mxu0 0.0
    %780 = vmatpush1.msra.mxu0 0.0
    %781 = vmatprep.subr.mxu0 0.0
    %782 = vmatpush1.msra.mxu0 0.0
    %783 = vmatprep.subr.mxu0 0.0
    %784 = vmatpush1.msra.mxu0 0.0
    %785 = vmatprep.subr.mxu0 0.0
    %786 = vmatpush1.msra.mxu0 0.0
    %787 = vmatprep.subr.mxu0 0.0
    %788 = vmatpush1.msra.mxu0 0.0
    %789 = vmatprep.subr.mxu0 0.0
    %790 = vmatpush1.msra.mxu0 0.0
    %791 = vmatprep.subr.mxu0 0.0
    %792 = vmatpush1.msra.mxu0 0.0
    %793 = vmatprep.subr.mxu0 0.0
    %794 = vmatpush1.msra.mxu0 0.0
    %795 = vmatprep.subr.mxu0 0.0
    %796 = vmatpush1.msra.mxu0 0.0
    %797 = vmatprep.subr.mxu0 0.0
    %798 = vmatpush1.msra.mxu0 0.0
    %799 = vmatprep.subr.mxu0 0.0
    %800 = vmatpush1.msra.mxu0 0.0
    %801 = vmatprep.subr.mxu0 0.0
    %802 = vmatpush1.msra.mxu0 0.0
    %803 = vmatprep.subr.mxu0 0.0
    %804 = vmatpush1.msra.mxu0 0.0
    %805 = vmatprep.mubr.f32.mxu0 0.0
    %806 = vmatmul.mubr.f32.gmra.mrb[0].mxu0 %v739
    %v807 = vpop.f32.mrb[0].mxu0
    %v808 = vadd.f32 0.0, %v807
    %v809 = vpop.f32.mrb[0].mxu0
    %810 = vdwg.mxu0
    %811 = vmatprep.subr.mxu0 0.0
    %812 = vmatpush1.msra.mxu0 %v389
    %813 = vmatprep.subr.mxu0 0.0
    %814 = vmatpush1.msra.mxu0 %v390
    %815 = vmatprep.subr.mxu0 0.0
    %816 = vmatpush1.msra.mxu0 %v391
    %817 = vmatprep.subr.mxu0 0.0
    %818 = vmatpush1.msra.mxu0 %v392
    %819 = vmatprep.subr.mxu0 0.0
    %820 = vmatpush1.msra.mxu0 0.0
    %821 = vmatprep.subr.mxu0 0.0
    %822 = vmatpush1.msra.mxu0 0.0
    %823 = vmatprep.subr.mxu0 0.0
    %824 = vmatpush1.msra.mxu0 0.0
    %825 = vmatprep.subr.mxu0 0.0
    %826 = vmatpush1.msra.mxu0 0.0
    %827 = vmatprep.subr.mxu0 0.0
    %828 = vmatpush1.msra.mxu0 0.0
    %829 = vmatprep.subr.mxu0 0.0
    %830 = vmatpush1.msra.mxu0 0.0
    %831 = vmatprep.subr.mxu0 0.0
    %832 = vmatpush1.msra.mxu0 0.0
    %833 = vmatprep.subr.mxu0 0.0
    %834 = vmatpush1.msra.mxu0 0.0
    %835 = vmatprep.subr.mxu0 0.0
    %836 = vmatpush1.msra.mxu0 0.0
    %837 = vmatprep.subr.mxu0 0.0
    %838 = vmatpush1.msra.mxu0 0.0
    %839 = vmatprep.subr.mxu0 0.0
    %840 = vmatpush1.msra.mxu0 0.0
    %841 = vmatprep.subr.mxu0 0.0
    %842 = vmatpush1.msra.mxu0 0.0
    %843 = vmatprep.subr.mxu0 0.0
    %844 = vmatpush1.msra.mxu0 0.0
    %845 = vmatprep.subr.mxu0 0.0
    %846 = vmatpush1.msra.mxu0 0.0
    %847 = vmatprep.subr.mxu0 0.0
    %848 = vmatpush1.msra.mxu0 0.0
    %849 = vmatprep.subr.mxu0 0.0
    %850 = vmatpush1.msra.mxu0 0.0
    %851 = vmatprep.subr.mxu0 0.0
    %852 = vmatpush1.msra.mxu0 0.0
    %853 = vmatprep.subr.mxu0 0.0
    %854 = vmatpush1.msra.mxu0 0.0
    %855 = vmatprep.subr.mxu0 0.0
    %856 = vmatpush1.msra.mxu0 0.0
    %857 = vmatprep.subr.mxu0 0.0
    %858 = vmatpush1.msra.mxu0 0.0
    %859 = vmatprep.subr.mxu0 0.0
    %860 = vmatpush1.msra.mxu0 0.0
    %861 = vmatprep.subr.mxu0 0.0
    %862 = vmatpush1.msra.mxu0 0.0
    %863 = vmatprep.subr.mxu0 0.0
    %864 = vmatpush1.msra.mxu0 0.0
    %865 = vmatprep.subr.mxu0 0.0
    %866 = vmatpush1.msra.mxu0 0.0
    %867 = vmatprep.subr.mxu0 0.0
    %868 = vmatpush1.msra.mxu0 0.0
    %869 = vmatprep.subr.mxu0 0.0
    %870 = vmatpush1.msra.mxu0 0.0
    %871 = vmatprep.subr.mxu0 0.0
    %872 = vmatpush1.msra.mxu0 0.0
    %873 = vmatprep.subr.mxu0 0.0
    %874 = vmatpush1.msra.mxu0 0.0
    %875 = vmatprep.mubr.f32.mxu0 0.0
    %876 = vmatmul.mubr.f32.gmra.mrb[0].mxu0 %v569
    %v877 = vpop.f32.mrb[0].mxu0
    %v878 = vadd.f32 %v808, %v877
    %v879 = vpop.f32.mrb[0].mxu0
    %880 = vdwg.mxu0
    %v881 = vadd.f32 %v878, %v541
    %v882 = vmul.f32 %v881, %v31
    %v883 = vtanh.pop %v882
    %v884 = vmul.f32 %v883, %v31
    %v885 = vadd.f32 %v884, %v32
    %v886 = vmul.f32 %v885, %v557
    %888 = vrot.lane.b32.xlu0 %v885, 64
    %v889 = vpop.permute.xlu0 %888
    %v891 = vmul.f32 %v885, %v889
    %893 = vrot.lane.b32.xlu0 %v891, 32
    %v894 = vpop.permute.xlu0 %893
    %v896 = vadd.f32 %v886, %v894
    %v897 = vtanh.pop %v896
    %899 = vrot.lane.b32.xlu0 %v897, 64
    %v900 = vpop.permute.xlu0 %899
    %v902 = vmul.f32 %v885, %v900
    %s903 = scalar_lea.vmem [#allocation2], 144
    %v904 = vld [vmem:[%s903] sm:$0xff]
    %v905 = vld [vmem:[%s903 + $0x8] sm:$0xff]
    %v906 = vld [vmem:[%s903 + $0x10] sm:$0xff]
    %v907 = vld [vmem:[%s903 + $0x18] sm:$0xff]
    %v908 = vld [vmem:[%s903 + $0x20] sm:$0xff]
    %v909 = vld [vmem:[%s903 + $0x28] sm:$0xff]
    %v910 = vld [vmem:[%s903 + $0x30] sm:$0xff]
    %v911 = vld [vmem:[%s903 + $0x38] sm:$0xff]
    %v912 = vld [vmem:[%s903 + $0x40] sm:$0x1]
    %913 = vmatprep.subr.mxu0 0.0
    %914 = vmatpush1.msra.mxu0 %v908
    %915 = vmatprep.subr.mxu0 0.0
    %916 = vmatpush1.msra.mxu0 %v909
    %917 = vmatprep.subr.mxu0 0.0
    %918 = vmatpush1.msra.mxu0 %v910
    %919 = vmatprep.subr.mxu0 0.0
    %920 = vmatpush1.msra.mxu0 %v911
    %921 = vmatprep.subr.mxu0 0.0
    %922 = vmatpush1.msra.mxu0 0.0
    %923 = vmatprep.subr.mxu0 0.0
    %924 = vmatpush1.msra.mxu0 0.0
    %925 = vmatprep.subr.mxu0 0.0
    %926 = vmatpush1.msra.mxu0 0.0
    %927 = vmatprep.subr.mxu0 0.0
    %928 = vmatpush1.msra.mxu0 0.0
    %929 = vmatprep.subr.mxu0 0.0
    %930 = vmatpush1.msra.mxu0 0.0
    %931 = vmatprep.subr.mxu0 0.0
    %932 = vmatpush1.msra.mxu0 0.0
    %933 = vmatprep.subr.mxu0 0.0
    %934 = vmatpush1.msra.mxu0 0.0
    %935 = vmatprep.subr.mxu0 0.0
    %936 = vmatpush1.msra.mxu0 0.0
    %937 = vmatprep.subr.mxu0 0.0
    %938 = vmatpush1.msra.mxu0 0.0
    %939 = vmatprep.subr.mxu0 0.0
    %940 = vmatpush1.msra.mxu0 0.0
    %941 = vmatprep.subr.mxu0 0.0
    %942 = vmatpush1.msra.mxu0 0.0
    %943 = vmatprep.subr.mxu0 0.0
    %944 = vmatpush1.msra.mxu0 0.0
    %945 = vmatprep.subr.mxu0 0.0
    %946 = vmatpush1.msra.mxu0 0.0
    %947 = vmatprep.subr.mxu0 0.0
    %948 = vmatpush1.msra.mxu0 0.0
    %949 = vmatprep.subr.mxu0 0.0
    %950 = vmatpush1.msra.mxu0 0.0
    %951 = vmatprep.subr.mxu0 0.0
    %952 = vmatpush1.msra.mxu0 0.0
    %953 = vmatprep.subr.mxu0 0.0
    %954 = vmatpush1.msra.mxu0 0.0
    %955 = vmatprep.subr.mxu0 0.0
    %956 = vmatpush1.msra.mxu0 0.0
    %957 = vmatprep.subr.mxu0 0.0
    %958 = vmatpush1.msra.mxu0 0.0
    %959 = vmatprep.subr.mxu0 0.0
    %960 = vmatpush1.msra.mxu0 0.0
    %961 = vmatprep.subr.mxu0 0.0
    %962 = vmatpush1.msra.mxu0 0.0
    %963 = vmatprep.subr.mxu0 0.0
    %964 = vmatpush1.msra.mxu0 0.0
    %965 = vmatprep.subr.mxu0 0.0
    %966 = vmatpush1.msra.mxu0 0.0
    %967 = vmatprep.subr.mxu0 0.0
    %968 = vmatpush1.msra.mxu0 0.0
    %969 = vmatprep.subr.mxu0 0.0
    %970 = vmatpush1.msra.mxu0 0.0
    %971 = vmatprep.subr.mxu0 0.0
    %972 = vmatpush1.msra.mxu0 0.0
    %973 = vmatprep.subr.mxu0 0.0
    %974 = vmatpush1.msra.mxu0 0.0
    %975 = vmatprep.subr.mxu0 0.0
    %976 = vmatpush1.msra.mxu0 0.0
    %977 = vmatprep.mubr.f32.mxu0 0.0
    %978 = vmatmul.mubr.f32.gmra.mrb[0].mxu0 %v45
    %v979 = vpop.f32.mrb[0].mxu0
    %v980 = vadd.f32 0.0, %v979
    %v981 = vpop.f32.mrb[0].mxu0
    %982 = vdwg.mxu0
    %983 = vmatprep.subr.mxu0 0.0
    %984 = vmatpush1.msra.mxu0 %v904
    %985 = vmatprep.subr.mxu0 0.0
    %986 = vmatpush1.msra.mxu0 %v905
    %987 = vmatprep.subr.mxu0 0.0
    %988 = vmatpush1.msra.mxu0 %v906
    %989 = vmatprep.subr.mxu0 0.0
    %990 = vmatpush1.msra.mxu0 %v907
    %991 = vmatprep.subr.mxu0 0.0
    %992 = vmatpush1.msra.mxu0 0.0
    %993 = vmatprep.subr.mxu0 0.0
    %994 = vmatpush1.msra.mxu0 0.0
    %995 = vmatprep.subr.mxu0 0.0
    %996 = vmatpush1.msra.mxu0 0.0
    %997 = vmatprep.subr.mxu0 0.0
    %998 = vmatpush1.msra.mxu0 0.0
    %999 = vmatprep.subr.mxu0 0.0
    %1000 = vmatpush1.msra.mxu0 0.0
    %1001 = vmatprep.subr.mxu0 0.0
    %1002 = vmatpush1.msra.mxu0 0.0
    %1003 = vmatprep.subr.mxu0 0.0
    %1004 = vmatpush1.msra.mxu0 0.0
    %1005 = vmatprep.subr.mxu0 0.0
    %1006 = vmatpush1.msra.mxu0 0.0
    %1007 = vmatprep.subr.mxu0 0.0
    %1008 = vmatpush1.msra.mxu0 0.0
    %1009 = vmatprep.subr.mxu0 0.0
    %1010 = vmatpush1.msra.mxu0 0.0
    %1011 = vmatprep.subr.mxu0 0.0
    %1012 = vmatpush1.msra.mxu0 0.0
    %1013 = vmatprep.subr.mxu0 0.0
    %1014 = vmatpush1.msra.mxu0 0.0
    %1015 = vmatprep.subr.mxu0 0.0
    %1016 = vmatpush1.msra.mxu0 0.0
    %1017 = vmatprep.subr.mxu0 0.0
    %1018 = vmatpush1.msra.mxu0 0.0
    %1019 = vmatprep.subr.mxu0 0.0
    %1020 = vmatpush1.msra.mxu0 0.0
    %1021 = vmatprep.subr.mxu0 0.0
    %1022 = vmatpush1.msra.mxu0 0.0
    %1023 = vmatprep.subr.mxu0 0.0
    %1024 = vmatpush1.msra.mxu0 0.0
    %1025 = vmatprep.subr.mxu0 0.0
    %1026 = vmatpush1.msra.mxu0 0.0
    %1027 = vmatprep.subr.mxu0 0.0
    %1028 = vmatpush1.msra.mxu0 0.0
    %1029 = vmatprep.subr.mxu0 0.0
    %1030 = vmatpush1.msra.mxu0 0.0
    %1031 = vmatprep.subr.mxu0 0.0
    %1032 = vmatpush1.msra.mxu0 0.0
    %1033 = vmatprep.subr.mxu0 0.0
    %1034 = vmatpush1.msra.mxu0 0.0
    %1035 = vmatprep.subr.mxu0 0.0
    %1036 = vmatpush1.msra.mxu0 0.0
    %1037 = vmatprep.subr.mxu0 0.0
    %1038 = vmatpush1.msra.mxu0 0.0
    %1039 = vmatprep.subr.mxu0 0.0
    %1040 = vmatpush1.msra.mxu0 0.0
    %1041 = vmatprep.subr.mxu0 0.0
    %1042 = vmatpush1.msra.mxu0 0.0
    %1043 = vmatprep.subr.mxu0 0.0
    %1044 = vmatpush1.msra.mxu0 0.0
    %1045 = vmatprep.subr.mxu0 0.0
    %1046 = vmatpush1.msra.mxu0 0.0
    %1047 = vmatprep.mubr.f32.mxu0 0.0
    %1048 = vmatmul.mubr.f32.gmra.mrb[0].mxu0 %v739
    %v1049 = vpop.f32.mrb[0].mxu0
    %v1050 = vadd.f32 %v980, %v1049
    %v1051 = vpop.f32.mrb[0].mxu0
    %1052 = vdwg.mxu0
    %v1053 = vlaneseq
    %v1054 = vshrl.u32 %v1053, 7
    %v1055 = vsub.s32 0, %v1054
    %v1056 = vrot.slane %v912, %v1055
    %v1057 = vadd.f32 %v1050, %v1056
    %v1058 = vmul.f32 %v1057, %v31
    %v1059 = vtanh.pop %v1058
    %v1060 = vmul.f32 %v1059, %v31
    %v1061 = vadd.f32 %v1060, %v32
    %v1062 = vmul.f32 %v1061, 0.0
    %1064 = vrot.lane.b32.xlu0 %v1061, 64
    %v1065 = vpop.permute.xlu0 %1064
    %v1067 = vmul.f32 %v1061, %v1065
    %1069 = vrot.lane.b32.xlu0 %v1067, 32
    %v1070 = vpop.permute.xlu0 %1069
    %v1072 = vadd.f32 %v1062, %v1070
    %v1073 = vtanh.pop %v1072
    %1075 = vrot.lane.b32.xlu0 %v1073, 64
    %v1076 = vpop.permute.xlu0 %1075
    %v1078 = vmul.f32 %v1061, %v1076
    %s1079 = scalar_lea.vmem %s0, 12
    %v1080 = vld [vmem:[%s1079] sm:$0xf]
    %1082 = vrot.lane.b32.xlu0 %v735, 32
    %v1083 = vpop.permute.xlu0 %1082
    %v1084 = vsel %vm43, %v1083, 0
    %1086 = vmatprep.subr.mxu0 0.0
    %1087 = vmatpush1.msra.mxu0 %v37
    %1088 = vmatprep.subr.mxu0 0.0
    %1089 = vmatpush1.msra.mxu0 %v38
    %1090 = vmatprep.subr.mxu0 0.0
    %1091 = vmatpush1.msra.mxu0 %v39
    %1092 = vmatprep.subr.mxu0 0.0
    %1093 = vmatpush1.msra.mxu0 %v40
    %1094 = vmatprep.subr.mxu0 0.0
    %1095 = vmatpush1.msra.mxu0 0.0
    %1096 = vmatprep.subr.mxu0 0.0
    %1097 = vmatpush1.msra.mxu0 0.0
    %1098 = vmatprep.subr.mxu0 0.0
    %1099 = vmatpush1.msra.mxu0 0.0
    %1100 = vmatprep.subr.mxu0 0.0
    %1101 = vmatpush1.msra.mxu0 0.0
    %1102 = vmatprep.subr.mxu0 0.0
    %1103 = vmatpush1.msra.mxu0 0.0
    %1104 = vmatprep.subr.mxu0 0.0
    %1105 = vmatpush1.msra.mxu0 0.0
    %1106 = vmatprep.subr.mxu0 0.0
    %1107 = vmatpush1.msra.mxu0 0.0
    %1108 = vmatprep.subr.mxu0 0.0
    %1109 = vmatpush1.msra.mxu0 0.0
    %1110 = vmatprep.subr.mxu0 0.0
    %1111 = vmatpush1.msra.mxu0 0.0
    %1112 = vmatprep.subr.mxu0 0.0
    %1113 = vmatpush1.msra.mxu0 0.0
    %1114 = vmatprep.subr.mxu0 0.0
    %1115 = vmatpush1.msra.mxu0 0.0
    %1116 = vmatprep.subr.mxu0 0.0
    %1117 = vmatpush1.msra.mxu0 0.0
    %1118 = vmatprep.subr.mxu0 0.0
    %1119 = vmatpush1.msra.mxu0 0.0
    %1120 = vmatprep.subr.mxu0 0.0
    %1121 = vmatpush1.msra.mxu0 0.0
    %1122 = vmatprep.subr.mxu0 0.0
    %1123 = vmatpush1.msra.mxu0 0.0
    %1124 = vmatprep.subr.mxu0 0.0
    %1125 = vmatpush1.msra.mxu0 0.0
    %1126 = vmatprep.subr.mxu0 0.0
    %1127 = vmatpush1.msra.mxu0 0.0
    %1128 = vmatprep.subr.mxu0 0.0
    %1129 = vmatpush1.msra.mxu0 0.0
    %1130 = vmatprep.subr.mxu0 0.0
    %1131 = vmatpush1.msra.mxu0 0.0
    %1132 = vmatprep.subr.mxu0 0.0
    %1133 = vmatpush1.msra.mxu0 0.0
    %1134 = vmatprep.subr.mxu0 0.0
    %1135 = vmatpush1.msra.mxu0 0.0
    %1136 = vmatprep.subr.mxu0 0.0
    %1137 = vmatpush1.msra.mxu0 0.0
    %1138 = vmatprep.subr.mxu0 0.0
    %1139 = vmatpush1.msra.mxu0 0.0
    %1140 = vmatprep.subr.mxu0 0.0
    %1141 = vmatpush1.msra.mxu0 0.0
    %1142 = vmatprep.subr.mxu0 0.0
    %1143 = vmatpush1.msra.mxu0 0.0
    %1144 = vmatprep.subr.mxu0 0.0
    %1145 = vmatpush1.msra.mxu0 0.0
    %1146 = vmatprep.subr.mxu0 0.0
    %1147 = vmatpush1.msra.mxu0 0.0
    %1148 = vmatprep.subr.mxu0 0.0
    %1149 = vmatpush1.msra.mxu0 0.0
    %1150 = vmatprep.mubr.f32.mxu0 0.0
    %1151 = vmatmul.mubr.f32.gmra.mrb[0].mxu0 %v1084
    %v1152 = vpop.f32.mrb[0].mxu0
    %v1153 = vadd.f32 0.0, %v1152
    %v1154 = vpop.f32.mrb[0].mxu0
    %1155 = vdwg.mxu0
    %v1157 = vsel %vm43, %v1080, 0
    %1159 = vmatprep.subr.mxu0 0.0
    %1160 = vmatpush1.msra.mxu0 %v33
    %1161 = vmatprep.subr.mxu0 0.0
    %1162 = vmatpush1.msra.mxu0 %v34
    %1163 = vmatprep.subr.mxu0 0.0
    %1164 = vmatpush1.msra.mxu0 %v35
    %1165 = vmatprep.subr.mxu0 0.0
    %1166 = vmatpush1.msra.mxu0 %v36
    %1167 = vmatprep.subr.mxu0 0.0
    %1168 = vmatpush1.msra.mxu0 0.0
    %1169 = vmatprep.subr.mxu0 0.0
    %1170 = vmatpush1.msra.mxu0 0.0
    %1171 = vmatprep.subr.mxu0 0.0
    %1172 = vmatpush1.msra.mxu0 0.0
    %1173 = vmatprep.subr.mxu0 0.0
    %1174 = vmatpush1.msra.mxu0 0.0
    %1175 = vmatprep.subr.mxu0 0.0
    %1176 = vmatpush1.msra.mxu0 0.0
    %1177 = vmatprep.subr.mxu0 0.0
    %1178 = vmatpush1.msra.mxu0 0.0
    %1179 = vmatprep.subr.mxu0 0.0
    %1180 = vmatpush1.msra.mxu0 0.0
    %1181 = vmatprep.subr.mxu0 0.0
    %1182 = vmatpush1.msra.mxu0 0.0
    %1183 = vmatprep.subr.mxu0 0.0
    %1184 = vmatpush1.msra.mxu0 0.0
    %1185 = vmatprep.subr.mxu0 0.0
    %1186 = vmatpush1.msra.mxu0 0.0
    %1187 = vmatprep.subr.mxu0 0.0
    %1188 = vmatpush1.msra.mxu0 0.0
    %1189 = vmatprep.subr.mxu0 0.0
    %1190 = vmatpush1.msra.mxu0 0.0
    %1191 = vmatprep.subr.mxu0 0.0
    %1192 = vmatpush1.msra.mxu0 0.0
    %1193 = vmatprep.subr.mxu0 0.0
    %1194 = vmatpush1.msra.mxu0 0.0
    %1195 = vmatprep.subr.mxu0 0.0
    %1196 = vmatpush1.msra.mxu0 0.0
    %1197 = vmatprep.subr.mxu0 0.0
    %1198 = vmatpush1.msra.mxu0 0.0
    %1199 = vmatprep.subr.mxu0 0.0
    %1200 = vmatpush1.msra.mxu0 0.0
    %1201 = vmatprep.subr.mxu0 0.0
    %1202 = vmatpush1.msra.mxu0 0.0
    %1203 = vmatprep.subr.mxu0 0.0
    %1204 = vmatpush1.msra.mxu0 0.0
    %1205 = vmatprep.subr.mxu0 0.0
    %1206 = vmatpush1.msra.mxu0 0.0
    %1207 = vmatprep.subr.mxu0 0.0
    %1208 = vmatpush1.msra.mxu0 0.0
    %1209 = vmatprep.subr.mxu0 0.0
    %1210 = vmatpush1.msra.mxu0 0.0
    %1211 = vmatprep.subr.mxu0 0.0
    %1212 = vmatpush1.msra.mxu0 0.0
    %1213 = vmatprep.subr.mxu0 0.0
    %1214 = vmatpush1.msra.mxu0 0.0
    %1215 = vmatprep.subr.mxu0 0.0
    %1216 = vmatpush1.msra.mxu0 0.0
    %1217 = vmatprep.subr.mxu0 0.0
    %1218 = vmatpush1.msra.mxu0 0.0
    %1219 = vmatprep.subr.mxu0 0.0
    %1220 = vmatpush1.msra.mxu0 0.0
    %1221 = vmatprep.subr.mxu0 0.0
    %1222 = vmatpush1.msra.mxu0 0.0
    %1223 = vmatprep.mubr.f32.mxu0 0.0
    %1224 = vmatmul.mubr.f32.gmra.mrb[0].mxu0 %v1157
    %v1225 = vpop.f32.mrb[0].mxu0
    %v1226 = vadd.f32 %v1153, %v1225
    %v1227 = vpop.f32.mrb[0].mxu0
    %1228 = vdwg.mxu0
    %v1229 = vadd.f32 %v1226, %v193
    %v1230 = vmul.f32 %v1229, %v31
    %v1231 = vtanh.pop %v1230
    %v1232 = vmul.f32 %v1231, %v31
    %v1233 = vadd.f32 %v1232, %v32
    %v1234 = vmul.f32 %v1233, %v729
    %1236 = vrot.lane.b32.xlu0 %v1233, 64
    %v1237 = vpop.permute.xlu0 %1236
    %v1239 = vmul.f32 %v1233, %v1237
    %1241 = vrot.lane.b32.xlu0 %v1239, 32
    %v1242 = vpop.permute.xlu0 %1241
    %v1244 = vadd.f32 %v1234, %v1242
    %v1245 = vtanh.pop %v1244
    %1247 = vrot.lane.b32.xlu0 %v1245, 64
    %v1248 = vpop.permute.xlu0 %1247
    %v1250 = vmul.f32 %v1233, %v1248
    %1252 = vrot.lane.b32.xlu0 %v902, 32
    %v1253 = vpop.permute.xlu0 %1252
    %v1254 = vsel %vm43, %v1253, 0
    %1256 = vmatprep.subr.mxu0 0.0
    %1257 = vmatpush1.msra.mxu0 %v393
    %1258 = vmatprep.subr.mxu0 0.0
    %1259 = vmatpush1.msra.mxu0 %v394
    %1260 = vmatprep.subr.mxu0 0.0
    %1261 = vmatpush1.msra.mxu0 %v395
    %1262 = vmatprep.subr.mxu0 0.0
    %1263 = vmatpush1.msra.mxu0 %v396
    %1264 = vmatprep.subr.mxu0 0.0
    %1265 = vmatpush1.msra.mxu0 0.0
    %1266 = vmatprep.subr.mxu0 0.0
    %1267 = vmatpush1.msra.mxu0 0.0
    %1268 = vmatprep.subr.mxu0 0.0
    %1269 = vmatpush1.msra.mxu0 0.0
    %1270 = vmatprep.subr.mxu0 0.0
    %1271 = vmatpush1.msra.mxu0 0.0
    %1272 = vmatprep.subr.mxu0 0.0
    %1273 = vmatpush1.msra.mxu0 0.0
    %1274 = vmatprep.subr.mxu0 0.0
    %1275 = vmatpush1.msra.mxu0 0.0
    %1276 = vmatprep.subr.mxu0 0.0
    %1277 = vmatpush1.msra.mxu0 0.0
    %1278 = vmatprep.subr.mxu0 0.0
    %1279 = vmatpush1.msra.mxu0 0.0
    %1280 = vmatprep.subr.mxu0 0.0
    %1281 = vmatpush1.msra.mxu0 0.0
    %1282 = vmatprep.subr.mxu0 0.0
    %1283 = vmatpush1.msra.mxu0 0.0
    %1284 = vmatprep.subr.mxu0 0.0
    %1285 = vmatpush1.msra.mxu0 0.0
    %1286 = vmatprep.subr.mxu0 0.0
    %1287 = vmatpush1.msra.mxu0 0.0
    %1288 = vmatprep.subr.mxu0 0.0
    %1289 = vmatpush1.msra.mxu0 0.0
    %1290 = vmatprep.subr.mxu0 0.0
    %1291 = vmatpush1.msra.mxu0 0.0
    %1292 = vmatprep.subr.mxu0 0.0
    %1293 = vmatpush1.msra.mxu0 0.0
    %1294 = vmatprep.subr.mxu0 0.0
    %1295 = vmatpush1.msra.mxu0 0.0
    %1296 = vmatprep.subr.mxu0 0.0
    %1297 = vmatpush1.msra.mxu0 0.0
    %1298 = vmatprep.subr.mxu0 0.0
    %1299 = vmatpush1.msra.mxu0 0.0
    %1300 = vmatprep.subr.mxu0 0.0
    %1301 = vmatpush1.msra.mxu0 0.0
    %1302 = vmatprep.subr.mxu0 0.0
    %1303 = vmatpush1.msra.mxu0 0.0
    %1304 = vmatprep.subr.mxu0 0.0
    %1305 = vmatpush1.msra.mxu0 0.0
    %1306 = vmatprep.subr.mxu0 0.0
    %1307 = vmatpush1.msra.mxu0 0.0
    %1308 = vmatprep.subr.mxu0 0.0
    %1309 = vmatpush1.msra.mxu0 0.0
    %1310 = vmatprep.subr.mxu0 0.0
    %1311 = vmatpush1.msra.mxu0 0.0
    %1312 = vmatprep.subr.mxu0 0.0
    %1313 = vmatpush1.msra.mxu0 0.0
    %1314 = vmatprep.subr.mxu0 0.0
    %1315 = vmatpush1.msra.mxu0 0.0
    %1316 = vmatprep.subr.mxu0 0.0
    %1317 = vmatpush1.msra.mxu0 0.0
    %1318 = vmatprep.subr.mxu0 0.0
    %1319 = vmatpush1.msra.mxu0 0.0
    %1320 = vmatprep.mubr.f32.mxu0 0.0
    %1321 = vmatmul.mubr.f32.gmra.mrb[0].mxu0 %v1254
    %v1322 = vpop.f32.mrb[0].mxu0
    %v1323 = vadd.f32 0.0, %v1322
    %v1324 = vpop.f32.mrb[0].mxu0
    %1325 = vdwg.mxu0
    %1326 = vmatprep.subr.mxu0 0.0
    %1327 = vmatpush1.msra.mxu0 %v389
    %1328 = vmatprep.subr.mxu0 0.0
    %1329 = vmatpush1.msra.mxu0 %v390
    %1330 = vmatprep.subr.mxu0 0.0
    %1331 = vmatpush1.msra.mxu0 %v391
    %1332 = vmatprep.subr.mxu0 0.0
    %1333 = vmatpush1.msra.mxu0 %v392
    %1334 = vmatprep.subr.mxu0 0.0
    %1335 = vmatpush1.msra.mxu0 0.0
    %1336 = vmatprep.subr.mxu0 0.0
    %1337 = vmatpush1.msra.mxu0 0.0
    %1338 = vmatprep.subr.mxu0 0.0
    %1339 = vmatpush1.msra.mxu0 0.0
    %1340 = vmatprep.subr.mxu0 0.0
    %1341 = vmatpush1.msra.mxu0 0.0
    %1342 = vmatprep.subr.mxu0 0.0
    %1343 = vmatpush1.msra.mxu0 0.0
    %1344 = vmatprep.subr.mxu0 0.0
    %1345 = vmatpush1.msra.mxu0 0.0
    %1346 = vmatprep.subr.mxu0 0.0
    %1347 = vmatpush1.msra.mxu0 0.0
    %1348 = vmatprep.subr.mxu0 0.0
    %1349 = vmatpush1.msra.mxu0 0.0
    %1350 = vmatprep.subr.mxu0 0.0
    %1351 = vmatpush1.msra.mxu0 0.0
    %1352 = vmatprep.subr.mxu0 0.0
    %1353 = vmatpush1.msra.mxu0 0.0
    %1354 = vmatprep.subr.mxu0 0.0
    %1355 = vmatpush1.msra.mxu0 0.0
    %1356 = vmatprep.subr.mxu0 0.0
    %1357 = vmatpush1.msra.mxu0 0.0
    %1358 = vmatprep.subr.mxu0 0.0
    %1359 = vmatpush1.msra.mxu0 0.0
    %1360 = vmatprep.subr.mxu0 0.0
    %1361 = vmatpush1.msra.mxu0 0.0
    %1362 = vmatprep.subr.mxu0 0.0
    %1363 = vmatpush1.msra.mxu0 0.0
    %1364 = vmatprep.subr.mxu0 0.0
    %1365 = vmatpush1.msra.mxu0 0.0
    %1366 = vmatprep.subr.mxu0 0.0
    %1367 = vmatpush1.msra.mxu0 0.0
    %1368 = vmatprep.subr.mxu0 0.0
    %1369 = vmatpush1.msra.mxu0 0.0
    %1370 = vmatprep.subr.mxu0 0.0
    %1371 = vmatpush1.msra.mxu0 0.0
    %1372 = vmatprep.subr.mxu0 0.0
    %1373 = vmatpush1.msra.mxu0 0.0
    %1374 = vmatprep.subr.mxu0 0.0
    %1375 = vmatpush1.msra.mxu0 0.0
    %1376 = vmatprep.subr.mxu0 0.0
    %1377 = vmatpush1.msra.mxu0 0.0
    %1378 = vmatprep.subr.mxu0 0.0
    %1379 = vmatpush1.msra.mxu0 0.0
    %1380 = vmatprep.subr.mxu0 0.0
    %1381 = vmatpush1.msra.mxu0 0.0
    %1382 = vmatprep.subr.mxu0 0.0
    %1383 = vmatpush1.msra.mxu0 0.0
    %1384 = vmatprep.subr.mxu0 0.0
    %1385 = vmatpush1.msra.mxu0 0.0
    %1386 = vmatprep.subr.mxu0 0.0
    %1387 = vmatpush1.msra.mxu0 0.0
    %1388 = vmatprep.subr.mxu0 0.0
    %1389 = vmatpush1.msra.mxu0 0.0
    %1390 = vmatprep.mubr.f32.mxu0 0.0
    %1391 = vmatmul.mubr.f32.gmra.mrb[0].mxu0 %v1084
    %v1392 = vpop.f32.mrb[0].mxu0
    %v1393 = vadd.f32 %v1323, %v1392
    %v1394 = vpop.f32.mrb[0].mxu0
    %1395 = vdwg.mxu0
    %v1396 = vadd.f32 %v1393, %v541
    %v1397 = vmul.f32 %v1396, %v31
    %v1398 = vtanh.pop %v1397
    %v1399 = vmul.f32 %v1398, %v31
    %v1400 = vadd.f32 %v1399, %v32
    %v1401 = vmul.f32 %v1400, %v896
    %1403 = vrot.lane.b32.xlu0 %v1400, 64
    %v1404 = vpop.permute.xlu0 %1403
    %v1406 = vmul.f32 %v1400, %v1404
    %1408 = vrot.lane.b32.xlu0 %v1406, 32
    %v1409 = vpop.permute.xlu0 %1408
    %v1411 = vadd.f32 %v1401, %v1409
    %v1412 = vtanh.pop %v1411
    %1414 = vrot.lane.b32.xlu0 %v1412, 64
    %v1415 = vpop.permute.xlu0 %1414
    %v1417 = vmul.f32 %v1400, %v1415
    %1419 = vrot.lane.b32.xlu0 %v1078, 32
    %v1420 = vpop.permute.xlu0 %1419
    %v1421 = vsel %vm43, %v1420, 0
    %1423 = vmatprep.subr.mxu0 0.0
    %1424 = vmatpush1.msra.mxu0 %v908
    %1425 = vmatprep.subr.mxu0 0.0
    %1426 = vmatpush1.msra.mxu0 %v909
    %1427 = vmatprep.subr.mxu0 0.0
    %1428 = vmatpush1.msra.mxu0 %v910
    %1429 = vmatprep.subr.mxu0 0.0
    %1430 = vmatpush1.msra.mxu0 %v911
    %1431 = vmatprep.subr.mxu0 0.0
    %1432 = vmatpush1.msra.mxu0 0.0
    %1433 = vmatprep.subr.mxu0 0.0
    %1434 = vmatpush1.msra.mxu0 0.0
    %1435 = vmatprep.subr.mxu0 0.0
    %1436 = vmatpush1.msra.mxu0 0.0
    %1437 = vmatprep.subr.mxu0 0.0
    %1438 = vmatpush1.msra.mxu0 0.0
    %1439 = vmatprep.subr.mxu0 0.0
    %1440 = vmatpush1.msra.mxu0 0.0
    %1441 = vmatprep.subr.mxu0 0.0
    %1442 = vmatpush1.msra.mxu0 0.0
    %1443 = vmatprep.subr.mxu0 0.0
    %1444 = vmatpush1.msra.mxu0 0.0
    %1445 = vmatprep.subr.mxu0 0.0
    %1446 = vmatpush1.msra.mxu0 0.0
    %1447 = vmatprep.subr.mxu0 0.0
    %1448 = vmatpush1.msra.mxu0 0.0
    %1449 = vmatprep.subr.mxu0 0.0
    %1450 = vmatpush1.msra.mxu0 0.0
    %1451 = vmatprep.subr.mxu0 0.0
    %1452 = vmatpush1.msra.mxu0 0.0
    %1453 = vmatprep.subr.mxu0 0.0
    %1454 = vmatpush1.msra.mxu0 0.0
    %1455 = vmatprep.subr.mxu0 0.0
    %1456 = vmatpush1.msra.mxu0 0.0
    %1457 = vmatprep.subr.mxu0 0.0
    %1458 = vmatpush1.msra.mxu0 0.0
    %1459 = vmatprep.subr.mxu0 0.0
    %1460 = vmatpush1.msra.mxu0 0.0
    %1461 = vmatprep.subr.mxu0 0.0
    %1462 = vmatpush1.msra.mxu0 0.0
    %1463 = vmatprep.subr.mxu0 0.0
    %1464 = vmatpush1.msra.mxu0 0.0
    %1465 = vmatprep.subr.mxu0 0.0
    %1466 = vmatpush1.msra.mxu0 0.0
    %1467 = vmatprep.subr.mxu0 0.0
    %1468 = vmatpush1.msra.mxu0 0.0
    %1469 = vmatprep.subr.mxu0 0.0
    %1470 = vmatpush1.msra.mxu0 0.0
    %1471 = vmatprep.subr.mxu0 0.0
    %1472 = vmatpush1.msra.mxu0 0.0
    %1473 = vmatprep.subr.mxu0 0.0
    %1474 = vmatpush1.msra.mxu0 0.0
    %1475 = vmatprep.subr.mxu0 0.0
    %1476 = vmatpush1.msra.mxu0 0.0
    %1477 = vmatprep.subr.mxu0 0.0
    %1478 = vmatpush1.msra.mxu0 0.0
    %1479 = vmatprep.subr.mxu0 0.0
    %1480 = vmatpush1.msra.mxu0 0.0
    %1481 = vmatprep.subr.mxu0 0.0
    %1482 = vmatpush1.msra.mxu0 0.0
    %1483 = vmatprep.subr.mxu0 0.0
    %1484 = vmatpush1.msra.mxu0 0.0
    %1485 = vmatprep.subr.mxu0 0.0
    %1486 = vmatpush1.msra.mxu0 0.0
    %1487 = vmatprep.mubr.f32.mxu0 0.0
    %1488 = vmatmul.mubr.f32.gmra.mrb[0].mxu0 %v1421
    %v1489 = vpop.f32.mrb[0].mxu0
    %v1490 = vadd.f32 0.0, %v1489
    %v1491 = vpop.f32.mrb[0].mxu0
    %1492 = vdwg.mxu0
    %1493 = vmatprep.subr.mxu0 0.0
    %1494 = vmatpush1.msra.mxu0 %v904
    %1495 = vmatprep.subr.mxu0 0.0
    %1496 = vmatpush1.msra.mxu0 %v905
    %1497 = vmatprep.subr.mxu0 0.0
    %1498 = vmatpush1.msra.mxu0 %v906
    %1499 = vmatprep.subr.mxu0 0.0
    %1500 = vmatpush1.msra.mxu0 %v907
    %1501 = vmatprep.subr.mxu0 0.0
    %1502 = vmatpush1.msra.mxu0 0.0
    %1503 = vmatprep.subr.mxu0 0.0
    %1504 = vmatpush1.msra.mxu0 0.0
    %1505 = vmatprep.subr.mxu0 0.0
    %1506 = vmatpush1.msra.mxu0 0.0
    %1507 = vmatprep.subr.mxu0 0.0
    %1508 = vmatpush1.msra.mxu0 0.0
    %1509 = vmatprep.subr.mxu0 0.0
    %1510 = vmatpush1.msra.mxu0 0.0
    %1511 = vmatprep.subr.mxu0 0.0
    %1512 = vmatpush1.msra.mxu0 0.0
    %1513 = vmatprep.subr.mxu0 0.0
    %1514 = vmatpush1.msra.mxu0 0.0
    %1515 = vmatprep.subr.mxu0 0.0
    %1516 = vmatpush1.msra.mxu0 0.0
    %1517 = vmatprep.subr.mxu0 0.0
    %1518 = vmatpush1.msra.mxu0 0.0
    %1519 = vmatprep.subr.mxu0 0.0
    %1520 = vmatpush1.msra.mxu0 0.0
    %1521 = vmatprep.subr.mxu0 0.0
    %1522 = vmatpush1.msra.mxu0 0.0
    %1523 = vmatprep.subr.mxu0 0.0
    %1524 = vmatpush1.msra.mxu0 0.0
    %1525 = vmatprep.subr.mxu0 0.0
    %1526 = vmatpush1.msra.mxu0 0.0
    %1527 = vmatprep.subr.mxu0 0.0
    %1528 = vmatpush1.msra.mxu0 0.0
    %1529 = vmatprep.subr.mxu0 0.0
    %1530 = vmatpush1.msra.mxu0 0.0
    %1531 = vmatprep.subr.mxu0 0.0
    %1532 = vmatpush1.msra.mxu0 0.0
    %1533 = vmatprep.subr.mxu0 0.0
    %1534 = vmatpush1.msra.mxu0 0.0
    %1535 = vmatprep.subr.mxu0 0.0
    %1536 = vmatpush1.msra.mxu0 0.0
    %1537 = vmatprep.subr.mxu0 0.0
    %1538 = vmatpush1.msra.mxu0 0.0
    %1539 = vmatprep.subr.mxu0 0.0
    %1540 = vmatpush1.msra.mxu0 0.0
    %1541 = vmatprep.subr.mxu0 0.0
    %1542 = vmatpush1.msra.mxu0 0.0
    %1543 = vmatprep.subr.mxu0 0.0
    %1544 = vmatpush1.msra.mxu0 0.0
    %1545 = vmatprep.subr.mxu0 0.0
    %1546 = vmatpush1.msra.mxu0 0.0
    %1547 = vmatprep.subr.mxu0 0.0
    %1548 = vmatpush1.msra.mxu0 0.0
    %1549 = vmatprep.subr.mxu0 0.0
    %1550 = vmatpush1.msra.mxu0 0.0
    %1551 = vmatprep.subr.mxu0 0.0
    %1552 = vmatpush1.msra.mxu0 0.0
    %1553 = vmatprep.subr.mxu0 0.0
    %1554 = vmatpush1.msra.mxu0 0.0
    %1555 = vmatprep.subr.mxu0 0.0
    %1556 = vmatpush1.msra.mxu0 0.0
    %1557 = vmatprep.mubr.f32.mxu0 0.0
    %1558 = vmatmul.mubr.f32.gmra.mrb[0].mxu0 %v1254
    %v1559 = vpop.f32.mrb[0].mxu0
    %v1560 = vadd.f32 %v1490, %v1559
    %v1561 = vpop.f32.mrb[0].mxu0
    %1562 = vdwg.mxu0
    %v1563 = vadd.f32 %v1560, %v1056
    %v1564 = vmul.f32 %v1563, %v31
    %v1565 = vtanh.pop %v1564
    %v1566 = vmul.f32 %v1565, %v31
    %v1567 = vadd.f32 %v1566, %v32
    %v1568 = vmul.f32 %v1567, %v1072
    %1570 = vrot.lane.b32.xlu0 %v1567, 64
    %v1571 = vpop.permute.xlu0 %1570
    %v1573 = vmul.f32 %v1567, %v1571
    %1575 = vrot.lane.b32.xlu0 %v1573, 32
    %v1576 = vpop.permute.xlu0 %1575
    %v1578 = vadd.f32 %v1568, %v1576
    %v1579 = vtanh.pop %v1578
    %1581 = vrot.lane.b32.xlu0 %v1579, 64
    %v1582 = vpop.permute.xlu0 %1581
    %v1584 = vmul.f32 %v1567, %v1582
    %s1585 = scalar_lea.vmem [#allocation2], 216
    %v1586 = vld [vmem:[%s1585] sm:$0xff]
    %v1587 = vld [vmem:[%s1585 + $0x8] sm:$0xff]
    %v1588 = vld [vmem:[%s1585 + $0x10] sm:$0xff]
    %v1589 = vld [vmem:[%s1585 + $0x18] sm:$0xff]
    %v1590 = vld [vmem:[%s1585 + $0x20] sm:$0xff]
    %v1591 = vld [vmem:[%s1585 + $0x28] sm:$0xff]
    %v1592 = vld [vmem:[%s1585 + $0x30] sm:$0xff]
    %v1593 = vld [vmem:[%s1585 + $0x38] sm:$0xff]
    %v1594 = vld [vmem:[%s1585 + $0x40] sm:$0x1]
    %1595 = vmatprep.subr.mxu0 0.0
    %1596 = vmatpush1.msra.mxu0 %v1590
    %1597 = vmatprep.subr.mxu0 0.0
    %1598 = vmatpush1.msra.mxu0 %v1591
    %1599 = vmatprep.subr.mxu0 0.0
    %1600 = vmatpush1.msra.mxu0 %v1592
    %1601 = vmatprep.subr.mxu0 0.0
    %1602 = vmatpush1.msra.mxu0 %v1593
    %1603 = vmatprep.subr.mxu0 0.0
    %1604 = vmatpush1.msra.mxu0 0.0
    %1605 = vmatprep.subr.mxu0 0.0
    %1606 = vmatpush1.msra.mxu0 0.0
    %1607 = vmatprep.subr.mxu0 0.0
    %1608 = vmatpush1.msra.mxu0 0.0
    %1609 = vmatprep.subr.mxu0 0.0
    %1610 = vmatpush1.msra.mxu0 0.0
    %1611 = vmatprep.subr.mxu0 0.0
    %1612 = vmatpush1.msra.mxu0 0.0
    %1613 = vmatprep.subr.mxu0 0.0
    %1614 = vmatpush1.msra.mxu0 0.0
    %1615 = vmatprep.subr.mxu0 0.0
    %1616 = vmatpush1.msra.mxu0 0.0
    %1617 = vmatprep.subr.mxu0 0.0
    %1618 = vmatpush1.msra.mxu0 0.0
    %1619 = vmatprep.subr.mxu0 0.0
    %1620 = vmatpush1.msra.mxu0 0.0
    %1621 = vmatprep.subr.mxu0 0.0
    %1622 = vmatpush1.msra.mxu0 0.0
    %1623 = vmatprep.subr.mxu0 0.0
    %1624 = vmatpush1.msra.mxu0 0.0
    %1625 = vmatprep.subr.mxu0 0.0
    %1626 = vmatpush1.msra.mxu0 0.0
    %1627 = vmatprep.subr.mxu0 0.0
    %1628 = vmatpush1.msra.mxu0 0.0
    %1629 = vmatprep.subr.mxu0 0.0
    %1630 = vmatpush1.msra.mxu0 0.0
    %1631 = vmatprep.subr.mxu0 0.0
    %1632 = vmatpush1.msra.mxu0 0.0
    %1633 = vmatprep.subr.mxu0 0.0
    %1634 = vmatpush1.msra.mxu0 0.0
    %1635 = vmatprep.subr.mxu0 0.0
    %1636 = vmatpush1.msra.mxu0 0.0
    %1637 = vmatprep.subr.mxu0 0.0
    %1638 = vmatpush1.msra.mxu0 0.0
    %1639 = vmatprep.subr.mxu0 0.0
    %1640 = vmatpush1.msra.mxu0 0.0
    %1641 = vmatprep.subr.mxu0 0.0
    %1642 = vmatpush1.msra.mxu0 0.0
    %1643 = vmatprep.subr.mxu0 0.0
    %1644 = vmatpush1.msra.mxu0 0.0
    %1645 = vmatprep.subr.mxu0 0.0
    %1646 = vmatpush1.msra.mxu0 0.0
    %1647 = vmatprep.subr.mxu0 0.0
    %1648 = vmatpush1.msra.mxu0 0.0
    %1649 = vmatprep.subr.mxu0 0.0
    %1650 = vmatpush1.msra.mxu0 0.0
    %1651 = vmatprep.subr.mxu0 0.0
    %1652 = vmatpush1.msra.mxu0 0.0
    %1653 = vmatprep.subr.mxu0 0.0
    %1654 = vmatpush1.msra.mxu0 0.0
    %1655 = vmatprep.subr.mxu0 0.0
    %1656 = vmatpush1.msra.mxu0 0.0
    %1657 = vmatprep.subr.mxu0 0.0
    %1658 = vmatpush1.msra.mxu0 0.0
    %1659 = vmatprep.mubr.f32.mxu0 0.0
    %1660 = vmatmul.mubr.f32.gmra.mrb[0].mxu0 %v45
    %v1661 = vpop.f32.mrb[0].mxu0
    %v1662 = vadd.f32 0.0, %v1661
    %v1663 = vpop.f32.mrb[0].mxu0
    %1664 = vdwg.mxu0
    %1665 = vmatprep.subr.mxu0 0.0
    %1666 = vmatpush1.msra.mxu0 %v1586
    %1667 = vmatprep.subr.mxu0 0.0
    %1668 = vmatpush1.msra.mxu0 %v1587
    %1669 = vmatprep.subr.mxu0 0.0
    %1670 = vmatpush1.msra.mxu0 %v1588
    %1671 = vmatprep.subr.mxu0 0.0
    %1672 = vmatpush1.msra.mxu0 %v1589
    %1673 = vmatprep.subr.mxu0 0.0
    %1674 = vmatpush1.msra.mxu0 0.0
    %1675 = vmatprep.subr.mxu0 0.0
    %1676 = vmatpush1.msra.mxu0 0.0
    %1677 = vmatprep.subr.mxu0 0.0
    %1678 = vmatpush1.msra.mxu0 0.0
    %1679 = vmatprep.subr.mxu0 0.0
    %1680 = vmatpush1.msra.mxu0 0.0
    %1681 = vmatprep.subr.mxu0 0.0
    %1682 = vmatpush1.msra.mxu0 0.0
    %1683 = vmatprep.subr.mxu0 0.0
    %1684 = vmatpush1.msra.mxu0 0.0
    %1685 = vmatprep.subr.mxu0 0.0
    %1686 = vmatpush1.msra.mxu0 0.0
    %1687 = vmatprep.subr.mxu0 0.0
    %1688 = vmatpush1.msra.mxu0 0.0
    %1689 = vmatprep.subr.mxu0 0.0
    %1690 = vmatpush1.msra.mxu0 0.0
    %1691 = vmatprep.subr.mxu0 0.0
    %1692 = vmatpush1.msra.mxu0 0.0
    %1693 = vmatprep.subr.mxu0 0.0
    %1694 = vmatpush1.msra.mxu0 0.0
    %1695 = vmatprep.subr.mxu0 0.0
    %1696 = vmatpush1.msra.mxu0 0.0
    %1697 = vmatprep.subr.mxu0 0.0
    %1698 = vmatpush1.msra.mxu0 0.0
    %1699 = vmatprep.subr.mxu0 0.0
    %1700 = vmatpush1.msra.mxu0 0.0
    %1701 = vmatprep.subr.mxu0 0.0
    %1702 = vmatpush1.msra.mxu0 0.0
    %1703 = vmatprep.subr.mxu0 0.0
    %1704 = vmatpush1.msra.mxu0 0.0
    %1705 = vmatprep.subr.mxu0 0.0
    %1706 = vmatpush1.msra.mxu0 0.0
    %1707 = vmatprep.subr.mxu0 0.0
    %1708 = vmatpush1.msra.mxu0 0.0
    %1709 = vmatprep.subr.mxu0 0.0
    %1710 = vmatpush1.msra.mxu0 0.0
    %1711 = vmatprep.subr.mxu0 0.0
    %1712 = vmatpush1.msra.mxu0 0.0
    %1713 = vmatprep.subr.mxu0 0.0
    %1714 = vmatpush1.msra.mxu0 0.0
    %1715 = vmatprep.subr.mxu0 0.0
    %1716 = vmatpush1.msra.mxu0 0.0
    %1717 = vmatprep.subr.mxu0 0.0
    %1718 = vmatpush1.msra.mxu0 0.0
    %1719 = vmatprep.subr.mxu0 0.0
    %1720 = vmatpush1.msra.mxu0 0.0
    %1721 = vmatprep.subr.mxu0 0.0
    %1722 = vmatpush1.msra.mxu0 0.0
    %1723 = vmatprep.subr.mxu0 0.0
    %1724 = vmatpush1.msra.mxu0 0.0
    %1725 = vmatprep.subr.mxu0 0.0
    %1726 = vmatpush1.msra.mxu0 0.0
    %1727 = vmatprep.subr.mxu0 0.0
    %1728 = vmatpush1.msra.mxu0 0.0
    %1729 = vmatprep.mubr.f32.mxu0 0.0
    %1730 = vmatmul.mubr.f32.gmra.mrb[0].mxu0 %v1421
    %v1731 = vpop.f32.mrb[0].mxu0
    %v1732 = vadd.f32 %v1662, %v1731
    %v1733 = vpop.f32.mrb[0].mxu0
    %1734 = vdwg.mxu0
    %v1735 = vlaneseq
    %v1736 = vshrl.u32 %v1735, 7
    %v1737 = vsub.s32 0, %v1736
    %v1738 = vrot.slane %v1594, %v1737
    %v1739 = vadd.f32 %v1732, %v1738
    %v1740 = vmul.f32 %v1739, %v31
    %v1741 = vtanh.pop %v1740
    %v1742 = vmul.f32 %v1741, %v31
    %v1743 = vadd.f32 %v1742, %v32
    %v1744 = vmul.f32 %v1743, 0.0
    %1746 = vrot.lane.b32.xlu0 %v1743, 64
    %v1747 = vpop.permute.xlu0 %1746
    %v1749 = vmul.f32 %v1743, %v1747
    %1751 = vrot.lane.b32.xlu0 %v1749, 32
    %v1752 = vpop.permute.xlu0 %1751
    %v1754 = vadd.f32 %v1744, %v1752
    %v1755 = vtanh.pop %v1754
    %1757 = vrot.lane.b32.xlu0 %v1755, 64
    %v1758 = vpop.permute.xlu0 %1757
    %v1760 = vmul.f32 %v1743, %v1758
    %s1761 = scalar_lea.vmem %s0, 16
    %v1762 = vld [vmem:[%s1761] sm:$0xf]
    %1764 = vrot.lane.b32.xlu0 %v1250, 32
    %v1765 = vpop.permute.xlu0 %1764
    %v1766 = vsel %vm43, %v1765, 0
    %1768 = vmatprep.subr.mxu0 0.0
    %1769 = vmatpush1.msra.mxu0 %v37
    %1770 = vmatprep.subr.mxu0 0.0
    %1771 = vmatpush1.msra.mxu0 %v38
    %1772 = vmatprep.subr.mxu0 0.0
    %1773 = vmatpush1.msra.mxu0 %v39
    %1774 = vmatprep.subr.mxu0 0.0
    %1775 = vmatpush1.msra.mxu0 %v40
    %1776 = vmatprep.subr.mxu0 0.0
    %1777 = vmatpush1.msra.mxu0 0.0
    %1778 = vmatprep.subr.mxu0 0.0
    %1779 = vmatpush1.msra.mxu0 0.0
    %1780 = vmatprep.subr.mxu0 0.0
    %1781 = vmatpush1.msra.mxu0 0.0
    %1782 = vmatprep.subr.mxu0 0.0
    %1783 = vmatpush1.msra.mxu0 0.0
    %1784 = vmatprep.subr.mxu0 0.0
    %1785 = vmatpush1.msra.mxu0 0.0
    %1786 = vmatprep.subr.mxu0 0.0
    %1787 = vmatpush1.msra.mxu0 0.0
    %1788 = vmatprep.subr.mxu0 0.0
    %1789 = vmatpush1.msra.mxu0 0.0
    %1790 = vmatprep.subr.mxu0 0.0
    %1791 = vmatpush1.msra.mxu0 0.0
    %1792 = vmatprep.subr.mxu0 0.0
    %1793 = vmatpush1.msra.mxu0 0.0
    %1794 = vmatprep.subr.mxu0 0.0
    %1795 = vmatpush1.msra.mxu0 0.0
    %1796 = vmatprep.subr.mxu0 0.0
    %1797 = vmatpush1.msra.mxu0 0.0
    %1798 = vmatprep.subr.mxu0 0.0
    %1799 = vmatpush1.msra.mxu0 0.0
    %1800 = vmatprep.subr.mxu0 0.0
    %1801 = vmatpush1.msra.mxu0 0.0
    %1802 = vmatprep.subr.mxu0 0.0
    %1803 = vmatpush1.msra.mxu0 0.0
    %1804 = vmatprep.subr.mxu0 0.0
    %1805 = vmatpush1.msra.mxu0 0.0
    %1806 = vmatprep.subr.mxu0 0.0
    %1807 = vmatpush1.msra.mxu0 0.0
    %1808 = vmatprep.subr.mxu0 0.0
    %1809 = vmatpush1.msra.mxu0 0.0
    %1810 = vmatprep.subr.mxu0 0.0
    %1811 = vmatpush1.msra.mxu0 0.0
    %1812 = vmatprep.subr.mxu0 0.0
    %1813 = vmatpush1.msra.mxu0 0.0
    %1814 = vmatprep.subr.mxu0 0.0
    %1815 = vmatpush1.msra.mxu0 0.0
    %1816 = vmatprep.subr.mxu0 0.0
    %1817 = vmatpush1.msra.mxu0 0.0
    %1818 = vmatprep.subr.mxu0 0.0
    %1819 = vmatpush1.msra.mxu0 0.0
    %1820 = vmatprep.subr.mxu0 0.0
    %1821 = vmatpush1.msra.mxu0 0.0
    %1822 = vmatprep.subr.mxu0 0.0
    %1823 = vmatpush1.msra.mxu0 0.0
    %1824 = vmatprep.subr.mxu0 0.0
    %1825 = vmatpush1.msra.mxu0 0.0
    %1826 = vmatprep.subr.mxu0 0.0
    %1827 = vmatpush1.msra.mxu0 0.0
    %1828 = vmatprep.subr.mxu0 0.0
    %1829 = vmatpush1.msra.mxu0 0.0
    %1830 = vmatprep.subr.mxu0 0.0
    %1831 = vmatpush1.msra.mxu0 0.0
    %1832 = vmatprep.mubr.f32.mxu0 0.0
    %1833 = vmatmul.mubr.f32.gmra.mrb[0].mxu0 %v1766
    %v1834 = vpop.f32.mrb[0].mxu0
    %v1835 = vadd.f32 0.0, %v1834
    %v1836 = vpop.f32.mrb[0].mxu0
    %1837 = vdwg.mxu0
    %v1839 = vsel %vm43, %v1762, 0
    %1841 = vmatprep.subr.mxu0 0.0
    %1842 = vmatpush1.msra.mxu0 %v33
    %1843 = vmatprep.subr.mxu0 0.0
    %1844 = vmatpush1.msra.mxu0 %v34
    %1845 = vmatprep.subr.mxu0 0.0
    %1846 = vmatpush1.msra.mxu0 %v35
    %1847 = vmatprep.subr.mxu0 0.0
    %1848 = vmatpush1.msra.mxu0 %v36
    %1849 = vmatprep.subr.mxu0 0.0
    %1850 = vmatpush1.msra.mxu0 0.0
    %1851 = vmatprep.subr.mxu0 0.0
    %1852 = vmatpush1.msra.mxu0 0.0
    %1853 = vmatprep.subr.mxu0 0.0
    %1854 = vmatpush1.msra.mxu0 0.0
    %1855 = vmatprep.subr.mxu0 0.0
    %1856 = vmatpush1.msra.mxu0 0.0
    %1857 = vmatprep.subr.mxu0 0.0
    %1858 = vmatpush1.msra.mxu0 0.0
    %1859 = vmatprep.subr.mxu0 0.0
    %1860 = vmatpush1.msra.mxu0 0.0
    %1861 = vmatprep.subr.mxu0 0.0
    %1862 = vmatpush1.msra.mxu0 0.0
    %1863 = vmatprep.subr.mxu0 0.0
    %1864 = vmatpush1.msra.mxu0 0.0
    %1865 = vmatprep.subr.mxu0 0.0
    %1866 = vmatpush1.msra.mxu0 0.0
    %1867 = vmatprep.subr.mxu0 0.0
    %1868 = vmatpush1.msra.mxu0 0.0
    %1869 = vmatprep.subr.mxu0 0.0
    %1870 = vmatpush1.msra.mxu0 0.0
    %1871 = vmatprep.subr.mxu0 0.0
    %1872 = vmatpush1.msra.mxu0 0.0
    %1873 = vmatprep.subr.mxu0 0.0
    %1874 = vmatpush1.msra.mxu0 0.0
    %1875 = vmatprep.subr.mxu0 0.0
    %1876 = vmatpush1.msra.mxu0 0.0
    %1877 = vmatprep.subr.mxu0 0.0
    %1878 = vmatpush1.msra.mxu0 0.0
    %1879 = vmatprep.subr.mxu0 0.0
    %1880 = vmatpush1.msra.mxu0 0.0
    %1881 = vmatprep.subr.mxu0 0.0
    %1882 = vmatpush1.msra.mxu0 0.0
    %1883 = vmatprep.subr.mxu0 0.0
    %1884 = vmatpush1.msra.mxu0 0.0
    %1885 = vmatprep.subr.mxu0 0.0
    %1886 = vmatpush1.msra.mxu0 0.0
    %1887 = vmatprep.subr.mxu0 0.0
    %1888 = vmatpush1.msra.mxu0 0.0
    %1889 = vmatprep.subr.mxu0 0.0
    %1890 = vmatpush1.msra.mxu0 0.0
    %1891 = vmatprep.subr.mxu0 0.0
    %1892 = vmatpush1.msra.mxu0 0.0
    %1893 = vmatprep.subr.mxu0 0.0
    %1894 = vmatpush1.msra.mxu0 0.0
    %1895 = vmatprep.subr.mxu0 0.0
    %1896 = vmatpush1.msra.mxu0 0.0
    %1897 = vmatprep.subr.mxu0 0.0
    %1898 = vmatpush1.msra.mxu0 0.0
    %1899 = vmatprep.subr.mxu0 0.0
    %1900 = vmatpush1.msra.mxu0 0.0
    %1901 = vmatprep.subr.mxu0 0.0
    %1902 = vmatpush1.msra.mxu0 0.0
    %1903 = vmatprep.subr.mxu0 0.0
    %1904 = vmatpush1.msra.mxu0 0.0
    %1905 = vmatprep.mubr.f32.mxu0 0.0
    %1906 = vmatmul.mubr.f32.gmra.mrb[0].mxu0 %v1839
    %v1907 = vpop.f32.mrb[0].mxu0
    %v1908 = vadd.f32 %v1835, %v1907
    %v1909 = vpop.f32.mrb[0].mxu0
    %1910 = vdwg.mxu0
    %v1911 = vadd.f32 %v1908, %v193
    %v1912 = vmul.f32 %v1911, %v31
    %v1913 = vtanh.pop %v1912
    %v1914 = vmul.f32 %v1913, %v31
    %v1915 = vadd.f32 %v1914, %v32
    %v1916 = vmul.f32 %v1915, %v1244
    %1918 = vrot.lane.b32.xlu0 %v1915, 64
    %v1919 = vpop.permute.xlu0 %1918
    %v1921 = vmul.f32 %v1915, %v1919
    %1923 = vrot.lane.b32.xlu0 %v1921, 32
    %v1924 = vpop.permute.xlu0 %1923
    %v1926 = vadd.f32 %v1916, %v1924
    %v1927 = vtanh.pop %v1926
    %1929 = vrot.lane.b32.xlu0 %v1927, 64
    %v1930 = vpop.permute.xlu0 %1929
    %v1932 = vmul.f32 %v1915, %v1930
    %1934 = vrot.lane.b32.xlu0 %v1417, 32
    %v1935 = vpop.permute.xlu0 %1934
    %v1936 = vsel %vm43, %v1935, 0
    %1938 = vmatprep.subr.mxu0 0.0
    %1939 = vmatpush1.msra.mxu0 %v393
    %1940 = vmatprep.subr.mxu0 0.0
    %1941 = vmatpush1.msra.mxu0 %v394
    %1942 = vmatprep.subr.mxu0 0.0
    %1943 = vmatpush1.msra.mxu0 %v395
    %1944 = vmatprep.subr.mxu0 0.0
    %1945 = vmatpush1.msra.mxu0 %v396
    %1946 = vmatprep.subr.mxu0 0.0
    %1947 = vmatpush1.msra.mxu0 0.0
    %1948 = vmatprep.subr.mxu0 0.0
    %1949 = vmatpush1.msra.mxu0 0.0
    %1950 = vmatprep.subr.mxu0 0.0
    %1951 = vmatpush1.msra.mxu0 0.0
    %1952 = vmatprep.subr.mxu0 0.0
    %1953 = vmatpush1.msra.mxu0 0.0
    %1954 = vmatprep.subr.mxu0 0.0
    %1955 = vmatpush1.msra.mxu0 0.0
    %1956 = vmatprep.subr.mxu0 0.0
    %1957 = vmatpush1.msra.mxu0 0.0
    %1958 = vmatprep.subr.mxu0 0.0
    %1959 = vmatpush1.msra.mxu0 0.0
    %1960 = vmatprep.subr.mxu0 0.0
    %1961 = vmatpush1.msra.mxu0 0.0
    %1962 = vmatprep.subr.mxu0 0.0
    %1963 = vmatpush1.msra.mxu0 0.0
    %1964 = vmatprep.subr.mxu0 0.0
    %1965 = vmatpush1.msra.mxu0 0.0
    %1966 = vmatprep.subr.mxu0 0.0
    %1967 = vmatpush1.msra.mxu0 0.0
    %1968 = vmatprep.subr.mxu0 0.0
    %1969 = vmatpush1.msra.mxu0 0.0
    %1970 = vmatprep.subr.mxu0 0.0
    %1971 = vmatpush1.msra.mxu0 0.0
    %1972 = vmatprep.subr.mxu0 0.0
    %1973 = vmatpush1.msra.mxu0 0.0
    %1974 = vmatprep.subr.mxu0 0.0
    %1975 = vmatpush1.msra.mxu0 0.0
    %1976 = vmatprep.subr.mxu0 0.0
    %1977 = vmatpush1.msra.mxu0 0.0
    %1978 = vmatprep.subr.mxu0 0.0
    %1979 = vmatpush1.msra.mxu0 0.0
    %1980 = vmatprep.subr.mxu0 0.0
    %1981 = vmatpush1.msra.mxu0 0.0
    %1982 = vmatprep.subr.mxu0 0.0
    %1983 = vmatpush1.msra.mxu0 0.0
    %1984 = vmatprep.subr.mxu0 0.0
    %1985 = vmatpush1.msra.mxu0 0.0
    %1986 = vmatprep.subr.mxu0 0.0
    %1987 = vmatpush1.msra.mxu0 0.0
    %1988 = vmatprep.subr.mxu0 0.0
    %1989 = vmatpush1.msra.mxu0 0.0
    %1990 = vmatprep.subr.mxu0 0.0
    %1991 = vmatpush1.msra.mxu0 0.0
    %1992 = vmatprep.subr.mxu0 0.0
    %1993 = vmatpush1.msra.mxu0 0.0
    %1994 = vmatprep.subr.mxu0 0.0
    %1995 = vmatpush1.msra.mxu0 0.0
    %1996 = vmatprep.subr.mxu0 0.0
    %1997 = vmatpush1.msra.mxu0 0.0
    %1998 = vmatprep.subr.mxu0 0.0
    %1999 = vmatpush1.msra.mxu0 0.0
    %2000 = vmatprep.subr.mxu0 0.0
    %2001 = vmatpush1.msra.mxu0 0.0
    %2002 = vmatprep.mubr.f32.mxu0 0.0
    %2003 = vmatmul.mubr.f32.gmra.mrb[0].mxu0 %v1936
    %v2004 = vpop.f32.mrb[0].mxu0
    %v2005 = vadd.f32 0.0, %v2004
    %v2006 = vpop.f32.mrb[0].mxu0
    %2007 = vdwg.mxu0
    %2008 = vmatprep.subr.mxu0 0.0
    %2009 = vmatpush1.msra.mxu0 %v389
    %2010 = vmatprep.subr.mxu0 0.0
    %2011 = vmatpush1.msra.mxu0 %v390
    %2012 = vmatprep.subr.mxu0 0.0
    %2013 = vmatpush1.msra.mxu0 %v391
    %2014 = vmatprep.subr.mxu0 0.0
    %2015 = vmatpush1.msra.mxu0 %v392
    %2016 = vmatprep.subr.mxu0 0.0
    %2017 = vmatpush1.msra.mxu0 0.0
    %2018 = vmatprep.subr.mxu0 0.0
    %2019 = vmatpush1.msra.mxu0 0.0
    %2020 = vmatprep.subr.mxu0 0.0
    %2021 = vmatpush1.msra.mxu0 0.0
    %2022 = vmatprep.subr.mxu0 0.0
    %2023 = vmatpush1.msra.mxu0 0.0
    %2024 = vmatprep.subr.mxu0 0.0
    %2025 = vmatpush1.msra.mxu0 0.0
    %2026 = vmatprep.subr.mxu0 0.0
    %2027 = vmatpush1.msra.mxu0 0.0
    %2028 = vmatprep.subr.mxu0 0.0
    %2029 = vmatpush1.msra.mxu0 0.0
    %2030 = vmatprep.subr.mxu0 0.0
    %2031 = vmatpush1.msra.mxu0 0.0
    %2032 = vmatprep.subr.mxu0 0.0
    %2033 = vmatpush1.msra.mxu0 0.0
    %2034 = vmatprep.subr.mxu0 0.0
    %2035 = vmatpush1.msra.mxu0 0.0
    %2036 = vmatprep.subr.mxu0 0.0
    %2037 = vmatpush1.msra.mxu0 0.0
    %2038 = vmatprep.subr.mxu0 0.0
    %2039 = vmatpush1.msra.mxu0 0.0
    %2040 = vmatprep.subr.mxu0 0.0
    %2041 = vmatpush1.msra.mxu0 0.0
    %2042 = vmatprep.subr.mxu0 0.0
    %2043 = vmatpush1.msra.mxu0 0.0
    %2044 = vmatprep.subr.mxu0 0.0
    %2045 = vmatpush1.msra.mxu0 0.0
    %2046 = vmatprep.subr.mxu0 0.0
    %2047 = vmatpush1.msra.mxu0 0.0
    %2048 = vmatprep.subr.mxu0 0.0
    %2049 = vmatpush1.msra.mxu0 0.0
    %2050 = vmatprep.subr.mxu0 0.0
    %2051 = vmatpush1.msra.mxu0 0.0
    %2052 = vmatprep.subr.mxu0 0.0
    %2053 = vmatpush1.msra.mxu0 0.0
    %2054 = vmatprep.subr.mxu0 0.0
    %2055 = vmatpush1.msra.mxu0 0.0
    %2056 = vmatprep.subr.mxu0 0.0
    %2057 = vmatpush1.msra.mxu0 0.0
    %2058 = vmatprep.subr.mxu0 0.0
    %2059 = vmatpush1.msra.mxu0 0.0
    %2060 = vmatprep.subr.mxu0 0.0
    %2061 = vmatpush1.msra.mxu0 0.0
    %2062 = vmatprep.subr.mxu0 0.0
    %2063 = vmatpush1.msra.mxu0 0.0
    %2064 = vmatprep.subr.mxu0 0.0
    %2065 = vmatpush1.msra.mxu0 0.0
    %2066 = vmatprep.subr.mxu0 0.0
    %2067 = vmatpush1.msra.mxu0 0.0
    %2068 = vmatprep.subr.mxu0 0.0
    %2069 = vmatpush1.msra.mxu0 0.0
    %2070 = vmatprep.subr.mxu0 0.0
    %2071 = vmatpush1.msra.mxu0 0.0
    %2072 = vmatprep.mubr.f32.mxu0 0.0
    %2073 = vmatmul.mubr.f32.gmra.mrb[0].mxu0 %v1766
    %v2074 = vpop.f32.mrb[0].mxu0
    %v2075 = vadd.f32 %v2005, %v2074
    %v2076 = vpop.f32.mrb[0].mxu0
    %2077 = vdwg.mxu0
    %v2078 = vadd.f32 %v2075, %v541
    %v2079 = vmul.f32 %v2078, %v31
    %v2080 = vtanh.pop %v2079
    %v2081 = vmul.f32 %v2080, %v31
    %v2082 = vadd.f32 %v2081, %v32
    %v2083 = vmul.f32 %v2082, %v1411
    %2085 = vrot.lane.b32.xlu0 %v2082, 64
    %v2086 = vpop.permute.xlu0 %2085
    %v2088 = vmul.f32 %v2082, %v2086
    %2090 = vrot.lane.b32.xlu0 %v2088, 32
    %v2091 = vpop.permute.xlu0 %2090
    %v2093 = vadd.f32 %v2083, %v2091
    %v2094 = vtanh.pop %v2093
    %2096 = vrot.lane.b32.xlu0 %v2094, 64
    %v2097 = vpop.permute.xlu0 %2096
    %v2099 = vmul.f32 %v2082, %v2097
    %2101 = vrot.lane.b32.xlu0 %v1584, 32
    %v2102 = vpop.permute.xlu0 %2101
    %v2103 = vsel %vm43, %v2102, 0
    %2105 = vmatprep.subr.mxu0 0.0
    %2106 = vmatpush1.msra.mxu0 %v908
    %2107 = vmatprep.subr.mxu0 0.0
    %2108 = vmatpush1.msra.mxu0 %v909
    %2109 = vmatprep.subr.mxu0 0.0
    %2110 = vmatpush1.msra.mxu0 %v910
    %2111 = vmatprep.subr.mxu0 0.0
    %2112 = vmatpush1.msra.mxu0 %v911
    %2113 = vmatprep.subr.mxu0 0.0
    %2114 = vmatpush1.msra.mxu0 0.0
    %2115 = vmatprep.subr.mxu0 0.0
    %2116 = vmatpush1.msra.mxu0 0.0
    %2117 = vmatprep.subr.mxu0 0.0
    %2118 = vmatpush1.msra.mxu0 0.0
    %2119 = vmatprep.subr.mxu0 0.0
    %2120 = vmatpush1.msra.mxu0 0.0
    %2121 = vmatprep.subr.mxu0 0.0
    %2122 = vmatpush1.msra.mxu0 0.0
    %2123 = vmatprep.subr.mxu0 0.0
    %2124 = vmatpush1.msra.mxu0 0.0
    %2125 = vmatprep.subr.mxu0 0.0
    %2126 = vmatpush1.msra.mxu0 0.0
    %2127 = vmatprep.subr.mxu0 0.0
    %2128 = vmatpush1.msra.mxu0 0.0
    %2129 = vmatprep.subr.mxu0 0.0
    %2130 = vmatpush1.msra.mxu0 0.0
    %2131 = vmatprep.subr.mxu0 0.0
    %2132 = vmatpush1.msra.mxu0 0.0
    %2133 = vmatprep.subr.mxu0 0.0
    %2134 = vmatpush1.msra.mxu0 0.0
    %2135 = vmatprep.subr.mxu0 0.0
    %2136 = vmatpush1.msra.mxu0 0.0
    %2137 = vmatprep.subr.mxu0 0.0
    %2138 = vmatpush1.msra.mxu0 0.0
    %2139 = vmatprep.subr.mxu0 0.0
    %2140 = vmatpush1.msra.mxu0 0.0
    %2141 = vmatprep.subr.mxu0 0.0
    %2142 = vmatpush1.msra.mxu0 0.0
    %2143 = vmatprep.subr.mxu0 0.0
    %2144 = vmatpush1.msra.mxu0 0.0
    %2145 = vmatprep.subr.mxu0 0.0
    %2146 = vmatpush1.msra.mxu0 0.0
    %2147 = vmatprep.subr.mxu0 0.0
    %2148 = vmatpush1.msra.mxu0 0.0
    %2149 = vmatprep.subr.mxu0 0.0
    %2150 = vmatpush1.msra.mxu0 0.0
    %2151 = vmatprep.subr.mxu0 0.0
    %2152 = vmatpush1.msra.mxu0 0.0
    %2153 = vmatprep.subr.mxu0 0.0
    %2154 = vmatpush1.msra.mxu0 0.0
    %2155 = vmatprep.subr.mxu0 0.0
    %2156 = vmatpush1.msra.mxu0 0.0
    %2157 = vmatprep.subr.mxu0 0.0
    %2158 = vmatpush1.msra.mxu0 0.0
    %2159 = vmatprep.subr.mxu0 0.0
    %2160 = vmatpush1.msra.mxu0 0.0
    %2161 = vmatprep.subr.mxu0 0.0
    %2162 = vmatpush1.msra.mxu0 0.0
    %2163 = vmatprep.subr.mxu0 0.0
    %2164 = vmatpush1.msra.mxu0 0.0
    %2165 = vmatprep.subr.mxu0 0.0
    %2166 = vmatpush1.msra.mxu0 0.0
    %2167 = vmatprep.subr.mxu0 0.0
    %2168 = vmatpush1.msra.mxu0 0.0
    %2169 = vmatprep.mubr.f32.mxu0 0.0
    %2170 = vmatmul.mubr.f32.gmra.mrb[0].mxu0 %v2103
    %v2171 = vpop.f32.mrb[0].mxu0
    %v2172 = vadd.f32 0.0, %v2171
    %v2173 = vpop.f32.mrb[0].mxu0
    %2174 = vdwg.mxu0
    %2175 = vmatprep.subr.mxu0 0.0
    %2176 = vmatpush1.msra.mxu0 %v904
    %2177 = vmatprep.subr.mxu0 0.0
    %2178 = vmatpush1.msra.mxu0 %v905
    %2179 = vmatprep.subr.mxu0 0.0
    %2180 = vmatpush1.msra.mxu0 %v906
    %2181 = vmatprep.subr.mxu0 0.0
    %2182 = vmatpush1.msra.mxu0 %v907
    %2183 = vmatprep.subr.mxu0 0.0
    %2184 = vmatpush1.msra.mxu0 0.0
    %2185 = vmatprep.subr.mxu0 0.0
    %2186 = vmatpush1.msra.mxu0 0.0
    %2187 = vmatprep.subr.mxu0 0.0
    %2188 = vmatpush1.msra.mxu0 0.0
    %2189 = vmatprep.subr.mxu0 0.0
    %2190 = vmatpush1.msra.mxu0 0.0
    %2191 = vmatprep.subr.mxu0 0.0
    %2192 = vmatpush1.msra.mxu0 0.0
    %2193 = vmatprep.subr.mxu0 0.0
    %2194 = vmatpush1.msra.mxu0 0.0
    %2195 = vmatprep.subr.mxu0 0.0
    %2196 = vmatpush1.msra.mxu0 0.0
    %2197 = vmatprep.subr.mxu0 0.0
    %2198 = vmatpush1.msra.mxu0 0.0
    %2199 = vmatprep.subr.mxu0 0.0
    %2200 = vmatpush1.msra.mxu0 0.0
    %2201 = vmatprep.subr.mxu0 0.0
    %2202 = vmatpush1.msra.mxu0 0.0
    %2203 = vmatprep.subr.mxu0 0.0
    %2204 = vmatpush1.msra.mxu0 0.0
    %2205 = vmatprep.subr.mxu0 0.0
    %2206 = vmatpush1.msra.mxu0 0.0
    %2207 = vmatprep.subr.mxu0 0.0
    %2208 = vmatpush1.msra.mxu0 0.0
    %2209 = vmatprep.subr.mxu0 0.0
    %2210 = vmatpush1.msra.mxu0 0.0
    %2211 = vmatprep.subr.mxu0 0.0
    %2212 = vmatpush1.msra.mxu0 0.0
    %2213 = vmatprep.subr.mxu0 0.0
    %2214 = vmatpush1.msra.mxu0 0.0
    %2215 = vmatprep.subr.mxu0 0.0
    %2216 = vmatpush1.msra.mxu0 0.0
    %2217 = vmatprep.subr.mxu0 0.0
    %2218 = vmatpush1.msra.mxu0 0.0
    %2219 = vmatprep.subr.mxu0 0.0
    %2220 = vmatpush1.msra.mxu0 0.0
    %2221 = vmatprep.subr.mxu0 0.0
    %2222 = vmatpush1.msra.mxu0 0.0
    %2223 = vmatprep.subr.mxu0 0.0
    %2224 = vmatpush1.msra.mxu0 0.0
    %2225 = vmatprep.subr.mxu0 0.0
    %2226 = vmatpush1.msra.mxu0 0.0
    %2227 = vmatprep.subr.mxu0 0.0
    %2228 = vmatpush1.msra.mxu0 0.0
    %2229 = vmatprep.subr.mxu0 0.0
    %2230 = vmatpush1.msra.mxu0 0.0
    %2231 = vmatprep.subr.mxu0 0.0
    %2232 = vmatpush1.msra.mxu0 0.0
    %2233 = vmatprep.subr.mxu0 0.0
    %2234 = vmatpush1.msra.mxu0 0.0
    %2235 = vmatprep.subr.mxu0 0.0
    %2236 = vmatpush1.msra.mxu0 0.0
    %2237 = vmatprep.subr.mxu0 0.0
    %2238 = vmatpush1.msra.mxu0 0.0
    %2239 = vmatprep.mubr.f32.mxu0 0.0
    %2240 = vmatmul.mubr.f32.gmra.mrb[0].mxu0 %v1936
    %v2241 = vpop.f32.mrb[0].mxu0
    %v2242 = vadd.f32 %v2172, %v2241
    %v2243 = vpop.f32.mrb[0].mxu0
    %2244 = vdwg.mxu0
    %v2245 = vadd.f32 %v2242, %v1056
    %v2246 = vmul.f32 %v2245, %v31
    %v2247 = vtanh.pop %v2246
    %v2248 = vmul.f32 %v2247, %v31
    %v2249 = vadd.f32 %v2248, %v32
    %v2250 = vmul.f32 %v2249, %v1578
    %2252 = vrot.lane.b32.xlu0 %v2249, 64
    %v2253 = vpop.permute.xlu0 %2252
    %v2255 = vmul.f32 %v2249, %v2253
    %2257 = vrot.lane.b32.xlu0 %v2255, 32
    %v2258 = vpop.permute.xlu0 %2257
    %v2260 = vadd.f32 %v2250, %v2258
    %v2261 = vtanh.pop %v2260
    %2263 = vrot.lane.b32.xlu0 %v2261, 64
    %v2264 = vpop.permute.xlu0 %2263
    %v2266 = vmul.f32 %v2249, %v2264
    %2268 = vrot.lane.b32.xlu0 %v1760, 32
    %v2269 = vpop.permute.xlu0 %2268
    %v2270 = vsel %vm43, %v2269, 0
    %2272 = vmatprep.subr.mxu0 0.0
    %2273 = vmatpush1.msra.mxu0 %v1590
    %2274 = vmatprep.subr.mxu0 0.0
    %2275 = vmatpush1.msra.mxu0 %v1591
    %2276 = vmatprep.subr.mxu0 0.0
    %2277 = vmatpush1.msra.mxu0 %v1592
    %2278 = vmatprep.subr.mxu0 0.0
    %2279 = vmatpush1.msra.mxu0 %v1593
    %2280 = vmatprep.subr.mxu0 0.0
    %2281 = vmatpush1.msra.mxu0 0.0
    %2282 = vmatprep.subr.mxu0 0.0
    %2283 = vmatpush1.msra.mxu0 0.0
    %2284 = vmatprep.subr.mxu0 0.0
    %2285 = vmatpush1.msra.mxu0 0.0
    %2286 = vmatprep.subr.mxu0 0.0
    %2287 = vmatpush1.msra.mxu0 0.0
    %2288 = vmatprep.subr.mxu0 0.0
    %2289 = vmatpush1.msra.mxu0 0.0
    %2290 = vmatprep.subr.mxu0 0.0
    %2291 = vmatpush1.msra.mxu0 0.0
    %2292 = vmatprep.subr.mxu0 0.0
    %2293 = vmatpush1.msra.mxu0 0.0
    %2294 = vmatprep.subr.mxu0 0.0
    %2295 = vmatpush1.msra.mxu0 0.0
    %2296 = vmatprep.subr.mxu0 0.0
    %2297 = vmatpush1.msra.mxu0 0.0
    %2298 = vmatprep.subr.mxu0 0.0
    %2299 = vmatpush1.msra.mxu0 0.0
    %2300 = vmatprep.subr.mxu0 0.0
    %2301 = vmatpush1.msra.mxu0 0.0
    %2302 = vmatprep.subr.mxu0 0.0
    %2303 = vmatpush1.msra.mxu0 0.0
    %2304 = vmatprep.subr.mxu0 0.0
    %2305 = vmatpush1.msra.mxu0 0.0
    %2306 = vmatprep.subr.mxu0 0.0
    %2307 = vmatpush1.msra.mxu0 0.0
    %2308 = vmatprep.subr.mxu0 0.0
    %2309 = vmatpush1.msra.mxu0 0.0
    %2310 = vmatprep.subr.mxu0 0.0
    %2311 = vmatpush1.msra.mxu0 0.0
    %2312 = vmatprep.subr.mxu0 0.0
    %2313 = vmatpush1.msra.mxu0 0.0
    %2314 = vmatprep.subr.mxu0 0.0
    %2315 = vmatpush1.msra.mxu0 0.0
    %2316 = vmatprep.subr.mxu0 0.0
    %2317 = vmatpush1.msra.mxu0 0.0
    %2318 = vmatprep.subr.mxu0 0.0
    %2319 = vmatpush1.msra.mxu0 0.0
    %2320 = vmatprep.subr.mxu0 0.0
    %2321 = vmatpush1.msra.mxu0 0.0
    %2322 = vmatprep.subr.mxu0 0.0
    %2323 = vmatpush1.msra.mxu0 0.0
    %2324 = vmatprep.subr.mxu0 0.0
    %2325 = vmatpush1.msra.mxu0 0.0
    %2326 = vmatprep.subr.mxu0 0.0
    %2327 = vmatpush1.msra.mxu0 0.0
    %2328 = vmatprep.subr.mxu0 0.0
    %2329 = vmatpush1.msra.mxu0 0.0
    %2330 = vmatprep.subr.mxu0 0.0
    %2331 = vmatpush1.msra.mxu0 0.0
    %2332 = vmatprep.subr.mxu0 0.0
    %2333 = vmatpush1.msra.mxu0 0.0
    %2334 = vmatprep.subr.mxu0 0.0
    %2335 = vmatpush1.msra.mxu0 0.0
    %2336 = vmatprep.mubr.f32.mxu0 0.0
    %2337 = vmatmul.mubr.f32.gmra.mrb[0].mxu0 %v2270
    %v2338 = vpop.f32.mrb[0].mxu0
    %v2339 = vadd.f32 0.0, %v2338
    %v2340 = vpop.f32.mrb[0].mxu0
    %2341 = vdwg.mxu0
    %2342 = vmatprep.subr.mxu0 0.0
    %2343 = vmatpush1.msra.mxu0 %v1586
    %2344 = vmatprep.subr.mxu0 0.0
    %2345 = vmatpush1.msra.mxu0 %v1587
    %2346 = vmatprep.subr.mxu0 0.0
    %2347 = vmatpush1.msra.mxu0 %v1588
    %2348 = vmatprep.subr.mxu0 0.0
    %2349 = vmatpush1.msra.mxu0 %v1589
    %2350 = vmatprep.subr.mxu0 0.0
    %2351 = vmatpush1.msra.mxu0 0.0
    %2352 = vmatprep.subr.mxu0 0.0
    %2353 = vmatpush1.msra.mxu0 0.0
    %2354 = vmatprep.subr.mxu0 0.0
    %2355 = vmatpush1.msra.mxu0 0.0
    %2356 = vmatprep.subr.mxu0 0.0
    %2357 = vmatpush1.msra.mxu0 0.0
    %2358 = vmatprep.subr.mxu0 0.0
    %2359 = vmatpush1.msra.mxu0 0.0
    %2360 = vmatprep.subr.mxu0 0.0
    %2361 = vmatpush1.msra.mxu0 0.0
    %2362 = vmatprep.subr.mxu0 0.0
    %2363 = vmatpush1.msra.mxu0 0.0
    %2364 = vmatprep.subr.mxu0 0.0
    %2365 = vmatpush1.msra.mxu0 0.0
    %2366 = vmatprep.subr.mxu0 0.0
    %2367 = vmatpush1.msra.mxu0 0.0
    %2368 = vmatprep.subr.mxu0 0.0
    %2369 = vmatpush1.msra.mxu0 0.0
    %2370 = vmatprep.subr.mxu0 0.0
    %2371 = vmatpush1.msra.mxu0 0.0
    %2372 = vmatprep.subr.mxu0 0.0
    %2373 = vmatpush1.msra.mxu0 0.0
    %2374 = vmatprep.subr.mxu0 0.0
    %2375 = vmatpush1.msra.mxu0 0.0
    %2376 = vmatprep.subr.mxu0 0.0
    %2377 = vmatpush1.msra.mxu0 0.0
    %2378 = vmatprep.subr.mxu0 0.0
    %2379 = vmatpush1.msra.mxu0 0.0
    %2380 = vmatprep.subr.mxu0 0.0
    %2381 = vmatpush1.msra.mxu0 0.0
    %2382 = vmatprep.subr.mxu0 0.0
    %2383 = vmatpush1.msra.mxu0 0.0
    %2384 = vmatprep.subr.mxu0 0.0
    %2385 = vmatpush1.msra.mxu0 0.0
    %2386 = vmatprep.subr.mxu0 0.0
    %2387 = vmatpush1.msra.mxu0 0.0
    %2388 = vmatprep.subr.mxu0 0.0
    %2389 = vmatpush1.msra.mxu0 0.0
    %2390 = vmatprep.subr.mxu0 0.0
    %2391 = vmatpush1.msra.mxu0 0.0
    %2392 = vmatprep.subr.mxu0 0.0
    %2393 = vmatpush1.msra.mxu0 0.0
    %2394 = vmatprep.subr.mxu0 0.0
    %2395 = vmatpush1.msra.mxu0 0.0
    %2396 = vmatprep.subr.mxu0 0.0
    %2397 = vmatpush1.msra.mxu0 0.0
    %2398 = vmatprep.subr.mxu0 0.0
    %2399 = vmatpush1.msra.mxu0 0.0
    %2400 = vmatprep.subr.mxu0 0.0
    %2401 = vmatpush1.msra.mxu0 0.0
    %2402 = vmatprep.subr.mxu0 0.0
    %2403 = vmatpush1.msra.mxu0 0.0
    %2404 = vmatprep.subr.mxu0 0.0
    %2405 = vmatpush1.msra.mxu0 0.0
    %2406 = vmatprep.mubr.f32.mxu0 0.0
    %2407 = vmatmul.mubr.f32.gmra.mrb[0].mxu0 %v2103
    %v2408 = vpop.f32.mrb[0].mxu0
    %v2409 = vadd.f32 %v2339, %v2408
    %v2410 = vpop.f32.mrb[0].mxu0
    %2411 = vdwg.mxu0
    %v2412 = vadd.f32 %v2409, %v1738
    %v2413 = vmul.f32 %v2412, %v31
    %v2414 = vtanh.pop %v2413
    %v2415 = vmul.f32 %v2414, %v31
    %v2416 = vadd.f32 %v2415, %v32
    %v2417 = vmul.f32 %v2416, %v1754
    %2419 = vrot.lane.b32.xlu0 %v2416, 64
    %v2420 = vpop.permute.xlu0 %2419
    %v2422 = vmul.f32 %v2416, %v2420
    %2424 = vrot.lane.b32.xlu0 %v2422, 32
    %v2425 = vpop.permute.xlu0 %2424
    %v2427 = vadd.f32 %v2417, %v2425
    %v2428 = vtanh.pop %v2427
    %2430 = vrot.lane.b32.xlu0 %v2428, 64
    %v2431 = vpop.permute.xlu0 %2430
    %v2433 = vmul.f32 %v2416, %v2431
    %s2434 = scalar_lea.vmem %s0, 20
    %v2435 = vld [vmem:[%s2434] sm:$0xf]
    %2437 = vrot.lane.b32.xlu0 %v1932, 32
    %v2438 = vpop.permute.xlu0 %2437
    %v2439 = vsel %vm43, %v2438, 0
    %2441 = vmatprep.subr.mxu0 0.0
    %2442 = vmatpush1.msra.mxu0 %v37
    %2443 = vmatprep.subr.mxu0 0.0
    %2444 = vmatpush1.msra.mxu0 %v38
    %2445 = vmatprep.subr.mxu0 0.0
    %2446 = vmatpush1.msra.mxu0 %v39
    %2447 = vmatprep.subr.mxu0 0.0
    %2448 = vmatpush1.msra.mxu0 %v40
    %2449 = vmatprep.subr.mxu0 0.0
    %2450 = vmatpush1.msra.mxu0 0.0
    %2451 = vmatprep.subr.mxu0 0.0
    %2452 = vmatpush1.msra.mxu0 0.0
    %2453 = vmatprep.subr.mxu0 0.0
    %2454 = vmatpush1.msra.mxu0 0.0
    %2455 = vmatprep.subr.mxu0 0.0
    %2456 = vmatpush1.msra.mxu0 0.0
    %2457 = vmatprep.subr.mxu0 0.0
    %2458 = vmatpush1.msra.mxu0 0.0
    %2459 = vmatprep.subr.mxu0 0.0
    %2460 = vmatpush1.msra.mxu0 0.0
    %2461 = vmatprep.subr.mxu0 0.0
    %2462 = vmatpush1.msra.mxu0 0.0
    %2463 = vmatprep.subr.mxu0 0.0
    %2464 = vmatpush1.msra.mxu0 0.0
    %2465 = vmatprep.subr.mxu0 0.0
    %2466 = vmatpush1.msra.mxu0 0.0
    %2467 = vmatprep.subr.mxu0 0.0
    %2468 = vmatpush1.msra.mxu0 0.0
    %2469 = vmatprep.subr.mxu0 0.0
    %2470 = vmatpush1.msra.mxu0 0.0
    %2471 = vmatprep.subr.mxu0 0.0
    %2472 = vmatpush1.msra.mxu0 0.0
    %2473 = vmatprep.subr.mxu0 0.0
    %2474 = vmatpush1.msra.mxu0 0.0
    %2475 = vmatprep.subr.mxu0 0.0
    %2476 = vmatpush1.msra.mxu0 0.0
    %2477 = vmatprep.subr.mxu0 0.0
    %2478 = vmatpush1.msra.mxu0 0.0
    %2479 = vmatprep.subr.mxu0 0.0
    %2480 = vmatpush1.msra.mxu0 0.0
    %2481 = vmatprep.subr.mxu0 0.0
    %2482 = vmatpush1.msra.mxu0 0.0
    %2483 = vmatprep.subr.mxu0 0.0
    %2484 = vmatpush1.msra.mxu0 0.0
    %2485 = vmatprep.subr.mxu0 0.0
    %2486 = vmatpush1.msra.mxu0 0.0
    %2487 = vmatprep.subr.mxu0 0.0
    %2488 = vmatpush1.msra.mxu0 0.0
    %2489 = vmatprep.subr.mxu0 0.0
    %2490 = vmatpush1.msra.mxu0 0.0
    %2491 = vmatprep.subr.mxu0 0.0
    %2492 = vmatpush1.msra.mxu0 0.0
    %2493 = vmatprep.subr.mxu0 0.0
    %2494 = vmatpush1.msra.mxu0 0.0
    %2495 = vmatprep.subr.mxu0 0.0
    %2496 = vmatpush1.msra.mxu0 0.0
    %2497 = vmatprep.subr.mxu0 0.0
    %2498 = vmatpush1.msra.mxu0 0.0
    %2499 = vmatprep.subr.mxu0 0.0
    %2500 = vmatpush1.msra.mxu0 0.0
    %2501 = vmatprep.subr.mxu0 0.0
    %2502 = vmatpush1.msra.mxu0 0.0
    %2503 = vmatprep.subr.mxu0 0.0
    %2504 = vmatpush1.msra.mxu0 0.0
    %2505 = vmatprep.mubr.f32.mxu0 0.0
    %2506 = vmatmul.mubr.f32.gmra.mrb[0].mxu0 %v2439
    %v2507 = vpop.f32.mrb[0].mxu0
    %v2508 = vadd.f32 0.0, %v2507
    %v2509 = vpop.f32.mrb[0].mxu0
    %2510 = vdwg.mxu0
    %v2512 = vsel %vm43, %v2435, 0
    %2514 = vmatprep.subr.mxu0 0.0
    %2515 = vmatpush1.msra.mxu0 %v33
    %2516 = vmatprep.subr.mxu0 0.0
    %2517 = vmatpush1.msra.mxu0 %v34
    %2518 = vmatprep.subr.mxu0 0.0
    %2519 = vmatpush1.msra.mxu0 %v35
    %2520 = vmatprep.subr.mxu0 0.0
    %2521 = vmatpush1.msra.mxu0 %v36
    %2522 = vmatprep.subr.mxu0 0.0
    %2523 = vmatpush1.msra.mxu0 0.0
    %2524 = vmatprep.subr.mxu0 0.0
    %2525 = vmatpush1.msra.mxu0 0.0
    %2526 = vmatprep.subr.mxu0 0.0
    %2527 = vmatpush1.msra.mxu0 0.0
    %2528 = vmatprep.subr.mxu0 0.0
    %2529 = vmatpush1.msra.mxu0 0.0
    %2530 = vmatprep.subr.mxu0 0.0
    %2531 = vmatpush1.msra.mxu0 0.0
    %2532 = vmatprep.subr.mxu0 0.0
    %2533 = vmatpush1.msra.mxu0 0.0
    %2534 = vmatprep.subr.mxu0 0.0
    %2535 = vmatpush1.msra.mxu0 0.0
    %2536 = vmatprep.subr.mxu0 0.0
    %2537 = vmatpush1.msra.mxu0 0.0
    %2538 = vmatprep.subr.mxu0 0.0
    %2539 = vmatpush1.msra.mxu0 0.0
    %2540 = vmatprep.subr.mxu0 0.0
    %2541 = vmatpush1.msra.mxu0 0.0
    %2542 = vmatprep.subr.mxu0 0.0
    %2543 = vmatpush1.msra.mxu0 0.0
    %2544 = vmatprep.subr.mxu0 0.0
    %2545 = vmatpush1.msra.mxu0 0.0
    %2546 = vmatprep.subr.mxu0 0.0
    %2547 = vmatpush1.msra.mxu0 0.0
    %2548 = vmatprep.subr.mxu0 0.0
    %2549 = vmatpush1.msra.mxu0 0.0
    %2550 = vmatprep.subr.mxu0 0.0
    %2551 = vmatpush1.msra.mxu0 0.0
    %2552 = vmatprep.subr.mxu0 0.0
    %2553 = vmatpush1.msra.mxu0 0.0
    %2554 = vmatprep.subr.mxu0 0.0
    %2555 = vmatpush1.msra.mxu0 0.0
    %2556 = vmatprep.subr.mxu0 0.0
    %2557 = vmatpush1.msra.mxu0 0.0
    %2558 = vmatprep.subr.mxu0 0.0
    %2559 = vmatpush1.msra.mxu0 0.0
    %2560 = vmatprep.subr.mxu0 0.0
    %2561 = vmatpush1.msra.mxu0 0.0
    %2562 = vmatprep.subr.mxu0 0.0
    %2563 = vmatpush1.msra.mxu0 0.0
    %2564 = vmatprep.subr.mxu0 0.0
    %2565 = vmatpush1.msra.mxu0 0.0
    %2566 = vmatprep.subr.mxu0 0.0
    %2567 = vmatpush1.msra.mxu0 0.0
    %2568 = vmatprep.subr.mxu0 0.0
    %2569 = vmatpush1.msra.mxu0 0.0
    %2570 = vmatprep.subr.mxu0 0.0
    %2571 = vmatpush1.msra.mxu0 0.0
    %2572 = vmatprep.subr.mxu0 0.0
    %2573 = vmatpush1.msra.mxu0 0.0
    %2574 = vmatprep.subr.mxu0 0.0
    %2575 = vmatpush1.msra.mxu0 0.0
    %2576 = vmatprep.subr.mxu0 0.0
    %2577 = vmatpush1.msra.mxu0 0.0
    %2578 = vmatprep.mubr.f32.mxu0 0.0
    %2579 = vmatmul.mubr.f32.gmra.mrb[0].mxu0 %v2512
    %v2580 = vpop.f32.mrb[0].mxu0
    %v2581 = vadd.f32 %v2508, %v2580
    %v2582 = vpop.f32.mrb[0].mxu0
    %2583 = vdwg.mxu0
    %v2584 = vadd.f32 %v2581, %v193
    %v2585 = vmul.f32 %v2584, %v31
    %v2586 = vtanh.pop %v2585
    %v2587 = vmul.f32 %v2586, %v31
    %v2588 = vadd.f32 %v2587, %v32
    %v2589 = vmul.f32 %v2588, %v1926
    %2591 = vrot.lane.b32.xlu0 %v2588, 64
    %v2592 = vpop.permute.xlu0 %2591
    %v2594 = vmul.f32 %v2588, %v2592
    %2596 = vrot.lane.b32.xlu0 %v2594, 32
    %v2597 = vpop.permute.xlu0 %2596
    %v2599 = vadd.f32 %v2589, %v2597
    %v2600 = vtanh.pop %v2599
    %2602 = vrot.lane.b32.xlu0 %v2600, 64
    %v2603 = vpop.permute.xlu0 %2602
    %v2605 = vmul.f32 %v2588, %v2603
    %2607 = vrot.lane.b32.xlu0 %v2099, 32
    %v2608 = vpop.permute.xlu0 %2607
    %v2609 = vsel %vm43, %v2608, 0
    %2611 = vmatprep.subr.mxu0 0.0
    %2612 = vmatpush1.msra.mxu0 %v393
    %2613 = vmatprep.subr.mxu0 0.0
    %2614 = vmatpush1.msra.mxu0 %v394
    %2615 = vmatprep.subr.mxu0 0.0
    %2616 = vmatpush1.msra.mxu0 %v395
    %2617 = vmatprep.subr.mxu0 0.0
    %2618 = vmatpush1.msra.mxu0 %v396
    %2619 = vmatprep.subr.mxu0 0.0
    %2620 = vmatpush1.msra.mxu0 0.0
    %2621 = vmatprep.subr.mxu0 0.0
    %2622 = vmatpush1.msra.mxu0 0.0
    %2623 = vmatprep.subr.mxu0 0.0
    %2624 = vmatpush1.msra.mxu0 0.0
    %2625 = vmatprep.subr.mxu0 0.0
    %2626 = vmatpush1.msra.mxu0 0.0
    %2627 = vmatprep.subr.mxu0 0.0
    %2628 = vmatpush1.msra.mxu0 0.0
    %2629 = vmatprep.subr.mxu0 0.0
    %2630 = vmatpush1.msra.mxu0 0.0
    %2631 = vmatprep.subr.mxu0 0.0
    %2632 = vmatpush1.msra.mxu0 0.0
    %2633 = vmatprep.subr.mxu0 0.0
    %2634 = vmatpush1.msra.mxu0 0.0
    %2635 = vmatprep.subr.mxu0 0.0
    %2636 = vmatpush1.msra.mxu0 0.0
    %2637 = vmatprep.subr.mxu0 0.0
    %2638 = vmatpush1.msra.mxu0 0.0
    %2639 = vmatprep.subr.mxu0 0.0
    %2640 = vmatpush1.msra.mxu0 0.0
    %2641 = vmatprep.subr.mxu0 0.0
    %2642 = vmatpush1.msra.mxu0 0.0
    %2643 = vmatprep.subr.mxu0 0.0
    %2644 = vmatpush1.msra.mxu0 0.0
    %2645 = vmatprep.subr.mxu0 0.0
    %2646 = vmatpush1.msra.mxu0 0.0
    %2647 = vmatprep.subr.mxu0 0.0
    %2648 = vmatpush1.msra.mxu0 0.0
    %2649 = vmatprep.subr.mxu0 0.0
    %2650 = vmatpush1.msra.mxu0 0.0
    %2651 = vmatprep.subr.mxu0 0.0
    %2652 = vmatpush1.msra.mxu0 0.0
    %2653 = vmatprep.subr.mxu0 0.0
    %2654 = vmatpush1.msra.mxu0 0.0
    %2655 = vmatprep.subr.mxu0 0.0
    %2656 = vmatpush1.msra.mxu0 0.0
    %2657 = vmatprep.subr.mxu0 0.0
    %2658 = vmatpush1.msra.mxu0 0.0
    %2659 = vmatprep.subr.mxu0 0.0
    %2660 = vmatpush1.msra.mxu0 0.0
    %2661 = vmatprep.subr.mxu0 0.0
    %2662 = vmatpush1.msra.mxu0 0.0
    %2663 = vmatprep.subr.mxu0 0.0
    %2664 = vmatpush1.msra.mxu0 0.0
    %2665 = vmatprep.subr.mxu0 0.0
    %2666 = vmatpush1.msra.mxu0 0.0
    %2667 = vmatprep.subr.mxu0 0.0
    %2668 = vmatpush1.msra.mxu0 0.0
    %2669 = vmatprep.subr.mxu0 0.0
    %2670 = vmatpush1.msra.mxu0 0.0
    %2671 = vmatprep.subr.mxu0 0.0
    %2672 = vmatpush1.msra.mxu0 0.0
    %2673 = vmatprep.subr.mxu0 0.0
    %2674 = vmatpush1.msra.mxu0 0.0
    %2675 = vmatprep.mubr.f32.mxu0 0.0
    %2676 = vmatmul.mubr.f32.gmra.mrb[0].mxu0 %v2609
    %v2677 = vpop.f32.mrb[0].mxu0
    %v2678 = vadd.f32 0.0, %v2677
    %v2679 = vpop.f32.mrb[0].mxu0
    %2680 = vdwg.mxu0
    %2681 = vmatprep.subr.mxu0 0.0
    %2682 = vmatpush1.msra.mxu0 %v389
    %2683 = vmatprep.subr.mxu0 0.0
    %2684 = vmatpush1.msra.mxu0 %v390
    %2685 = vmatprep.subr.mxu0 0.0
    %2686 = vmatpush1.msra.mxu0 %v391
    %2687 = vmatprep.subr.mxu0 0.0
    %2688 = vmatpush1.msra.mxu0 %v392
    %2689 = vmatprep.subr.mxu0 0.0
    %2690 = vmatpush1.msra.mxu0 0.0
    %2691 = vmatprep.subr.mxu0 0.0
    %2692 = vmatpush1.msra.mxu0 0.0
    %2693 = vmatprep.subr.mxu0 0.0
    %2694 = vmatpush1.msra.mxu0 0.0
    %2695 = vmatprep.subr.mxu0 0.0
    %2696 = vmatpush1.msra.mxu0 0.0
    %2697 = vmatprep.subr.mxu0 0.0
    %2698 = vmatpush1.msra.mxu0 0.0
    %2699 = vmatprep.subr.mxu0 0.0
    %2700 = vmatpush1.msra.mxu0 0.0
    %2701 = vmatprep.subr.mxu0 0.0
    %2702 = vmatpush1.msra.mxu0 0.0
    %2703 = vmatprep.subr.mxu0 0.0
    %2704 = vmatpush1.msra.mxu0 0.0
    %2705 = vmatprep.subr.mxu0 0.0
    %2706 = vmatpush1.msra.mxu0 0.0
    %2707 = vmatprep.subr.mxu0 0.0
    %2708 = vmatpush1.msra.mxu0 0.0
    %2709 = vmatprep.subr.mxu0 0.0
    %2710 = vmatpush1.msra.mxu0 0.0
    %2711 = vmatprep.subr.mxu0 0.0
    %2712 = vmatpush1.msra.mxu0 0.0
    %2713 = vmatprep.subr.mxu0 0.0
    %2714 = vmatpush1.msra.mxu0 0.0
    %2715 = vmatprep.subr.mxu0 0.0
    %2716 = vmatpush1.msra.mxu0 0.0
    %2717 = vmatprep.subr.mxu0 0.0
    %2718 = vmatpush1.msra.mxu0 0.0
    %2719 = vmatprep.subr.mxu0 0.0
    %2720 = vmatpush1.msra.mxu0 0.0
    %2721 = vmatprep.subr.mxu0 0.0
    %2722 = vmatpush1.msra.mxu0 0.0
    %2723 = vmatprep.subr.mxu0 0.0
    %2724 = vmatpush1.msra.mxu0 0.0
    %2725 = vmatprep.subr.mxu0 0.0
    %2726 = vmatpush1.msra.mxu0 0.0
    %2727 = vmatprep.subr.mxu0 0.0
    %2728 = vmatpush1.msra.mxu0 0.0
    %2729 = vmatprep.subr.mxu0 0.0
    %2730 = vmatpush1.msra.mxu0 0.0
    %2731 = vmatprep.subr.mxu0 0.0
    %2732 = vmatpush1.msra.mxu0 0.0
    %2733 = vmatprep.subr.mxu0 0.0
    %2734 = vmatpush1.msra.mxu0 0.0
    %2735 = vmatprep.subr.mxu0 0.0
    %2736 = vmatpush1.msra.mxu0 0.0
    %2737 = vmatprep.subr.mxu0 0.0
    %2738 = vmatpush1.msra.mxu0 0.0
    %2739 = vmatprep.subr.mxu0 0.0
    %2740 = vmatpush1.msra.mxu0 0.0
    %2741 = vmatprep.subr.mxu0 0.0
    %2742 = vmatpush1.msra.mxu0 0.0
    %2743 = vmatprep.subr.mxu0 0.0
    %2744 = vmatpush1.msra.mxu0 0.0
    %2745 = vmatprep.mubr.f32.mxu0 0.0
    %2746 = vmatmul.mubr.f32.gmra.mrb[0].mxu0 %v2439
    %v2747 = vpop.f32.mrb[0].mxu0
    %v2748 = vadd.f32 %v2678, %v2747
    %v2749 = vpop.f32.mrb[0].mxu0
    %2750 = vdwg.mxu0
    %v2751 = vadd.f32 %v2748, %v541
    %v2752 = vmul.f32 %v2751, %v31
    %v2753 = vtanh.pop %v2752
    %v2754 = vmul.f32 %v2753, %v31
    %v2755 = vadd.f32 %v2754, %v32
    %v2756 = vmul.f32 %v2755, %v2093
    %2758 = vrot.lane.b32.xlu0 %v2755, 64
    %v2759 = vpop.permute.xlu0 %2758
    %v2761 = vmul.f32 %v2755, %v2759
    %2763 = vrot.lane.b32.xlu0 %v2761, 32
    %v2764 = vpop.permute.xlu0 %2763
    %v2766 = vadd.f32 %v2756, %v2764
    %v2767 = vtanh.pop %v2766
    %2769 = vrot.lane.b32.xlu0 %v2767, 64
    %v2770 = vpop.permute.xlu0 %2769
    %v2772 = vmul.f32 %v2755, %v2770
    %2774 = vrot.lane.b32.xlu0 %v2266, 32
    %v2775 = vpop.permute.xlu0 %2774
    %v2776 = vsel %vm43, %v2775, 0
    %2778 = vmatprep.subr.mxu0 0.0
    %2779 = vmatpush1.msra.mxu0 %v908
    %2780 = vmatprep.subr.mxu0 0.0
    %2781 = vmatpush1.msra.mxu0 %v909
    %2782 = vmatprep.subr.mxu0 0.0
    %2783 = vmatpush1.msra.mxu0 %v910
    %2784 = vmatprep.subr.mxu0 0.0
    %2785 = vmatpush1.msra.mxu0 %v911
    %2786 = vmatprep.subr.mxu0 0.0
    %2787 = vmatpush1.msra.mxu0 0.0
    %2788 = vmatprep.subr.mxu0 0.0
    %2789 = vmatpush1.msra.mxu0 0.0
    %2790 = vmatprep.subr.mxu0 0.0
    %2791 = vmatpush1.msra.mxu0 0.0
    %2792 = vmatprep.subr.mxu0 0.0
    %2793 = vmatpush1.msra.mxu0 0.0
    %2794 = vmatprep.subr.mxu0 0.0
    %2795 = vmatpush1.msra.mxu0 0.0
    %2796 = vmatprep.subr.mxu0 0.0
    %2797 = vmatpush1.msra.mxu0 0.0
    %2798 = vmatprep.subr.mxu0 0.0
    %2799 = vmatpush1.msra.mxu0 0.0
    %2800 = vmatprep.subr.mxu0 0.0
    %2801 = vmatpush1.msra.mxu0 0.0
    %2802 = vmatprep.subr.mxu0 0.0
    %2803 = vmatpush1.msra.mxu0 0.0
    %2804 = vmatprep.subr.mxu0 0.0
    %2805 = vmatpush1.msra.mxu0 0.0
    %2806 = vmatprep.subr.mxu0 0.0
    %2807 = vmatpush1.msra.mxu0 0.0
    %2808 = vmatprep.subr.mxu0 0.0
    %2809 = vmatpush1.msra.mxu0 0.0
    %2810 = vmatprep.subr.mxu0 0.0
    %2811 = vmatpush1.msra.mxu0 0.0
    %2812 = vmatprep.subr.mxu0 0.0
    %2813 = vmatpush1.msra.mxu0 0.0
    %2814 = vmatprep.subr.mxu0 0.0
    %2815 = vmatpush1.msra.mxu0 0.0
    %2816 = vmatprep.subr.mxu0 0.0
    %2817 = vmatpush1.msra.mxu0 0.0
    %2818 = vmatprep.subr.mxu0 0.0
    %2819 = vmatpush1.msra.mxu0 0.0
    %2820 = vmatprep.subr.mxu0 0.0
    %2821 = vmatpush1.msra.mxu0 0.0
    %2822 = vmatprep.subr.mxu0 0.0
    %2823 = vmatpush1.msra.mxu0 0.0
    %2824 = vmatprep.subr.mxu0 0.0
    %2825 = vmatpush1.msra.mxu0 0.0
    %2826 = vmatprep.subr.mxu0 0.0
    %2827 = vmatpush1.msra.mxu0 0.0
    %2828 = vmatprep.subr.mxu0 0.0
    %2829 = vmatpush1.msra.mxu0 0.0
    %2830 = vmatprep.subr.mxu0 0.0
    %2831 = vmatpush1.msra.mxu0 0.0
    %2832 = vmatprep.subr.mxu0 0.0
    %2833 = vmatpush1.msra.mxu0 0.0
    %2834 = vmatprep.subr.mxu0 0.0
    %2835 = vmatpush1.msra.mxu0 0.0
    %2836 = vmatprep.subr.mxu0 0.0
    %2837 = vmatpush1.msra.mxu0 0.0
    %2838 = vmatprep.subr.mxu0 0.0
    %2839 = vmatpush1.msra.mxu0 0.0
    %2840 = vmatprep.subr.mxu0 0.0
    %2841 = vmatpush1.msra.mxu0 0.0
    %2842 = vmatprep.mubr.f32.mxu0 0.0
    %2843 = vmatmul.mubr.f32.gmra.mrb[0].mxu0 %v2776
    %v2844 = vpop.f32.mrb[0].mxu0
    %v2845 = vadd.f32 0.0, %v2844
    %v2846 = vpop.f32.mrb[0].mxu0
    %2847 = vdwg.mxu0
    %2848 = vmatprep.subr.mxu0 0.0
    %2849 = vmatpush1.msra.mxu0 %v904
    %2850 = vmatprep.subr.mxu0 0.0
    %2851 = vmatpush1.msra.mxu0 %v905
    %2852 = vmatprep.subr.mxu0 0.0
    %2853 = vmatpush1.msra.mxu0 %v906
    %2854 = vmatprep.subr.mxu0 0.0
    %2855 = vmatpush1.msra.mxu0 %v907
    %2856 = vmatprep.subr.mxu0 0.0
    %2857 = vmatpush1.msra.mxu0 0.0
    %2858 = vmatprep.subr.mxu0 0.0
    %2859 = vmatpush1.msra.mxu0 0.0
    %2860 = vmatprep.subr.mxu0 0.0
    %2861 = vmatpush1.msra.mxu0 0.0
    %2862 = vmatprep.subr.mxu0 0.0
    %2863 = vmatpush1.msra.mxu0 0.0
    %2864 = vmatprep.subr.mxu0 0.0
    %2865 = vmatpush1.msra.mxu0 0.0
    %2866 = vmatprep.subr.mxu0 0.0
    %2867 = vmatpush1.msra.mxu0 0.0
    %2868 = vmatprep.subr.mxu0 0.0
    %2869 = vmatpush1.msra.mxu0 0.0
    %2870 = vmatprep.subr.mxu0 0.0
    %2871 = vmatpush1.msra.mxu0 0.0
    %2872 = vmatprep.subr.mxu0 0.0
    %2873 = vmatpush1.msra.mxu0 0.0
    %2874 = vmatprep.subr.mxu0 0.0
    %2875 = vmatpush1.msra.mxu0 0.0
    %2876 = vmatprep.subr.mxu0 0.0
    %2877 = vmatpush1.msra.mxu0 0.0
    %2878 = vmatprep.subr.mxu0 0.0
    %2879 = vmatpush1.msra.mxu0 0.0
    %2880 = vmatprep.subr.mxu0 0.0
    %2881 = vmatpush1.msra.mxu0 0.0
    %2882 = vmatprep.subr.mxu0 0.0
    %2883 = vmatpush1.msra.mxu0 0.0
    %2884 = vmatprep.subr.mxu0 0.0
    %2885 = vmatpush1.msra.mxu0 0.0
    %2886 = vmatprep.subr.mxu0 0.0
    %2887 = vmatpush1.msra.mxu0 0.0
    %2888 = vmatprep.subr.mxu0 0.0
    %2889 = vmatpush1.msra.mxu0 0.0
    %2890 = vmatprep.subr.mxu0 0.0
    %2891 = vmatpush1.msra.mxu0 0.0
    %2892 = vmatprep.subr.mxu0 0.0
    %2893 = vmatpush1.msra.mxu0 0.0
    %2894 = vmatprep.subr.mxu0 0.0
    %2895 = vmatpush1.msra.mxu0 0.0
    %2896 = vmatprep.subr.mxu0 0.0
    %2897 = vmatpush1.msra.mxu0 0.0
    %2898 = vmatprep.subr.mxu0 0.0
    %2899 = vmatpush1.msra.mxu0 0.0
    %2900 = vmatprep.subr.mxu0 0.0
    %2901 = vmatpush1.msra.mxu0 0.0
    %2902 = vmatprep.subr.mxu0 0.0
    %2903 = vmatpush1.msra.mxu0 0.0
    %2904 = vmatprep.subr.mxu0 0.0
    %2905 = vmatpush1.msra.mxu0 0.0
    %2906 = vmatprep.subr.mxu0 0.0
    %2907 = vmatpush1.msra.mxu0 0.0
    %2908 = vmatprep.subr.mxu0 0.0
    %2909 = vmatpush1.msra.mxu0 0.0
    %2910 = vmatprep.subr.mxu0 0.0
    %2911 = vmatpush1.msra.mxu0 0.0
    %2912 = vmatprep.mubr.f32.mxu0 0.0
    %2913 = vmatmul.mubr.f32.gmra.mrb[0].mxu0 %v2609
    %v2914 = vpop.f32.mrb[0].mxu0
    %v2915 = vadd.f32 %v2845, %v2914
    %v2916 = vpop.f32.mrb[0].mxu0
    %2917 = vdwg.mxu0
    %v2918 = vadd.f32 %v2915, %v1056
    %v2919 = vmul.f32 %v2918, %v31
    %v2920 = vtanh.pop %v2919
    %v2921 = vmul.f32 %v2920, %v31
    %v2922 = vadd.f32 %v2921, %v32
    %v2923 = vmul.f32 %v2922, %v2260
    %2925 = vrot.lane.b32.xlu0 %v2922, 64
    %v2926 = vpop.permute.xlu0 %2925
    %v2928 = vmul.f32 %v2922, %v2926
    %2930 = vrot.lane.b32.xlu0 %v2928, 32
    %v2931 = vpop.permute.xlu0 %2930
    %v2933 = vadd.f32 %v2923, %v2931
    %v2934 = vtanh.pop %v2933
    %2936 = vrot.lane.b32.xlu0 %v2934, 64
    %v2937 = vpop.permute.xlu0 %2936
    %v2939 = vmul.f32 %v2922, %v2937
    %2941 = vrot.lane.b32.xlu0 %v2433, 32
    %v2942 = vpop.permute.xlu0 %2941
    %v2943 = vsel %vm43, %v2942, 0
    %2945 = vmatprep.subr.mxu0 0.0
    %2946 = vmatpush1.msra.mxu0 %v1590
    %2947 = vmatprep.subr.mxu0 0.0
    %2948 = vmatpush1.msra.mxu0 %v1591
    %2949 = vmatprep.subr.mxu0 0.0
    %2950 = vmatpush1.msra.mxu0 %v1592
    %2951 = vmatprep.subr.mxu0 0.0
    %2952 = vmatpush1.msra.mxu0 %v1593
    %2953 = vmatprep.subr.mxu0 0.0
    %2954 = vmatpush1.msra.mxu0 0.0
    %2955 = vmatprep.subr.mxu0 0.0
    %2956 = vmatpush1.msra.mxu0 0.0
    %2957 = vmatprep.subr.mxu0 0.0
    %2958 = vmatpush1.msra.mxu0 0.0
    %2959 = vmatprep.subr.mxu0 0.0
    %2960 = vmatpush1.msra.mxu0 0.0
    %2961 = vmatprep.subr.mxu0 0.0
    %2962 = vmatpush1.msra.mxu0 0.0
    %2963 = vmatprep.subr.mxu0 0.0
    %2964 = vmatpush1.msra.mxu0 0.0
    %2965 = vmatprep.subr.mxu0 0.0
    %2966 = vmatpush1.msra.mxu0 0.0
    %2967 = vmatprep.subr.mxu0 0.0
    %2968 = vmatpush1.msra.mxu0 0.0
    %2969 = vmatprep.subr.mxu0 0.0
    %2970 = vmatpush1.msra.mxu0 0.0
    %2971 = vmatprep.subr.mxu0 0.0
    %2972 = vmatpush1.msra.mxu0 0.0
    %2973 = vmatprep.subr.mxu0 0.0
    %2974 = vmatpush1.msra.mxu0 0.0
    %2975 = vmatprep.subr.mxu0 0.0
    %2976 = vmatpush1.msra.mxu0 0.0
    %2977 = vmatprep.subr.mxu0 0.0
    %2978 = vmatpush1.msra.mxu0 0.0
    %2979 = vmatprep.subr.mxu0 0.0
    %2980 = vmatpush1.msra.mxu0 0.0
    %2981 = vmatprep.subr.mxu0 0.0
    %2982 = vmatpush1.msra.mxu0 0.0
    %2983 = vmatprep.subr.mxu0 0.0
    %2984 = vmatpush1.msra.mxu0 0.0
    %2985 = vmatprep.subr.mxu0 0.0
    %2986 = vmatpush1.msra.mxu0 0.0
    %2987 = vmatprep.subr.mxu0 0.0
    %2988 = vmatpush1.msra.mxu0 0.0
    %2989 = vmatprep.subr.mxu0 0.0
    %2990 = vmatpush1.msra.mxu0 0.0
    %2991 = vmatprep.subr.mxu0 0.0
    %2992 = vmatpush1.msra.mxu0 0.0
    %2993 = vmatprep.subr.mxu0 0.0
    %2994 = vmatpush1.msra.mxu0 0.0
    %2995 = vmatprep.subr.mxu0 0.0
    %2996 = vmatpush1.msra.mxu0 0.0
    %2997 = vmatprep.subr.mxu0 0.0
    %2998 = vmatpush1.msra.mxu0 0.0
    %2999 = vmatprep.subr.mxu0 0.0
    %3000 = vmatpush1.msra.mxu0 0.0
    %3001 = vmatprep.subr.mxu0 0.0
    %3002 = vmatpush1.msra.mxu0 0.0
    %3003 = vmatprep.subr.mxu0 0.0
    %3004 = vmatpush1.msra.mxu0 0.0
    %3005 = vmatprep.subr.mxu0 0.0
    %3006 = vmatpush1.msra.mxu0 0.0
    %3007 = vmatprep.subr.mxu0 0.0
    %3008 = vmatpush1.msra.mxu0 0.0
    %3009 = vmatprep.mubr.f32.mxu0 0.0
    %3010 = vmatmul.mubr.f32.gmra.mrb[0].mxu0 %v2943
    %v3011 = vpop.f32.mrb[0].mxu0
    %v3012 = vadd.f32 0.0, %v3011
    %v3013 = vpop.f32.mrb[0].mxu0
    %3014 = vdwg.mxu0
    %3015 = vmatprep.subr.mxu0 0.0
    %3016 = vmatpush1.msra.mxu0 %v1586
    %3017 = vmatprep.subr.mxu0 0.0
    %3018 = vmatpush1.msra.mxu0 %v1587
    %3019 = vmatprep.subr.mxu0 0.0
    %3020 = vmatpush1.msra.mxu0 %v1588
    %3021 = vmatprep.subr.mxu0 0.0
    %3022 = vmatpush1.msra.mxu0 %v1589
    %3023 = vmatprep.subr.mxu0 0.0
    %3024 = vmatpush1.msra.mxu0 0.0
    %3025 = vmatprep.subr.mxu0 0.0
    %3026 = vmatpush1.msra.mxu0 0.0
    %3027 = vmatprep.subr.mxu0 0.0
    %3028 = vmatpush1.msra.mxu0 0.0
    %3029 = vmatprep.subr.mxu0 0.0
    %3030 = vmatpush1.msra.mxu0 0.0
    %3031 = vmatprep.subr.mxu0 0.0
    %3032 = vmatpush1.msra.mxu0 0.0
    %3033 = vmatprep.subr.mxu0 0.0
    %3034 = vmatpush1.msra.mxu0 0.0
    %3035 = vmatprep.subr.mxu0 0.0
    %3036 = vmatpush1.msra.mxu0 0.0
    %3037 = vmatprep.subr.mxu0 0.0
    %3038 = vmatpush1.msra.mxu0 0.0
    %3039 = vmatprep.subr.mxu0 0.0
    %3040 = vmatpush1.msra.mxu0 0.0
    %3041 = vmatprep.subr.mxu0 0.0
    %3042 = vmatpush1.msra.mxu0 0.0
    %3043 = vmatprep.subr.mxu0 0.0
    %3044 = vmatpush1.msra.mxu0 0.0
    %3045 = vmatprep.subr.mxu0 0.0
    %3046 = vmatpush1.msra.mxu0 0.0
    %3047 = vmatprep.subr.mxu0 0.0
    %3048 = vmatpush1.msra.mxu0 0.0
    %3049 = vmatprep.subr.mxu0 0.0
    %3050 = vmatpush1.msra.mxu0 0.0
    %3051 = vmatprep.subr.mxu0 0.0
    %3052 = vmatpush1.msra.mxu0 0.0
    %3053 = vmatprep.subr.mxu0 0.0
    %3054 = vmatpush1.msra.mxu0 0.0
    %3055 = vmatprep.subr.mxu0 0.0
    %3056 = vmatpush1.msra.mxu0 0.0
    %3057 = vmatprep.subr.mxu0 0.0
    %3058 = vmatpush1.msra.mxu0 0.0
    %3059 = vmatprep.subr.mxu0 0.0
    %3060 = vmatpush1.msra.mxu0 0.0
    %3061 = vmatprep.subr.mxu0 0.0
    %3062 = vmatpush1.msra.mxu0 0.0
    %3063 = vmatprep.subr.mxu0 0.0
    %3064 = vmatpush1.msra.mxu0 0.0
    %3065 = vmatprep.subr.mxu0 0.0
    %3066 = vmatpush1.msra.mxu0 0.0
    %3067 = vmatprep.subr.mxu0 0.0
    %3068 = vmatpush1.msra.mxu0 0.0
    %3069 = vmatprep.subr.mxu0 0.0
    %3070 = vmatpush1.msra.mxu0 0.0
    %3071 = vmatprep.subr.mxu0 0.0
    %3072 = vmatpush1.msra.mxu0 0.0
    %3073 = vmatprep.subr.mxu0 0.0
    %3074 = vmatpush1.msra.mxu0 0.0
    %3075 = vmatprep.subr.mxu0 0.0
    %3076 = vmatpush1.msra.mxu0 0.0
    %3077 = vmatprep.subr.mxu0 0.0
    %3078 = vmatpush1.msra.mxu0 0.0
    %3079 = vmatprep.mubr.f32.mxu0 0.0
    %3080 = vmatmul.mubr.f32.gmra.mrb[0].mxu0 %v2776
    %v3081 = vpop.f32.mrb[0].mxu0
    %v3082 = vadd.f32 %v3012, %v3081
    %v3083 = vpop.f32.mrb[0].mxu0
    %3084 = vdwg.mxu0
    %v3085 = vadd.f32 %v3082, %v1738
    %v3086 = vmul.f32 %v3085, %v31
    %v3087 = vtanh.pop %v3086
    %v3088 = vmul.f32 %v3087, %v31
    %v3089 = vadd.f32 %v3088, %v32
    %v3090 = vmul.f32 %v3089, %v2427
    %3092 = vrot.lane.b32.xlu0 %v3089, 64
    %v3093 = vpop.permute.xlu0 %3092
    %v3095 = vmul.f32 %v3089, %v3093
    %3097 = vrot.lane.b32.xlu0 %v3095, 32
    %v3098 = vpop.permute.xlu0 %3097
    %v3100 = vadd.f32 %v3090, %v3098
    %v3101 = vtanh.pop %v3100
    %3103 = vrot.lane.b32.xlu0 %v3101, 64
    %v3104 = vpop.permute.xlu0 %3103
    %v3106 = vmul.f32 %v3089, %v3104
    %s3107 = scalar_lea.vmem %s0, 24
    %v3108 = vld [vmem:[%s3107] sm:$0xf]
    %3110 = vrot.lane.b32.xlu0 %v2605, 32
    %v3111 = vpop.permute.xlu0 %3110
    %v3112 = vsel %vm43, %v3111, 0
    %3114 = vmatprep.subr.mxu0 0.0
    %3115 = vmatpush1.msra.mxu0 %v37
    %3116 = vmatprep.subr.mxu0 0.0
    %3117 = vmatpush1.msra.mxu0 %v38
    %3118 = vmatprep.subr.mxu0 0.0
    %3119 = vmatpush1.msra.mxu0 %v39
    %3120 = vmatprep.subr.mxu0 0.0
    %3121 = vmatpush1.msra.mxu0 %v40
    %3122 = vmatprep.subr.mxu0 0.0
    %3123 = vmatpush1.msra.mxu0 0.0
    %3124 = vmatprep.subr.mxu0 0.0
    %3125 = vmatpush1.msra.mxu0 0.0
    %3126 = vmatprep.subr.mxu0 0.0
    %3127 = vmatpush1.msra.mxu0 0.0
    %3128 = vmatprep.subr.mxu0 0.0
    %3129 = vmatpush1.msra.mxu0 0.0
    %3130 = vmatprep.subr.mxu0 0.0
    %3131 = vmatpush1.msra.mxu0 0.0
    %3132 = vmatprep.subr.mxu0 0.0
    %3133 = vmatpush1.msra.mxu0 0.0
    %3134 = vmatprep.subr.mxu0 0.0
    %3135 = vmatpush1.msra.mxu0 0.0
    %3136 = vmatprep.subr.mxu0 0.0
    %3137 = vmatpush1.msra.mxu0 0.0
    %3138 = vmatprep.subr.mxu0 0.0
    %3139 = vmatpush1.msra.mxu0 0.0
    %3140 = vmatprep.subr.mxu0 0.0
    %3141 = vmatpush1.msra.mxu0 0.0
    %3142 = vmatprep.subr.mxu0 0.0
    %3143 = vmatpush1.msra.mxu0 0.0
    %3144 = vmatprep.subr.mxu0 0.0
    %3145 = vmatpush1.msra.mxu0 0.0
    %3146 = vmatprep.subr.mxu0 0.0
    %3147 = vmatpush1.msra.mxu0 0.0
    %3148 = vmatprep.subr.mxu0 0.0
    %3149 = vmatpush1.msra.mxu0 0.0
    %3150 = vmatprep.subr.mxu0 0.0
    %3151 = vmatpush1.msra.mxu0 0.0
    %3152 = vmatprep.subr.mxu0 0.0
    %3153 = vmatpush1.msra.mxu0 0.0
    %3154 = vmatprep.subr.mxu0 0.0
    %3155 = vmatpush1.msra.mxu0 0.0
    %3156 = vmatprep.subr.mxu0 0.0
    %3157 = vmatpush1.msra.mxu0 0.0
    %3158 = vmatprep.subr.mxu0 0.0
    %3159 = vmatpush1.msra.mxu0 0.0
    %3160 = vmatprep.subr.mxu0 0.0
    %3161 = vmatpush1.msra.mxu0 0.0
    %3162 = vmatprep.subr.mxu0 0.0
    %3163 = vmatpush1.msra.mxu0 0.0
    %3164 = vmatprep.subr.mxu0 0.0
    %3165 = vmatpush1.msra.mxu0 0.0
    %3166 = vmatprep.subr.mxu0 0.0
    %3167 = vmatpush1.msra.mxu0 0.0
    %3168 = vmatprep.subr.mxu0 0.0
    %3169 = vmatpush1.msra.mxu0 0.0
    %3170 = vmatprep.subr.mxu0 0.0
    %3171 = vmatpush1.msra.mxu0 0.0
    %3172 = vmatprep.subr.mxu0 0.0
    %3173 = vmatpush1.msra.mxu0 0.0
    %3174 = vmatprep.subr.mxu0 0.0
    %3175 = vmatpush1.msra.mxu0 0.0
    %3176 = vmatprep.subr.mxu0 0.0
    %3177 = vmatpush1.msra.mxu0 0.0
    %3178 = vmatprep.mubr.f32.mxu0 0.0
    %3179 = vmatmul.mubr.f32.gmra.mrb[0].mxu0 %v3112
    %v3180 = vpop.f32.mrb[0].mxu0
    %v3181 = vadd.f32 0.0, %v3180
    %v3182 = vpop.f32.mrb[0].mxu0
    %3183 = vdwg.mxu0
    %v3185 = vsel %vm43, %v3108, 0
    %3187 = vmatprep.subr.mxu0 0.0
    %3188 = vmatpush1.msra.mxu0 %v33
    %3189 = vmatprep.subr.mxu0 0.0
    %3190 = vmatpush1.msra.mxu0 %v34
    %3191 = vmatprep.subr.mxu0 0.0
    %3192 = vmatpush1.msra.mxu0 %v35
    %3193 = vmatprep.subr.mxu0 0.0
    %3194 = vmatpush1.msra.mxu0 %v36
    %3195 = vmatprep.subr.mxu0 0.0
    %3196 = vmatpush1.msra.mxu0 0.0
    %3197 = vmatprep.subr.mxu0 0.0
    %3198 = vmatpush1.msra.mxu0 0.0
    %3199 = vmatprep.subr.mxu0 0.0
    %3200 = vmatpush1.msra.mxu0 0.0
    %3201 = vmatprep.subr.mxu0 0.0
    %3202 = vmatpush1.msra.mxu0 0.0
    %3203 = vmatprep.subr.mxu0 0.0
    %3204 = vmatpush1.msra.mxu0 0.0
    %3205 = vmatprep.subr.mxu0 0.0
    %3206 = vmatpush1.msra.mxu0 0.0
    %3207 = vmatprep.subr.mxu0 0.0
    %3208 = vmatpush1.msra.mxu0 0.0
    %3209 = vmatprep.subr.mxu0 0.0
    %3210 = vmatpush1.msra.mxu0 0.0
    %3211 = vmatprep.subr.mxu0 0.0
    %3212 = vmatpush1.msra.mxu0 0.0
    %3213 = vmatprep.subr.mxu0 0.0
    %3214 = vmatpush1.msra.mxu0 0.0
    %3215 = vmatprep.subr.mxu0 0.0
    %3216 = vmatpush1.msra.mxu0 0.0
    %3217 = vmatprep.subr.mxu0 0.0
    %3218 = vmatpush1.msra.mxu0 0.0
    %3219 = vmatprep.subr.mxu0 0.0
    %3220 = vmatpush1.msra.mxu0 0.0
    %3221 = vmatprep.subr.mxu0 0.0
    %3222 = vmatpush1.msra.mxu0 0.0
    %3223 = vmatprep.subr.mxu0 0.0
    %3224 = vmatpush1.msra.mxu0 0.0
    %3225 = vmatprep.subr.mxu0 0.0
    %3226 = vmatpush1.msra.mxu0 0.0
    %3227 = vmatprep.subr.mxu0 0.0
    %3228 = vmatpush1.msra.mxu0 0.0
    %3229 = vmatprep.subr.mxu0 0.0
    %3230 = vmatpush1.msra.mxu0 0.0
    %3231 = vmatprep.subr.mxu0 0.0
    %3232 = vmatpush1.msra.mxu0 0.0
    %3233 = vmatprep.subr.mxu0 0.0
    %3234 = vmatpush1.msra.mxu0 0.0
    %3235 = vmatprep.subr.mxu0 0.0
    %3236 = vmatpush1.msra.mxu0 0.0
    %3237 = vmatprep.subr.mxu0 0.0
    %3238 = vmatpush1.msra.mxu0 0.0
    %3239 = vmatprep.subr.mxu0 0.0
    %3240 = vmatpush1.msra.mxu0 0.0
    %3241 = vmatprep.subr.mxu0 0.0
    %3242 = vmatpush1.msra.mxu0 0.0
    %3243 = vmatprep.subr.mxu0 0.0
    %3244 = vmatpush1.msra.mxu0 0.0
    %3245 = vmatprep.subr.mxu0 0.0
    %3246 = vmatpush1.msra.mxu0 0.0
    %3247 = vmatprep.subr.mxu0 0.0
    %3248 = vmatpush1.msra.mxu0 0.0
    %3249 = vmatprep.subr.mxu0 0.0
    %3250 = vmatpush1.msra.mxu0 0.0
    %3251 = vmatprep.mubr.f32.mxu0 0.0
    %3252 = vmatmul.mubr.f32.gmra.mrb[0].mxu0 %v3185
    %v3253 = vpop.f32.mrb[0].mxu0
    %v3254 = vadd.f32 %v3181, %v3253
    %v3255 = vpop.f32.mrb[0].mxu0
    %3256 = vdwg.mxu0
    %v3257 = vadd.f32 %v3254, %v193
    %v3258 = vmul.f32 %v3257, %v31
    %v3259 = vtanh.pop %v3258
    %v3260 = vmul.f32 %v3259, %v31
    %v3261 = vadd.f32 %v3260, %v32
    %v3262 = vmul.f32 %v3261, %v2599
    %3264 = vrot.lane.b32.xlu0 %v3261, 64
    %v3265 = vpop.permute.xlu0 %3264
    %v3267 = vmul.f32 %v3261, %v3265
    %3269 = vrot.lane.b32.xlu0 %v3267, 32
    %v3270 = vpop.permute.xlu0 %3269
    %v3272 = vadd.f32 %v3262, %v3270
    %v3273 = vtanh.pop %v3272
    %3275 = vrot.lane.b32.xlu0 %v3273, 64
    %v3276 = vpop.permute.xlu0 %3275
    %v3278 = vmul.f32 %v3261, %v3276
    %3280 = vrot.lane.b32.xlu0 %v2772, 32
    %v3281 = vpop.permute.xlu0 %3280
    %v3282 = vsel %vm43, %v3281, 0
    %3284 = vmatprep.subr.mxu0 0.0
    %3285 = vmatpush1.msra.mxu0 %v393
    %3286 = vmatprep.subr.mxu0 0.0
    %3287 = vmatpush1.msra.mxu0 %v394
    %3288 = vmatprep.subr.mxu0 0.0
    %3289 = vmatpush1.msra.mxu0 %v395
    %3290 = vmatprep.subr.mxu0 0.0
    %3291 = vmatpush1.msra.mxu0 %v396
    %3292 = vmatprep.subr.mxu0 0.0
    %3293 = vmatpush1.msra.mxu0 0.0
    %3294 = vmatprep.subr.mxu0 0.0
    %3295 = vmatpush1.msra.mxu0 0.0
    %3296 = vmatprep.subr.mxu0 0.0
    %3297 = vmatpush1.msra.mxu0 0.0
    %3298 = vmatprep.subr.mxu0 0.0
    %3299 = vmatpush1.msra.mxu0 0.0
    %3300 = vmatprep.subr.mxu0 0.0
    %3301 = vmatpush1.msra.mxu0 0.0
    %3302 = vmatprep.subr.mxu0 0.0
    %3303 = vmatpush1.msra.mxu0 0.0
    %3304 = vmatprep.subr.mxu0 0.0
    %3305 = vmatpush1.msra.mxu0 0.0
    %3306 = vmatprep.subr.mxu0 0.0
    %3307 = vmatpush1.msra.mxu0 0.0
    %3308 = vmatprep.subr.mxu0 0.0
    %3309 = vmatpush1.msra.mxu0 0.0
    %3310 = vmatprep.subr.mxu0 0.0
    %3311 = vmatpush1.msra.mxu0 0.0
    %3312 = vmatprep.subr.mxu0 0.0
    %3313 = vmatpush1.msra.mxu0 0.0
    %3314 = vmatprep.subr.mxu0 0.0
    %3315 = vmatpush1.msra.mxu0 0.0
    %3316 = vmatprep.subr.mxu0 0.0
    %3317 = vmatpush1.msra.mxu0 0.0
    %3318 = vmatprep.subr.mxu0 0.0
    %3319 = vmatpush1.msra.mxu0 0.0
    %3320 = vmatprep.subr.mxu0 0.0
    %3321 = vmatpush1.msra.mxu0 0.0
    %3322 = vmatprep.subr.mxu0 0.0
    %3323 = vmatpush1.msra.mxu0 0.0
    %3324 = vmatprep.subr.mxu0 0.0
    %3325 = vmatpush1.msra.mxu0 0.0
    %3326 = vmatprep.subr.mxu0 0.0
    %3327 = vmatpush1.msra.mxu0 0.0
    %3328 = vmatprep.subr.mxu0 0.0
    %3329 = vmatpush1.msra.mxu0 0.0
    %3330 = vmatprep.subr.mxu0 0.0
    %3331 = vmatpush1.msra.mxu0 0.0
    %3332 = vmatprep.subr.mxu0 0.0
    %3333 = vmatpush1.msra.mxu0 0.0
    %3334 = vmatprep.subr.mxu0 0.0
    %3335 = vmatpush1.msra.mxu0 0.0
    %3336 = vmatprep.subr.mxu0 0.0
    %3337 = vmatpush1.msra.mxu0 0.0
    %3338 = vmatprep.subr.mxu0 0.0
    %3339 = vmatpush1.msra.mxu0 0.0
    %3340 = vmatprep.subr.mxu0 0.0
    %3341 = vmatpush1.msra.mxu0 0.0
    %3342 = vmatprep.subr.mxu0 0.0
    %3343 = vmatpush1.msra.mxu0 0.0
    %3344 = vmatprep.subr.mxu0 0.0
    %3345 = vmatpush1.msra.mxu0 0.0
    %3346 = vmatprep.subr.mxu0 0.0
    %3347 = vmatpush1.msra.mxu0 0.0
    %3348 = vmatprep.mubr.f32.mxu0 0.0
    %3349 = vmatmul.mubr.f32.gmra.mrb[0].mxu0 %v3282
    %v3350 = vpop.f32.mrb[0].mxu0
    %v3351 = vadd.f32 0.0, %v3350
    %v3352 = vpop.f32.mrb[0].mxu0
    %3353 = vdwg.mxu0
    %3354 = vmatprep.subr.mxu0 0.0
    %3355 = vmatpush1.msra.mxu0 %v389
    %3356 = vmatprep.subr.mxu0 0.0
    %3357 = vmatpush1.msra.mxu0 %v390
    %3358 = vmatprep.subr.mxu0 0.0
    %3359 = vmatpush1.msra.mxu0 %v391
    %3360 = vmatprep.subr.mxu0 0.0
    %3361 = vmatpush1.msra.mxu0 %v392
    %3362 = vmatprep.subr.mxu0 0.0
    %3363 = vmatpush1.msra.mxu0 0.0
    %3364 = vmatprep.subr.mxu0 0.0
    %3365 = vmatpush1.msra.mxu0 0.0
    %3366 = vmatprep.subr.mxu0 0.0
    %3367 = vmatpush1.msra.mxu0 0.0
    %3368 = vmatprep.subr.mxu0 0.0
    %3369 = vmatpush1.msra.mxu0 0.0
    %3370 = vmatprep.subr.mxu0 0.0
    %3371 = vmatpush1.msra.mxu0 0.0
    %3372 = vmatprep.subr.mxu0 0.0
    %3373 = vmatpush1.msra.mxu0 0.0
    %3374 = vmatprep.subr.mxu0 0.0
    %3375 = vmatpush1.msra.mxu0 0.0
    %3376 = vmatprep.subr.mxu0 0.0
    %3377 = vmatpush1.msra.mxu0 0.0
    %3378 = vmatprep.subr.mxu0 0.0
    %3379 = vmatpush1.msra.mxu0 0.0
    %3380 = vmatprep.subr.mxu0 0.0
    %3381 = vmatpush1.msra.mxu0 0.0
    %3382 = vmatprep.subr.mxu0 0.0
    %3383 = vmatpush1.msra.mxu0 0.0
    %3384 = vmatprep.subr.mxu0 0.0
    %3385 = vmatpush1.msra.mxu0 0.0
    %3386 = vmatprep.subr.mxu0 0.0
    %3387 = vmatpush1.msra.mxu0 0.0
    %3388 = vmatprep.subr.mxu0 0.0
    %3389 = vmatpush1.msra.mxu0 0.0
    %3390 = vmatprep.subr.mxu0 0.0
    %3391 = vmatpush1.msra.mxu0 0.0
    %3392 = vmatprep.subr.mxu0 0.0
    %3393 = vmatpush1.msra.mxu0 0.0
    %3394 = vmatprep.subr.mxu0 0.0
    %3395 = vmatpush1.msra.mxu0 0.0
    %3396 = vmatprep.subr.mxu0 0.0
    %3397 = vmatpush1.msra.mxu0 0.0
    %3398 = vmatprep.subr.mxu0 0.0
    %3399 = vmatpush1.msra.mxu0 0.0
    %3400 = vmatprep.subr.mxu0 0.0
    %3401 = vmatpush1.msra.mxu0 0.0
    %3402 = vmatprep.subr.mxu0 0.0
    %3403 = vmatpush1.msra.mxu0 0.0
    %3404 = vmatprep.subr.mxu0 0.0
    %3405 = vmatpush1.msra.mxu0 0.0
    %3406 = vmatprep.subr.mxu0 0.0
    %3407 = vmatpush1.msra.mxu0 0.0
    %3408 = vmatprep.subr.mxu0 0.0
    %3409 = vmatpush1.msra.mxu0 0.0
    %3410 = vmatprep.subr.mxu0 0.0
    %3411 = vmatpush1.msra.mxu0 0.0
    %3412 = vmatprep.subr.mxu0 0.0
    %3413 = vmatpush1.msra.mxu0 0.0
    %3414 = vmatprep.subr.mxu0 0.0
    %3415 = vmatpush1.msra.mxu0 0.0
    %3416 = vmatprep.subr.mxu0 0.0
    %3417 = vmatpush1.msra.mxu0 0.0
    %3418 = vmatprep.mubr.f32.mxu0 0.0
    %3419 = vmatmul.mubr.f32.gmra.mrb[0].mxu0 %v3112
    %v3420 = vpop.f32.mrb[0].mxu0
    %v3421 = vadd.f32 %v3351, %v3420
    %v3422 = vpop.f32.mrb[0].mxu0
    %3423 = vdwg.mxu0
    %v3424 = vadd.f32 %v3421, %v541
    %v3425 = vmul.f32 %v3424, %v31
    %v3426 = vtanh.pop %v3425
    %v3427 = vmul.f32 %v3426, %v31
    %v3428 = vadd.f32 %v3427, %v32
    %v3429 = vmul.f32 %v3428, %v2766
    %3431 = vrot.lane.b32.xlu0 %v3428, 64
    %v3432 = vpop.permute.xlu0 %3431
    %v3434 = vmul.f32 %v3428, %v3432
    %3436 = vrot.lane.b32.xlu0 %v3434, 32
    %v3437 = vpop.permute.xlu0 %3436
    %v3439 = vadd.f32 %v3429, %v3437
    %v3440 = vtanh.pop %v3439
    %3442 = vrot.lane.b32.xlu0 %v3440, 64
    %v3443 = vpop.permute.xlu0 %3442
    %v3445 = vmul.f32 %v3428, %v3443
    %3447 = vrot.lane.b32.xlu0 %v2939, 32
    %v3448 = vpop.permute.xlu0 %3447
    %v3449 = vsel %vm43, %v3448, 0
    %3451 = vmatprep.subr.mxu0 0.0
    %3452 = vmatpush1.msra.mxu0 %v908
    %3453 = vmatprep.subr.mxu0 0.0
    %3454 = vmatpush1.msra.mxu0 %v909
    %3455 = vmatprep.subr.mxu0 0.0
    %3456 = vmatpush1.msra.mxu0 %v910
    %3457 = vmatprep.subr.mxu0 0.0
    %3458 = vmatpush1.msra.mxu0 %v911
    %3459 = vmatprep.subr.mxu0 0.0
    %3460 = vmatpush1.msra.mxu0 0.0
    %3461 = vmatprep.subr.mxu0 0.0
    %3462 = vmatpush1.msra.mxu0 0.0
    %3463 = vmatprep.subr.mxu0 0.0
    %3464 = vmatpush1.msra.mxu0 0.0
    %3465 = vmatprep.subr.mxu0 0.0
    %3466 = vmatpush1.msra.mxu0 0.0
    %3467 = vmatprep.subr.mxu0 0.0
    %3468 = vmatpush1.msra.mxu0 0.0
    %3469 = vmatprep.subr.mxu0 0.0
    %3470 = vmatpush1.msra.mxu0 0.0
    %3471 = vmatprep.subr.mxu0 0.0
    %3472 = vmatpush1.msra.mxu0 0.0
    %3473 = vmatprep.subr.mxu0 0.0
    %3474 = vmatpush1.msra.mxu0 0.0
    %3475 = vmatprep.subr.mxu0 0.0
    %3476 = vmatpush1.msra.mxu0 0.0
    %3477 = vmatprep.subr.mxu0 0.0
    %3478 = vmatpush1.msra.mxu0 0.0
    %3479 = vmatprep.subr.mxu0 0.0
    %3480 = vmatpush1.msra.mxu0 0.0
    %3481 = vmatprep.subr.mxu0 0.0
    %3482 = vmatpush1.msra.mxu0 0.0
    %3483 = vmatprep.subr.mxu0 0.0
    %3484 = vmatpush1.msra.mxu0 0.0
    %3485 = vmatprep.subr.mxu0 0.0
    %3486 = vmatpush1.msra.mxu0 0.0
    %3487 = vmatprep.subr.mxu0 0.0
    %3488 = vmatpush1.msra.mxu0 0.0
    %3489 = vmatprep.subr.mxu0 0.0
    %3490 = vmatpush1.msra.mxu0 0.0
    %3491 = vmatprep.subr.mxu0 0.0
    %3492 = vmatpush1.msra.mxu0 0.0
    %3493 = vmatprep.subr.mxu0 0.0
    %3494 = vmatpush1.msra.mxu0 0.0
    %3495 = vmatprep.subr.mxu0 0.0
    %3496 = vmatpush1.msra.mxu0 0.0
    %3497 = vmatprep.subr.mxu0 0.0
    %3498 = vmatpush1.msra.mxu0 0.0
    %3499 = vmatprep.subr.mxu0 0.0
    %3500 = vmatpush1.msra.mxu0 0.0
    %3501 = vmatprep.subr.mxu0 0.0
    %3502 = vmatpush1.msra.mxu0 0.0
    %3503 = vmatprep.subr.mxu0 0.0
    %3504 = vmatpush1.msra.mxu0 0.0
    %3505 = vmatprep.subr.mxu0 0.0
    %3506 = vmatpush1.msra.mxu0 0.0
    %3507 = vmatprep.subr.mxu0 0.0
    %3508 = vmatpush1.msra.mxu0 0.0
    %3509 = vmatprep.subr.mxu0 0.0
    %3510 = vmatpush1.msra.mxu0 0.0
    %3511 = vmatprep.subr.mxu0 0.0
    %3512 = vmatpush1.msra.mxu0 0.0
    %3513 = vmatprep.subr.mxu0 0.0
    %3514 = vmatpush1.msra.mxu0 0.0
    %3515 = vmatprep.mubr.f32.mxu0 0.0
    %3516 = vmatmul.mubr.f32.gmra.mrb[0].mxu0 %v3449
    %v3517 = vpop.f32.mrb[0].mxu0
    %v3518 = vadd.f32 0.0, %v3517
    %v3519 = vpop.f32.mrb[0].mxu0
    %3520 = vdwg.mxu0
    %3521 = vmatprep.subr.mxu0 0.0
    %3522 = vmatpush1.msra.mxu0 %v904
    %3523 = vmatprep.subr.mxu0 0.0
    %3524 = vmatpush1.msra.mxu0 %v905
    %3525 = vmatprep.subr.mxu0 0.0
    %3526 = vmatpush1.msra.mxu0 %v906
    %3527 = vmatprep.subr.mxu0 0.0
    %3528 = vmatpush1.msra.mxu0 %v907
    %3529 = vmatprep.subr.mxu0 0.0
    %3530 = vmatpush1.msra.mxu0 0.0
    %3531 = vmatprep.subr.mxu0 0.0
    %3532 = vmatpush1.msra.mxu0 0.0
    %3533 = vmatprep.subr.mxu0 0.0
    %3534 = vmatpush1.msra.mxu0 0.0
    %3535 = vmatprep.subr.mxu0 0.0
    %3536 = vmatpush1.msra.mxu0 0.0
    %3537 = vmatprep.subr.mxu0 0.0
    %3538 = vmatpush1.msra.mxu0 0.0
    %3539 = vmatprep.subr.mxu0 0.0
    %3540 = vmatpush1.msra.mxu0 0.0
    %3541 = vmatprep.subr.mxu0 0.0
    %3542 = vmatpush1.msra.mxu0 0.0
    %3543 = vmatprep.subr.mxu0 0.0
    %3544 = vmatpush1.msra.mxu0 0.0
    %3545 = vmatprep.subr.mxu0 0.0
    %3546 = vmatpush1.msra.mxu0 0.0
    %3547 = vmatprep.subr.mxu0 0.0
    %3548 = vmatpush1.msra.mxu0 0.0
    %3549 = vmatprep.subr.mxu0 0.0
    %3550 = vmatpush1.msra.mxu0 0.0
    %3551 = vmatprep.subr.mxu0 0.0
    %3552 = vmatpush1.msra.mxu0 0.0
    %3553 = vmatprep.subr.mxu0 0.0
    %3554 = vmatpush1.msra.mxu0 0.0
    %3555 = vmatprep.subr.mxu0 0.0
    %3556 = vmatpush1.msra.mxu0 0.0
    %3557 = vmatprep.subr.mxu0 0.0
    %3558 = vmatpush1.msra.mxu0 0.0
    %3559 = vmatprep.subr.mxu0 0.0
    %3560 = vmatpush1.msra.mxu0 0.0
    %3561 = vmatprep.subr.mxu0 0.0
    %3562 = vmatpush1.msra.mxu0 0.0
    %3563 = vmatprep.subr.mxu0 0.0
    %3564 = vmatpush1.msra.mxu0 0.0
    %3565 = vmatprep.subr.mxu0 0.0
    %3566 = vmatpush1.msra.mxu0 0.0
    %3567 = vmatprep.subr.mxu0 0.0
    %3568 = vmatpush1.msra.mxu0 0.0
    %3569 = vmatprep.subr.mxu0 0.0
    %3570 = vmatpush1.msra.mxu0 0.0
    %3571 = vmatprep.subr.mxu0 0.0
    %3572 = vmatpush1.msra.mxu0 0.0
    %3573 = vmatprep.subr.mxu0 0.0
    %3574 = vmatpush1.msra.mxu0 0.0
    %3575 = vmatprep.subr.mxu0 0.0
    %3576 = vmatpush1.msra.mxu0 0.0
    %3577 = vmatprep.subr.mxu0 0.0
    %3578 = vmatpush1.msra.mxu0 0.0
    %3579 = vmatprep.subr.mxu0 0.0
    %3580 = vmatpush1.msra.mxu0 0.0
    %3581 = vmatprep.subr.mxu0 0.0
    %3582 = vmatpush1.msra.mxu0 0.0
    %3583 = vmatprep.subr.mxu0 0.0
    %3584 = vmatpush1.msra.mxu0 0.0
    %3585 = vmatprep.mubr.f32.mxu0 0.0
    %3586 = vmatmul.mubr.f32.gmra.mrb[0].mxu0 %v3282
    %v3587 = vpop.f32.mrb[0].mxu0
    %v3588 = vadd.f32 %v3518, %v3587
    %v3589 = vpop.f32.mrb[0].mxu0
    %3590 = vdwg.mxu0
    %v3591 = vadd.f32 %v3588, %v1056
    %v3592 = vmul.f32 %v3591, %v31
    %v3593 = vtanh.pop %v3592
    %v3594 = vmul.f32 %v3593, %v31
    %v3595 = vadd.f32 %v3594, %v32
    %v3596 = vmul.f32 %v3595, %v2933
    %3598 = vrot.lane.b32.xlu0 %v3595, 64
    %v3599 = vpop.permute.xlu0 %3598
    %v3601 = vmul.f32 %v3595, %v3599
    %3603 = vrot.lane.b32.xlu0 %v3601, 32
    %v3604 = vpop.permute.xlu0 %3603
    %v3606 = vadd.f32 %v3596, %v3604
    %v3607 = vtanh.pop %v3606
    %3609 = vrot.lane.b32.xlu0 %v3607, 64
    %v3610 = vpop.permute.xlu0 %3609
    %v3612 = vmul.f32 %v3595, %v3610
    %3614 = vrot.lane.b32.xlu0 %v3106, 32
    %v3615 = vpop.permute.xlu0 %3614
    %v3616 = vsel %vm43, %v3615, 0
    %3618 = vmatprep.subr.mxu0 0.0
    %3619 = vmatpush1.msra.mxu0 %v1590
    %3620 = vmatprep.subr.mxu0 0.0
    %3621 = vmatpush1.msra.mxu0 %v1591
    %3622 = vmatprep.subr.mxu0 0.0
    %3623 = vmatpush1.msra.mxu0 %v1592
    %3624 = vmatprep.subr.mxu0 0.0
    %3625 = vmatpush1.msra.mxu0 %v1593
    %3626 = vmatprep.subr.mxu0 0.0
    %3627 = vmatpush1.msra.mxu0 0.0
    %3628 = vmatprep.subr.mxu0 0.0
    %3629 = vmatpush1.msra.mxu0 0.0
    %3630 = vmatprep.subr.mxu0 0.0
    %3631 = vmatpush1.msra.mxu0 0.0
    %3632 = vmatprep.subr.mxu0 0.0
    %3633 = vmatpush1.msra.mxu0 0.0
    %3634 = vmatprep.subr.mxu0 0.0
    %3635 = vmatpush1.msra.mxu0 0.0
    %3636 = vmatprep.subr.mxu0 0.0
    %3637 = vmatpush1.msra.mxu0 0.0
    %3638 = vmatprep.subr.mxu0 0.0
    %3639 = vmatpush1.msra.mxu0 0.0
    %3640 = vmatprep.subr.mxu0 0.0
    %3641 = vmatpush1.msra.mxu0 0.0
    %3642 = vmatprep.subr.mxu0 0.0
    %3643 = vmatpush1.msra.mxu0 0.0
    %3644 = vmatprep.subr.mxu0 0.0
    %3645 = vmatpush1.msra.mxu0 0.0
    %3646 = vmatprep.subr.mxu0 0.0
    %3647 = vmatpush1.msra.mxu0 0.0
    %3648 = vmatprep.subr.mxu0 0.0
    %3649 = vmatpush1.msra.mxu0 0.0
    %3650 = vmatprep.subr.mxu0 0.0
    %3651 = vmatpush1.msra.mxu0 0.0
    %3652 = vmatprep.subr.mxu0 0.0
    %3653 = vmatpush1.msra.mxu0 0.0
    %3654 = vmatprep.subr.mxu0 0.0
    %3655 = vmatpush1.msra.mxu0 0.0
    %3656 = vmatprep.subr.mxu0 0.0
    %3657 = vmatpush1.msra.mxu0 0.0
    %3658 = vmatprep.subr.mxu0 0.0
    %3659 = vmatpush1.msra.mxu0 0.0
    %3660 = vmatprep.subr.mxu0 0.0
    %3661 = vmatpush1.msra.mxu0 0.0
    %3662 = vmatprep.subr.mxu0 0.0
    %3663 = vmatpush1.msra.mxu0 0.0
    %3664 = vmatprep.subr.mxu0 0.0
    %3665 = vmatpush1.msra.mxu0 0.0
    %3666 = vmatprep.subr.mxu0 0.0
    %3667 = vmatpush1.msra.mxu0 0.0
    %3668 = vmatprep.subr.mxu0 0.0
    %3669 = vmatpush1.msra.mxu0 0.0
    %3670 = vmatprep.subr.mxu0 0.0
    %3671 = vmatpush1.msra.mxu0 0.0
    %3672 = vmatprep.subr.mxu0 0.0
    %3673 = vmatpush1.msra.mxu0 0.0
    %3674 = vmatprep.subr.mxu0 0.0
    %3675 = vmatpush1.msra.mxu0 0.0
    %3676 = vmatprep.subr.mxu0 0.0
    %3677 = vmatpush1.msra.mxu0 0.0
    %3678 = vmatprep.subr.mxu0 0.0
    %3679 = vmatpush1.msra.mxu0 0.0
    %3680 = vmatprep.subr.mxu0 0.0
    %3681 = vmatpush1.msra.mxu0 0.0
    %3682 = vmatprep.mubr.f32.mxu0 0.0
    %3683 = vmatmul.mubr.f32.gmra.mrb[0].mxu0 %v3616
    %v3684 = vpop.f32.mrb[0].mxu0
    %v3685 = vadd.f32 0.0, %v3684
    %v3686 = vpop.f32.mrb[0].mxu0
    %3687 = vdwg.mxu0
    %3688 = vmatprep.subr.mxu0 0.0
    %3689 = vmatpush1.msra.mxu0 %v1586
    %3690 = vmatprep.subr.mxu0 0.0
    %3691 = vmatpush1.msra.mxu0 %v1587
    %3692 = vmatprep.subr.mxu0 0.0
    %3693 = vmatpush1.msra.mxu0 %v1588
    %3694 = vmatprep.subr.mxu0 0.0
    %3695 = vmatpush1.msra.mxu0 %v1589
    %3696 = vmatprep.subr.mxu0 0.0
    %3697 = vmatpush1.msra.mxu0 0.0
    %3698 = vmatprep.subr.mxu0 0.0
    %3699 = vmatpush1.msra.mxu0 0.0
    %3700 = vmatprep.subr.mxu0 0.0
    %3701 = vmatpush1.msra.mxu0 0.0
    %3702 = vmatprep.subr.mxu0 0.0
    %3703 = vmatpush1.msra.mxu0 0.0
    %3704 = vmatprep.subr.mxu0 0.0
    %3705 = vmatpush1.msra.mxu0 0.0
    %3706 = vmatprep.subr.mxu0 0.0
    %3707 = vmatpush1.msra.mxu0 0.0
    %3708 = vmatprep.subr.mxu0 0.0
    %3709 = vmatpush1.msra.mxu0 0.0
    %3710 = vmatprep.subr.mxu0 0.0
    %3711 = vmatpush1.msra.mxu0 0.0
    %3712 = vmatprep.subr.mxu0 0.0
    %3713 = vmatpush1.msra.mxu0 0.0
    %3714 = vmatprep.subr.mxu0 0.0
    %3715 = vmatpush1.msra.mxu0 0.0
    %3716 = vmatprep.subr.mxu0 0.0
    %3717 = vmatpush1.msra.mxu0 0.0
    %3718 = vmatprep.subr.mxu0 0.0
    %3719 = vmatpush1.msra.mxu0 0.0
    %3720 = vmatprep.subr.mxu0 0.0
    %3721 = vmatpush1.msra.mxu0 0.0
    %3722 = vmatprep.subr.mxu0 0.0
    %3723 = vmatpush1.msra.mxu0 0.0
    %3724 = vmatprep.subr.mxu0 0.0
    %3725 = vmatpush1.msra.mxu0 0.0
    %3726 = vmatprep.subr.mxu0 0.0
    %3727 = vmatpush1.msra.mxu0 0.0
    %3728 = vmatprep.subr.mxu0 0.0
    %3729 = vmatpush1.msra.mxu0 0.0
    %3730 = vmatprep.subr.mxu0 0.0
    %3731 = vmatpush1.msra.mxu0 0.0
    %3732 = vmatprep.subr.mxu0 0.0
    %3733 = vmatpush1.msra.mxu0 0.0
    %3734 = vmatprep.subr.mxu0 0.0
    %3735 = vmatpush1.msra.mxu0 0.0
    %3736 = vmatprep.subr.mxu0 0.0
    %3737 = vmatpush1.msra.mxu0 0.0
    %3738 = vmatprep.subr.mxu0 0.0
    %3739 = vmatpush1.msra.mxu0 0.0
    %3740 = vmatprep.subr.mxu0 0.0
    %3741 = vmatpush1.msra.mxu0 0.0
    %3742 = vmatprep.subr.mxu0 0.0
    %3743 = vmatpush1.msra.mxu0 0.0
    %3744 = vmatprep.subr.mxu0 0.0
    %3745 = vmatpush1.msra.mxu0 0.0
    %3746 = vmatprep.subr.mxu0 0.0
    %3747 = vmatpush1.msra.mxu0 0.0
    %3748 = vmatprep.subr.mxu0 0.0
    %3749 = vmatpush1.msra.mxu0 0.0
    %3750 = vmatprep.subr.mxu0 0.0
    %3751 = vmatpush1.msra.mxu0 0.0
    %3752 = vmatprep.mubr.f32.mxu0 0.0
    %3753 = vmatmul.mubr.f32.gmra.mrb[0].mxu0 %v3449
    %v3754 = vpop.f32.mrb[0].mxu0
    %v3755 = vadd.f32 %v3685, %v3754
    %v3756 = vpop.f32.mrb[0].mxu0
    %3757 = vdwg.mxu0
    %v3758 = vadd.f32 %v3755, %v1738
    %v3759 = vmul.f32 %v3758, %v31
    %v3760 = vtanh.pop %v3759
    %v3761 = vmul.f32 %v3760, %v31
    %v3762 = vadd.f32 %v3761, %v32
    %v3763 = vmul.f32 %v3762, %v3100
    %3765 = vrot.lane.b32.xlu0 %v3762, 64
    %v3766 = vpop.permute.xlu0 %3765
    %v3768 = vmul.f32 %v3762, %v3766
    %3770 = vrot.lane.b32.xlu0 %v3768, 32
    %v3771 = vpop.permute.xlu0 %3770
    %v3773 = vadd.f32 %v3763, %v3771
    %v3774 = vtanh.pop %v3773
    %3776 = vrot.lane.b32.xlu0 %v3774, 64
    %v3777 = vpop.permute.xlu0 %3776
    %v3779 = vmul.f32 %v3762, %v3777
    %s3780 = scalar_lea.vmem %s0, 28
    %v3781 = vld [vmem:[%s3780] sm:$0xf]
    %3783 = vrot.lane.b32.xlu0 %v3278, 32
    %v3784 = vpop.permute.xlu0 %3783
    %v3785 = vsel %vm43, %v3784, 0
    %3787 = vmatprep.subr.mxu0 0.0
    %3788 = vmatpush1.msra.mxu0 %v37
    %3789 = vmatprep.subr.mxu0 0.0
    %3790 = vmatpush1.msra.mxu0 %v38
    %3791 = vmatprep.subr.mxu0 0.0
    %3792 = vmatpush1.msra.mxu0 %v39
    %3793 = vmatprep.subr.mxu0 0.0
    %3794 = vmatpush1.msra.mxu0 %v40
    %3795 = vmatprep.subr.mxu0 0.0
    %3796 = vmatpush1.msra.mxu0 0.0
    %3797 = vmatprep.subr.mxu0 0.0
    %3798 = vmatpush1.msra.mxu0 0.0
    %3799 = vmatprep.subr.mxu0 0.0
    %3800 = vmatpush1.msra.mxu0 0.0
    %3801 = vmatprep.subr.mxu0 0.0
    %3802 = vmatpush1.msra.mxu0 0.0
    %3803 = vmatprep.subr.mxu0 0.0
    %3804 = vmatpush1.msra.mxu0 0.0
    %3805 = vmatprep.subr.mxu0 0.0
    %3806 = vmatpush1.msra.mxu0 0.0
    %3807 = vmatprep.subr.mxu0 0.0
    %3808 = vmatpush1.msra.mxu0 0.0
    %3809 = vmatprep.subr.mxu0 0.0
    %3810 = vmatpush1.msra.mxu0 0.0
    %3811 = vmatprep.subr.mxu0 0.0
    %3812 = vmatpush1.msra.mxu0 0.0
    %3813 = vmatprep.subr.mxu0 0.0
    %3814 = vmatpush1.msra.mxu0 0.0
    %3815 = vmatprep.subr.mxu0 0.0
    %3816 = vmatpush1.msra.mxu0 0.0
    %3817 = vmatprep.subr.mxu0 0.0
    %3818 = vmatpush1.msra.mxu0 0.0
    %3819 = vmatprep.subr.mxu0 0.0
    %3820 = vmatpush1.msra.mxu0 0.0
    %3821 = vmatprep.subr.mxu0 0.0
    %3822 = vmatpush1.msra.mxu0 0.0
    %3823 = vmatprep.subr.mxu0 0.0
    %3824 = vmatpush1.msra.mxu0 0.0
    %3825 = vmatprep.subr.mxu0 0.0
    %3826 = vmatpush1.msra.mxu0 0.0
    %3827 = vmatprep.subr.mxu0 0.0
    %3828 = vmatpush1.msra.mxu0 0.0
    %3829 = vmatprep.subr.mxu0 0.0
    %3830 = vmatpush1.msra.mxu0 0.0
    %3831 = vmatprep.subr.mxu0 0.0
    %3832 = vmatpush1.msra.mxu0 0.0
    %3833 = vmatprep.subr.mxu0 0.0
    %3834 = vmatpush1.msra.mxu0 0.0
    %3835 = vmatprep.subr.mxu0 0.0
    %3836 = vmatpush1.msra.mxu0 0.0
    %3837 = vmatprep.subr.mxu0 0.0
    %3838 = vmatpush1.msra.mxu0 0.0
    %3839 = vmatprep.subr.mxu0 0.0
    %3840 = vmatpush1.msra.mxu0 0.0
    %3841 = vmatprep.subr.mxu0 0.0
    %3842 = vmatpush1.msra.mxu0 0.0
    %3843 = vmatprep.subr.mxu0 0.0
    %3844 = vmatpush1.msra.mxu0 0.0
    %3845 = vmatprep.subr.mxu0 0.0
    %3846 = vmatpush1.msra.mxu0 0.0
    %3847 = vmatprep.subr.mxu0 0.0
    %3848 = vmatpush1.msra.mxu0 0.0
    %3849 = vmatprep.subr.mxu0 0.0
    %3850 = vmatpush1.msra.mxu0 0.0
    %3851 = vmatprep.mubr.f32.mxu0 0.0
    %3852 = vmatmul.mubr.f32.gmra.mrb[0].mxu0 %v3785
    %v3853 = vpop.f32.mrb[0].mxu0
    %v3854 = vadd.f32 0.0, %v3853
    %v3855 = vpop.f32.mrb[0].mxu0
    %3856 = vdwg.mxu0
    %v3858 = vsel %vm43, %v3781, 0
    %3860 = vmatprep.subr.mxu0 0.0
    %3861 = vmatpush1.msra.mxu0 %v33
    %3862 = vmatprep.subr.mxu0 0.0
    %3863 = vmatpush1.msra.mxu0 %v34
    %3864 = vmatprep.subr.mxu0 0.0
    %3865 = vmatpush1.msra.mxu0 %v35
    %3866 = vmatprep.subr.mxu0 0.0
    %3867 = vmatpush1.msra.mxu0 %v36
    %3868 = vmatprep.subr.mxu0 0.0
    %3869 = vmatpush1.msra.mxu0 0.0
    %3870 = vmatprep.subr.mxu0 0.0
    %3871 = vmatpush1.msra.mxu0 0.0
    %3872 = vmatprep.subr.mxu0 0.0
    %3873 = vmatpush1.msra.mxu0 0.0
    %3874 = vmatprep.subr.mxu0 0.0
    %3875 = vmatpush1.msra.mxu0 0.0
    %3876 = vmatprep.subr.mxu0 0.0
    %3877 = vmatpush1.msra.mxu0 0.0
    %3878 = vmatprep.subr.mxu0 0.0
    %3879 = vmatpush1.msra.mxu0 0.0
    %3880 = vmatprep.subr.mxu0 0.0
    %3881 = vmatpush1.msra.mxu0 0.0
    %3882 = vmatprep.subr.mxu0 0.0
    %3883 = vmatpush1.msra.mxu0 0.0
    %3884 = vmatprep.subr.mxu0 0.0
    %3885 = vmatpush1.msra.mxu0 0.0
    %3886 = vmatprep.subr.mxu0 0.0
    %3887 = vmatpush1.msra.mxu0 0.0
    %3888 = vmatprep.subr.mxu0 0.0
    %3889 = vmatpush1.msra.mxu0 0.0
    %3890 = vmatprep.subr.mxu0 0.0
    %3891 = vmatpush1.msra.mxu0 0.0
    %3892 = vmatprep.subr.mxu0 0.0
    %3893 = vmatpush1.msra.mxu0 0.0
    %3894 = vmatprep.subr.mxu0 0.0
    %3895 = vmatpush1.msra.mxu0 0.0
    %3896 = vmatprep.subr.mxu0 0.0
    %3897 = vmatpush1.msra.mxu0 0.0
    %3898 = vmatprep.subr.mxu0 0.0
    %3899 = vmatpush1.msra.mxu0 0.0
    %3900 = vmatprep.subr.mxu0 0.0
    %3901 = vmatpush1.msra.mxu0 0.0
    %3902 = vmatprep.subr.mxu0 0.0
    %3903 = vmatpush1.msra.mxu0 0.0
    %3904 = vmatprep.subr.mxu0 0.0
    %3905 = vmatpush1.msra.mxu0 0.0
    %3906 = vmatprep.subr.mxu0 0.0
    %3907 = vmatpush1.msra.mxu0 0.0
    %3908 = vmatprep.subr.mxu0 0.0
    %3909 = vmatpush1.msra.mxu0 0.0
    %3910 = vmatprep.subr.mxu0 0.0
    %3911 = vmatpush1.msra.mxu0 0.0
    %3912 = vmatprep.subr.mxu0 0.0
    %3913 = vmatpush1.msra.mxu0 0.0
    %3914 = vmatprep.subr.mxu0 0.0
    %3915 = vmatpush1.msra.mxu0 0.0
    %3916 = vmatprep.subr.mxu0 0.0
    %3917 = vmatpush1.msra.mxu0 0.0
    %3918 = vmatprep.subr.mxu0 0.0
    %3919 = vmatpush1.msra.mxu0 0.0
    %3920 = vmatprep.subr.mxu0 0.0
    %3921 = vmatpush1.msra.mxu0 0.0
    %3922 = vmatprep.subr.mxu0 0.0
    %3923 = vmatpush1.msra.mxu0 0.0
    %3924 = vmatprep.mubr.f32.mxu0 0.0
    %3925 = vmatmul.mubr.f32.gmra.mrb[0].mxu0 %v3858
    %v3926 = vpop.f32.mrb[0].mxu0
    %v3927 = vadd.f32 %v3854, %v3926
    %v3928 = vpop.f32.mrb[0].mxu0
    %3929 = vdwg.mxu0
    %v3930 = vadd.f32 %v3927, %v193
    %v3931 = vmul.f32 %v3930, %v31
    %v3932 = vtanh.pop %v3931
    %v3933 = vmul.f32 %v3932, %v31
    %v3934 = vadd.f32 %v3933, %v32
    %v3935 = vmul.f32 %v3934, %v3272
    %3937 = vrot.lane.b32.xlu0 %v3934, 64
    %v3938 = vpop.permute.xlu0 %3937
    %v3940 = vmul.f32 %v3934, %v3938
    %3942 = vrot.lane.b32.xlu0 %v3940, 32
    %v3943 = vpop.permute.xlu0 %3942
    %v3945 = vadd.f32 %v3935, %v3943
    %v3946 = vtanh.pop %v3945
    %3948 = vrot.lane.b32.xlu0 %v3946, 64
    %v3949 = vpop.permute.xlu0 %3948
    %v3951 = vmul.f32 %v3934, %v3949
    %3953 = vrot.lane.b32.xlu0 %v3445, 32
    %v3954 = vpop.permute.xlu0 %3953
    %v3955 = vsel %vm43, %v3954, 0
    %3957 = vmatprep.subr.mxu0 0.0
    %3958 = vmatpush1.msra.mxu0 %v393
    %3959 = vmatprep.subr.mxu0 0.0
    %3960 = vmatpush1.msra.mxu0 %v394
    %3961 = vmatprep.subr.mxu0 0.0
    %3962 = vmatpush1.msra.mxu0 %v395
    %3963 = vmatprep.subr.mxu0 0.0
    %3964 = vmatpush1.msra.mxu0 %v396
    %3965 = vmatprep.subr.mxu0 0.0
    %3966 = vmatpush1.msra.mxu0 0.0
    %3967 = vmatprep.subr.mxu0 0.0
    %3968 = vmatpush1.msra.mxu0 0.0
    %3969 = vmatprep.subr.mxu0 0.0
    %3970 = vmatpush1.msra.mxu0 0.0
    %3971 = vmatprep.subr.mxu0 0.0
    %3972 = vmatpush1.msra.mxu0 0.0
    %3973 = vmatprep.subr.mxu0 0.0
    %3974 = vmatpush1.msra.mxu0 0.0
    %3975 = vmatprep.subr.mxu0 0.0
    %3976 = vmatpush1.msra.mxu0 0.0
    %3977 = vmatprep.subr.mxu0 0.0
    %3978 = vmatpush1.msra.mxu0 0.0
    %3979 = vmatprep.subr.mxu0 0.0
    %3980 = vmatpush1.msra.mxu0 0.0
    %3981 = vmatprep.subr.mxu0 0.0
    %3982 = vmatpush1.msra.mxu0 0.0
    %3983 = vmatprep.subr.mxu0 0.0
    %3984 = vmatpush1.msra.mxu0 0.0
    %3985 = vmatprep.subr.mxu0 0.0
    %3986 = vmatpush1.msra.mxu0 0.0
    %3987 = vmatprep.subr.mxu0 0.0
    %3988 = vmatpush1.msra.mxu0 0.0
    %3989 = vmatprep.subr.mxu0 0.0
    %3990 = vmatpush1.msra.mxu0 0.0
    %3991 = vmatprep.subr.mxu0 0.0
    %3992 = vmatpush1.msra.mxu0 0.0
    %3993 = vmatprep.subr.mxu0 0.0
    %3994 = vmatpush1.msra.mxu0 0.0
    %3995 = vmatprep.subr.mxu0 0.0
    %3996 = vmatpush1.msra.mxu0 0.0
    %3997 = vmatprep.subr.mxu0 0.0
    %3998 = vmatpush1.msra.mxu0 0.0
    %3999 = vmatprep.subr.mxu0 0.0
    %4000 = vmatpush1.msra.mxu0 0.0
    %4001 = vmatprep.subr.mxu0 0.0
    %4002 = vmatpush1.msra.mxu0 0.0
    %4003 = vmatprep.subr.mxu0 0.0
    %4004 = vmatpush1.msra.mxu0 0.0
    %4005 = vmatprep.subr.mxu0 0.0
    %4006 = vmatpush1.msra.mxu0 0.0
    %4007 = vmatprep.subr.mxu0 0.0
    %4008 = vmatpush1.msra.mxu0 0.0
    %4009 = vmatprep.subr.mxu0 0.0
    %4010 = vmatpush1.msra.mxu0 0.0
    %4011 = vmatprep.subr.mxu0 0.0
    %4012 = vmatpush1.msra.mxu0 0.0
    %4013 = vmatprep.subr.mxu0 0.0
    %4014 = vmatpush1.msra.mxu0 0.0
    %4015 = vmatprep.subr.mxu0 0.0
    %4016 = vmatpush1.msra.mxu0 0.0
    %4017 = vmatprep.subr.mxu0 0.0
    %4018 = vmatpush1.msra.mxu0 0.0
    %4019 = vmatprep.subr.mxu0 0.0
    %4020 = vmatpush1.msra.mxu0 0.0
    %4021 = vmatprep.mubr.f32.mxu0 0.0
    %4022 = vmatmul.mubr.f32.gmra.mrb[0].mxu0 %v3955
    %v4023 = vpop.f32.mrb[0].mxu0
    %v4024 = vadd.f32 0.0, %v4023
    %v4025 = vpop.f32.mrb[0].mxu0
    %4026 = vdwg.mxu0
    %4027 = vmatprep.subr.mxu0 0.0
    %4028 = vmatpush1.msra.mxu0 %v389
    %4029 = vmatprep.subr.mxu0 0.0
    %4030 = vmatpush1.msra.mxu0 %v390
    %4031 = vmatprep.subr.mxu0 0.0
    %4032 = vmatpush1.msra.mxu0 %v391
    %4033 = vmatprep.subr.mxu0 0.0
    %4034 = vmatpush1.msra.mxu0 %v392
    %4035 = vmatprep.subr.mxu0 0.0
    %4036 = vmatpush1.msra.mxu0 0.0
    %4037 = vmatprep.subr.mxu0 0.0
    %4038 = vmatpush1.msra.mxu0 0.0
    %4039 = vmatprep.subr.mxu0 0.0
    %4040 = vmatpush1.msra.mxu0 0.0
    %4041 = vmatprep.subr.mxu0 0.0
    %4042 = vmatpush1.msra.mxu0 0.0
    %4043 = vmatprep.subr.mxu0 0.0
    %4044 = vmatpush1.msra.mxu0 0.0
    %4045 = vmatprep.subr.mxu0 0.0
    %4046 = vmatpush1.msra.mxu0 0.0
    %4047 = vmatprep.subr.mxu0 0.0
    %4048 = vmatpush1.msra.mxu0 0.0
    %4049 = vmatprep.subr.mxu0 0.0
    %4050 = vmatpush1.msra.mxu0 0.0
    %4051 = vmatprep.subr.mxu0 0.0
    %4052 = vmatpush1.msra.mxu0 0.0
    %4053 = vmatprep.subr.mxu0 0.0
    %4054 = vmatpush1.msra.mxu0 0.0
    %4055 = vmatprep.subr.mxu0 0.0
    %4056 = vmatpush1.msra.mxu0 0.0
    %4057 = vmatprep.subr.mxu0 0.0
    %4058 = vmatpush1.msra.mxu0 0.0
    %4059 = vmatprep.subr.mxu0 0.0
    %4060 = vmatpush1.msra.mxu0 0.0
    %4061 = vmatprep.subr.mxu0 0.0
    %4062 = vmatpush1.msra.mxu0 0.0
    %4063 = vmatprep.subr.mxu0 0.0
    %4064 = vmatpush1.msra.mxu0 0.0
    %4065 = vmatprep.subr.mxu0 0.0
    %4066 = vmatpush1.msra.mxu0 0.0
    %4067 = vmatprep.subr.mxu0 0.0
    %4068 = vmatpush1.msra.mxu0 0.0
    %4069 = vmatprep.subr.mxu0 0.0
    %4070 = vmatpush1.msra.mxu0 0.0
    %4071 = vmatprep.subr.mxu0 0.0
    %4072 = vmatpush1.msra.mxu0 0.0
    %4073 = vmatprep.subr.mxu0 0.0
    %4074 = vmatpush1.msra.mxu0 0.0
    %4075 = vmatprep.subr.mxu0 0.0
    %4076 = vmatpush1.msra.mxu0 0.0
    %4077 = vmatprep.subr.mxu0 0.0
    %4078 = vmatpush1.msra.mxu0 0.0
    %4079 = vmatprep.subr.mxu0 0.0
    %4080 = vmatpush1.msra.mxu0 0.0
    %4081 = vmatprep.subr.mxu0 0.0
    %4082 = vmatpush1.msra.mxu0 0.0
    %4083 = vmatprep.subr.mxu0 0.0
    %4084 = vmatpush1.msra.mxu0 0.0
    %4085 = vmatprep.subr.mxu0 0.0
    %4086 = vmatpush1.msra.mxu0 0.0
    %4087 = vmatprep.subr.mxu0 0.0
    %4088 = vmatpush1.msra.mxu0 0.0
    %4089 = vmatprep.subr.mxu0 0.0
    %4090 = vmatpush1.msra.mxu0 0.0
    %4091 = vmatprep.mubr.f32.mxu0 0.0
    %4092 = vmatmul.mubr.f32.gmra.mrb[0].mxu0 %v3785
    %v4093 = vpop.f32.mrb[0].mxu0
    %v4094 = vadd.f32 %v4024, %v4093
    %v4095 = vpop.f32.mrb[0].mxu0
    %4096 = vdwg.mxu0
    %v4097 = vadd.f32 %v4094, %v541
    %v4098 = vmul.f32 %v4097, %v31
    %v4099 = vtanh.pop %v4098
    %v4100 = vmul.f32 %v4099, %v31
    %v4101 = vadd.f32 %v4100, %v32
    %v4102 = vmul.f32 %v4101, %v3439
    %4104 = vrot.lane.b32.xlu0 %v4101, 64
    %v4105 = vpop.permute.xlu0 %4104
    %v4107 = vmul.f32 %v4101, %v4105
    %4109 = vrot.lane.b32.xlu0 %v4107, 32
    %v4110 = vpop.permute.xlu0 %4109
    %v4112 = vadd.f32 %v4102, %v4110
    %v4113 = vtanh.pop %v4112
    %4115 = vrot.lane.b32.xlu0 %v4113, 64
    %v4116 = vpop.permute.xlu0 %4115
    %v4118 = vmul.f32 %v4101, %v4116
    %4120 = vrot.lane.b32.xlu0 %v3612, 32
    %v4121 = vpop.permute.xlu0 %4120
    %v4122 = vsel %vm43, %v4121, 0
    %4124 = vmatprep.subr.mxu0 0.0
    %4125 = vmatpush1.msra.mxu0 %v908
    %4126 = vmatprep.subr.mxu0 0.0
    %4127 = vmatpush1.msra.mxu0 %v909
    %4128 = vmatprep.subr.mxu0 0.0
    %4129 = vmatpush1.msra.mxu0 %v910
    %4130 = vmatprep.subr.mxu0 0.0
    %4131 = vmatpush1.msra.mxu0 %v911
    %4132 = vmatprep.subr.mxu0 0.0
    %4133 = vmatpush1.msra.mxu0 0.0
    %4134 = vmatprep.subr.mxu0 0.0
    %4135 = vmatpush1.msra.mxu0 0.0
    %4136 = vmatprep.subr.mxu0 0.0
    %4137 = vmatpush1.msra.mxu0 0.0
    %4138 = vmatprep.subr.mxu0 0.0
    %4139 = vmatpush1.msra.mxu0 0.0
    %4140 = vmatprep.subr.mxu0 0.0
    %4141 = vmatpush1.msra.mxu0 0.0
    %4142 = vmatprep.subr.mxu0 0.0
    %4143 = vmatpush1.msra.mxu0 0.0
    %4144 = vmatprep.subr.mxu0 0.0
    %4145 = vmatpush1.msra.mxu0 0.0
    %4146 = vmatprep.subr.mxu0 0.0
    %4147 = vmatpush1.msra.mxu0 0.0
    %4148 = vmatprep.subr.mxu0 0.0
    %4149 = vmatpush1.msra.mxu0 0.0
    %4150 = vmatprep.subr.mxu0 0.0
    %4151 = vmatpush1.msra.mxu0 0.0
    %4152 = vmatprep.subr.mxu0 0.0
    %4153 = vmatpush1.msra.mxu0 0.0
    %4154 = vmatprep.subr.mxu0 0.0
    %4155 = vmatpush1.msra.mxu0 0.0
    %4156 = vmatprep.subr.mxu0 0.0
    %4157 = vmatpush1.msra.mxu0 0.0
    %4158 = vmatprep.subr.mxu0 0.0
    %4159 = vmatpush1.msra.mxu0 0.0
    %4160 = vmatprep.subr.mxu0 0.0
    %4161 = vmatpush1.msra.mxu0 0.0
    %4162 = vmatprep.subr.mxu0 0.0
    %4163 = vmatpush1.msra.mxu0 0.0
    %4164 = vmatprep.subr.mxu0 0.0
    %4165 = vmatpush1.msra.mxu0 0.0
    %4166 = vmatprep.subr.mxu0 0.0
    %4167 = vmatpush1.msra.mxu0 0.0
    %4168 = vmatprep.subr.mxu0 0.0
    %4169 = vmatpush1.msra.mxu0 0.0
    %4170 = vmatprep.subr.mxu0 0.0
    %4171 = vmatpush1.msra.mxu0 0.0
    %4172 = vmatprep.subr.mxu0 0.0
    %4173 = vmatpush1.msra.mxu0 0.0
    %4174 = vmatprep.subr.mxu0 0.0
    %4175 = vmatpush1.msra.mxu0 0.0
    %4176 = vmatprep.subr.mxu0 0.0
    %4177 = vmatpush1.msra.mxu0 0.0
    %4178 = vmatprep.subr.mxu0 0.0
    %4179 = vmatpush1.msra.mxu0 0.0
    %4180 = vmatprep.subr.mxu0 0.0
    %4181 = vmatpush1.msra.mxu0 0.0
    %4182 = vmatprep.subr.mxu0 0.0
    %4183 = vmatpush1.msra.mxu0 0.0
    %4184 = vmatprep.subr.mxu0 0.0
    %4185 = vmatpush1.msra.mxu0 0.0
    %4186 = vmatprep.subr.mxu0 0.0
    %4187 = vmatpush1.msra.mxu0 0.0
    %4188 = vmatprep.mubr.f32.mxu0 0.0
    %4189 = vmatmul.mubr.f32.gmra.mrb[0].mxu0 %v4122
    %v4190 = vpop.f32.mrb[0].mxu0
    %v4191 = vadd.f32 0.0, %v4190
    %v4192 = vpop.f32.mrb[0].mxu0
    %4193 = vdwg.mxu0
    %4194 = vmatprep.subr.mxu0 0.0
    %4195 = vmatpush1.msra.mxu0 %v904
    %4196 = vmatprep.subr.mxu0 0.0
    %4197 = vmatpush1.msra.mxu0 %v905
    %4198 = vmatprep.subr.mxu0 0.0
    %4199 = vmatpush1.msra.mxu0 %v906
    %4200 = vmatprep.subr.mxu0 0.0
    %4201 = vmatpush1.msra.mxu0 %v907
    %4202 = vmatprep.subr.mxu0 0.0
    %4203 = vmatpush1.msra.mxu0 0.0
    %4204 = vmatprep.subr.mxu0 0.0
    %4205 = vmatpush1.msra.mxu0 0.0
    %4206 = vmatprep.subr.mxu0 0.0
    %4207 = vmatpush1.msra.mxu0 0.0
    %4208 = vmatprep.subr.mxu0 0.0
    %4209 = vmatpush1.msra.mxu0 0.0
    %4210 = vmatprep.subr.mxu0 0.0
    %4211 = vmatpush1.msra.mxu0 0.0
    %4212 = vmatprep.subr.mxu0 0.0
    %4213 = vmatpush1.msra.mxu0 0.0
    %4214 = vmatprep.subr.mxu0 0.0
    %4215 = vmatpush1.msra.mxu0 0.0
    %4216 = vmatprep.subr.mxu0 0.0
    %4217 = vmatpush1.msra.mxu0 0.0
    %4218 = vmatprep.subr.mxu0 0.0
    %4219 = vmatpush1.msra.mxu0 0.0
    %4220 = vmatprep.subr.mxu0 0.0
    %4221 = vmatpush1.msra.mxu0 0.0
    %4222 = vmatprep.subr.mxu0 0.0
    %4223 = vmatpush1.msra.mxu0 0.0
    %4224 = vmatprep.subr.mxu0 0.0
    %4225 = vmatpush1.msra.mxu0 0.0
    %4226 = vmatprep.subr.mxu0 0.0
    %4227 = vmatpush1.msra.mxu0 0.0
    %4228 = vmatprep.subr.mxu0 0.0
    %4229 = vmatpush1.msra.mxu0 0.0
    %4230 = vmatprep.subr.mxu0 0.0
    %4231 = vmatpush1.msra.mxu0 0.0
    %4232 = vmatprep.subr.mxu0 0.0
    %4233 = vmatpush1.msra.mxu0 0.0
    %4234 = vmatprep.subr.mxu0 0.0
    %4235 = vmatpush1.msra.mxu0 0.0
    %4236 = vmatprep.subr.mxu0 0.0
    %4237 = vmatpush1.msra.mxu0 0.0
    %4238 = vmatprep.subr.mxu0 0.0
    %4239 = vmatpush1.msra.mxu0 0.0
    %4240 = vmatprep.subr.mxu0 0.0
    %4241 = vmatpush1.msra.mxu0 0.0
    %4242 = vmatprep.subr.mxu0 0.0
    %4243 = vmatpush1.msra.mxu0 0.0
    %4244 = vmatprep.subr.mxu0 0.0
    %4245 = vmatpush1.msra.mxu0 0.0
    %4246 = vmatprep.subr.mxu0 0.0
    %4247 = vmatpush1.msra.mxu0 0.0
    %4248 = vmatprep.subr.mxu0 0.0
    %4249 = vmatpush1.msra.mxu0 0.0
    %4250 = vmatprep.subr.mxu0 0.0
    %4251 = vmatpush1.msra.mxu0 0.0
    %4252 = vmatprep.subr.mxu0 0.0
    %4253 = vmatpush1.msra.mxu0 0.0
    %4254 = vmatprep.subr.mxu0 0.0
    %4255 = vmatpush1.msra.mxu0 0.0
    %4256 = vmatprep.subr.mxu0 0.0
    %4257 = vmatpush1.msra.mxu0 0.0
    %4258 = vmatprep.mubr.f32.mxu0 0.0
    %4259 = vmatmul.mubr.f32.gmra.mrb[0].mxu0 %v3955
    %v4260 = vpop.f32.mrb[0].mxu0
    %v4261 = vadd.f32 %v4191, %v4260
    %v4262 = vpop.f32.mrb[0].mxu0
    %4263 = vdwg.mxu0
    %v4264 = vadd.f32 %v4261, %v1056
    %v4265 = vmul.f32 %v4264, %v31
    %v4266 = vtanh.pop %v4265
    %v4267 = vmul.f32 %v4266, %v31
    %v4268 = vadd.f32 %v4267, %v32
    %v4269 = vmul.f32 %v4268, %v3606
    %4271 = vrot.lane.b32.xlu0 %v4268, 64
    %v4272 = vpop.permute.xlu0 %4271
    %v4274 = vmul.f32 %v4268, %v4272
    %4276 = vrot.lane.b32.xlu0 %v4274, 32
    %v4277 = vpop.permute.xlu0 %4276
    %v4279 = vadd.f32 %v4269, %v4277
    %v4280 = vtanh.pop %v4279
    %4282 = vrot.lane.b32.xlu0 %v4280, 64
    %v4283 = vpop.permute.xlu0 %4282
    %v4285 = vmul.f32 %v4268, %v4283
    %4287 = vrot.lane.b32.xlu0 %v3779, 32
    %v4288 = vpop.permute.xlu0 %4287
    %v4289 = vsel %vm43, %v4288, 0
    %4291 = vmatprep.subr.mxu0 0.0
    %4292 = vmatpush1.msra.mxu0 %v1590
    %4293 = vmatprep.subr.mxu0 0.0
    %4294 = vmatpush1.msra.mxu0 %v1591
    %4295 = vmatprep.subr.mxu0 0.0
    %4296 = vmatpush1.msra.mxu0 %v1592
    %4297 = vmatprep.subr.mxu0 0.0
    %4298 = vmatpush1.msra.mxu0 %v1593
    %4299 = vmatprep.subr.mxu0 0.0
    %4300 = vmatpush1.msra.mxu0 0.0
    %4301 = vmatprep.subr.mxu0 0.0
    %4302 = vmatpush1.msra.mxu0 0.0
    %4303 = vmatprep.subr.mxu0 0.0
    %4304 = vmatpush1.msra.mxu0 0.0
    %4305 = vmatprep.subr.mxu0 0.0
    %4306 = vmatpush1.msra.mxu0 0.0
    %4307 = vmatprep.subr.mxu0 0.0
    %4308 = vmatpush1.msra.mxu0 0.0
    %4309 = vmatprep.subr.mxu0 0.0
    %4310 = vmatpush1.msra.mxu0 0.0
    %4311 = vmatprep.subr.mxu0 0.0
    %4312 = vmatpush1.msra.mxu0 0.0
    %4313 = vmatprep.subr.mxu0 0.0
    %4314 = vmatpush1.msra.mxu0 0.0
    %4315 = vmatprep.subr.mxu0 0.0
    %4316 = vmatpush1.msra.mxu0 0.0
    %4317 = vmatprep.subr.mxu0 0.0
    %4318 = vmatpush1.msra.mxu0 0.0
    %4319 = vmatprep.subr.mxu0 0.0
    %4320 = vmatpush1.msra.mxu0 0.0
    %4321 = vmatprep.subr.mxu0 0.0
    %4322 = vmatpush1.msra.mxu0 0.0
    %4323 = vmatprep.subr.mxu0 0.0
    %4324 = vmatpush1.msra.mxu0 0.0
    %4325 = vmatprep.subr.mxu0 0.0
    %4326 = vmatpush1.msra.mxu0 0.0
    %4327 = vmatprep.subr.mxu0 0.0
    %4328 = vmatpush1.msra.mxu0 0.0
    %4329 = vmatprep.subr.mxu0 0.0
    %4330 = vmatpush1.msra.mxu0 0.0
    %4331 = vmatprep.subr.mxu0 0.0
    %4332 = vmatpush1.msra.mxu0 0.0
    %4333 = vmatprep.subr.mxu0 0.0
    %4334 = vmatpush1.msra.mxu0 0.0
    %4335 = vmatprep.subr.mxu0 0.0
    %4336 = vmatpush1.msra.mxu0 0.0
    %4337 = vmatprep.subr.mxu0 0.0
    %4338 = vmatpush1.msra.mxu0 0.0
    %4339 = vmatprep.subr.mxu0 0.0
    %4340 = vmatpush1.msra.mxu0 0.0
    %4341 = vmatprep.subr.mxu0 0.0
    %4342 = vmatpush1.msra.mxu0 0.0
    %4343 = vmatprep.subr.mxu0 0.0
    %4344 = vmatpush1.msra.mxu0 0.0
    %4345 = vmatprep.subr.mxu0 0.0
    %4346 = vmatpush1.msra.mxu0 0.0
    %4347 = vmatprep.subr.mxu0 0.0
    %4348 = vmatpush1.msra.mxu0 0.0
    %4349 = vmatprep.subr.mxu0 0.0
    %4350 = vmatpush1.msra.mxu0 0.0
    %4351 = vmatprep.subr.mxu0 0.0
    %4352 = vmatpush1.msra.mxu0 0.0
    %4353 = vmatprep.subr.mxu0 0.0
    %4354 = vmatpush1.msra.mxu0 0.0
    %4355 = vmatprep.mubr.f32.mxu0 0.0
    %4356 = vmatmul.mubr.f32.gmra.mrb[0].mxu0 %v4289
    %v4357 = vpop.f32.mrb[0].mxu0
    %v4358 = vadd.f32 0.0, %v4357
    %v4359 = vpop.f32.mrb[0].mxu0
    %4360 = vdwg.mxu0
    %4361 = vmatprep.subr.mxu0 0.0
    %4362 = vmatpush1.msra.mxu0 %v1586
    %4363 = vmatprep.subr.mxu0 0.0
    %4364 = vmatpush1.msra.mxu0 %v1587
    %4365 = vmatprep.subr.mxu0 0.0
    %4366 = vmatpush1.msra.mxu0 %v1588
    %4367 = vmatprep.subr.mxu0 0.0
    %4368 = vmatpush1.msra.mxu0 %v1589
    %4369 = vmatprep.subr.mxu0 0.0
    %4370 = vmatpush1.msra.mxu0 0.0
    %4371 = vmatprep.subr.mxu0 0.0
    %4372 = vmatpush1.msra.mxu0 0.0
    %4373 = vmatprep.subr.mxu0 0.0
    %4374 = vmatpush1.msra.mxu0 0.0
    %4375 = vmatprep.subr.mxu0 0.0
    %4376 = vmatpush1.msra.mxu0 0.0
    %4377 = vmatprep.subr.mxu0 0.0
    %4378 = vmatpush1.msra.mxu0 0.0
    %4379 = vmatprep.subr.mxu0 0.0
    %4380 = vmatpush1.msra.mxu0 0.0
    %4381 = vmatprep.subr.mxu0 0.0
    %4382 = vmatpush1.msra.mxu0 0.0
    %4383 = vmatprep.subr.mxu0 0.0
    %4384 = vmatpush1.msra.mxu0 0.0
    %4385 = vmatprep.subr.mxu0 0.0
    %4386 = vmatpush1.msra.mxu0 0.0
    %4387 = vmatprep.subr.mxu0 0.0
    %4388 = vmatpush1.msra.mxu0 0.0
    %4389 = vmatprep.subr.mxu0 0.0
    %4390 = vmatpush1.msra.mxu0 0.0
    %4391 = vmatprep.subr.mxu0 0.0
    %4392 = vmatpush1.msra.mxu0 0.0
    %4393 = vmatprep.subr.mxu0 0.0
    %4394 = vmatpush1.msra.mxu0 0.0
    %4395 = vmatprep.subr.mxu0 0.0
    %4396 = vmatpush1.msra.mxu0 0.0
    %4397 = vmatprep.subr.mxu0 0.0
    %4398 = vmatpush1.msra.mxu0 0.0
    %4399 = vmatprep.subr.mxu0 0.0
    %4400 = vmatpush1.msra.mxu0 0.0
    %4401 = vmatprep.subr.mxu0 0.0
    %4402 = vmatpush1.msra.mxu0 0.0
    %4403 = vmatprep.subr.mxu0 0.0
    %4404 = vmatpush1.msra.mxu0 0.0
    %4405 = vmatprep.subr.mxu0 0.0
    %4406 = vmatpush1.msra.mxu0 0.0
    %4407 = vmatprep.subr.mxu0 0.0
    %4408 = vmatpush1.msra.mxu0 0.0
    %4409 = vmatprep.subr.mxu0 0.0
    %4410 = vmatpush1.msra.mxu0 0.0
    %4411 = vmatprep.subr.mxu0 0.0
    %4412 = vmatpush1.msra.mxu0 0.0
    %4413 = vmatprep.subr.mxu0 0.0
    %4414 = vmatpush1.msra.mxu0 0.0
    %4415 = vmatprep.subr.mxu0 0.0
    %4416 = vmatpush1.msra.mxu0 0.0
    %4417 = vmatprep.subr.mxu0 0.0
    %4418 = vmatpush1.msra.mxu0 0.0
    %4419 = vmatprep.subr.mxu0 0.0
    %4420 = vmatpush1.msra.mxu0 0.0
    %4421 = vmatprep.subr.mxu0 0.0
    %4422 = vmatpush1.msra.mxu0 0.0
    %4423 = vmatprep.subr.mxu0 0.0
    %4424 = vmatpush1.msra.mxu0 0.0
    %4425 = vmatprep.mubr.f32.mxu0 0.0
    %4426 = vmatmul.mubr.f32.gmra.mrb[0].mxu0 %v4122
    %v4427 = vpop.f32.mrb[0].mxu0
    %v4428 = vadd.f32 %v4358, %v4427
    %v4429 = vpop.f32.mrb[0].mxu0
    %4430 = vdwg.mxu0
    %v4431 = vadd.f32 %v4428, %v1738
    %v4432 = vmul.f32 %v4431, %v31
    %v4433 = vtanh.pop %v4432
    %v4434 = vmul.f32 %v4433, %v31
    %v4435 = vadd.f32 %v4434, %v32
    %v4436 = vmul.f32 %v4435, %v3773
    %4438 = vrot.lane.b32.xlu0 %v4435, 64
    %v4439 = vpop.permute.xlu0 %4438
    %v4441 = vmul.f32 %v4435, %v4439
    %4443 = vrot.lane.b32.xlu0 %v4441, 32
    %v4444 = vpop.permute.xlu0 %4443
    %v4446 = vadd.f32 %v4436, %v4444
    %v4447 = vtanh.pop %v4446
    %4449 = vrot.lane.b32.xlu0 %v4447, 64
    %v4450 = vpop.permute.xlu0 %4449
    %v4452 = vmul.f32 %v4435, %v4450
    %4454 = vrot.lane.b32.xlu0 %v4118, 32
    %v4455 = vpop.permute.xlu0 %4454
    %v4456 = vsel %vm43, %v4455, 0
    %4458 = vmatprep.subr.mxu0 0.0
    %4459 = vmatpush1.msra.mxu0 %v393
    %4460 = vmatprep.subr.mxu0 0.0
    %4461 = vmatpush1.msra.mxu0 %v394
    %4462 = vmatprep.subr.mxu0 0.0
    %4463 = vmatpush1.msra.mxu0 %v395
    %4464 = vmatprep.subr.mxu0 0.0
    %4465 = vmatpush1.msra.mxu0 %v396
    %4466 = vmatprep.subr.mxu0 0.0
    %4467 = vmatpush1.msra.mxu0 0.0
    %4468 = vmatprep.subr.mxu0 0.0
    %4469 = vmatpush1.msra.mxu0 0.0
    %4470 = vmatprep.subr.mxu0 0.0
    %4471 = vmatpush1.msra.mxu0 0.0
    %4472 = vmatprep.subr.mxu0 0.0
    %4473 = vmatpush1.msra.mxu0 0.0
    %4474 = vmatprep.subr.mxu0 0.0
    %4475 = vmatpush1.msra.mxu0 0.0
    %4476 = vmatprep.subr.mxu0 0.0
    %4477 = vmatpush1.msra.mxu0 0.0
    %4478 = vmatprep.subr.mxu0 0.0
    %4479 = vmatpush1.msra.mxu0 0.0
    %4480 = vmatprep.subr.mxu0 0.0
    %4481 = vmatpush1.msra.mxu0 0.0
    %4482 = vmatprep.subr.mxu0 0.0
    %4483 = vmatpush1.msra.mxu0 0.0
    %4484 = vmatprep.subr.mxu0 0.0
    %4485 = vmatpush1.msra.mxu0 0.0
    %4486 = vmatprep.subr.mxu0 0.0
    %4487 = vmatpush1.msra.mxu0 0.0
    %4488 = vmatprep.subr.mxu0 0.0
    %4489 = vmatpush1.msra.mxu0 0.0
    %4490 = vmatprep.subr.mxu0 0.0
    %4491 = vmatpush1.msra.mxu0 0.0
    %4492 = vmatprep.subr.mxu0 0.0
    %4493 = vmatpush1.msra.mxu0 0.0
    %4494 = vmatprep.subr.mxu0 0.0
    %4495 = vmatpush1.msra.mxu0 0.0
    %4496 = vmatprep.subr.mxu0 0.0
    %4497 = vmatpush1.msra.mxu0 0.0
    %4498 = vmatprep.subr.mxu0 0.0
    %4499 = vmatpush1.msra.mxu0 0.0
    %4500 = vmatprep.subr.mxu0 0.0
    %4501 = vmatpush1.msra.mxu0 0.0
    %4502 = vmatprep.subr.mxu0 0.0
    %4503 = vmatpush1.msra.mxu0 0.0
    %4504 = vmatprep.subr.mxu0 0.0
    %4505 = vmatpush1.msra.mxu0 0.0
    %4506 = vmatprep.subr.mxu0 0.0
    %4507 = vmatpush1.msra.mxu0 0.0
    %4508 = vmatprep.subr.mxu0 0.0
    %4509 = vmatpush1.msra.mxu0 0.0
    %4510 = vmatprep.subr.mxu0 0.0
    %4511 = vmatpush1.msra.mxu0 0.0
    %4512 = vmatprep.subr.mxu0 0.0
    %4513 = vmatpush1.msra.mxu0 0.0
    %4514 = vmatprep.subr.mxu0 0.0
    %4515 = vmatpush1.msra.mxu0 0.0
    %4516 = vmatprep.subr.mxu0 0.0
    %4517 = vmatpush1.msra.mxu0 0.0
    %4518 = vmatprep.subr.mxu0 0.0
    %4519 = vmatpush1.msra.mxu0 0.0
    %4520 = vmatprep.subr.mxu0 0.0
    %4521 = vmatpush1.msra.mxu0 0.0
    %4522 = vmatprep.mubr.f32.mxu0 0.0
    %4523 = vmatmul.mubr.f32.gmra.mrb[0].mxu0 %v4456
    %v4524 = vpop.f32.mrb[0].mxu0
    %v4525 = vadd.f32 0.0, %v4524
    %v4526 = vpop.f32.mrb[0].mxu0
    %4527 = vdwg.mxu0
    %4529 = vrot.lane.b32.xlu0 %v3951, 32
    %v4530 = vpop.permute.xlu0 %4529
    %v4531 = vsel %vm43, %v4530, 0
    %4533 = vmatprep.subr.mxu0 0.0
    %4534 = vmatpush1.msra.mxu0 %v389
    %4535 = vmatprep.subr.mxu0 0.0
    %4536 = vmatpush1.msra.mxu0 %v390
    %4537 = vmatprep.subr.mxu0 0.0
    %4538 = vmatpush1.msra.mxu0 %v391
    %4539 = vmatprep.subr.mxu0 0.0
    %4540 = vmatpush1.msra.mxu0 %v392
    %4541 = vmatprep.subr.mxu0 0.0
    %4542 = vmatpush1.msra.mxu0 0.0
    %4543 = vmatprep.subr.mxu0 0.0
    %4544 = vmatpush1.msra.mxu0 0.0
    %4545 = vmatprep.subr.mxu0 0.0
    %4546 = vmatpush1.msra.mxu0 0.0
    %4547 = vmatprep.subr.mxu0 0.0
    %4548 = vmatpush1.msra.mxu0 0.0
    %4549 = vmatprep.subr.mxu0 0.0
    %4550 = vmatpush1.msra.mxu0 0.0
    %4551 = vmatprep.subr.mxu0 0.0
    %4552 = vmatpush1.msra.mxu0 0.0
    %4553 = vmatprep.subr.mxu0 0.0
    %4554 = vmatpush1.msra.mxu0 0.0
    %4555 = vmatprep.subr.mxu0 0.0
    %4556 = vmatpush1.msra.mxu0 0.0
    %4557 = vmatprep.subr.mxu0 0.0
    %4558 = vmatpush1.msra.mxu0 0.0
    %4559 = vmatprep.subr.mxu0 0.0
    %4560 = vmatpush1.msra.mxu0 0.0
    %4561 = vmatprep.subr.mxu0 0.0
    %4562 = vmatpush1.msra.mxu0 0.0
    %4563 = vmatprep.subr.mxu0 0.0
    %4564 = vmatpush1.msra.mxu0 0.0
    %4565 = vmatprep.subr.mxu0 0.0
    %4566 = vmatpush1.msra.mxu0 0.0
    %4567 = vmatprep.subr.mxu0 0.0
    %4568 = vmatpush1.msra.mxu0 0.0
    %4569 = vmatprep.subr.mxu0 0.0
    %4570 = vmatpush1.msra.mxu0 0.0
    %4571 = vmatprep.subr.mxu0 0.0
    %4572 = vmatpush1.msra.mxu0 0.0
    %4573 = vmatprep.subr.mxu0 0.0
    %4574 = vmatpush1.msra.mxu0 0.0
    %4575 = vmatprep.subr.mxu0 0.0
    %4576 = vmatpush1.msra.mxu0 0.0
    %4577 = vmatprep.subr.mxu0 0.0
    %4578 = vmatpush1.msra.mxu0 0.0
    %4579 = vmatprep.subr.mxu0 0.0
    %4580 = vmatpush1.msra.mxu0 0.0
    %4581 = vmatprep.subr.mxu0 0.0
    %4582 = vmatpush1.msra.mxu0 0.0
    %4583 = vmatprep.subr.mxu0 0.0
    %4584 = vmatpush1.msra.mxu0 0.0
    %4585 = vmatprep.subr.mxu0 0.0
    %4586 = vmatpush1.msra.mxu0 0.0
    %4587 = vmatprep.subr.mxu0 0.0
    %4588 = vmatpush1.msra.mxu0 0.0
    %4589 = vmatprep.subr.mxu0 0.0
    %4590 = vmatpush1.msra.mxu0 0.0
    %4591 = vmatprep.subr.mxu0 0.0
    %4592 = vmatpush1.msra.mxu0 0.0
    %4593 = vmatprep.subr.mxu0 0.0
    %4594 = vmatpush1.msra.mxu0 0.0
    %4595 = vmatprep.subr.mxu0 0.0
    %4596 = vmatpush1.msra.mxu0 0.0
    %4597 = vmatprep.mubr.f32.mxu0 0.0
    %4598 = vmatmul.mubr.f32.gmra.mrb[0].mxu0 %v4531
    %v4599 = vpop.f32.mrb[0].mxu0
    %v4600 = vadd.f32 %v4525, %v4599
    %v4601 = vpop.f32.mrb[0].mxu0
    %4602 = vdwg.mxu0
    %v4603 = vadd.f32 %v4600, %v541
    %v4604 = vmul.f32 %v4603, %v31
    %v4605 = vtanh.pop %v4604
    %v4606 = vmul.f32 %v4605, %v31
    %v4607 = vadd.f32 %v4606, %v32
    %v4608 = vmul.f32 %v4607, %v4112
    %4610 = vrot.lane.b32.xlu0 %v4607, 64
    %v4611 = vpop.permute.xlu0 %4610
    %v4613 = vmul.f32 %v4607, %v4611
    %4615 = vrot.lane.b32.xlu0 %v4613, 32
    %v4616 = vpop.permute.xlu0 %4615
    %v4618 = vadd.f32 %v4608, %v4616
    %v4619 = vtanh.pop %v4618
    %4621 = vrot.lane.b32.xlu0 %v4619, 64
    %v4622 = vpop.permute.xlu0 %4621
    %v4624 = vmul.f32 %v4607, %v4622
    %4626 = vrot.lane.b32.xlu0 %v4285, 32
    %v4627 = vpop.permute.xlu0 %4626
    %v4628 = vsel %vm43, %v4627, 0
    %4630 = vmatprep.subr.mxu0 0.0
    %4631 = vmatpush1.msra.mxu0 %v908
    %4632 = vmatprep.subr.mxu0 0.0
    %4633 = vmatpush1.msra.mxu0 %v909
    %4634 = vmatprep.subr.mxu0 0.0
    %4635 = vmatpush1.msra.mxu0 %v910
    %4636 = vmatprep.subr.mxu0 0.0
    %4637 = vmatpush1.msra.mxu0 %v911
    %4638 = vmatprep.subr.mxu0 0.0
    %4639 = vmatpush1.msra.mxu0 0.0
    %4640 = vmatprep.subr.mxu0 0.0
    %4641 = vmatpush1.msra.mxu0 0.0
    %4642 = vmatprep.subr.mxu0 0.0
    %4643 = vmatpush1.msra.mxu0 0.0
    %4644 = vmatprep.subr.mxu0 0.0
    %4645 = vmatpush1.msra.mxu0 0.0
    %4646 = vmatprep.subr.mxu0 0.0
    %4647 = vmatpush1.msra.mxu0 0.0
    %4648 = vmatprep.subr.mxu0 0.0
    %4649 = vmatpush1.msra.mxu0 0.0
    %4650 = vmatprep.subr.mxu0 0.0
    %4651 = vmatpush1.msra.mxu0 0.0
    %4652 = vmatprep.subr.mxu0 0.0
    %4653 = vmatpush1.msra.mxu0 0.0
    %4654 = vmatprep.subr.mxu0 0.0
    %4655 = vmatpush1.msra.mxu0 0.0
    %4656 = vmatprep.subr.mxu0 0.0
    %4657 = vmatpush1.msra.mxu0 0.0
    %4658 = vmatprep.subr.mxu0 0.0
    %4659 = vmatpush1.msra.mxu0 0.0
    %4660 = vmatprep.subr.mxu0 0.0
    %4661 = vmatpush1.msra.mxu0 0.0
    %4662 = vmatprep.subr.mxu0 0.0
    %4663 = vmatpush1.msra.mxu0 0.0
    %4664 = vmatprep.subr.mxu0 0.0
    %4665 = vmatpush1.msra.mxu0 0.0
    %4666 = vmatprep.subr.mxu0 0.0
    %4667 = vmatpush1.msra.mxu0 0.0
    %4668 = vmatprep.subr.mxu0 0.0
    %4669 = vmatpush1.msra.mxu0 0.0
    %4670 = vmatprep.subr.mxu0 0.0
    %4671 = vmatpush1.msra.mxu0 0.0
    %4672 = vmatprep.subr.mxu0 0.0
    %4673 = vmatpush1.msra.mxu0 0.0
    %4674 = vmatprep.subr.mxu0 0.0
    %4675 = vmatpush1.msra.mxu0 0.0
    %4676 = vmatprep.subr.mxu0 0.0
    %4677 = vmatpush1.msra.mxu0 0.0
    %4678 = vmatprep.subr.mxu0 0.0
    %4679 = vmatpush1.msra.mxu0 0.0
    %4680 = vmatprep.subr.mxu0 0.0
    %4681 = vmatpush1.msra.mxu0 0.0
    %4682 = vmatprep.subr.mxu0 0.0
    %4683 = vmatpush1.msra.mxu0 0.0
    %4684 = vmatprep.subr.mxu0 0.0
    %4685 = vmatpush1.msra.mxu0 0.0
    %4686 = vmatprep.subr.mxu0 0.0
    %4687 = vmatpush1.msra.mxu0 0.0
    %4688 = vmatprep.subr.mxu0 0.0
    %4689 = vmatpush1.msra.mxu0 0.0
    %4690 = vmatprep.subr.mxu0 0.0
    %4691 = vmatpush1.msra.mxu0 0.0
    %4692 = vmatprep.subr.mxu0 0.0
    %4693 = vmatpush1.msra.mxu0 0.0
    %4694 = vmatprep.mubr.f32.mxu0 0.0
    %4695 = vmatmul.mubr.f32.gmra.mrb[0].mxu0 %v4628
    %v4696 = vpop.f32.mrb[0].mxu0
    %v4697 = vadd.f32 0.0, %v4696
    %v4698 = vpop.f32.mrb[0].mxu0
    %4699 = vdwg.mxu0
    %4700 = vmatprep.subr.mxu0 0.0
    %4701 = vmatpush1.msra.mxu0 %v904
    %4702 = vmatprep.subr.mxu0 0.0
    %4703 = vmatpush1.msra.mxu0 %v905
    %4704 = vmatprep.subr.mxu0 0.0
    %4705 = vmatpush1.msra.mxu0 %v906
    %4706 = vmatprep.subr.mxu0 0.0
    %4707 = vmatpush1.msra.mxu0 %v907
    %4708 = vmatprep.subr.mxu0 0.0
    %4709 = vmatpush1.msra.mxu0 0.0
    %4710 = vmatprep.subr.mxu0 0.0
    %4711 = vmatpush1.msra.mxu0 0.0
    %4712 = vmatprep.subr.mxu0 0.0
    %4713 = vmatpush1.msra.mxu0 0.0
    %4714 = vmatprep.subr.mxu0 0.0
    %4715 = vmatpush1.msra.mxu0 0.0
    %4716 = vmatprep.subr.mxu0 0.0
    %4717 = vmatpush1.msra.mxu0 0.0
    %4718 = vmatprep.subr.mxu0 0.0
    %4719 = vmatpush1.msra.mxu0 0.0
    %4720 = vmatprep.subr.mxu0 0.0
    %4721 = vmatpush1.msra.mxu0 0.0
    %4722 = vmatprep.subr.mxu0 0.0
    %4723 = vmatpush1.msra.mxu0 0.0
    %4724 = vmatprep.subr.mxu0 0.0
    %4725 = vmatpush1.msra.mxu0 0.0
    %4726 = vmatprep.subr.mxu0 0.0
    %4727 = vmatpush1.msra.mxu0 0.0
    %4728 = vmatprep.subr.mxu0 0.0
    %4729 = vmatpush1.msra.mxu0 0.0
    %4730 = vmatprep.subr.mxu0 0.0
    %4731 = vmatpush1.msra.mxu0 0.0
    %4732 = vmatprep.subr.mxu0 0.0
    %4733 = vmatpush1.msra.mxu0 0.0
    %4734 = vmatprep.subr.mxu0 0.0
    %4735 = vmatpush1.msra.mxu0 0.0
    %4736 = vmatprep.subr.mxu0 0.0
    %4737 = vmatpush1.msra.mxu0 0.0
    %4738 = vmatprep.subr.mxu0 0.0
    %4739 = vmatpush1.msra.mxu0 0.0
    %4740 = vmatprep.subr.mxu0 0.0
    %4741 = vmatpush1.msra.mxu0 0.0
    %4742 = vmatprep.subr.mxu0 0.0
    %4743 = vmatpush1.msra.mxu0 0.0
    %4744 = vmatprep.subr.mxu0 0.0
    %4745 = vmatpush1.msra.mxu0 0.0
    %4746 = vmatprep.subr.mxu0 0.0
    %4747 = vmatpush1.msra.mxu0 0.0
    %4748 = vmatprep.subr.mxu0 0.0
    %4749 = vmatpush1.msra.mxu0 0.0
    %4750 = vmatprep.subr.mxu0 0.0
    %4751 = vmatpush1.msra.mxu0 0.0
    %4752 = vmatprep.subr.mxu0 0.0
    %4753 = vmatpush1.msra.mxu0 0.0
    %4754 = vmatprep.subr.mxu0 0.0
    %4755 = vmatpush1.msra.mxu0 0.0
    %4756 = vmatprep.subr.mxu0 0.0
    %4757 = vmatpush1.msra.mxu0 0.0
    %4758 = vmatprep.subr.mxu0 0.0
    %4759 = vmatpush1.msra.mxu0 0.0
    %4760 = vmatprep.subr.mxu0 0.0
    %4761 = vmatpush1.msra.mxu0 0.0
    %4762 = vmatprep.subr.mxu0 0.0
    %4763 = vmatpush1.msra.mxu0 0.0
    %4764 = vmatprep.mubr.f32.mxu0 0.0
    %4765 = vmatmul.mubr.f32.gmra.mrb[0].mxu0 %v4456
    %v4766 = vpop.f32.mrb[0].mxu0
    %v4767 = vadd.f32 %v4697, %v4766
    %v4768 = vpop.f32.mrb[0].mxu0
    %4769 = vdwg.mxu0
    %v4770 = vadd.f32 %v4767, %v1056
    %v4771 = vmul.f32 %v4770, %v31
    %v4772 = vtanh.pop %v4771
    %v4773 = vmul.f32 %v4772, %v31
    %v4774 = vadd.f32 %v4773, %v32
    %v4775 = vmul.f32 %v4774, %v4279
    %4777 = vrot.lane.b32.xlu0 %v4774, 64
    %v4778 = vpop.permute.xlu0 %4777
    %v4780 = vmul.f32 %v4774, %v4778
    %4782 = vrot.lane.b32.xlu0 %v4780, 32
    %v4783 = vpop.permute.xlu0 %4782
    %v4785 = vadd.f32 %v4775, %v4783
    %v4786 = vtanh.pop %v4785
    %4788 = vrot.lane.b32.xlu0 %v4786, 64
    %v4789 = vpop.permute.xlu0 %4788
    %v4791 = vmul.f32 %v4774, %v4789
    %4793 = vrot.lane.b32.xlu0 %v4452, 32
    %v4794 = vpop.permute.xlu0 %4793
    %v4795 = vsel %vm43, %v4794, 0
    %4797 = vmatprep.subr.mxu0 0.0
    %4798 = vmatpush1.msra.mxu0 %v1590
    %4799 = vmatprep.subr.mxu0 0.0
    %4800 = vmatpush1.msra.mxu0 %v1591
    %4801 = vmatprep.subr.mxu0 0.0
    %4802 = vmatpush1.msra.mxu0 %v1592
    %4803 = vmatprep.subr.mxu0 0.0
    %4804 = vmatpush1.msra.mxu0 %v1593
    %4805 = vmatprep.subr.mxu0 0.0
    %4806 = vmatpush1.msra.mxu0 0.0
    %4807 = vmatprep.subr.mxu0 0.0
    %4808 = vmatpush1.msra.mxu0 0.0
    %4809 = vmatprep.subr.mxu0 0.0
    %4810 = vmatpush1.msra.mxu0 0.0
    %4811 = vmatprep.subr.mxu0 0.0
    %4812 = vmatpush1.msra.mxu0 0.0
    %4813 = vmatprep.subr.mxu0 0.0
    %4814 = vmatpush1.msra.mxu0 0.0
    %4815 = vmatprep.subr.mxu0 0.0
    %4816 = vmatpush1.msra.mxu0 0.0
    %4817 = vmatprep.subr.mxu0 0.0
    %4818 = vmatpush1.msra.mxu0 0.0
    %4819 = vmatprep.subr.mxu0 0.0
    %4820 = vmatpush1.msra.mxu0 0.0
    %4821 = vmatprep.subr.mxu0 0.0
    %4822 = vmatpush1.msra.mxu0 0.0
    %4823 = vmatprep.subr.mxu0 0.0
    %4824 = vmatpush1.msra.mxu0 0.0
    %4825 = vmatprep.subr.mxu0 0.0
    %4826 = vmatpush1.msra.mxu0 0.0
    %4827 = vmatprep.subr.mxu0 0.0
    %4828 = vmatpush1.msra.mxu0 0.0
    %4829 = vmatprep.subr.mxu0 0.0
    %4830 = vmatpush1.msra.mxu0 0.0
    %4831 = vmatprep.subr.mxu0 0.0
    %4832 = vmatpush1.msra.mxu0 0.0
    %4833 = vmatprep.subr.mxu0 0.0
    %4834 = vmatpush1.msra.mxu0 0.0
    %4835 = vmatprep.subr.mxu0 0.0
    %4836 = vmatpush1.msra.mxu0 0.0
    %4837 = vmatprep.subr.mxu0 0.0
    %4838 = vmatpush1.msra.mxu0 0.0
    %4839 = vmatprep.subr.mxu0 0.0
    %4840 = vmatpush1.msra.mxu0 0.0
    %4841 = vmatprep.subr.mxu0 0.0
    %4842 = vmatpush1.msra.mxu0 0.0
    %4843 = vmatprep.subr.mxu0 0.0
    %4844 = vmatpush1.msra.mxu0 0.0
    %4845 = vmatprep.subr.mxu0 0.0
    %4846 = vmatpush1.msra.mxu0 0.0
    %4847 = vmatprep.subr.mxu0 0.0
    %4848 = vmatpush1.msra.mxu0 0.0
    %4849 = vmatprep.subr.mxu0 0.0
    %4850 = vmatpush1.msra.mxu0 0.0
    %4851 = vmatprep.subr.mxu0 0.0
    %4852 = vmatpush1.msra.mxu0 0.0
    %4853 = vmatprep.subr.mxu0 0.0
    %4854 = vmatpush1.msra.mxu0 0.0
    %4855 = vmatprep.subr.mxu0 0.0
    %4856 = vmatpush1.msra.mxu0 0.0
    %4857 = vmatprep.subr.mxu0 0.0
    %4858 = vmatpush1.msra.mxu0 0.0
    %4859 = vmatprep.subr.mxu0 0.0
    %4860 = vmatpush1.msra.mxu0 0.0
    %4861 = vmatprep.mubr.f32.mxu0 0.0
    %4862 = vmatmul.mubr.f32.gmra.mrb[0].mxu0 %v4795
    %v4863 = vpop.f32.mrb[0].mxu0
    %v4864 = vadd.f32 0.0, %v4863
    %v4865 = vpop.f32.mrb[0].mxu0
    %4866 = vdwg.mxu0
    %4867 = vmatprep.subr.mxu0 0.0
    %4868 = vmatpush1.msra.mxu0 %v1586
    %4869 = vmatprep.subr.mxu0 0.0
    %4870 = vmatpush1.msra.mxu0 %v1587
    %4871 = vmatprep.subr.mxu0 0.0
    %4872 = vmatpush1.msra.mxu0 %v1588
    %4873 = vmatprep.subr.mxu0 0.0
    %4874 = vmatpush1.msra.mxu0 %v1589
    %4875 = vmatprep.subr.mxu0 0.0
    %4876 = vmatpush1.msra.mxu0 0.0
    %4877 = vmatprep.subr.mxu0 0.0
    %4878 = vmatpush1.msra.mxu0 0.0
    %4879 = vmatprep.subr.mxu0 0.0
    %4880 = vmatpush1.msra.mxu0 0.0
    %4881 = vmatprep.subr.mxu0 0.0
    %4882 = vmatpush1.msra.mxu0 0.0
    %4883 = vmatprep.subr.mxu0 0.0
    %4884 = vmatpush1.msra.mxu0 0.0
    %4885 = vmatprep.subr.mxu0 0.0
    %4886 = vmatpush1.msra.mxu0 0.0
    %4887 = vmatprep.subr.mxu0 0.0
    %4888 = vmatpush1.msra.mxu0 0.0
    %4889 = vmatprep.subr.mxu0 0.0
    %4890 = vmatpush1.msra.mxu0 0.0
    %4891 = vmatprep.subr.mxu0 0.0
    %4892 = vmatpush1.msra.mxu0 0.0
    %4893 = vmatprep.subr.mxu0 0.0
    %4894 = vmatpush1.msra.mxu0 0.0
    %4895 = vmatprep.subr.mxu0 0.0
    %4896 = vmatpush1.msra.mxu0 0.0
    %4897 = vmatprep.subr.mxu0 0.0
    %4898 = vmatpush1.msra.mxu0 0.0
    %4899 = vmatprep.subr.mxu0 0.0
    %4900 = vmatpush1.msra.mxu0 0.0
    %4901 = vmatprep.subr.mxu0 0.0
    %4902 = vmatpush1.msra.mxu0 0.0
    %4903 = vmatprep.subr.mxu0 0.0
    %4904 = vmatpush1.msra.mxu0 0.0
    %4905 = vmatprep.subr.mxu0 0.0
    %4906 = vmatpush1.msra.mxu0 0.0
    %4907 = vmatprep.subr.mxu0 0.0
    %4908 = vmatpush1.msra.mxu0 0.0
    %4909 = vmatprep.subr.mxu0 0.0
    %4910 = vmatpush1.msra.mxu0 0.0
    %4911 = vmatprep.subr.mxu0 0.0
    %4912 = vmatpush1.msra.mxu0 0.0
    %4913 = vmatprep.subr.mxu0 0.0
    %4914 = vmatpush1.msra.mxu0 0.0
    %4915 = vmatprep.subr.mxu0 0.0
    %4916 = vmatpush1.msra.mxu0 0.0
    %4917 = vmatprep.subr.mxu0 0.0
    %4918 = vmatpush1.msra.mxu0 0.0
    %4919 = vmatprep.subr.mxu0 0.0
    %4920 = vmatpush1.msra.mxu0 0.0
    %4921 = vmatprep.subr.mxu0 0.0
    %4922 = vmatpush1.msra.mxu0 0.0
    %4923 = vmatprep.subr.mxu0 0.0
    %4924 = vmatpush1.msra.mxu0 0.0
    %4925 = vmatprep.subr.mxu0 0.0
    %4926 = vmatpush1.msra.mxu0 0.0
    %4927 = vmatprep.subr.mxu0 0.0
    %4928 = vmatpush1.msra.mxu0 0.0
    %4929 = vmatprep.subr.mxu0 0.0
    %4930 = vmatpush1.msra.mxu0 0.0
    %4931 = vmatprep.mubr.f32.mxu0 0.0
    %4932 = vmatmul.mubr.f32.gmra.mrb[0].mxu0 %v4628
    %v4933 = vpop.f32.mrb[0].mxu0
    %v4934 = vadd.f32 %v4864, %v4933
    %v4935 = vpop.f32.mrb[0].mxu0
    %4936 = vdwg.mxu0
    %v4937 = vadd.f32 %v4934, %v1738
    %v4938 = vmul.f32 %v4937, %v31
    %v4939 = vtanh.pop %v4938
    %v4940 = vmul.f32 %v4939, %v31
    %v4941 = vadd.f32 %v4940, %v32
    %v4942 = vmul.f32 %v4941, %v4446
    %4944 = vrot.lane.b32.xlu0 %v4941, 64
    %v4945 = vpop.permute.xlu0 %4944
    %v4947 = vmul.f32 %v4941, %v4945
    %4949 = vrot.lane.b32.xlu0 %v4947, 32
    %v4950 = vpop.permute.xlu0 %4949
    %v4952 = vadd.f32 %v4942, %v4950
    %v4953 = vtanh.pop %v4952
    %4955 = vrot.lane.b32.xlu0 %v4953, 64
    %v4956 = vpop.permute.xlu0 %4955
    %v4958 = vmul.f32 %v4941, %v4956
    %4960 = vrot.lane.b32.xlu0 %v4791, 32
    %v4961 = vpop.permute.xlu0 %4960
    %v4962 = vsel %vm43, %v4961, 0
    %4964 = vmatprep.subr.mxu0 0.0
    %4965 = vmatpush1.msra.mxu0 %v908
    %4966 = vmatprep.subr.mxu0 0.0
    %4967 = vmatpush1.msra.mxu0 %v909
    %4968 = vmatprep.subr.mxu0 0.0
    %4969 = vmatpush1.msra.mxu0 %v910
    %4970 = vmatprep.subr.mxu0 0.0
    %4971 = vmatpush1.msra.mxu0 %v911
    %4972 = vmatprep.subr.mxu0 0.0
    %4973 = vmatpush1.msra.mxu0 0.0
    %4974 = vmatprep.subr.mxu0 0.0
    %4975 = vmatpush1.msra.mxu0 0.0
    %4976 = vmatprep.subr.mxu0 0.0
    %4977 = vmatpush1.msra.mxu0 0.0
    %4978 = vmatprep.subr.mxu0 0.0
    %4979 = vmatpush1.msra.mxu0 0.0
    %4980 = vmatprep.subr.mxu0 0.0
    %4981 = vmatpush1.msra.mxu0 0.0
    %4982 = vmatprep.subr.mxu0 0.0
    %4983 = vmatpush1.msra.mxu0 0.0
    %4984 = vmatprep.subr.mxu0 0.0
    %4985 = vmatpush1.msra.mxu0 0.0
    %4986 = vmatprep.subr.mxu0 0.0
    %4987 = vmatpush1.msra.mxu0 0.0
    %4988 = vmatprep.subr.mxu0 0.0
    %4989 = vmatpush1.msra.mxu0 0.0
    %4990 = vmatprep.subr.mxu0 0.0
    %4991 = vmatpush1.msra.mxu0 0.0
    %4992 = vmatprep.subr.mxu0 0.0
    %4993 = vmatpush1.msra.mxu0 0.0
    %4994 = vmatprep.subr.mxu0 0.0
    %4995 = vmatpush1.msra.mxu0 0.0
    %4996 = vmatprep.subr.mxu0 0.0
    %4997 = vmatpush1.msra.mxu0 0.0
    %4998 = vmatprep.subr.mxu0 0.0
    %4999 = vmatpush1.msra.mxu0 0.0
    %5000 = vmatprep.subr.mxu0 0.0
    %5001 = vmatpush1.msra.mxu0 0.0
    %5002 = vmatprep.subr.mxu0 0.0
    %5003 = vmatpush1.msra.mxu0 0.0
    %5004 = vmatprep.subr.mxu0 0.0
    %5005 = vmatpush1.msra.mxu0 0.0
    %5006 = vmatprep.subr.mxu0 0.0
    %5007 = vmatpush1.msra.mxu0 0.0
    %5008 = vmatprep.subr.mxu0 0.0
    %5009 = vmatpush1.msra.mxu0 0.0
    %5010 = vmatprep.subr.mxu0 0.0
    %5011 = vmatpush1.msra.mxu0 0.0
    %5012 = vmatprep.subr.mxu0 0.0
    %5013 = vmatpush1.msra.mxu0 0.0
    %5014 = vmatprep.subr.mxu0 0.0
    %5015 = vmatpush1.msra.mxu0 0.0
    %5016 = vmatprep.subr.mxu0 0.0
    %5017 = vmatpush1.msra.mxu0 0.0
    %5018 = vmatprep.subr.mxu0 0.0
    %5019 = vmatpush1.msra.mxu0 0.0
    %5020 = vmatprep.subr.mxu0 0.0
    %5021 = vmatpush1.msra.mxu0 0.0
    %5022 = vmatprep.subr.mxu0 0.0
    %5023 = vmatpush1.msra.mxu0 0.0
    %5024 = vmatprep.subr.mxu0 0.0
    %5025 = vmatpush1.msra.mxu0 0.0
    %5026 = vmatprep.subr.mxu0 0.0
    %5027 = vmatpush1.msra.mxu0 0.0
    %5028 = vmatprep.mubr.f32.mxu0 0.0
    %5029 = vmatmul.mubr.f32.gmra.mrb[0].mxu0 %v4962
    %v5030 = vpop.f32.mrb[0].mxu0
    %v5031 = vadd.f32 0.0, %v5030
    %v5032 = vpop.f32.mrb[0].mxu0
    %5033 = vdwg.mxu0
    %5035 = vrot.lane.b32.xlu0 %v4624, 32
    %v5036 = vpop.permute.xlu0 %5035
    %v5037 = vsel %vm43, %v5036, 0
    %5039 = vmatprep.subr.mxu0 0.0
    %5040 = vmatpush1.msra.mxu0 %v904
    %5041 = vmatprep.subr.mxu0 0.0
    %5042 = vmatpush1.msra.mxu0 %v905
    %5043 = vmatprep.subr.mxu0 0.0
    %5044 = vmatpush1.msra.mxu0 %v906
    %5045 = vmatprep.subr.mxu0 0.0
    %5046 = vmatpush1.msra.mxu0 %v907
    %5047 = vmatprep.subr.mxu0 0.0
    %5048 = vmatpush1.msra.mxu0 0.0
    %5049 = vmatprep.subr.mxu0 0.0
    %5050 = vmatpush1.msra.mxu0 0.0
    %5051 = vmatprep.subr.mxu0 0.0
    %5052 = vmatpush1.msra.mxu0 0.0
    %5053 = vmatprep.subr.mxu0 0.0
    %5054 = vmatpush1.msra.mxu0 0.0
    %5055 = vmatprep.subr.mxu0 0.0
    %5056 = vmatpush1.msra.mxu0 0.0
    %5057 = vmatprep.subr.mxu0 0.0
    %5058 = vmatpush1.msra.mxu0 0.0
    %5059 = vmatprep.subr.mxu0 0.0
    %5060 = vmatpush1.msra.mxu0 0.0
    %5061 = vmatprep.subr.mxu0 0.0
    %5062 = vmatpush1.msra.mxu0 0.0
    %5063 = vmatprep.subr.mxu0 0.0
    %5064 = vmatpush1.msra.mxu0 0.0
    %5065 = vmatprep.subr.mxu0 0.0
    %5066 = vmatpush1.msra.mxu0 0.0
    %5067 = vmatprep.subr.mxu0 0.0
    %5068 = vmatpush1.msra.mxu0 0.0
    %5069 = vmatprep.subr.mxu0 0.0
    %5070 = vmatpush1.msra.mxu0 0.0
    %5071 = vmatprep.subr.mxu0 0.0
    %5072 = vmatpush1.msra.mxu0 0.0
    %5073 = vmatprep.subr.mxu0 0.0
    %5074 = vmatpush1.msra.mxu0 0.0
    %5075 = vmatprep.subr.mxu0 0.0
    %5076 = vmatpush1.msra.mxu0 0.0
    %5077 = vmatprep.subr.mxu0 0.0
    %5078 = vmatpush1.msra.mxu0 0.0
    %5079 = vmatprep.subr.mxu0 0.0
    %5080 = vmatpush1.msra.mxu0 0.0
    %5081 = vmatprep.subr.mxu0 0.0
    %5082 = vmatpush1.msra.mxu0 0.0
    %5083 = vmatprep.subr.mxu0 0.0
    %5084 = vmatpush1.msra.mxu0 0.0
    %5085 = vmatprep.subr.mxu0 0.0
    %5086 = vmatpush1.msra.mxu0 0.0
    %5087 = vmatprep.subr.mxu0 0.0
    %5088 = vmatpush1.msra.mxu0 0.0
    %5089 = vmatprep.subr.mxu0 0.0
    %5090 = vmatpush1.msra.mxu0 0.0
    %5091 = vmatprep.subr.mxu0 0.0
    %5092 = vmatpush1.msra.mxu0 0.0
    %5093 = vmatprep.subr.mxu0 0.0
    %5094 = vmatpush1.msra.mxu0 0.0
    %5095 = vmatprep.subr.mxu0 0.0
    %5096 = vmatpush1.msra.mxu0 0.0
    %5097 = vmatprep.subr.mxu0 0.0
    %5098 = vmatpush1.msra.mxu0 0.0
    %5099 = vmatprep.subr.mxu0 0.0
    %5100 = vmatpush1.msra.mxu0 0.0
    %5101 = vmatprep.subr.mxu0 0.0
    %5102 = vmatpush1.msra.mxu0 0.0
    %5103 = vmatprep.mubr.f32.mxu0 0.0
    %5104 = vmatmul.mubr.f32.gmra.mrb[0].mxu0 %v5037
    %v5105 = vpop.f32.mrb[0].mxu0
    %v5106 = vadd.f32 %v5031, %v5105
    %v5107 = vpop.f32.mrb[0].mxu0
    %5108 = vdwg.mxu0
    %v5109 = vadd.f32 %v5106, %v1056
    %v5110 = vmul.f32 %v5109, %v31
    %v5111 = vtanh.pop %v5110
    %v5112 = vmul.f32 %v5111, %v31
    %v5113 = vadd.f32 %v5112, %v32
    %v5114 = vmul.f32 %v5113, %v4785
    %5116 = vrot.lane.b32.xlu0 %v5113, 64
    %v5117 = vpop.permute.xlu0 %5116
    %v5119 = vmul.f32 %v5113, %v5117
    %5121 = vrot.lane.b32.xlu0 %v5119, 32
    %v5122 = vpop.permute.xlu0 %5121
    %v5124 = vadd.f32 %v5114, %v5122
    %v5125 = vtanh.pop %v5124
    %5127 = vrot.lane.b32.xlu0 %v5125, 64
    %v5128 = vpop.permute.xlu0 %5127
    %v5130 = vmul.f32 %v5113, %v5128
    %5132 = vrot.lane.b32.xlu0 %v4958, 32
    %v5133 = vpop.permute.xlu0 %5132
    %v5134 = vsel %vm43, %v5133, 0
    %5136 = vmatprep.subr.mxu0 0.0
    %5137 = vmatpush1.msra.mxu0 %v1590
    %5138 = vmatprep.subr.mxu0 0.0
    %5139 = vmatpush1.msra.mxu0 %v1591
    %5140 = vmatprep.subr.mxu0 0.0
    %5141 = vmatpush1.msra.mxu0 %v1592
    %5142 = vmatprep.subr.mxu0 0.0
    %5143 = vmatpush1.msra.mxu0 %v1593
    %5144 = vmatprep.subr.mxu0 0.0
    %5145 = vmatpush1.msra.mxu0 0.0
    %5146 = vmatprep.subr.mxu0 0.0
    %5147 = vmatpush1.msra.mxu0 0.0
    %5148 = vmatprep.subr.mxu0 0.0
    %5149 = vmatpush1.msra.mxu0 0.0
    %5150 = vmatprep.subr.mxu0 0.0
    %5151 = vmatpush1.msra.mxu0 0.0
    %5152 = vmatprep.subr.mxu0 0.0
    %5153 = vmatpush1.msra.mxu0 0.0
    %5154 = vmatprep.subr.mxu0 0.0
    %5155 = vmatpush1.msra.mxu0 0.0
    %5156 = vmatprep.subr.mxu0 0.0
    %5157 = vmatpush1.msra.mxu0 0.0
    %5158 = vmatprep.subr.mxu0 0.0
    %5159 = vmatpush1.msra.mxu0 0.0
    %5160 = vmatprep.subr.mxu0 0.0
    %5161 = vmatpush1.msra.mxu0 0.0
    %5162 = vmatprep.subr.mxu0 0.0
    %5163 = vmatpush1.msra.mxu0 0.0
    %5164 = vmatprep.subr.mxu0 0.0
    %5165 = vmatpush1.msra.mxu0 0.0
    %5166 = vmatprep.subr.mxu0 0.0
    %5167 = vmatpush1.msra.mxu0 0.0
    %5168 = vmatprep.subr.mxu0 0.0
    %5169 = vmatpush1.msra.mxu0 0.0
    %5170 = vmatprep.subr.mxu0 0.0
    %5171 = vmatpush1.msra.mxu0 0.0
    %5172 = vmatprep.subr.mxu0 0.0
    %5173 = vmatpush1.msra.mxu0 0.0
    %5174 = vmatprep.subr.mxu0 0.0
    %5175 = vmatpush1.msra.mxu0 0.0
    %5176 = vmatprep.subr.mxu0 0.0
    %5177 = vmatpush1.msra.mxu0 0.0
    %5178 = vmatprep.subr.mxu0 0.0
    %5179 = vmatpush1.msra.mxu0 0.0
    %5180 = vmatprep.subr.mxu0 0.0
    %5181 = vmatpush1.msra.mxu0 0.0
    %5182 = vmatprep.subr.mxu0 0.0
    %5183 = vmatpush1.msra.mxu0 0.0
    %5184 = vmatprep.subr.mxu0 0.0
    %5185 = vmatpush1.msra.mxu0 0.0
    %5186 = vmatprep.subr.mxu0 0.0
    %5187 = vmatpush1.msra.mxu0 0.0
    %5188 = vmatprep.subr.mxu0 0.0
    %5189 = vmatpush1.msra.mxu0 0.0
    %5190 = vmatprep.subr.mxu0 0.0
    %5191 = vmatpush1.msra.mxu0 0.0
    %5192 = vmatprep.subr.mxu0 0.0
    %5193 = vmatpush1.msra.mxu0 0.0
    %5194 = vmatprep.subr.mxu0 0.0
    %5195 = vmatpush1.msra.mxu0 0.0
    %5196 = vmatprep.subr.mxu0 0.0
    %5197 = vmatpush1.msra.mxu0 0.0
    %5198 = vmatprep.subr.mxu0 0.0
    %5199 = vmatpush1.msra.mxu0 0.0
    %5200 = vmatprep.mubr.f32.mxu0 0.0
    %5201 = vmatmul.mubr.f32.gmra.mrb[0].mxu0 %v5134
    %v5202 = vpop.f32.mrb[0].mxu0
    %v5203 = vadd.f32 0.0, %v5202
    %v5204 = vpop.f32.mrb[0].mxu0
    %5205 = vdwg.mxu0
    %5206 = vmatprep.subr.mxu0 0.0
    %5207 = vmatpush1.msra.mxu0 %v1586
    %5208 = vmatprep.subr.mxu0 0.0
    %5209 = vmatpush1.msra.mxu0 %v1587
    %5210 = vmatprep.subr.mxu0 0.0
    %5211 = vmatpush1.msra.mxu0 %v1588
    %5212 = vmatprep.subr.mxu0 0.0
    %5213 = vmatpush1.msra.mxu0 %v1589
    %5214 = vmatprep.subr.mxu0 0.0
    %5215 = vmatpush1.msra.mxu0 0.0
    %5216 = vmatprep.subr.mxu0 0.0
    %5217 = vmatpush1.msra.mxu0 0.0
    %5218 = vmatprep.subr.mxu0 0.0
    %5219 = vmatpush1.msra.mxu0 0.0
    %5220 = vmatprep.subr.mxu0 0.0
    %5221 = vmatpush1.msra.mxu0 0.0
    %5222 = vmatprep.subr.mxu0 0.0
    %5223 = vmatpush1.msra.mxu0 0.0
    %5224 = vmatprep.subr.mxu0 0.0
    %5225 = vmatpush1.msra.mxu0 0.0
    %5226 = vmatprep.subr.mxu0 0.0
    %5227 = vmatpush1.msra.mxu0 0.0
    %5228 = vmatprep.subr.mxu0 0.0
    %5229 = vmatpush1.msra.mxu0 0.0
    %5230 = vmatprep.subr.mxu0 0.0
    %5231 = vmatpush1.msra.mxu0 0.0
    %5232 = vmatprep.subr.mxu0 0.0
    %5233 = vmatpush1.msra.mxu0 0.0
    %5234 = vmatprep.subr.mxu0 0.0
    %5235 = vmatpush1.msra.mxu0 0.0
    %5236 = vmatprep.subr.mxu0 0.0
    %5237 = vmatpush1.msra.mxu0 0.0
    %5238 = vmatprep.subr.mxu0 0.0
    %5239 = vmatpush1.msra.mxu0 0.0
    %5240 = vmatprep.subr.mxu0 0.0
    %5241 = vmatpush1.msra.mxu0 0.0
    %5242 = vmatprep.subr.mxu0 0.0
    %5243 = vmatpush1.msra.mxu0 0.0
    %5244 = vmatprep.subr.mxu0 0.0
    %5245 = vmatpush1.msra.mxu0 0.0
    %5246 = vmatprep.subr.mxu0 0.0
    %5247 = vmatpush1.msra.mxu0 0.0
    %5248 = vmatprep.subr.mxu0 0.0
    %5249 = vmatpush1.msra.mxu0 0.0
    %5250 = vmatprep.subr.mxu0 0.0
    %5251 = vmatpush1.msra.mxu0 0.0
    %5252 = vmatprep.subr.mxu0 0.0
    %5253 = vmatpush1.msra.mxu0 0.0
    %5254 = vmatprep.subr.mxu0 0.0
    %5255 = vmatpush1.msra.mxu0 0.0
    %5256 = vmatprep.subr.mxu0 0.0
    %5257 = vmatpush1.msra.mxu0 0.0
    %5258 = vmatprep.subr.mxu0 0.0
    %5259 = vmatpush1.msra.mxu0 0.0
    %5260 = vmatprep.subr.mxu0 0.0
    %5261 = vmatpush1.msra.mxu0 0.0
    %5262 = vmatprep.subr.mxu0 0.0
    %5263 = vmatpush1.msra.mxu0 0.0
    %5264 = vmatprep.subr.mxu0 0.0
    %5265 = vmatpush1.msra.mxu0 0.0
    %5266 = vmatprep.subr.mxu0 0.0
    %5267 = vmatpush1.msra.mxu0 0.0
    %5268 = vmatprep.subr.mxu0 0.0
    %5269 = vmatpush1.msra.mxu0 0.0
    %5270 = vmatprep.mubr.f32.mxu0 0.0
    %5271 = vmatmul.mubr.f32.gmra.mrb[0].mxu0 %v4962
    %v5272 = vpop.f32.mrb[0].mxu0
    %v5273 = vadd.f32 %v5203, %v5272
    %v5274 = vpop.f32.mrb[0].mxu0
    %5275 = vdwg.mxu0
    %v5276 = vadd.f32 %v5273, %v1738
    %v5277 = vmul.f32 %v5276, %v31
    %v5278 = vtanh.pop %v5277
    %v5279 = vmul.f32 %v5278, %v31
    %v5280 = vadd.f32 %v5279, %v32
    %v5281 = vmul.f32 %v5280, %v4952
    %5283 = vrot.lane.b32.xlu0 %v5280, 64
    %v5284 = vpop.permute.xlu0 %5283
    %v5286 = vmul.f32 %v5280, %v5284
    %5288 = vrot.lane.b32.xlu0 %v5286, 32
    %v5289 = vpop.permute.xlu0 %5288
    %v5291 = vadd.f32 %v5281, %v5289
    %v5292 = vtanh.pop %v5291
    %5294 = vrot.lane.b32.xlu0 %v5292, 64
    %v5295 = vpop.permute.xlu0 %5294
    %v5297 = vmul.f32 %v5280, %v5295
    %5299 = vrot.lane.b32.xlu0 %v5297, 32
    %v5300 = vpop.permute.xlu0 %5299
    %v5301 = vsel %vm43, %v5300, 0
    %5303 = vmatprep.subr.mxu0 0.0
    %5304 = vmatpush1.msra.mxu0 %v1590
    %5305 = vmatprep.subr.mxu0 0.0
    %5306 = vmatpush1.msra.mxu0 %v1591
    %5307 = vmatprep.subr.mxu0 0.0
    %5308 = vmatpush1.msra.mxu0 %v1592
    %5309 = vmatprep.subr.mxu0 0.0
    %5310 = vmatpush1.msra.mxu0 %v1593
    %5311 = vmatprep.subr.mxu0 0.0
    %5312 = vmatpush1.msra.mxu0 0.0
    %5313 = vmatprep.subr.mxu0 0.0
    %5314 = vmatpush1.msra.mxu0 0.0
    %5315 = vmatprep.subr.mxu0 0.0
    %5316 = vmatpush1.msra.mxu0 0.0
    %5317 = vmatprep.subr.mxu0 0.0
    %5318 = vmatpush1.msra.mxu0 0.0
    %5319 = vmatprep.subr.mxu0 0.0
    %5320 = vmatpush1.msra.mxu0 0.0
    %5321 = vmatprep.subr.mxu0 0.0
    %5322 = vmatpush1.msra.mxu0 0.0
    %5323 = vmatprep.subr.mxu0 0.0
    %5324 = vmatpush1.msra.mxu0 0.0
    %5325 = vmatprep.subr.mxu0 0.0
    %5326 = vmatpush1.msra.mxu0 0.0
    %5327 = vmatprep.subr.mxu0 0.0
    %5328 = vmatpush1.msra.mxu0 0.0
    %5329 = vmatprep.subr.mxu0 0.0
    %5330 = vmatpush1.msra.mxu0 0.0
    %5331 = vmatprep.subr.mxu0 0.0
    %5332 = vmatpush1.msra.mxu0 0.0
    %5333 = vmatprep.subr.mxu0 0.0
    %5334 = vmatpush1.msra.mxu0 0.0
    %5335 = vmatprep.subr.mxu0 0.0
    %5336 = vmatpush1.msra.mxu0 0.0
    %5337 = vmatprep.subr.mxu0 0.0
    %5338 = vmatpush1.msra.mxu0 0.0
    %5339 = vmatprep.subr.mxu0 0.0
    %5340 = vmatpush1.msra.mxu0 0.0
    %5341 = vmatprep.subr.mxu0 0.0
    %5342 = vmatpush1.msra.mxu0 0.0
    %5343 = vmatprep.subr.mxu0 0.0
    %5344 = vmatpush1.msra.mxu0 0.0
    %5345 = vmatprep.subr.mxu0 0.0
    %5346 = vmatpush1.msra.mxu0 0.0
    %5347 = vmatprep.subr.mxu0 0.0
    %5348 = vmatpush1.msra.mxu0 0.0
    %5349 = vmatprep.subr.mxu0 0.0
    %5350 = vmatpush1.msra.mxu0 0.0
    %5351 = vmatprep.subr.mxu0 0.0
    %5352 = vmatpush1.msra.mxu0 0.0
    %5353 = vmatprep.subr.mxu0 0.0
    %5354 = vmatpush1.msra.mxu0 0.0
    %5355 = vmatprep.subr.mxu0 0.0
    %5356 = vmatpush1.msra.mxu0 0.0
    %5357 = vmatprep.subr.mxu0 0.0
    %5358 = vmatpush1.msra.mxu0 0.0
    %5359 = vmatprep.subr.mxu0 0.0
    %5360 = vmatpush1.msra.mxu0 0.0
    %5361 = vmatprep.subr.mxu0 0.0
    %5362 = vmatpush1.msra.mxu0 0.0
    %5363 = vmatprep.subr.mxu0 0.0
    %5364 = vmatpush1.msra.mxu0 0.0
    %5365 = vmatprep.subr.mxu0 0.0
    %5366 = vmatpush1.msra.mxu0 0.0
    %5367 = vmatprep.mubr.f32.mxu0 0.0
    %5368 = vmatmul.mubr.f32.gmra.mrb[0].mxu0 %v5301
    %v5369 = vpop.f32.mrb[0].mxu0
    %v5370 = vadd.f32 0.0, %v5369
    %v5371 = vpop.f32.mrb[0].mxu0
    %5372 = vdwg.mxu0
    %5374 = vrot.lane.b32.xlu0 %v5130, 32
    %v5375 = vpop.permute.xlu0 %5374
    %v5376 = vsel %vm43, %v5375, 0
    %5378 = vmatprep.subr.mxu0 0.0
    %5379 = vmatpush1.msra.mxu0 %v1586
    %5380 = vmatprep.subr.mxu0 0.0
    %5381 = vmatpush1.msra.mxu0 %v1587
    %5382 = vmatprep.subr.mxu0 0.0
    %5383 = vmatpush1.msra.mxu0 %v1588
    %5384 = vmatprep.subr.mxu0 0.0
    %5385 = vmatpush1.msra.mxu0 %v1589
    %5386 = vmatprep.subr.mxu0 0.0
    %5387 = vmatpush1.msra.mxu0 0.0
    %5388 = vmatprep.subr.mxu0 0.0
    %5389 = vmatpush1.msra.mxu0 0.0
    %5390 = vmatprep.subr.mxu0 0.0
    %5391 = vmatpush1.msra.mxu0 0.0
    %5392 = vmatprep.subr.mxu0 0.0
    %5393 = vmatpush1.msra.mxu0 0.0
    %5394 = vmatprep.subr.mxu0 0.0
    %5395 = vmatpush1.msra.mxu0 0.0
    %5396 = vmatprep.subr.mxu0 0.0
    %5397 = vmatpush1.msra.mxu0 0.0
    %5398 = vmatprep.subr.mxu0 0.0
    %5399 = vmatpush1.msra.mxu0 0.0
    %5400 = vmatprep.subr.mxu0 0.0
    %5401 = vmatpush1.msra.mxu0 0.0
    %5402 = vmatprep.subr.mxu0 0.0
    %5403 = vmatpush1.msra.mxu0 0.0
    %5404 = vmatprep.subr.mxu0 0.0
    %5405 = vmatpush1.msra.mxu0 0.0
    %5406 = vmatprep.subr.mxu0 0.0
    %5407 = vmatpush1.msra.mxu0 0.0
    %5408 = vmatprep.subr.mxu0 0.0
    %5409 = vmatpush1.msra.mxu0 0.0
    %5410 = vmatprep.subr.mxu0 0.0
    %5411 = vmatpush1.msra.mxu0 0.0
    %5412 = vmatprep.subr.mxu0 0.0
    %5413 = vmatpush1.msra.mxu0 0.0
    %5414 = vmatprep.subr.mxu0 0.0
    %5415 = vmatpush1.msra.mxu0 0.0
    %5416 = vmatprep.subr.mxu0 0.0
    %5417 = vmatpush1.msra.mxu0 0.0
    %5418 = vmatprep.subr.mxu0 0.0
    %5419 = vmatpush1.msra.mxu0 0.0
    %5420 = vmatprep.subr.mxu0 0.0
    %5421 = vmatpush1.msra.mxu0 0.0
    %5422 = vmatprep.subr.mxu0 0.0
    %5423 = vmatpush1.msra.mxu0 0.0
    %5424 = vmatprep.subr.mxu0 0.0
    %5425 = vmatpush1.msra.mxu0 0.0
    %5426 = vmatprep.subr.mxu0 0.0
    %5427 = vmatpush1.msra.mxu0 0.0
    %5428 = vmatprep.subr.mxu0 0.0
    %5429 = vmatpush1.msra.mxu0 0.0
    %5430 = vmatprep.subr.mxu0 0.0
    %5431 = vmatpush1.msra.mxu0 0.0
    %5432 = vmatprep.subr.mxu0 0.0
    %5433 = vmatpush1.msra.mxu0 0.0
    %5434 = vmatprep.subr.mxu0 0.0
    %5435 = vmatpush1.msra.mxu0 0.0
    %5436 = vmatprep.subr.mxu0 0.0
    %5437 = vmatpush1.msra.mxu0 0.0
    %5438 = vmatprep.subr.mxu0 0.0
    %5439 = vmatpush1.msra.mxu0 0.0
    %5440 = vmatprep.subr.mxu0 0.0
    %5441 = vmatpush1.msra.mxu0 0.0
    %5442 = vmatprep.mubr.f32.mxu0 0.0
    %5443 = vmatmul.mubr.f32.gmra.mrb[0].mxu0 %v5376
    %v5444 = vpop.f32.mrb[0].mxu0
    %v5445 = vadd.f32 %v5370, %v5444
    %v5446 = vpop.f32.mrb[0].mxu0
    %5447 = vdwg.mxu0
    %v5448 = vadd.f32 %v5445, %v1738
    %v5449 = vmul.f32 %v5448, %v31
    %v5450 = vtanh.pop %v5449
    %v5451 = vmul.f32 %v5450, %v31
    %v5452 = vadd.f32 %v5451, %v32
    %v5453 = vmul.f32 %v5452, %v5291
    %5455 = vrot.lane.b32.xlu0 %v5452, 64
    %v5456 = vpop.permute.xlu0 %5455
    %v5458 = vmul.f32 %v5452, %v5456
    %5460 = vrot.lane.b32.xlu0 %v5458, 32
    %v5461 = vpop.permute.xlu0 %5460
    %v5463 = vadd.f32 %v5453, %v5461
    %v5464 = vtanh.pop %v5463
    %5466 = vrot.lane.b32.xlu0 %v5464, 64
    %v5467 = vpop.permute.xlu0 %5466
    %v5469 = vmul.f32 %v5452, %v5467
    %5471 = vrot.lane.b32.xlu0 %v5469, 32
    %v5472 = vpop.permute.xlu0 %5471
    %vm5474 = vcmask 257024
    %5475 = vst.msk [vmem:[#allocation5] sm:$0xf] %vm5474, %v5472
    // Predicated region
    $region14: #{keystrokes_encoder_forward.1} parent=1 // pred_check
      _
    $region15: #{keystrokes_encoder_forward.1} parent=1 // pred_check_branch
      %5477 = sbr.rel (0) target = $region17
    $region16: #{keystrokes_encoder_forward.1} parent=1 // pred_region
      %s5479 = ssub.s32 64, 64
      %5480 = vsyncadd [#allocation4], %s5479
      %s5482 = sshll.u32 [#allocation5], 4
      %s5483 = int_to_ptr.vmem [resolvable:$true] %s5482
      %5485 = dma.vmem_to_hbm [thread:$0]  %s5483, 64, %s2, [#allocation4]
    $region17: #{keystrokes_encoder_forward.1} parent=1 // pred_fallthru
      _
    // Predicated region
    $region18: #{keystrokes_encoder_forward.1} parent=1 // pred_check
      _
    $region19: #{keystrokes_encoder_forward.1} parent=1 // pred_check_branch
      %5487 = sbr.rel (0) target = $region21
    $region20: #{keystrokes_encoder_forward.1} parent=1 // pred_region
      %5488 = dma.done [#allocation4], 64
    $region21: #{keystrokes_encoder_forward.1} parent=1 // pred_fallthru
      _
    %5489 = vsyncpa [#allocation3], 1
    %5490 = vsyncpa [#allocation4], 1

</llo_original>
